<compile_context>
chip_gen: v7x
topology: tpu7x:2x2x1
jax: 0.10.0
libtpu: 0.0.40
codegen_flags: <defaults>
</compile_context>

<pallas_src>
import jax
import jax.numpy as jnp
from jax.experimental import pallas as pl
from jax.experimental.pallas import tpu as pltpu

BN_EPS = 1e-5
LEAKY_SLOPE = 0.01  # nn.LeakyReLU() / F.leaky_relu default


def _leaky(x):
    return jnp.where(x >= 0, x, LEAKY_SLOPE * x)


# ------------------------------- Pallas kernel -------------------------------

def siamese2c_kernel(
    x_ref,      # (2, B, N, 3) f32   rows ordered (view, batch, point)
    w1_ref,     # (3, 64)      f32   conv1 (BN folded)
    w2_ref,     # (64, 128)    bf16  conv2 (BN folded)
    w3_ref,     # (128, 512)   bf16  conv3 (BN folded)
    w4_ref,     # (512, 1024)  bf16  conv4 (BN folded)
    wf1_ref,    # (2048, 1024) bf16  fc1, de-interleaved & stacked [view0 ; view1]
    wf2_ref,    # (1024, 512)  bf16
    wf3_ref,    # (512, 64)    bf16
    wf4_ref,    # (64, K)      bf16
    bias_ref,   # (8, 1024)    f32   packed biases (rows: conv1..4, fc1..4)
    o_ref,      # (B, K)       f32
):
    V, B, N, _ = x_ref.shape
    R = V * B * N
    x = x_ref[...].reshape(R, 3)                         # points x coords, f32

    # ---- backbone layer 1 (C_in = 3): three VPU FMAs, no MXU round-trip ----
    w1 = w1_ref[...]                                     # (3, 64)
    h = (x[:, 0:1] * w1[0:1, :]
         + x[:, 1:2] * w1[1:2, :]
         + x[:, 2:3] * w1[2:3, :]
         + bias_ref[0:1, :w1.shape[1]])
    h = _leaky(h)                                        # (R, 64) f32

    def dense(v, w_ref, bias_row):
        c_out = w_ref.shape[1]
        y = jnp.dot(v.astype(jnp.bfloat16), w_ref[...],
                    preferred_element_type=jnp.float32)
        return y + bias_ref[bias_row:bias_row + 1, :c_out]

    # ---- backbone layers 2-4: bf16 MXU matmuls, f32 accumulate ----
    h = _leaky(dense(h, w2_ref, 1))                      # (R, 128)
    h = _leaky(dense(h, w3_ref, 2))                      # (R, 512)
    h = _leaky(dense(h, w4_ref, 3))                      # (R, 1024) f32

    # ---- max over the N point rows of each (view, batch) group ----
    # bf16 BEFORE the max (exact; halves vreg residency), then reshape + axis reduce.
    h = h.astype(jnp.bfloat16)
    c4 = h.shape[-1]
    gmax = jnp.max(h.reshape(V * B, N, c4), axis=1)      # (V*B, 1024) bf16
    # fc1 input is the interleaved (channel-major, view-minor) 2048-vector; the weight was
    # de-interleaved & stacked in the wrapper, so here it is just a lane-dim concat.
    g = jnp.concatenate([gmax[:B, :], gmax[B:, :]], axis=-1)   # (B, 2048) bf16

    # ---- head: fc1..fc4 (dropout = identity at inference) ----
    y = _leaky(dense(g, wf1_ref, 4))
    y = _leaky(dense(y, wf2_ref, 5))
    y = _leaky(dense(y, wf3_ref, 6))
    o_ref[...] = dense(y, wf4_ref, 7)                    # (B, K), no activation


# --------------------------------- wrapper -----------------------------------

def siamese2c_forward(x1, x2, kparams):
    """x1, x2: (B, N, 3) float32.  Returns (B, K) float32.

    One gridless pallas_call for the whole batch: weights are streamed once per call
    (single VMEM buffer each), so throughput improves almost linearly with B until the
    (2*B*N, 1024) matmuls approach the MXU roofline.
    """
    (w1, w2, w3, w4, wf1, wf2, wf3, wf4, bias_pack) = kparams
    B, N, _ = x1.shape
    K = wf4.shape[1]

    xs = jnp.stack([x1, x2], axis=0).astype(jnp.float32)    # (2, B, N, 3), view-major

    return pl.pallas_call(
        siamese2c_kernel,
        out_shape=jax.ShapeDtypeStruct((B, K), jnp.float32),
        compiler_params=pltpu.CompilerParams(
            vmem_limit_bytes=16 * 1024 * 1024,
        ),
    )(xs, w1, w2, w3, w4, wf1, wf2, wf3, wf4, bias_pack)


# ----------------------- parameter construction (glue) -----------------------

MLP = [64, 128, 512, 1024]


def init_raw_params(key, k_out=5):
    keys = iter(jax.random.split(key, 40))
    raw = {}
    last = 3
    for i, c in enumerate(MLP):
        raw[f"conv{i}_w"] = jax.random.normal(next(keys), (c, last, 1, 1)) / jnp.sqrt(last)
        raw[f"conv{i}_b"] = 0.1 * jax.random.normal(next(keys), (c,))
        raw[f"bn{i}_g"] = 1.0 + 0.1 * jax.random.normal(next(keys), (c,))
        raw[f"bn{i}_b"] = 0.1 * jax.random.normal(next(keys), (c,))
        raw[f"bn{i}_m"] = 0.1 * jax.random.normal(next(keys), (c,))
        raw[f"bn{i}_v"] = 1.0 + 0.1 * jax.random.uniform(next(keys), (c,))
        last = c
    fc_dims = [(1024, 2048), (512, 1024), (64, 512), (k_out, 64)]
    for j, (o, i_) in enumerate(fc_dims, start=1):
        raw[f"fc{j}_w"] = jax.random.normal(next(keys), (o, i_)) / jnp.sqrt(i_)
        raw[f"fc{j}_b"] = 0.1 * jax.random.normal(next(keys), (o,))
    return {k: v.astype(jnp.float32) for k, v in raw.items()}


def build_kernel_params(raw):
    folded_w, biases = [], []
    for i in range(4):
        W = raw[f"conv{i}_w"][:, :, 0, 0]                  # (out, in)
        b = raw[f"conv{i}_b"]
        g, bt, m, v = (raw[f"bn{i}_g"], raw[f"bn{i}_b"],
                       raw[f"bn{i}_m"], raw[f"bn{i}_v"])
        s = g / jnp.sqrt(v + BN_EPS)
        folded_w.append((W * s[:, None]).T)                # (in, out), BN folded
        biases.append((b - m) * s + bt)

    # fc1: flat[b, 2c+v] = maxfeat[b, c, v]  ->  de-interleave columns per view and stack
    # into one (2048, 1024) weight: rows [0:1024] multiply view-0 (x1) features, rows
    # [1024:2048] multiply view-1 (x2) features.
    wfc1 = raw["fc1_w"]                                    # (1024, 2048)
    wf1 = jnp.concatenate([wfc1[:, 0::2].T, wfc1[:, 1::2].T], axis=0)   # (2048, 1024)
    biases.append(raw["fc1_b"])
    wf2 = raw["fc2_w"].T; biases.append(raw["fc2_b"])
    wf3 = raw["fc3_w"].T; biases.append(raw["fc3_b"])
    wf4 = raw["fc4_w"].T; biases.append(raw["fc4_b"])

    width = max(int(b.shape[0]) for b in biases)           # 1024
    bias_pack = jnp.zeros((8, width), jnp.float32)
    for i, b in enumerate(biases):
        bias_pack = bias_pack.at[i, :b.shape[0]].set(b.astype(jnp.float32))

    bf16 = lambda a: a.astype(jnp.bfloat16)
    return (folded_w[0].astype(jnp.float32),               # conv1 stays f32 (VPU FMAs)
            bf16(folded_w[1]), bf16(folded_w[2]), bf16(folded_w[3]),
            bf16(wf1), bf16(wf2), bf16(wf3), bf16(wf4),
            bias_pack)


# ----------------------- pure-JAX reference (PyTorch semantics) --------------

def reference_forward(x1, x2, raw):
    B = x1.shape[0]
    x = jnp.concatenate([x1[..., None], x2[..., None]], axis=3)   # (B, N, 3, 2)
    h = jnp.transpose(x, (0, 2, 1, 3))                            # (B, 3, N, 2)
    for i in range(4):
        W = raw[f"conv{i}_w"][:, :, 0, 0]
        b = raw[f"conv{i}_b"]
        h = jnp.einsum("oc,bcnv->bonv", W, h) + b[None, :, None, None]
        g, bt, m, v = (raw[f"bn{i}_g"], raw[f"bn{i}_b"],
                       raw[f"bn{i}_m"], raw[f"bn{i}_v"])
        h = ((h - m[None, :, None, None])
             / jnp.sqrt(v[None, :, None, None] + BN_EPS)
             * g[None, :, None, None] + bt[None, :, None, None])
        h = _leaky(h)
    h = jnp.max(h, axis=2)                    # (B, 1024, 2)
    flat = h.reshape(B, -1)                   # (B, 2048): channel-major, view-minor
    y = _leaky(flat @ raw["fc1_w"].T + raw["fc1_b"])   # dropout = identity (eval)
    y = _leaky(y @ raw["fc2_w"].T + raw["fc2_b"])      # dropout = identity (eval)
    y = _leaky(y @ raw["fc3_w"].T + raw["fc3_b"])
    return y @ raw["fc4_w"].T + raw["fc4_b"]


if __name__ == "__main__":
    B, N, K_OUT = 2, 16, 5

    key = jax.random.PRNGKey(0)
    k1, k2, kp = jax.random.split(key, 3)
    x1 = jax.random.normal(k1, (B, N, 3), dtype=jnp.float32)
    x2 = jax.random.normal(k2, (B, N, 3), dtype=jnp.float32)

    raw = init_raw_params(kp, K_OUT)
    kparams = build_kernel_params(raw)

    out = jax.block_until_ready(siamese2c_forward(x1, x2, kparams))
    ref = jax.block_until_ready(reference_forward(x1, x2, raw))

    assert out.shape == (B, K_OUT), out.shape
    max_err = float(jnp.max(jnp.abs(out - ref)))
    assert max_err < 5e-2, f"mismatch vs reference: {max_err}"
    print("KERNEL_OK")
</pallas_src>

<mosaic_0001>
module attributes {stable_mosaic.version = 11 : i64} {
  func.func @siamese2c_kernel(%arg0: memref<2x2x16x3xf32, #tpu.memory_space<vmem>>, %arg1: memref<3x64xf32, #tpu.memory_space<vmem>>, %arg2: memref<64x128xbf16, #tpu.memory_space<vmem>>, %arg3: memref<128x512xbf16, #tpu.memory_space<vmem>>, %arg4: memref<512x1024xbf16, #tpu.memory_space<vmem>>, %arg5: memref<2048x1024xbf16, #tpu.memory_space<vmem>>, %arg6: memref<1024x512xbf16, #tpu.memory_space<vmem>>, %arg7: memref<512x64xbf16, #tpu.memory_space<vmem>>, %arg8: memref<64x5xbf16, #tpu.memory_space<vmem>>, %arg9: memref<8x1024xf32, #tpu.memory_space<vmem>>, %arg10: memref<2x5xf32, #tpu.memory_space<vmem>>) attributes {dimension_semantics = [], scalar_prefetch = 0 : i64, scratch_operands = 0 : i64, tpu.core_type = #tpu.core_type<tc>} {
    %c0 = arith.constant 0 : index
    %c0_0 = arith.constant 0 : index
    %c0_1 = arith.constant 0 : index
    %c0_2 = arith.constant 0 : index
    %0 = vector.load %arg0[%c0, %c0_0, %c0_1, %c0_2] : memref<2x2x16x3xf32, #tpu.memory_space<vmem>>, vector<2x2x16x3xf32>
    %1 = vector.shape_cast %0 : vector<2x2x16x3xf32> to vector<64x3xf32>
    %c0_3 = arith.constant 0 : index
    %c0_4 = arith.constant 0 : index
    %2 = vector.load %arg1[%c0_3, %c0_4] : memref<3x64xf32, #tpu.memory_space<vmem>>, vector<3x64xf32>
    %3 = vector.extract_strided_slice %1 {offsets = [0, 0], sizes = [64, 1], strides = [1, 1]} : vector<64x3xf32> to vector<64x1xf32>
    %4 = vector.extract_strided_slice %2 {offsets = [0, 0], sizes = [1, 64], strides = [1, 1]} : vector<3x64xf32> to vector<1x64xf32>
    %5 = vector.broadcast %3 : vector<64x1xf32> to vector<64x64xf32>
    %6 = vector.broadcast %4 : vector<1x64xf32> to vector<64x64xf32>
    %7 = arith.mulf %5, %6 : vector<64x64xf32>
    %8 = vector.extract_strided_slice %1 {offsets = [0, 1], sizes = [64, 1], strides = [1, 1]} : vector<64x3xf32> to vector<64x1xf32>
    %9 = vector.extract_strided_slice %2 {offsets = [1, 0], sizes = [1, 64], strides = [1, 1]} : vector<3x64xf32> to vector<1x64xf32>
    %10 = vector.broadcast %8 : vector<64x1xf32> to vector<64x64xf32>
    %11 = vector.broadcast %9 : vector<1x64xf32> to vector<64x64xf32>
    %12 = arith.mulf %10, %11 : vector<64x64xf32>
    %13 = arith.addf %7, %12 : vector<64x64xf32>
    %14 = vector.extract_strided_slice %1 {offsets = [0, 2], sizes = [64, 1], strides = [1, 1]} : vector<64x3xf32> to vector<64x1xf32>
    %15 = vector.extract_strided_slice %2 {offsets = [2, 0], sizes = [1, 64], strides = [1, 1]} : vector<3x64xf32> to vector<1x64xf32>
    %16 = vector.broadcast %14 : vector<64x1xf32> to vector<64x64xf32>
    %17 = vector.broadcast %15 : vector<1x64xf32> to vector<64x64xf32>
    %18 = arith.mulf %16, %17 : vector<64x64xf32>
    %19 = arith.addf %13, %18 : vector<64x64xf32>
    %c0_5 = arith.constant 0 : index
    %c0_6 = arith.constant 0 : index
    %20 = vector.load %arg9[%c0_5, %c0_6] : memref<8x1024xf32, #tpu.memory_space<vmem>>, vector<1x64xf32>
    %21 = vector.broadcast %20 : vector<1x64xf32> to vector<64x64xf32>
    %22 = arith.addf %19, %21 : vector<64x64xf32>
    %cst = arith.constant 0.000000e+00 : f32
    %23 = vector.broadcast %cst : f32 to vector<64x64xf32>
    %24 = arith.cmpf oge, %22, %23 : vector<64x64xf32>
    %cst_7 = arith.constant 0.00999999977 : f32
    %25 = vector.broadcast %cst_7 : f32 to vector<64x64xf32>
    %26 = arith.mulf %25, %22 : vector<64x64xf32>
    %27 = arith.select %24, %22, %26 : vector<64x64xi1>, vector<64x64xf32>
    %28 = arith.truncf %27 : vector<64x64xf32> to vector<64x64xbf16>
    %c0_8 = arith.constant 0 : index
    %c0_9 = arith.constant 0 : index
    %29 = vector.load %arg2[%c0_8, %c0_9] : memref<64x128xbf16, #tpu.memory_space<vmem>>, vector<64x128xbf16>
    %cst_10 = arith.constant dense<0.000000e+00> : vector<64x128xf32>
    %30 = tpu.matmul %28, %29, %cst_10 {dimension_numbers = #tpu.dot_dimension_numbers<[1], [0], [0], [1], [0, 0, 1, 1], [], []>} : vector<64x64xbf16>, vector<64x128xbf16>, vector<64x128xf32> -> vector<64x128xf32>
    %c1 = arith.constant 1 : index
    %c0_11 = arith.constant 0 : index
    %31 = vector.load %arg9[%c1, %c0_11] : memref<8x1024xf32, #tpu.memory_space<vmem>>, vector<1x128xf32>
    %32 = vector.broadcast %31 : vector<1x128xf32> to vector<64x128xf32>
    %33 = arith.addf %30, %32 : vector<64x128xf32>
    %cst_12 = arith.constant 0.000000e+00 : f32
    %34 = vector.broadcast %cst_12 : f32 to vector<64x128xf32>
    %35 = arith.cmpf oge, %33, %34 : vector<64x128xf32>
    %cst_13 = arith.constant 0.00999999977 : f32
    %36 = vector.broadcast %cst_13 : f32 to vector<64x128xf32>
    %37 = arith.mulf %36, %33 : vector<64x128xf32>
    %38 = arith.select %35, %33, %37 : vector<64x128xi1>, vector<64x128xf32>
    %39 = arith.truncf %38 : vector<64x128xf32> to vector<64x128xbf16>
    %c0_14 = arith.constant 0 : index
    %c0_15 = arith.constant 0 : index
    %40 = vector.load %arg3[%c0_14, %c0_15] : memref<128x512xbf16, #tpu.memory_space<vmem>>, vector<128x512xbf16>
    %cst_16 = arith.constant dense<0.000000e+00> : vector<64x512xf32>
    %41 = tpu.matmul %39, %40, %cst_16 {dimension_numbers = #tpu.dot_dimension_numbers<[1], [0], [0], [1], [0, 0, 1, 1], [], []>} : vector<64x128xbf16>, vector<128x512xbf16>, vector<64x512xf32> -> vector<64x512xf32>
    %c2 = arith.constant 2 : index
    %c0_17 = arith.constant 0 : index
    %42 = vector.load %arg9[%c2, %c0_17] : memref<8x1024xf32, #tpu.memory_space<vmem>>, vector<1x512xf32>
    %43 = vector.broadcast %42 : vector<1x512xf32> to vector<64x512xf32>
    %44 = arith.addf %41, %43 : vector<64x512xf32>
    %cst_18 = arith.constant 0.000000e+00 : f32
    %45 = vector.broadcast %cst_18 : f32 to vector<64x512xf32>
    %46 = arith.cmpf oge, %44, %45 : vector<64x512xf32>
    %cst_19 = arith.constant 0.00999999977 : f32
    %47 = vector.broadcast %cst_19 : f32 to vector<64x512xf32>
    %48 = arith.mulf %47, %44 : vector<64x512xf32>
    %49 = arith.select %46, %44, %48 : vector<64x512xi1>, vector<64x512xf32>
    %50 = arith.truncf %49 : vector<64x512xf32> to vector<64x512xbf16>
    %c0_20 = arith.constant 0 : index
    %c0_21 = arith.constant 0 : index
    %51 = vector.load %arg4[%c0_20, %c0_21] : memref<512x1024xbf16, #tpu.memory_space<vmem>>, vector<512x1024xbf16>
    %cst_22 = arith.constant dense<0.000000e+00> : vector<64x1024xf32>
    %52 = tpu.matmul %50, %51, %cst_22 {dimension_numbers = #tpu.dot_dimension_numbers<[1], [0], [0], [1], [0, 0, 1, 1], [], []>} : vector<64x512xbf16>, vector<512x1024xbf16>, vector<64x1024xf32> -> vector<64x1024xf32>
    %c3 = arith.constant 3 : index
    %c0_23 = arith.constant 0 : index
    %53 = vector.load %arg9[%c3, %c0_23] : memref<8x1024xf32, #tpu.memory_space<vmem>>, vector<1x1024xf32>
    %54 = vector.broadcast %53 : vector<1x1024xf32> to vector<64x1024xf32>
    %55 = arith.addf %52, %54 : vector<64x1024xf32>
    %cst_24 = arith.constant 0.000000e+00 : f32
    %56 = vector.broadcast %cst_24 : f32 to vector<64x1024xf32>
    %57 = arith.cmpf oge, %55, %56 : vector<64x1024xf32>
    %cst_25 = arith.constant 0.00999999977 : f32
    %58 = vector.broadcast %cst_25 : f32 to vector<64x1024xf32>
    %59 = arith.mulf %58, %55 : vector<64x1024xf32>
    %60 = arith.select %57, %55, %59 : vector<64x1024xi1>, vector<64x1024xf32>
    %61 = arith.truncf %60 : vector<64x1024xf32> to vector<64x1024xbf16>
    %62 = vector.shape_cast %61 : vector<64x1024xbf16> to vector<4x16x1024xbf16>
    %cst_26 = arith.constant dense<0xFF80> : vector<4x1024xbf16>
    %63 = vector.multi_reduction <maximumf>, %62, %cst_26 [1] : vector<4x16x1024xbf16> to vector<4x1024xbf16>
    %64 = vector.extract_strided_slice %63 {offsets = [0, 0], sizes = [2, 1024], strides = [1, 1]} : vector<4x1024xbf16> to vector<2x1024xbf16>
    %65 = vector.extract_strided_slice %63 {offsets = [2, 0], sizes = [2, 1024], strides = [1, 1]} : vector<4x1024xbf16> to vector<2x1024xbf16>
    %66 = tpu.concatenate %64, %65 in 1 : vector<2x1024xbf16>, vector<2x1024xbf16> -> vector<2x2048xbf16>
    %c0_27 = arith.constant 0 : index
    %c0_28 = arith.constant 0 : index
    %67 = vector.load %arg5[%c0_27, %c0_28] : memref<2048x1024xbf16, #tpu.memory_space<vmem>>, vector<2048x1024xbf16>
    %cst_29 = arith.constant dense<0.000000e+00> : vector<2x1024xf32>
    %68 = tpu.matmul %66, %67, %cst_29 {dimension_numbers = #tpu.dot_dimension_numbers<[1], [0], [0], [1], [0, 0, 1, 1], [], []>} : vector<2x2048xbf16>, vector<2048x1024xbf16>, vector<2x1024xf32> -> vector<2x1024xf32>
    %c4 = arith.constant 4 : index
    %c0_30 = arith.constant 0 : index
    %69 = vector.load %arg9[%c4, %c0_30] : memref<8x1024xf32, #tpu.memory_space<vmem>>, vector<1x1024xf32>
    %70 = vector.broadcast %69 : vector<1x1024xf32> to vector<2x1024xf32>
    %71 = arith.addf %68, %70 : vector<2x1024xf32>
    %cst_31 = arith.constant 0.000000e+00 : f32
    %72 = vector.broadcast %cst_31 : f32 to vector<2x1024xf32>
    %73 = arith.cmpf oge, %71, %72 : vector<2x1024xf32>
    %cst_32 = arith.constant 0.00999999977 : f32
    %74 = vector.broadcast %cst_32 : f32 to vector<2x1024xf32>
    %75 = arith.mulf %74, %71 : vector<2x1024xf32>
    %76 = arith.select %73, %71, %75 : vector<2x1024xi1>, vector<2x1024xf32>
    %77 = arith.truncf %76 : vector<2x1024xf32> to vector<2x1024xbf16>
    %c0_33 = arith.constant 0 : index
    %c0_34 = arith.constant 0 : index
    %78 = vector.load %arg6[%c0_33, %c0_34] : memref<1024x512xbf16, #tpu.memory_space<vmem>>, vector<1024x512xbf16>
    %cst_35 = arith.constant dense<0.000000e+00> : vector<2x512xf32>
    %79 = tpu.matmul %77, %78, %cst_35 {dimension_numbers = #tpu.dot_dimension_numbers<[1], [0], [0], [1], [0, 0, 1, 1], [], []>} : vector<2x1024xbf16>, vector<1024x512xbf16>, vector<2x512xf32> -> vector<2x512xf32>
    %c5 = arith.constant 5 : index
    %c0_36 = arith.constant 0 : index
    %80 = vector.load %arg9[%c5, %c0_36] : memref<8x1024xf32, #tpu.memory_space<vmem>>, vector<1x512xf32>
    %81 = vector.broadcast %80 : vector<1x512xf32> to vector<2x512xf32>
    %82 = arith.addf %79, %81 : vector<2x512xf32>
    %cst_37 = arith.constant 0.000000e+00 : f32
    %83 = vector.broadcast %cst_37 : f32 to vector<2x512xf32>
    %84 = arith.cmpf oge, %82, %83 : vector<2x512xf32>
    %cst_38 = arith.constant 0.00999999977 : f32
    %85 = vector.broadcast %cst_38 : f32 to vector<2x512xf32>
    %86 = arith.mulf %85, %82 : vector<2x512xf32>
    %87 = arith.select %84, %82, %86 : vector<2x512xi1>, vector<2x512xf32>
    %88 = arith.truncf %87 : vector<2x512xf32> to vector<2x512xbf16>
    %c0_39 = arith.constant 0 : index
    %c0_40 = arith.constant 0 : index
    %89 = vector.load %arg7[%c0_39, %c0_40] : memref<512x64xbf16, #tpu.memory_space<vmem>>, vector<512x64xbf16>
    %cst_41 = arith.constant dense<0.000000e+00> : vector<2x64xf32>
    %90 = tpu.matmul %88, %89, %cst_41 {dimension_numbers = #tpu.dot_dimension_numbers<[1], [0], [0], [1], [0, 0, 1, 1], [], []>} : vector<2x512xbf16>, vector<512x64xbf16>, vector<2x64xf32> -> vector<2x64xf32>
    %c6 = arith.constant 6 : index
    %c0_42 = arith.constant 0 : index
    %91 = vector.load %arg9[%c6, %c0_42] : memref<8x1024xf32, #tpu.memory_space<vmem>>, vector<1x64xf32>
    %92 = vector.broadcast %91 : vector<1x64xf32> to vector<2x64xf32>
    %93 = arith.addf %90, %92 : vector<2x64xf32>
    %cst_43 = arith.constant 0.000000e+00 : f32
    %94 = vector.broadcast %cst_43 : f32 to vector<2x64xf32>
    %95 = arith.cmpf oge, %93, %94 : vector<2x64xf32>
    %cst_44 = arith.constant 0.00999999977 : f32
    %96 = vector.broadcast %cst_44 : f32 to vector<2x64xf32>
    %97 = arith.mulf %96, %93 : vector<2x64xf32>
    %98 = arith.select %95, %93, %97 : vector<2x64xi1>, vector<2x64xf32>
    %99 = arith.truncf %98 : vector<2x64xf32> to vector<2x64xbf16>
    %c0_45 = arith.constant 0 : index
    %c0_46 = arith.constant 0 : index
    %100 = vector.load %arg8[%c0_45, %c0_46] : memref<64x5xbf16, #tpu.memory_space<vmem>>, vector<64x5xbf16>
    %cst_47 = arith.constant dense<0.000000e+00> : vector<2x5xf32>
    %101 = tpu.matmul %99, %100, %cst_47 {dimension_numbers = #tpu.dot_dimension_numbers<[1], [0], [0], [1], [0, 0, 1, 1], [], []>} : vector<2x64xbf16>, vector<64x5xbf16>, vector<2x5xf32> -> vector<2x5xf32>
    %c7 = arith.constant 7 : index
    %c0_48 = arith.constant 0 : index
    %102 = vector.load %arg9[%c7, %c0_48] : memref<8x1024xf32, #tpu.memory_space<vmem>>, vector<1x5xf32>
    %103 = vector.broadcast %102 : vector<1x5xf32> to vector<2x5xf32>
    %104 = arith.addf %101, %103 : vector<2x5xf32>
    %c0_49 = arith.constant 0 : index
    %c0_50 = arith.constant 0 : index
    %105 = vector.load %arg10[%c0_49, %c0_50] : memref<2x5xf32, #tpu.memory_space<vmem>>, vector<2x5xf32>
    tpu.vector_store %arg10[%c0_49, %c0_50], %104 {strides = array<i32>} : memref<2x5xf32, #tpu.memory_space<vmem>>, vector<2x5xf32>,
    return
  }
}

</mosaic_0001>

<llo_original>
// kernel: tpu_custom_call.1
$region0: #{tpu_custom_call.1}
  #allocation0 [shape = 'u32[]', space=smem, size = 0x4, offset = 0x4, fixed_abs, tag = 'smem constant byte address 0x4 - core index']
  #allocation1 [shape = 'u32[144,128]{1,0:T(1,128)}', space=vmem, size = 0x12000, scoped, tag = 'internal scratch']
  %s0 = inlined_call_operand.vmem [shape: f32[2,2,16,3], index: 0, kind: input, shape index: {}]
  %s1 = inlined_call_operand.hbm [shape: f32[3,64], index: 1, kind: input, shape index: {}]
  %s2 = inlined_call_operand.hbm [shape: bf16[64,128], index: 2, kind: input, shape index: {}]
  %s3 = inlined_call_operand.hbm [shape: bf16[128,512], index: 3, kind: input, shape index: {}]
  %s4 = inlined_call_operand.hbm [shape: bf16[512,1024], index: 4, kind: input, shape index: {}]
  %s5 = inlined_call_operand.hbm [shape: bf16[2048,1024], index: 5, kind: input, shape index: {}]
  %s6 = inlined_call_operand.hbm [shape: bf16[1024,512], index: 6, kind: input, shape index: {}]
  %s7 = inlined_call_operand.vmem [shape: bf16[512,64], index: 7, kind: input, shape index: {}]
  %s8 = inlined_call_operand.vmem [shape: bf16[64,5], index: 8, kind: input, shape index: {}]
  %s9 = inlined_call_operand.hbm [shape: f32[8,1024], index: 9, kind: input, shape index: {}]
  %s10 = inlined_call_operand.hbm [shape: f32[2,5], index: 10, kind: output, shape index: {}]
  %s11 = sld [smem:[#allocation0]]
  $region78: #{tpu_custom_call.1} parent=0
    _
  %s13 = ssub.s32 1, %s11
  %s14 = scalar_select 0, %s13, %s11
  $region1: #{tpu_custom_call.1} parent=0
    #allocation2 [shape = 'u8[2048]{0}', space=vmem, size = 0x800, scoped, tag = 'input window, operand 1, single buffered']
    #allocation3 [shape = 's32[1]{0}', space=sflag, size = 0x4, scoped, tag = 'scoped memory for tpu_custom_call.1']
    #allocation4 [shape = 's32[1]{0}', space=sflag, size = 0x4, scoped, tag = 'scoped memory for tpu_custom_call.1']
    #allocation5 [shape = 'u8[16384]{0}', space=vmem, size = 0x4000, scoped, tag = 'input window, operand 2, single buffered']
    #allocation6 [shape = 's32[1]{0}', space=sflag, size = 0x4, scoped, tag = 'scoped memory for tpu_custom_call.1']
    #allocation7 [shape = 'u8[131072]{0}', space=vmem, size = 0x20000, scoped, tag = 'input window, operand 3, single buffered']
    #allocation8 [shape = 'u8[1048576]{0}', space=vmem, size = 0x100000, scoped, tag = 'input window, operand 4, single buffered']
    #allocation9 [shape = 's32[1]{0}', space=sflag, size = 0x4, scoped, tag = 'scoped memory for tpu_custom_call.1']
    #allocation10 [shape = 'u8[4194304]{0}', space=vmem, size = 0x400000, scoped, tag = 'input window, operand 5, single buffered']
    #allocation11 [shape = 'u8[1048576]{0}', space=vmem, size = 0x100000, scoped, tag = 'input window, operand 6, single buffered']
    #allocation12 [shape = 's32[1]{0}', space=sflag, size = 0x4, scoped, tag = 'scoped memory for tpu_custom_call.1']
    #allocation13 [shape = 'u8[32768]{0}', space=vmem, size = 0x8000, scoped, tag = 'input window, operand 9, single buffered']
    #allocation14 [shape = 'u8[1024]{0}', space=vmem, size = 0x400, scoped, tag = 'output window, operand 0, single buffered']
    %15 = vsyncpa [#allocation3], 0
    %16 = vsyncpa [#allocation6], 0
    %17 = vsyncpa [#allocation9], 0
    %18 = vsyncpa [#allocation12], 0
    %19 = vsyncpa [#allocation4], 0
    // Predicated region
    $region2: #{tpu_custom_call.1} parent=1 // pred_check
      _
    $region3: #{tpu_custom_call.1} parent=1 // pred_check_branch
      %21 = sbr.rel (0) target = $region5
    $region4: #{tpu_custom_call.1} parent=1 // pred_region
      _
    $region5: #{tpu_custom_call.1} parent=1 // pred_fallthru
      _
    // Predicated region
    $region6: #{tpu_custom_call.1} parent=1 // pred_check
      _
    $region7: #{tpu_custom_call.1} parent=1 // pred_check_branch
      %23 = sbr.rel (0) target = $region9
    $region8: #{tpu_custom_call.1} parent=1 // pred_region
      %s25 = ssub.s32 64, 64
      %26 = vsyncadd [#allocation3], %s25
      %s28 = sshll.u32 [#allocation2], 4
      %s29 = int_to_ptr.vmem [resolvable:$true] %s28
      %31 = dma.hbm_to_vmem [thread:$0]  %s1, 64, %s29, [#allocation3]
    $region9: #{tpu_custom_call.1} parent=1 // pred_fallthru
      _
    // Predicated region
    $region10: #{tpu_custom_call.1} parent=1 // pred_check
      _
    $region11: #{tpu_custom_call.1} parent=1 // pred_check_branch
      %33 = sbr.rel (0) target = $region13
    $region12: #{tpu_custom_call.1} parent=1 // pred_region
      %s35 = ssub.s32 512, 512
      %36 = vsyncadd [#allocation6], %s35
      %s37 = sshll.u32 [#allocation5], 4
      %s38 = int_to_ptr.vmem [resolvable:$true] %s37
      %43 = dma.hbm_to_vmem [thread:$0]  %s2, 512, %s38, [#allocation6], 64, 64, 4
    $region13: #{tpu_custom_call.1} parent=1 // pred_fallthru
      _
    // Predicated region
    $region14: #{tpu_custom_call.1} parent=1 // pred_check
      _
    $region15: #{tpu_custom_call.1} parent=1 // pred_check_branch
      %45 = sbr.rel (0) target = $region17
    $region16: #{tpu_custom_call.1} parent=1 // pred_region
      %s47 = ssub.s32 4096, 4096
      %48 = vsyncadd [#allocation6], %s47
      %s49 = sshll.u32 [#allocation7], 4
      %s50 = int_to_ptr.vmem [resolvable:$true] %s49
      %55 = dma.hbm_to_vmem [thread:$0]  %s3, 4096, %s50, [#allocation6], 256, 256, 16
    $region17: #{tpu_custom_call.1} parent=1 // pred_fallthru
      _
    // Predicated region
    $region18: #{tpu_custom_call.1} parent=1 // pred_check
      _
    $region19: #{tpu_custom_call.1} parent=1 // pred_check_branch
      %57 = sbr.rel (0) target = $region21
    $region20: #{tpu_custom_call.1} parent=1 // pred_region
      %s59 = ssub.s32 32768, 32768
      %60 = vsyncadd [#allocation9], %s59
      %s61 = sshll.u32 [#allocation8], 4
      %s62 = int_to_ptr.vmem [resolvable:$true] %s61
      %67 = dma.hbm_to_vmem [thread:$0]  %s4, 32768, %s62, [#allocation9], 512, 512, 32
    $region21: #{tpu_custom_call.1} parent=1 // pred_fallthru
      _
    // Predicated region
    $region22: #{tpu_custom_call.1} parent=1 // pred_check
      _
    $region23: #{tpu_custom_call.1} parent=1 // pred_check_branch
      %69 = sbr.rel (0) target = $region25
    $region24: #{tpu_custom_call.1} parent=1 // pred_region
      %s71 = ssub.s32 131072, 131072
      %72 = vsyncadd [#allocation9], %s71
      %s73 = sshll.u32 [#allocation10], 4
      %s74 = int_to_ptr.vmem [resolvable:$true] %s73
      %79 = dma.hbm_to_vmem [thread:$0]  %s5, 131072, %s74, [#allocation9], 512, 512, 32
    $region25: #{tpu_custom_call.1} parent=1 // pred_fallthru
      _
    // Predicated region
    $region26: #{tpu_custom_call.1} parent=1 // pred_check
      _
    $region27: #{tpu_custom_call.1} parent=1 // pred_check_branch
      %81 = sbr.rel (0) target = $region29
    $region28: #{tpu_custom_call.1} parent=1 // pred_region
      %s83 = ssub.s32 32768, 32768
      %84 = vsyncadd [#allocation12], %s83
      %s85 = sshll.u32 [#allocation11], 4
      %s86 = int_to_ptr.vmem [resolvable:$true] %s85
      %91 = dma.hbm_to_vmem [thread:$0]  %s6, 32768, %s86, [#allocation12], 256, 256, 16
    $region29: #{tpu_custom_call.1} parent=1 // pred_fallthru
      _
    // Predicated region
    $region30: #{tpu_custom_call.1} parent=1 // pred_check
      _
    $region31: #{tpu_custom_call.1} parent=1 // pred_check_branch
      %93 = sbr.rel (0) target = $region33
    $region32: #{tpu_custom_call.1} parent=1 // pred_region
      _
    $region33: #{tpu_custom_call.1} parent=1 // pred_fallthru
      _
    // Predicated region
    $region34: #{tpu_custom_call.1} parent=1 // pred_check
      _
    $region35: #{tpu_custom_call.1} parent=1 // pred_check_branch
      %95 = sbr.rel (0) target = $region37
    $region36: #{tpu_custom_call.1} parent=1 // pred_region
      _
    $region37: #{tpu_custom_call.1} parent=1 // pred_fallthru
      _
    // Predicated region
    $region38: #{tpu_custom_call.1} parent=1 // pred_check
      _
    $region39: #{tpu_custom_call.1} parent=1 // pred_check_branch
      %97 = sbr.rel (0) target = $region41
    $region40: #{tpu_custom_call.1} parent=1 // pred_region
      %s99 = ssub.s32 1024, 1024
      %100 = vsyncadd [#allocation12], %s99
      %s102 = sshll.u32 [#allocation13], 4
      %s103 = int_to_ptr.vmem [resolvable:$true] %s102
      %105 = dma.hbm_to_vmem [thread:$0]  %s9, 1024, %s103, [#allocation12]
    $region41: #{tpu_custom_call.1} parent=1 // pred_fallthru
      _
    // Predicated region
    $region42: #{tpu_custom_call.1} parent=1 // pred_check
      _
    $region43: #{tpu_custom_call.1} parent=1 // pred_check_branch
      %107 = sbr.rel (0) target = $region45
    $region44: #{tpu_custom_call.1} parent=1 // pred_region
      %108 = dma.done [#allocation3], 64
    $region45: #{tpu_custom_call.1} parent=1 // pred_fallthru
      _
    // Predicated region
    $region46: #{tpu_custom_call.1} parent=1 // pred_check
      _
    $region47: #{tpu_custom_call.1} parent=1 // pred_check_branch
      %110 = sbr.rel (0) target = $region49
    $region48: #{tpu_custom_call.1} parent=1 // pred_region
      %111 = dma.done [#allocation6], 512
    $region49: #{tpu_custom_call.1} parent=1 // pred_fallthru
      _
    // Predicated region
    $region50: #{tpu_custom_call.1} parent=1 // pred_check
      _
    $region51: #{tpu_custom_call.1} parent=1 // pred_check_branch
      %113 = sbr.rel (0) target = $region53
    $region52: #{tpu_custom_call.1} parent=1 // pred_region
      %114 = dma.done [#allocation6], 4096
    $region53: #{tpu_custom_call.1} parent=1 // pred_fallthru
      _
    // Predicated region
    $region54: #{tpu_custom_call.1} parent=1 // pred_check
      _
    $region55: #{tpu_custom_call.1} parent=1 // pred_check_branch
      %116 = sbr.rel (0) target = $region57
    $region56: #{tpu_custom_call.1} parent=1 // pred_region
      %117 = dma.done [#allocation9], 32768
    $region57: #{tpu_custom_call.1} parent=1 // pred_fallthru
      _
    // Predicated region
    $region58: #{tpu_custom_call.1} parent=1 // pred_check
      _
    $region59: #{tpu_custom_call.1} parent=1 // pred_check_branch
      %119 = sbr.rel (0) target = $region61
    $region60: #{tpu_custom_call.1} parent=1 // pred_region
      %120 = dma.done [#allocation9], 131072
    $region61: #{tpu_custom_call.1} parent=1 // pred_fallthru
      _
    // Predicated region
    $region62: #{tpu_custom_call.1} parent=1 // pred_check
      _
    $region63: #{tpu_custom_call.1} parent=1 // pred_check_branch
      %122 = sbr.rel (0) target = $region65
    $region64: #{tpu_custom_call.1} parent=1 // pred_region
      %123 = dma.done [#allocation12], 32768
    $region65: #{tpu_custom_call.1} parent=1 // pred_fallthru
      _
    // Predicated region
    $region66: #{tpu_custom_call.1} parent=1 // pred_check
      _
    $region67: #{tpu_custom_call.1} parent=1 // pred_check_branch
      %125 = sbr.rel (0) target = $region69
    $region68: #{tpu_custom_call.1} parent=1 // pred_region
      %126 = dma.done [#allocation12], 1024
    $region69: #{tpu_custom_call.1} parent=1 // pred_fallthru
      _
    %v128 = vld [vmem:[%s0] sm:$0xff]
    %v129 = vld [vmem:[%s0 + $0x8] sm:$0xff]
    %v130 = vld [vmem:[%s0 + $0x10] sm:$0xff]
    %v131 = vld [vmem:[%s0 + $0x18] sm:$0xff]
    %v132 = vld [vmem:[%s0 + $0x20] sm:$0xff]
    %v133 = vld [vmem:[%s0 + $0x28] sm:$0xff]
    %v134 = vld [vmem:[%s0 + $0x30] sm:$0xff]
    %v135 = vld [vmem:[%s0 + $0x38] sm:$0xff]
    %v136 = vld [vmem:[#allocation2] sm:$0x7]
    %138 = vset.pattern.permute.xlu0 0
    %139 = vperm.xlu0 %138, %v128
    %v140 = vpop.permute.xlu0 %139
    %143 = vset.pattern.permute.xlu0 0
    %144 = vperm.xlu0 %143, %v129
    %v145 = vpop.permute.xlu0 %144
    %148 = vset.pattern.permute.xlu0 0
    %149 = vperm.xlu0 %148, %v130
    %v150 = vpop.permute.xlu0 %149
    %153 = vset.pattern.permute.xlu0 0
    %154 = vperm.xlu0 %153, %v131
    %v155 = vpop.permute.xlu0 %154
    %158 = vset.pattern.permute.xlu0 0
    %159 = vperm.xlu0 %158, %v132
    %v160 = vpop.permute.xlu0 %159
    %163 = vset.pattern.permute.xlu0 0
    %164 = vperm.xlu0 %163, %v133
    %v165 = vpop.permute.xlu0 %164
    %168 = vset.pattern.permute.xlu0 0
    %169 = vperm.xlu0 %168, %v134
    %v170 = vpop.permute.xlu0 %169
    %173 = vset.pattern.permute.xlu0 0
    %174 = vperm.xlu0 %173, %v135
    %v175 = vpop.permute.xlu0 %174
    %v177 = vlaneseq
    %v178 = vshrl.u32 %v177, 7
    %v179 = vsub.s32 0, %v178
    %v180 = vrot.slane %v136, %v179
    %v181 = vmul.f32 %v140, %v180
    %v182 = vmul.f32 %v145, %v180
    %v183 = vmul.f32 %v150, %v180
    %v184 = vmul.f32 %v155, %v180
    %v185 = vmul.f32 %v160, %v180
    %v186 = vmul.f32 %v165, %v180
    %v187 = vmul.f32 %v170, %v180
    %v188 = vmul.f32 %v175, %v180
    %189 = vset.pattern.permute.xlu0 1
    %190 = vperm.xlu0 %189, %v128
    %v191 = vpop.permute.xlu0 %190
    %193 = vset.pattern.permute.xlu0 1
    %194 = vperm.xlu0 %193, %v129
    %v195 = vpop.permute.xlu0 %194
    %197 = vset.pattern.permute.xlu0 1
    %198 = vperm.xlu0 %197, %v130
    %v199 = vpop.permute.xlu0 %198
    %201 = vset.pattern.permute.xlu0 1
    %202 = vperm.xlu0 %201, %v131
    %v203 = vpop.permute.xlu0 %202
    %205 = vset.pattern.permute.xlu0 1
    %206 = vperm.xlu0 %205, %v132
    %v207 = vpop.permute.xlu0 %206
    %209 = vset.pattern.permute.xlu0 1
    %210 = vperm.xlu0 %209, %v133
    %v211 = vpop.permute.xlu0 %210
    %213 = vset.pattern.permute.xlu0 1
    %214 = vperm.xlu0 %213, %v134
    %v215 = vpop.permute.xlu0 %214
    %217 = vset.pattern.permute.xlu0 1
    %218 = vperm.xlu0 %217, %v135
    %v219 = vpop.permute.xlu0 %218
    %v221 = vlaneseq
    %v222 = vshrl.u32 %v221, 7
    %v223 = vsub.s32 1, %v222
    %v224 = vrot.slane %v136, %v223
    %v225 = vmul.f32 %v191, %v224
    %v226 = vmul.f32 %v195, %v224
    %v227 = vmul.f32 %v199, %v224
    %v228 = vmul.f32 %v203, %v224
    %v229 = vmul.f32 %v207, %v224
    %v230 = vmul.f32 %v211, %v224
    %v231 = vmul.f32 %v215, %v224
    %v232 = vmul.f32 %v219, %v224
    %v233 = vadd.f32 %v181, %v225
    %v234 = vadd.f32 %v182, %v226
    %v235 = vadd.f32 %v183, %v227
    %v236 = vadd.f32 %v184, %v228
    %v237 = vadd.f32 %v185, %v229
    %v238 = vadd.f32 %v186, %v230
    %v239 = vadd.f32 %v187, %v231
    %v240 = vadd.f32 %v188, %v232
    %241 = vset.pattern.permute.xlu0 2
    %242 = vperm.xlu0 %241, %v128
    %v243 = vpop.permute.xlu0 %242
    %245 = vset.pattern.permute.xlu0 2
    %246 = vperm.xlu0 %245, %v129
    %v247 = vpop.permute.xlu0 %246
    %249 = vset.pattern.permute.xlu0 2
    %250 = vperm.xlu0 %249, %v130
    %v251 = vpop.permute.xlu0 %250
    %253 = vset.pattern.permute.xlu0 2
    %254 = vperm.xlu0 %253, %v131
    %v255 = vpop.permute.xlu0 %254
    %257 = vset.pattern.permute.xlu0 2
    %258 = vperm.xlu0 %257, %v132
    %v259 = vpop.permute.xlu0 %258
    %261 = vset.pattern.permute.xlu0 2
    %262 = vperm.xlu0 %261, %v133
    %v263 = vpop.permute.xlu0 %262
    %265 = vset.pattern.permute.xlu0 2
    %266 = vperm.xlu0 %265, %v134
    %v267 = vpop.permute.xlu0 %266
    %269 = vset.pattern.permute.xlu0 2
    %270 = vperm.xlu0 %269, %v135
    %v271 = vpop.permute.xlu0 %270
    %v273 = vlaneseq
    %v274 = vshrl.u32 %v273, 7
    %v275 = vsub.s32 2, %v274
    %v276 = vrot.slane %v136, %v275
    %v277 = vmul.f32 %v243, %v276
    %v278 = vmul.f32 %v247, %v276
    %v279 = vmul.f32 %v251, %v276
    %v280 = vmul.f32 %v255, %v276
    %v281 = vmul.f32 %v259, %v276
    %v282 = vmul.f32 %v263, %v276
    %v283 = vmul.f32 %v267, %v276
    %v284 = vmul.f32 %v271, %v276
    %v285 = vadd.f32 %v233, %v277
    %v286 = vadd.f32 %v234, %v278
    %v287 = vadd.f32 %v235, %v279
    %v288 = vadd.f32 %v236, %v280
    %v289 = vadd.f32 %v237, %v281
    %v290 = vadd.f32 %v238, %v282
    %v291 = vadd.f32 %v239, %v283
    %v292 = vadd.f32 %v240, %v284
    %v293 = vld [vmem:[#allocation13] ss:$0 sm:$0xff]
    %v294 = vadd.f32 %v285, %v293
    %v295 = vadd.f32 %v286, %v293
    %v296 = vadd.f32 %v287, %v293
    %v297 = vadd.f32 %v288, %v293
    %v298 = vadd.f32 %v289, %v293
    %v299 = vadd.f32 %v290, %v293
    %v300 = vadd.f32 %v291, %v293
    %v301 = vadd.f32 %v292, %v293
    %vm302 = vcmp.ge.f32.partialorder %v294, 0.0
    %vm303 = vcmp.ge.f32.partialorder %v295, 0.0
    %vm304 = vcmp.ge.f32.partialorder %v296, 0.0
    %vm305 = vcmp.ge.f32.partialorder %v297, 0.0
    %vm306 = vcmp.ge.f32.partialorder %v298, 0.0
    %vm307 = vcmp.ge.f32.partialorder %v299, 0.0
    %vm308 = vcmp.ge.f32.partialorder %v300, 0.0
    %vm309 = vcmp.ge.f32.partialorder %v301, 0.0
    %v310 = vmul.f32 %v294, 0.01
    %v311 = vmul.f32 %v295, 0.01
    %v312 = vmul.f32 %v296, 0.01
    %v313 = vmul.f32 %v297, 0.01
    %v314 = vmul.f32 %v298, 0.01
    %v315 = vmul.f32 %v299, 0.01
    %v316 = vmul.f32 %v300, 0.01
    %v317 = vmul.f32 %v301, 0.01
    %v318 = vsel %vm302, %v294, %v310
    %v319 = vsel %vm303, %v295, %v311
    %v320 = vsel %vm304, %v296, %v312
    %v321 = vsel %vm305, %v297, %v313
    %v322 = vsel %vm306, %v298, %v314
    %v323 = vsel %vm307, %v299, %v315
    %v324 = vsel %vm308, %v300, %v316
    %v325 = vsel %vm309, %v301, %v317
    %v326 = vpack.c.bf16 %v319, %v318
    %v327 = vpack.c.bf16 %v321, %v320
    %v328 = vpack.c.bf16 %v323, %v322
    %v329 = vpack.c.bf16 %v325, %v324
    %v330 = vld [vmem:[#allocation5] sm:$0xf]
    %v331 = vld [vmem:[#allocation5 + $0x4] sm:$0xf]
    %v332 = vld [vmem:[#allocation5 + $0x8] sm:$0xf]
    %v333 = vld [vmem:[#allocation5 + $0xc] sm:$0xf]
    %v334 = vld [vmem:[#allocation5 + $0x10] sm:$0xf]
    %v335 = vld [vmem:[#allocation5 + $0x14] sm:$0xf]
    %v336 = vld [vmem:[#allocation5 + $0x18] sm:$0xf]
    %v337 = vld [vmem:[#allocation5 + $0x1c] sm:$0xf]
    %v338 = vld [vmem:[#allocation13 + $0x1] ss:$0 sm:$0xff]
    %v347 = vunpack.c.l.b16 %v330
    %v348 = vunpack.c.l.b16 %v331
    %v349 = vunpack.c.l.b16 %v332
    %v350 = vunpack.c.l.b16 %v333
    %v351 = vunpack.c.l.b16 %v334
    %v352 = vunpack.c.l.b16 %v335
    %v353 = vunpack.c.l.b16 %v336
    %v354 = vunpack.c.l.b16 %v337
    %v355 = vpack.c.b16 %v348, %v347
    %v356 = vpack.c.b16 %v350, %v349
    %v357 = vpack.c.b16 %v352, %v351
    %v358 = vpack.c.b16 %v354, %v353
    %vm363 = vcmask 523264
    %v365 = vsel %vm363, %v326, 0
    %v368 = vsel %vm363, %v327, 0
    %v371 = vsel %vm363, %v328, 0
    %v374 = vsel %vm363, %v329, 0
    %376 = vmatprep.subr.bf16.mxu0 0
    %377 = vmatpush1.bf16.msra.mxu0 %v355
    %378 = vmatprep.subr.bf16.mxu0 0
    %379 = vmatpush1.bf16.msra.mxu0 %v356
    %380 = vmatprep.subr.bf16.mxu0 0
    %381 = vmatpush1.bf16.msra.mxu0 %v357
    %382 = vmatprep.subr.bf16.mxu0 0
    %383 = vmatpush1.bf16.msra.mxu0 %v358
    %384 = vmatprep.subr.bf16.mxu0 0
    %385 = vmatpush1.bf16.msra.mxu0 0
    %386 = vmatprep.subr.bf16.mxu0 0
    %387 = vmatpush1.bf16.msra.mxu0 0
    %388 = vmatprep.subr.bf16.mxu0 0
    %389 = vmatpush1.bf16.msra.mxu0 0
    %390 = vmatprep.subr.bf16.mxu0 0
    %391 = vmatpush1.bf16.msra.mxu0 0
    %392 = vmatprep.subr.bf16.mxu0 0
    %393 = vmatpush1.bf16.msra.mxu0 0
    %394 = vmatprep.subr.bf16.mxu0 0
    %395 = vmatpush1.bf16.msra.mxu0 0
    %396 = vmatprep.subr.bf16.mxu0 0
    %397 = vmatpush1.bf16.msra.mxu0 0
    %398 = vmatprep.subr.bf16.mxu0 0
    %399 = vmatpush1.bf16.msra.mxu0 0
    %400 = vmatprep.subr.bf16.mxu0 0
    %401 = vmatpush1.bf16.msra.mxu0 0
    %402 = vmatprep.subr.bf16.mxu0 0
    %403 = vmatpush1.bf16.msra.mxu0 0
    %404 = vmatprep.subr.bf16.mxu0 0
    %405 = vmatpush1.bf16.msra.mxu0 0
    %406 = vmatprep.subr.bf16.mxu0 0
    %407 = vmatpush1.bf16.msra.mxu0 0
    %408 = vmatprep.mubr.bf16.mxu0 0
    %409 = vmatmul.mubr.bf16.gmra.mrb[0].mxu0 %v365
    %v410 = vpop.f32.mrb[0].mxu0
    %v411 = vadd.f32 %v338, %v410
    %v412 = vpop.f32.mrb[0].mxu0
    %v413 = vpop.f32.mrb[0].mxu0
    %v414 = vadd.f32 %v338, %v413
    %v415 = vpop.f32.mrb[0].mxu0
    %416 = vmatprep.mubr.bf16.mxu0 0
    %417 = vmatmul.mubr.bf16.gmra.mrb[0].mxu0 %v368
    %v418 = vpop.f32.mrb[0].mxu0
    %v419 = vadd.f32 %v338, %v418
    %v420 = vpop.f32.mrb[0].mxu0
    %v421 = vpop.f32.mrb[0].mxu0
    %v422 = vadd.f32 %v338, %v421
    %v423 = vpop.f32.mrb[0].mxu0
    %424 = vmatprep.mubr.bf16.mxu0 0
    %425 = vmatmul.mubr.bf16.gmra.mrb[0].mxu0 %v371
    %v426 = vpop.f32.mrb[0].mxu0
    %v427 = vadd.f32 %v338, %v426
    %v428 = vpop.f32.mrb[0].mxu0
    %v429 = vpop.f32.mrb[0].mxu0
    %v430 = vadd.f32 %v338, %v429
    %v431 = vpop.f32.mrb[0].mxu0
    %432 = vmatprep.mubr.bf16.mxu0 0
    %433 = vmatmul.mubr.bf16.gmra.mrb[0].mxu0 %v374
    %v434 = vpop.f32.mrb[0].mxu0
    %v435 = vadd.f32 %v338, %v434
    %v436 = vpop.f32.mrb[0].mxu0
    %v437 = vpop.f32.mrb[0].mxu0
    %v438 = vadd.f32 %v338, %v437
    %v439 = vpop.f32.mrb[0].mxu0
    %440 = vdwg.mxu0
    %vm441 = vcmp.ge.f32.partialorder %v411, 0.0
    %vm442 = vcmp.ge.f32.partialorder %v414, 0.0
    %vm443 = vcmp.ge.f32.partialorder %v419, 0.0
    %vm444 = vcmp.ge.f32.partialorder %v422, 0.0
    %vm445 = vcmp.ge.f32.partialorder %v427, 0.0
    %vm446 = vcmp.ge.f32.partialorder %v430, 0.0
    %vm447 = vcmp.ge.f32.partialorder %v435, 0.0
    %vm448 = vcmp.ge.f32.partialorder %v438, 0.0
    %v449 = vmul.f32 %v411, 0.01
    %v450 = vmul.f32 %v414, 0.01
    %v451 = vmul.f32 %v419, 0.01
    %v452 = vmul.f32 %v422, 0.01
    %v453 = vmul.f32 %v427, 0.01
    %v454 = vmul.f32 %v430, 0.01
    %v455 = vmul.f32 %v435, 0.01
    %v456 = vmul.f32 %v438, 0.01
    %v457 = vsel %vm441, %v411, %v449
    %v458 = vsel %vm442, %v414, %v450
    %v459 = vsel %vm443, %v419, %v451
    %v460 = vsel %vm444, %v422, %v452
    %v461 = vsel %vm445, %v427, %v453
    %v462 = vsel %vm446, %v430, %v454
    %v463 = vsel %vm447, %v435, %v455
    %v464 = vsel %vm448, %v438, %v456
    %v465 = vpack.c.bf16 %v458, %v457
    %v466 = vpack.c.bf16 %v460, %v459
    %v467 = vpack.c.bf16 %v462, %v461
    %v468 = vpack.c.bf16 %v464, %v463
    %v469 = vld [vmem:[#allocation7] sm:$0xff]
    %v470 = vld [vmem:[#allocation7 + $0x8] sm:$0xff]
    %v471 = vld [vmem:[#allocation7 + $0x10] sm:$0xff]
    %v472 = vld [vmem:[#allocation7 + $0x18] sm:$0xff]
    %v473 = vld [vmem:[#allocation7 + $0x20] sm:$0xff]
    %v474 = vld [vmem:[#allocation7 + $0x28] sm:$0xff]
    %v475 = vld [vmem:[#allocation7 + $0x30] sm:$0xff]
    %v476 = vld [vmem:[#allocation7 + $0x38] sm:$0xff]
    %v477 = vld [vmem:[#allocation7 + $0x40] sm:$0xff]
    %v478 = vld [vmem:[#allocation7 + $0x48] sm:$0xff]
    %v479 = vld [vmem:[#allocation7 + $0x50] sm:$0xff]
    %v480 = vld [vmem:[#allocation7 + $0x58] sm:$0xff]
    %v481 = vld [vmem:[#allocation7 + $0x60] sm:$0xff]
    %v482 = vld [vmem:[#allocation7 + $0x68] sm:$0xff]
    %v483 = vld [vmem:[#allocation7 + $0x70] sm:$0xff]
    %v484 = vld [vmem:[#allocation7 + $0x78] sm:$0xff]
    %v485 = vld [vmem:[#allocation7 + $0x80] sm:$0xff]
    %v486 = vld [vmem:[#allocation7 + $0x88] sm:$0xff]
    %v487 = vld [vmem:[#allocation7 + $0x90] sm:$0xff]
    %v488 = vld [vmem:[#allocation7 + $0x98] sm:$0xff]
    %v489 = vld [vmem:[#allocation7 + $0xa0] sm:$0xff]
    %v490 = vld [vmem:[#allocation7 + $0xa8] sm:$0xff]
    %v491 = vld [vmem:[#allocation7 + $0xb0] sm:$0xff]
    %v492 = vld [vmem:[#allocation7 + $0xb8] sm:$0xff]
    %v493 = vld [vmem:[#allocation7 + $0xc0] sm:$0xff]
    %v494 = vld [vmem:[#allocation7 + $0xc8] sm:$0xff]
    %v495 = vld [vmem:[#allocation7 + $0xd0] sm:$0xff]
    %v496 = vld [vmem:[#allocation7 + $0xd8] sm:$0xff]
    %v497 = vld [vmem:[#allocation7 + $0xe0] sm:$0xff]
    %v498 = vld [vmem:[#allocation7 + $0xe8] sm:$0xff]
    %v499 = vld [vmem:[#allocation7 + $0xf0] sm:$0xff]
    %v500 = vld [vmem:[#allocation7 + $0xf8] sm:$0xff]
    %s501 = scalar_lea.vmem [#allocation13], 2
    %v502 = vld [vmem:[%s501] ss:$8 sm:$0xf]
    %v504 = vlaneseq
    %v505 = vshrl.u32 %v504, 7
    %v506 = vsub.s32 0, %v505
    %v507 = vrot.slane %v502, %v506
    %v508 = vlaneseq
    %v509 = vshrl.u32 %v508, 7
    %v510 = vsub.s32 1, %v509
    %v511 = vrot.slane %v502, %v510
    %v512 = vlaneseq
    %v513 = vshrl.u32 %v512, 7
    %v514 = vsub.s32 2, %v513
    %v515 = vrot.slane %v502, %v514
    %v516 = vlaneseq
    %v517 = vshrl.u32 %v516, 7
    %v518 = vsub.s32 3, %v517
    %v519 = vrot.slane %v502, %v518
    %v556 = vunpack.c.l.b16 %v469
    %v557 = vunpack.c.h.b16 %v469
    %v558 = vunpack.c.l.b16 %v470
    %v559 = vunpack.c.h.b16 %v470
    %v560 = vunpack.c.l.b16 %v471
    %v561 = vunpack.c.h.b16 %v471
    %v562 = vunpack.c.l.b16 %v472
    %v563 = vunpack.c.h.b16 %v472
    %v564 = vunpack.c.l.b16 %v473
    %v565 = vunpack.c.h.b16 %v473
    %v566 = vunpack.c.l.b16 %v474
    %v567 = vunpack.c.h.b16 %v474
    %v568 = vunpack.c.l.b16 %v475
    %v569 = vunpack.c.h.b16 %v475
    %v570 = vunpack.c.l.b16 %v476
    %v571 = vunpack.c.h.b16 %v476
    %v572 = vunpack.c.l.b16 %v477
    %v573 = vunpack.c.h.b16 %v477
    %v574 = vunpack.c.l.b16 %v478
    %v575 = vunpack.c.h.b16 %v478
    %v576 = vunpack.c.l.b16 %v479
    %v577 = vunpack.c.h.b16 %v479
    %v578 = vunpack.c.l.b16 %v480
    %v579 = vunpack.c.h.b16 %v480
    %v580 = vunpack.c.l.b16 %v481
    %v581 = vunpack.c.h.b16 %v481
    %v582 = vunpack.c.l.b16 %v482
    %v583 = vunpack.c.h.b16 %v482
    %v584 = vunpack.c.l.b16 %v483
    %v585 = vunpack.c.h.b16 %v483
    %v586 = vunpack.c.l.b16 %v484
    %v587 = vunpack.c.h.b16 %v484
    %v588 = vunpack.c.l.b16 %v485
    %v589 = vunpack.c.h.b16 %v485
    %v590 = vunpack.c.l.b16 %v486
    %v591 = vunpack.c.h.b16 %v486
    %v592 = vunpack.c.l.b16 %v487
    %v593 = vunpack.c.h.b16 %v487
    %v594 = vunpack.c.l.b16 %v488
    %v595 = vunpack.c.h.b16 %v488
    %v596 = vunpack.c.l.b16 %v489
    %v597 = vunpack.c.h.b16 %v489
    %v598 = vunpack.c.l.b16 %v490
    %v599 = vunpack.c.h.b16 %v490
    %v600 = vunpack.c.l.b16 %v491
    %v601 = vunpack.c.h.b16 %v491
    %v602 = vunpack.c.l.b16 %v492
    %v603 = vunpack.c.h.b16 %v492
    %v604 = vunpack.c.l.b16 %v493
    %v605 = vunpack.c.h.b16 %v493
    %v606 = vunpack.c.l.b16 %v494
    %v607 = vunpack.c.h.b16 %v494
    %v608 = vunpack.c.l.b16 %v495
    %v609 = vunpack.c.h.b16 %v495
    %v610 = vunpack.c.l.b16 %v496
    %v611 = vunpack.c.h.b16 %v496
    %v612 = vunpack.c.l.b16 %v497
    %v613 = vunpack.c.h.b16 %v497
    %v614 = vunpack.c.l.b16 %v498
    %v615 = vunpack.c.h.b16 %v498
    %v616 = vunpack.c.l.b16 %v499
    %v617 = vunpack.c.h.b16 %v499
    %v618 = vunpack.c.l.b16 %v500
    %v619 = vunpack.c.h.b16 %v500
    %v620 = vpack.c.b16 %v560, %v556
    %v621 = vpack.c.b16 %v561, %v557
    %v622 = vpack.c.b16 %v562, %v558
    %v623 = vpack.c.b16 %v563, %v559
    %v624 = vpack.c.b16 %v568, %v564
    %v625 = vpack.c.b16 %v569, %v565
    %v626 = vpack.c.b16 %v570, %v566
    %v627 = vpack.c.b16 %v571, %v567
    %v628 = vpack.c.b16 %v576, %v572
    %v629 = vpack.c.b16 %v577, %v573
    %v630 = vpack.c.b16 %v578, %v574
    %v631 = vpack.c.b16 %v579, %v575
    %v632 = vpack.c.b16 %v584, %v580
    %v633 = vpack.c.b16 %v585, %v581
    %v634 = vpack.c.b16 %v586, %v582
    %v635 = vpack.c.b16 %v587, %v583
    %v636 = vpack.c.b16 %v592, %v588
    %v637 = vpack.c.b16 %v593, %v589
    %v638 = vpack.c.b16 %v594, %v590
    %v639 = vpack.c.b16 %v595, %v591
    %v640 = vpack.c.b16 %v600, %v596
    %v641 = vpack.c.b16 %v601, %v597
    %v642 = vpack.c.b16 %v602, %v598
    %v643 = vpack.c.b16 %v603, %v599
    %v644 = vpack.c.b16 %v608, %v604
    %v645 = vpack.c.b16 %v609, %v605
    %v646 = vpack.c.b16 %v610, %v606
    %v647 = vpack.c.b16 %v611, %v607
    %v648 = vpack.c.b16 %v616, %v612
    %v649 = vpack.c.b16 %v617, %v613
    %v650 = vpack.c.b16 %v618, %v614
    %v651 = vpack.c.b16 %v619, %v615
    %684 = vmatprep.subr.bf16.mxu0 %v621
    %685 = vmatpush1.bf16.msra.mxu0 %v620
    %686 = vmatprep.subr.bf16.mxu0 %v625
    %687 = vmatpush1.bf16.msra.mxu0 %v624
    %688 = vmatprep.subr.bf16.mxu0 %v629
    %689 = vmatpush1.bf16.msra.mxu0 %v628
    %690 = vmatprep.subr.bf16.mxu0 %v633
    %691 = vmatpush1.bf16.msra.mxu0 %v632
    %692 = vmatprep.subr.bf16.mxu0 %v637
    %693 = vmatpush1.bf16.msra.mxu0 %v636
    %694 = vmatprep.subr.bf16.mxu0 %v641
    %695 = vmatpush1.bf16.msra.mxu0 %v640
    %696 = vmatprep.subr.bf16.mxu0 %v645
    %697 = vmatpush1.bf16.msra.mxu0 %v644
    %698 = vmatprep.subr.bf16.mxu0 %v649
    %699 = vmatpush1.bf16.msra.mxu0 %v648
    %700 = vmatprep.subr.bf16.mxu0 0
    %701 = vmatpush1.bf16.msra.mxu0 0
    %702 = vmatprep.subr.bf16.mxu0 0
    %703 = vmatpush1.bf16.msra.mxu0 0
    %704 = vmatprep.subr.bf16.mxu0 0
    %705 = vmatpush1.bf16.msra.mxu0 0
    %706 = vmatprep.subr.bf16.mxu0 0
    %707 = vmatpush1.bf16.msra.mxu0 0
    %708 = vmatprep.subr.bf16.mxu0 0
    %709 = vmatpush1.bf16.msra.mxu0 0
    %710 = vmatprep.subr.bf16.mxu0 0
    %711 = vmatpush1.bf16.msra.mxu0 0
    %712 = vmatprep.subr.bf16.mxu0 0
    %713 = vmatpush1.bf16.msra.mxu0 0
    %714 = vmatprep.subr.bf16.mxu0 0
    %715 = vmatpush1.bf16.msra.mxu0 0
    %716 = vmatprep.mubr.bf16.mxu0 0
    %717 = vmatmul.mubr.bf16.gmra.mrb[0].mxu0 %v465
    %v718 = vpop.f32.mrb[0].mxu0
    %v719 = vadd.f32 %v507, %v718
    %v720 = vpop.f32.mrb[0].mxu0
    %v721 = vadd.f32 %v511, %v720
    %v722 = vpop.f32.mrb[0].mxu0
    %v723 = vadd.f32 %v507, %v722
    %v724 = vpop.f32.mrb[0].mxu0
    %v725 = vadd.f32 %v511, %v724
    %726 = vmatprep.mubr.bf16.mxu0 0
    %727 = vmatmul.mubr.bf16.gmra.mrb[0].mxu0 %v466
    %v728 = vpop.f32.mrb[0].mxu0
    %v729 = vadd.f32 %v507, %v728
    %v730 = vpop.f32.mrb[0].mxu0
    %v731 = vadd.f32 %v511, %v730
    %v732 = vpop.f32.mrb[0].mxu0
    %v733 = vadd.f32 %v507, %v732
    %v734 = vpop.f32.mrb[0].mxu0
    %v735 = vadd.f32 %v511, %v734
    %736 = vmatprep.mubr.bf16.mxu0 0
    %737 = vmatmul.mubr.bf16.gmra.mrb[0].mxu0 %v467
    %v738 = vpop.f32.mrb[0].mxu0
    %v739 = vadd.f32 %v507, %v738
    %v740 = vpop.f32.mrb[0].mxu0
    %v741 = vadd.f32 %v511, %v740
    %v742 = vpop.f32.mrb[0].mxu0
    %v743 = vadd.f32 %v507, %v742
    %v744 = vpop.f32.mrb[0].mxu0
    %v745 = vadd.f32 %v511, %v744
    %746 = vmatprep.mubr.bf16.mxu0 0
    %747 = vmatmul.mubr.bf16.gmra.mrb[0].mxu0 %v468
    %v748 = vpop.f32.mrb[0].mxu0
    %v749 = vadd.f32 %v507, %v748
    %v750 = vpop.f32.mrb[0].mxu0
    %v751 = vadd.f32 %v511, %v750
    %v752 = vpop.f32.mrb[0].mxu0
    %v753 = vadd.f32 %v507, %v752
    %v754 = vpop.f32.mrb[0].mxu0
    %v755 = vadd.f32 %v511, %v754
    %756 = vdwg.mxu0
    %757 = vmatprep.subr.bf16.mxu0 %v623
    %758 = vmatpush1.bf16.msra.mxu0 %v622
    %759 = vmatprep.subr.bf16.mxu0 %v627
    %760 = vmatpush1.bf16.msra.mxu0 %v626
    %761 = vmatprep.subr.bf16.mxu0 %v631
    %762 = vmatpush1.bf16.msra.mxu0 %v630
    %763 = vmatprep.subr.bf16.mxu0 %v635
    %764 = vmatpush1.bf16.msra.mxu0 %v634
    %765 = vmatprep.subr.bf16.mxu0 %v639
    %766 = vmatpush1.bf16.msra.mxu0 %v638
    %767 = vmatprep.subr.bf16.mxu0 %v643
    %768 = vmatpush1.bf16.msra.mxu0 %v642
    %769 = vmatprep.subr.bf16.mxu0 %v647
    %770 = vmatpush1.bf16.msra.mxu0 %v646
    %771 = vmatprep.subr.bf16.mxu0 %v651
    %772 = vmatpush1.bf16.msra.mxu0 %v650
    %773 = vmatprep.subr.bf16.mxu0 0
    %774 = vmatpush1.bf16.msra.mxu0 0
    %775 = vmatprep.subr.bf16.mxu0 0
    %776 = vmatpush1.bf16.msra.mxu0 0
    %777 = vmatprep.subr.bf16.mxu0 0
    %778 = vmatpush1.bf16.msra.mxu0 0
    %779 = vmatprep.subr.bf16.mxu0 0
    %780 = vmatpush1.bf16.msra.mxu0 0
    %781 = vmatprep.subr.bf16.mxu0 0
    %782 = vmatpush1.bf16.msra.mxu0 0
    %783 = vmatprep.subr.bf16.mxu0 0
    %784 = vmatpush1.bf16.msra.mxu0 0
    %785 = vmatprep.subr.bf16.mxu0 0
    %786 = vmatpush1.bf16.msra.mxu0 0
    %787 = vmatprep.subr.bf16.mxu0 0
    %788 = vmatpush1.bf16.msra.mxu0 0
    %789 = vmatprep.mubr.bf16.mxu0 0
    %790 = vmatmul.mubr.bf16.gmra.mrb[0].mxu0 %v465
    %v791 = vpop.f32.mrb[0].mxu0
    %v792 = vadd.f32 %v515, %v791
    %v793 = vpop.f32.mrb[0].mxu0
    %v794 = vadd.f32 %v519, %v793
    %v795 = vpop.f32.mrb[0].mxu0
    %v796 = vadd.f32 %v515, %v795
    %v797 = vpop.f32.mrb[0].mxu0
    %v798 = vadd.f32 %v519, %v797
    %799 = vmatprep.mubr.bf16.mxu0 0
    %800 = vmatmul.mubr.bf16.gmra.mrb[0].mxu0 %v466
    %v801 = vpop.f32.mrb[0].mxu0
    %v802 = vadd.f32 %v515, %v801
    %v803 = vpop.f32.mrb[0].mxu0
    %v804 = vadd.f32 %v519, %v803
    %v805 = vpop.f32.mrb[0].mxu0
    %v806 = vadd.f32 %v515, %v805
    %v807 = vpop.f32.mrb[0].mxu0
    %v808 = vadd.f32 %v519, %v807
    %809 = vmatprep.mubr.bf16.mxu0 0
    %810 = vmatmul.mubr.bf16.gmra.mrb[0].mxu0 %v467
    %v811 = vpop.f32.mrb[0].mxu0
    %v812 = vadd.f32 %v515, %v811
    %v813 = vpop.f32.mrb[0].mxu0
    %v814 = vadd.f32 %v519, %v813
    %v815 = vpop.f32.mrb[0].mxu0
    %v816 = vadd.f32 %v515, %v815
    %v817 = vpop.f32.mrb[0].mxu0
    %v818 = vadd.f32 %v519, %v817
    %819 = vmatprep.mubr.bf16.mxu0 0
    %820 = vmatmul.mubr.bf16.gmra.mrb[0].mxu0 %v468
    %v821 = vpop.f32.mrb[0].mxu0
    %v822 = vadd.f32 %v515, %v821
    %v823 = vpop.f32.mrb[0].mxu0
    %v824 = vadd.f32 %v519, %v823
    %v825 = vpop.f32.mrb[0].mxu0
    %v826 = vadd.f32 %v515, %v825
    %v827 = vpop.f32.mrb[0].mxu0
    %v828 = vadd.f32 %v519, %v827
    %829 = vdwg.mxu0
    %vm830 = vcmp.ge.f32.partialorder %v719, 0.0
    %vm831 = vcmp.ge.f32.partialorder %v721, 0.0
    %vm832 = vcmp.ge.f32.partialorder %v792, 0.0
    %vm833 = vcmp.ge.f32.partialorder %v794, 0.0
    %vm834 = vcmp.ge.f32.partialorder %v723, 0.0
    %vm835 = vcmp.ge.f32.partialorder %v725, 0.0
    %vm836 = vcmp.ge.f32.partialorder %v796, 0.0
    %vm837 = vcmp.ge.f32.partialorder %v798, 0.0
    %vm838 = vcmp.ge.f32.partialorder %v729, 0.0
    %vm839 = vcmp.ge.f32.partialorder %v731, 0.0
    %vm840 = vcmp.ge.f32.partialorder %v802, 0.0
    %vm841 = vcmp.ge.f32.partialorder %v804, 0.0
    %vm842 = vcmp.ge.f32.partialorder %v733, 0.0
    %vm843 = vcmp.ge.f32.partialorder %v735, 0.0
    %vm844 = vcmp.ge.f32.partialorder %v806, 0.0
    %vm845 = vcmp.ge.f32.partialorder %v808, 0.0
    %vm846 = vcmp.ge.f32.partialorder %v739, 0.0
    %vm847 = vcmp.ge.f32.partialorder %v741, 0.0
    %vm848 = vcmp.ge.f32.partialorder %v812, 0.0
    %vm849 = vcmp.ge.f32.partialorder %v814, 0.0
    %vm850 = vcmp.ge.f32.partialorder %v743, 0.0
    %vm851 = vcmp.ge.f32.partialorder %v745, 0.0
    %vm852 = vcmp.ge.f32.partialorder %v816, 0.0
    %vm853 = vcmp.ge.f32.partialorder %v818, 0.0
    %vm854 = vcmp.ge.f32.partialorder %v749, 0.0
    %vm855 = vcmp.ge.f32.partialorder %v751, 0.0
    %vm856 = vcmp.ge.f32.partialorder %v822, 0.0
    %vm857 = vcmp.ge.f32.partialorder %v824, 0.0
    %vm858 = vcmp.ge.f32.partialorder %v753, 0.0
    %vm859 = vcmp.ge.f32.partialorder %v755, 0.0
    %vm860 = vcmp.ge.f32.partialorder %v826, 0.0
    %vm861 = vcmp.ge.f32.partialorder %v828, 0.0
    %v862 = vmul.f32 %v719, 0.01
    %v863 = vmul.f32 %v721, 0.01
    %v864 = vmul.f32 %v792, 0.01
    %v865 = vmul.f32 %v794, 0.01
    %v866 = vmul.f32 %v723, 0.01
    %v867 = vmul.f32 %v725, 0.01
    %v868 = vmul.f32 %v796, 0.01
    %v869 = vmul.f32 %v798, 0.01
    %v870 = vmul.f32 %v729, 0.01
    %v871 = vmul.f32 %v731, 0.01
    %v872 = vmul.f32 %v802, 0.01
    %v873 = vmul.f32 %v804, 0.01
    %v874 = vmul.f32 %v733, 0.01
    %v875 = vmul.f32 %v735, 0.01
    %v876 = vmul.f32 %v806, 0.01
    %v877 = vmul.f32 %v808, 0.01
    %v878 = vmul.f32 %v739, 0.01
    %v879 = vmul.f32 %v741, 0.01
    %v880 = vmul.f32 %v812, 0.01
    %v881 = vmul.f32 %v814, 0.01
    %v882 = vmul.f32 %v743, 0.01
    %v883 = vmul.f32 %v745, 0.01
    %v884 = vmul.f32 %v816, 0.01
    %v885 = vmul.f32 %v818, 0.01
    %v886 = vmul.f32 %v749, 0.01
    %v887 = vmul.f32 %v751, 0.01
    %v888 = vmul.f32 %v822, 0.01
    %v889 = vmul.f32 %v824, 0.01
    %v890 = vmul.f32 %v753, 0.01
    %v891 = vmul.f32 %v755, 0.01
    %v892 = vmul.f32 %v826, 0.01
    %v893 = vmul.f32 %v828, 0.01
    %v894 = vsel %vm830, %v719, %v862
    %v895 = vsel %vm831, %v721, %v863
    %v896 = vsel %vm832, %v792, %v864
    %v897 = vsel %vm833, %v794, %v865
    %v898 = vsel %vm834, %v723, %v866
    %v899 = vsel %vm835, %v725, %v867
    %v900 = vsel %vm836, %v796, %v868
    %v901 = vsel %vm837, %v798, %v869
    %v902 = vsel %vm838, %v729, %v870
    %v903 = vsel %vm839, %v731, %v871
    %v904 = vsel %vm840, %v802, %v872
    %v905 = vsel %vm841, %v804, %v873
    %v906 = vsel %vm842, %v733, %v874
    %v907 = vsel %vm843, %v735, %v875
    %v908 = vsel %vm844, %v806, %v876
    %v909 = vsel %vm845, %v808, %v877
    %v910 = vsel %vm846, %v739, %v878
    %v911 = vsel %vm847, %v741, %v879
    %v912 = vsel %vm848, %v812, %v880
    %v913 = vsel %vm849, %v814, %v881
    %v914 = vsel %vm850, %v743, %v882
    %v915 = vsel %vm851, %v745, %v883
    %v916 = vsel %vm852, %v816, %v884
    %v917 = vsel %vm853, %v818, %v885
    %v918 = vsel %vm854, %v749, %v886
    %v919 = vsel %vm855, %v751, %v887
    %v920 = vsel %vm856, %v822, %v888
    %v921 = vsel %vm857, %v824, %v889
    %v922 = vsel %vm858, %v753, %v890
    %v923 = vsel %vm859, %v755, %v891
    %v924 = vsel %vm860, %v826, %v892
    %v925 = vsel %vm861, %v828, %v893
    %v926 = vpack.c.bf16 %v898, %v894
    %v927 = vpack.c.bf16 %v899, %v895
    %v928 = vpack.c.bf16 %v900, %v896
    %v929 = vpack.c.bf16 %v901, %v897
    %v930 = vpack.c.bf16 %v906, %v902
    %v931 = vpack.c.bf16 %v907, %v903
    %v932 = vpack.c.bf16 %v908, %v904
    %v933 = vpack.c.bf16 %v909, %v905
    %v934 = vpack.c.bf16 %v914, %v910
    %v935 = vpack.c.bf16 %v915, %v911
    %v936 = vpack.c.bf16 %v916, %v912
    %v937 = vpack.c.bf16 %v917, %v913
    %v938 = vpack.c.bf16 %v922, %v918
    %v939 = vpack.c.bf16 %v923, %v919
    %v940 = vpack.c.bf16 %v924, %v920
    %v941 = vpack.c.bf16 %v925, %v921
    %v942 = vld [vmem:[#allocation8] sm:$0xff]
    %v943 = vld [vmem:[#allocation8 + $0x8] sm:$0xff]
    %v944 = vld [vmem:[#allocation8 + $0x10] sm:$0xff]
    %v945 = vld [vmem:[#allocation8 + $0x18] sm:$0xff]
    %v946 = vld [vmem:[#allocation8 + $0x20] sm:$0xff]
    %v947 = vld [vmem:[#allocation8 + $0x28] sm:$0xff]
    %v948 = vld [vmem:[#allocation8 + $0x30] sm:$0xff]
    %v949 = vld [vmem:[#allocation8 + $0x38] sm:$0xff]
    %v950 = vld [vmem:[#allocation8 + $0x40] sm:$0xff]
    %v951 = vld [vmem:[#allocation8 + $0x48] sm:$0xff]
    %v952 = vld [vmem:[#allocation8 + $0x50] sm:$0xff]
    %v953 = vld [vmem:[#allocation8 + $0x58] sm:$0xff]
    %v954 = vld [vmem:[#allocation8 + $0x60] sm:$0xff]
    %v955 = vld [vmem:[#allocation8 + $0x68] sm:$0xff]
    %v956 = vld [vmem:[#allocation8 + $0x70] sm:$0xff]
    %v957 = vld [vmem:[#allocation8 + $0x78] sm:$0xff]
    %v958 = vld [vmem:[#allocation8 + $0x80] sm:$0xff]
    %v959 = vld [vmem:[#allocation8 + $0x88] sm:$0xff]
    %v960 = vld [vmem:[#allocation8 + $0x90] sm:$0xff]
    %v961 = vld [vmem:[#allocation8 + $0x98] sm:$0xff]
    %v962 = vld [vmem:[#allocation8 + $0xa0] sm:$0xff]
    %v963 = vld [vmem:[#allocation8 + $0xa8] sm:$0xff]
    %v964 = vld [vmem:[#allocation8 + $0xb0] sm:$0xff]
    %v965 = vld [vmem:[#allocation8 + $0xb8] sm:$0xff]
    %v966 = vld [vmem:[#allocation8 + $0xc0] sm:$0xff]
    %v967 = vld [vmem:[#allocation8 + $0xc8] sm:$0xff]
    %v968 = vld [vmem:[#allocation8 + $0xd0] sm:$0xff]
    %v969 = vld [vmem:[#allocation8 + $0xd8] sm:$0xff]
    %v970 = vld [vmem:[#allocation8 + $0xe0] sm:$0xff]
    %v971 = vld [vmem:[#allocation8 + $0xe8] sm:$0xff]
    %v972 = vld [vmem:[#allocation8 + $0xf0] sm:$0xff]
    %v973 = vld [vmem:[#allocation8 + $0xf8] sm:$0xff]
    %v974 = vld [vmem:[#allocation8 + $0x100] sm:$0xff]
    %v975 = vld [vmem:[#allocation8 + $0x108] sm:$0xff]
    %v976 = vld [vmem:[#allocation8 + $0x110] sm:$0xff]
    %v977 = vld [vmem:[#allocation8 + $0x118] sm:$0xff]
    %v978 = vld [vmem:[#allocation8 + $0x120] sm:$0xff]
    %v979 = vld [vmem:[#allocation8 + $0x128] sm:$0xff]
    %v980 = vld [vmem:[#allocation8 + $0x130] sm:$0xff]
    %v981 = vld [vmem:[#allocation8 + $0x138] sm:$0xff]
    %v982 = vld [vmem:[#allocation8 + $0x140] sm:$0xff]
    %v983 = vld [vmem:[#allocation8 + $0x148] sm:$0xff]
    %v984 = vld [vmem:[#allocation8 + $0x150] sm:$0xff]
    %v985 = vld [vmem:[#allocation8 + $0x158] sm:$0xff]
    %v986 = vld [vmem:[#allocation8 + $0x160] sm:$0xff]
    %v987 = vld [vmem:[#allocation8 + $0x168] sm:$0xff]
    %v988 = vld [vmem:[#allocation8 + $0x170] sm:$0xff]
    %v989 = vld [vmem:[#allocation8 + $0x178] sm:$0xff]
    %v990 = vld [vmem:[#allocation8 + $0x180] sm:$0xff]
    %v991 = vld [vmem:[#allocation8 + $0x188] sm:$0xff]
    %v992 = vld [vmem:[#allocation8 + $0x190] sm:$0xff]
    %v993 = vld [vmem:[#allocation8 + $0x198] sm:$0xff]
    %v994 = vld [vmem:[#allocation8 + $0x1a0] sm:$0xff]
    %v995 = vld [vmem:[#allocation8 + $0x1a8] sm:$0xff]
    %v996 = vld [vmem:[#allocation8 + $0x1b0] sm:$0xff]
    %v997 = vld [vmem:[#allocation8 + $0x1b8] sm:$0xff]
    %v998 = vld [vmem:[#allocation8 + $0x1c0] sm:$0xff]
    %v999 = vld [vmem:[#allocation8 + $0x1c8] sm:$0xff]
    %v1000 = vld [vmem:[#allocation8 + $0x1d0] sm:$0xff]
    %v1001 = vld [vmem:[#allocation8 + $0x1d8] sm:$0xff]
    %v1002 = vld [vmem:[#allocation8 + $0x1e0] sm:$0xff]
    %v1003 = vld [vmem:[#allocation8 + $0x1e8] sm:$0xff]
    %v1004 = vld [vmem:[#allocation8 + $0x1f0] sm:$0xff]
    %v1005 = vld [vmem:[#allocation8 + $0x1f8] sm:$0xff]
    %v1006 = vld [vmem:[#allocation8 + $0x200] sm:$0xff]
    %v1007 = vld [vmem:[#allocation8 + $0x208] sm:$0xff]
    %v1008 = vld [vmem:[#allocation8 + $0x210] sm:$0xff]
    %v1009 = vld [vmem:[#allocation8 + $0x218] sm:$0xff]
    %v1010 = vld [vmem:[#allocation8 + $0x220] sm:$0xff]
    %v1011 = vld [vmem:[#allocation8 + $0x228] sm:$0xff]
    %v1012 = vld [vmem:[#allocation8 + $0x230] sm:$0xff]
    %v1013 = vld [vmem:[#allocation8 + $0x238] sm:$0xff]
    %v1014 = vld [vmem:[#allocation8 + $0x240] sm:$0xff]
    %v1015 = vld [vmem:[#allocation8 + $0x248] sm:$0xff]
    %v1016 = vld [vmem:[#allocation8 + $0x250] sm:$0xff]
    %v1017 = vld [vmem:[#allocation8 + $0x258] sm:$0xff]
    %v1018 = vld [vmem:[#allocation8 + $0x260] sm:$0xff]
    %v1019 = vld [vmem:[#allocation8 + $0x268] sm:$0xff]
    %v1020 = vld [vmem:[#allocation8 + $0x270] sm:$0xff]
    %v1021 = vld [vmem:[#allocation8 + $0x278] sm:$0xff]
    %v1022 = vld [vmem:[#allocation8 + $0x280] sm:$0xff]
    %v1023 = vld [vmem:[#allocation8 + $0x288] sm:$0xff]
    %v1024 = vld [vmem:[#allocation8 + $0x290] sm:$0xff]
    %v1025 = vld [vmem:[#allocation8 + $0x298] sm:$0xff]
    %v1026 = vld [vmem:[#allocation8 + $0x2a0] sm:$0xff]
    %v1027 = vld [vmem:[#allocation8 + $0x2a8] sm:$0xff]
    %v1028 = vld [vmem:[#allocation8 + $0x2b0] sm:$0xff]
    %v1029 = vld [vmem:[#allocation8 + $0x2b8] sm:$0xff]
    %v1030 = vld [vmem:[#allocation8 + $0x2c0] sm:$0xff]
    %v1031 = vld [vmem:[#allocation8 + $0x2c8] sm:$0xff]
    %v1032 = vld [vmem:[#allocation8 + $0x2d0] sm:$0xff]
    %v1033 = vld [vmem:[#allocation8 + $0x2d8] sm:$0xff]
    %v1034 = vld [vmem:[#allocation8 + $0x2e0] sm:$0xff]
    %v1035 = vld [vmem:[#allocation8 + $0x2e8] sm:$0xff]
    %v1036 = vld [vmem:[#allocation8 + $0x2f0] sm:$0xff]
    %v1037 = vld [vmem:[#allocation8 + $0x2f8] sm:$0xff]
    %v1038 = vld [vmem:[#allocation8 + $0x300] sm:$0xff]
    %v1039 = vld [vmem:[#allocation8 + $0x308] sm:$0xff]
    %v1040 = vld [vmem:[#allocation8 + $0x310] sm:$0xff]
    %v1041 = vld [vmem:[#allocation8 + $0x318] sm:$0xff]
    %v1042 = vld [vmem:[#allocation8 + $0x320] sm:$0xff]
    %v1043 = vld [vmem:[#allocation8 + $0x328] sm:$0xff]
    %v1044 = vld [vmem:[#allocation8 + $0x330] sm:$0xff]
    %v1045 = vld [vmem:[#allocation8 + $0x338] sm:$0xff]
    %v1046 = vld [vmem:[#allocation8 + $0x340] sm:$0xff]
    %v1047 = vld [vmem:[#allocation8 + $0x348] sm:$0xff]
    %v1048 = vld [vmem:[#allocation8 + $0x350] sm:$0xff]
    %v1049 = vld [vmem:[#allocation8 + $0x358] sm:$0xff]
    %v1050 = vld [vmem:[#allocation8 + $0x360] sm:$0xff]
    %v1051 = vld [vmem:[#allocation8 + $0x368] sm:$0xff]
    %v1052 = vld [vmem:[#allocation8 + $0x370] sm:$0xff]
    %v1053 = vld [vmem:[#allocation8 + $0x378] sm:$0xff]
    %v1054 = vld [vmem:[#allocation8 + $0x380] sm:$0xff]
    %v1055 = vld [vmem:[#allocation8 + $0x388] sm:$0xff]
    %v1056 = vld [vmem:[#allocation8 + $0x390] sm:$0xff]
    %v1057 = vld [vmem:[#allocation8 + $0x398] sm:$0xff]
    %v1058 = vld [vmem:[#allocation8 + $0x3a0] sm:$0xff]
    %v1059 = vld [vmem:[#allocation8 + $0x3a8] sm:$0xff]
    %v1060 = vld [vmem:[#allocation8 + $0x3b0] sm:$0xff]
    %v1061 = vld [vmem:[#allocation8 + $0x3b8] sm:$0xff]
    %v1062 = vld [vmem:[#allocation8 + $0x3c0] sm:$0xff]
    %v1063 = vld [vmem:[#allocation8 + $0x3c8] sm:$0xff]
    %v1064 = vld [vmem:[#allocation8 + $0x3d0] sm:$0xff]
    %v1065 = vld [vmem:[#allocation8 + $0x3d8] sm:$0xff]
    %v1066 = vld [vmem:[#allocation8 + $0x3e0] sm:$0xff]
    %v1067 = vld [vmem:[#allocation8 + $0x3e8] sm:$0xff]
    %v1068 = vld [vmem:[#allocation8 + $0x3f0] sm:$0xff]
    %v1069 = vld [vmem:[#allocation8 + $0x3f8] sm:$0xff]
    %v1070 = vld [vmem:[#allocation8 + $0x400] sm:$0xff]
    %v1071 = vld [vmem:[#allocation8 + $0x408] sm:$0xff]
    %v1072 = vld [vmem:[#allocation8 + $0x410] sm:$0xff]
    %v1073 = vld [vmem:[#allocation8 + $0x418] sm:$0xff]
    %v1074 = vld [vmem:[#allocation8 + $0x420] sm:$0xff]
    %v1075 = vld [vmem:[#allocation8 + $0x428] sm:$0xff]
    %v1076 = vld [vmem:[#allocation8 + $0x430] sm:$0xff]
    %v1077 = vld [vmem:[#allocation8 + $0x438] sm:$0xff]
    %v1078 = vld [vmem:[#allocation8 + $0x440] sm:$0xff]
    %v1079 = vld [vmem:[#allocation8 + $0x448] sm:$0xff]
    %v1080 = vld [vmem:[#allocation8 + $0x450] sm:$0xff]
    %v1081 = vld [vmem:[#allocation8 + $0x458] sm:$0xff]
    %v1082 = vld [vmem:[#allocation8 + $0x460] sm:$0xff]
    %v1083 = vld [vmem:[#allocation8 + $0x468] sm:$0xff]
    %v1084 = vld [vmem:[#allocation8 + $0x470] sm:$0xff]
    %v1085 = vld [vmem:[#allocation8 + $0x478] sm:$0xff]
    %v1086 = vld [vmem:[#allocation8 + $0x480] sm:$0xff]
    %v1087 = vld [vmem:[#allocation8 + $0x488] sm:$0xff]
    %v1088 = vld [vmem:[#allocation8 + $0x490] sm:$0xff]
    %v1089 = vld [vmem:[#allocation8 + $0x498] sm:$0xff]
    %v1090 = vld [vmem:[#allocation8 + $0x4a0] sm:$0xff]
    %v1091 = vld [vmem:[#allocation8 + $0x4a8] sm:$0xff]
    %v1092 = vld [vmem:[#allocation8 + $0x4b0] sm:$0xff]
    %v1093 = vld [vmem:[#allocation8 + $0x4b8] sm:$0xff]
    %v1094 = vld [vmem:[#allocation8 + $0x4c0] sm:$0xff]
    %v1095 = vld [vmem:[#allocation8 + $0x4c8] sm:$0xff]
    %v1096 = vld [vmem:[#allocation8 + $0x4d0] sm:$0xff]
    %v1097 = vld [vmem:[#allocation8 + $0x4d8] sm:$0xff]
    %v1098 = vld [vmem:[#allocation8 + $0x4e0] sm:$0xff]
    %v1099 = vld [vmem:[#allocation8 + $0x4e8] sm:$0xff]
    %v1100 = vld [vmem:[#allocation8 + $0x4f0] sm:$0xff]
    %v1101 = vld [vmem:[#allocation8 + $0x4f8] sm:$0xff]
    %v1102 = vld [vmem:[#allocation8 + $0x500] sm:$0xff]
    %v1103 = vld [vmem:[#allocation8 + $0x508] sm:$0xff]
    %v1104 = vld [vmem:[#allocation8 + $0x510] sm:$0xff]
    %v1105 = vld [vmem:[#allocation8 + $0x518] sm:$0xff]
    %v1106 = vld [vmem:[#allocation8 + $0x520] sm:$0xff]
    %v1107 = vld [vmem:[#allocation8 + $0x528] sm:$0xff]
    %v1108 = vld [vmem:[#allocation8 + $0x530] sm:$0xff]
    %v1109 = vld [vmem:[#allocation8 + $0x538] sm:$0xff]
    %v1110 = vld [vmem:[#allocation8 + $0x540] sm:$0xff]
    %v1111 = vld [vmem:[#allocation8 + $0x548] sm:$0xff]
    %v1112 = vld [vmem:[#allocation8 + $0x550] sm:$0xff]
    %v1113 = vld [vmem:[#allocation8 + $0x558] sm:$0xff]
    %v1114 = vld [vmem:[#allocation8 + $0x560] sm:$0xff]
    %v1115 = vld [vmem:[#allocation8 + $0x568] sm:$0xff]
    %v1116 = vld [vmem:[#allocation8 + $0x570] sm:$0xff]
    %v1117 = vld [vmem:[#allocation8 + $0x578] sm:$0xff]
    %v1118 = vld [vmem:[#allocation8 + $0x580] sm:$0xff]
    %v1119 = vld [vmem:[#allocation8 + $0x588] sm:$0xff]
    %v1120 = vld [vmem:[#allocation8 + $0x590] sm:$0xff]
    %v1121 = vld [vmem:[#allocation8 + $0x598] sm:$0xff]
    %v1122 = vld [vmem:[#allocation8 + $0x5a0] sm:$0xff]
    %v1123 = vld [vmem:[#allocation8 + $0x5a8] sm:$0xff]
    %v1124 = vld [vmem:[#allocation8 + $0x5b0] sm:$0xff]
    %v1125 = vld [vmem:[#allocation8 + $0x5b8] sm:$0xff]
    %v1126 = vld [vmem:[#allocation8 + $0x5c0] sm:$0xff]
    %v1127 = vld [vmem:[#allocation8 + $0x5c8] sm:$0xff]
    %v1128 = vld [vmem:[#allocation8 + $0x5d0] sm:$0xff]
    %v1129 = vld [vmem:[#allocation8 + $0x5d8] sm:$0xff]
    %v1130 = vld [vmem:[#allocation8 + $0x5e0] sm:$0xff]
    %v1131 = vld [vmem:[#allocation8 + $0x5e8] sm:$0xff]
    %v1132 = vld [vmem:[#allocation8 + $0x5f0] sm:$0xff]
    %v1133 = vld [vmem:[#allocation8 + $0x5f8] sm:$0xff]
    %v1134 = vld [vmem:[#allocation8 + $0x600] sm:$0xff]
    %v1135 = vld [vmem:[#allocation8 + $0x608] sm:$0xff]
    %v1136 = vld [vmem:[#allocation8 + $0x610] sm:$0xff]
    %v1137 = vld [vmem:[#allocation8 + $0x618] sm:$0xff]
    %v1138 = vld [vmem:[#allocation8 + $0x620] sm:$0xff]
    %v1139 = vld [vmem:[#allocation8 + $0x628] sm:$0xff]
    %v1140 = vld [vmem:[#allocation8 + $0x630] sm:$0xff]
    %v1141 = vld [vmem:[#allocation8 + $0x638] sm:$0xff]
    %v1142 = vld [vmem:[#allocation8 + $0x640] sm:$0xff]
    %v1143 = vld [vmem:[#allocation8 + $0x648] sm:$0xff]
    %v1144 = vld [vmem:[#allocation8 + $0x650] sm:$0xff]
    %v1145 = vld [vmem:[#allocation8 + $0x658] sm:$0xff]
    %v1146 = vld [vmem:[#allocation8 + $0x660] sm:$0xff]
    %v1147 = vld [vmem:[#allocation8 + $0x668] sm:$0xff]
    %v1148 = vld [vmem:[#allocation8 + $0x670] sm:$0xff]
    %v1149 = vld [vmem:[#allocation8 + $0x678] sm:$0xff]
    %v1150 = vld [vmem:[#allocation8 + $0x680] sm:$0xff]
    %v1151 = vld [vmem:[#allocation8 + $0x688] sm:$0xff]
    %v1152 = vld [vmem:[#allocation8 + $0x690] sm:$0xff]
    %v1153 = vld [vmem:[#allocation8 + $0x698] sm:$0xff]
    %v1154 = vld [vmem:[#allocation8 + $0x6a0] sm:$0xff]
    %v1155 = vld [vmem:[#allocation8 + $0x6a8] sm:$0xff]
    %v1156 = vld [vmem:[#allocation8 + $0x6b0] sm:$0xff]
    %v1157 = vld [vmem:[#allocation8 + $0x6b8] sm:$0xff]
    %v1158 = vld [vmem:[#allocation8 + $0x6c0] sm:$0xff]
    %v1159 = vld [vmem:[#allocation8 + $0x6c8] sm:$0xff]
    %v1160 = vld [vmem:[#allocation8 + $0x6d0] sm:$0xff]
    %v1161 = vld [vmem:[#allocation8 + $0x6d8] sm:$0xff]
    %v1162 = vld [vmem:[#allocation8 + $0x6e0] sm:$0xff]
    %v1163 = vld [vmem:[#allocation8 + $0x6e8] sm:$0xff]
    %v1164 = vld [vmem:[#allocation8 + $0x6f0] sm:$0xff]
    %v1165 = vld [vmem:[#allocation8 + $0x6f8] sm:$0xff]
    %v1166 = vld [vmem:[#allocation8 + $0x700] sm:$0xff]
    %v1167 = vld [vmem:[#allocation8 + $0x708] sm:$0xff]
    %v1168 = vld [vmem:[#allocation8 + $0x710] sm:$0xff]
    %v1169 = vld [vmem:[#allocation8 + $0x718] sm:$0xff]
    %v1170 = vld [vmem:[#allocation8 + $0x720] sm:$0xff]
    %v1171 = vld [vmem:[#allocation8 + $0x728] sm:$0xff]
    %v1172 = vld [vmem:[#allocation8 + $0x730] sm:$0xff]
    %v1173 = vld [vmem:[#allocation8 + $0x738] sm:$0xff]
    %v1174 = vld [vmem:[#allocation8 + $0x740] sm:$0xff]
    %v1175 = vld [vmem:[#allocation8 + $0x748] sm:$0xff]
    %v1176 = vld [vmem:[#allocation8 + $0x750] sm:$0xff]
    %v1177 = vld [vmem:[#allocation8 + $0x758] sm:$0xff]
    %v1178 = vld [vmem:[#allocation8 + $0x760] sm:$0xff]
    %v1179 = vld [vmem:[#allocation8 + $0x768] sm:$0xff]
    %v1180 = vld [vmem:[#allocation8 + $0x770] sm:$0xff]
    %v1181 = vld [vmem:[#allocation8 + $0x778] sm:$0xff]
    %v1182 = vld [vmem:[#allocation8 + $0x780] sm:$0xff]
    %v1183 = vld [vmem:[#allocation8 + $0x788] sm:$0xff]
    %v1184 = vld [vmem:[#allocation8 + $0x790] sm:$0xff]
    %v1185 = vld [vmem:[#allocation8 + $0x798] sm:$0xff]
    %v1186 = vld [vmem:[#allocation8 + $0x7a0] sm:$0xff]
    %v1187 = vld [vmem:[#allocation8 + $0x7a8] sm:$0xff]
    %v1188 = vld [vmem:[#allocation8 + $0x7b0] sm:$0xff]
    %v1189 = vld [vmem:[#allocation8 + $0x7b8] sm:$0xff]
    %v1190 = vld [vmem:[#allocation8 + $0x7c0] sm:$0xff]
    %v1191 = vld [vmem:[#allocation8 + $0x7c8] sm:$0xff]
    %v1192 = vld [vmem:[#allocation8 + $0x7d0] sm:$0xff]
    %v1193 = vld [vmem:[#allocation8 + $0x7d8] sm:$0xff]
    %v1194 = vld [vmem:[#allocation8 + $0x7e0] sm:$0xff]
    %v1195 = vld [vmem:[#allocation8 + $0x7e8] sm:$0xff]
    %v1196 = vld [vmem:[#allocation8 + $0x7f0] sm:$0xff]
    %v1197 = vld [vmem:[#allocation8 + $0x7f8] sm:$0xff]
    %s1198 = scalar_lea.vmem [#allocation13], 3
    %v1199 = vld [vmem:[%s1198] ss:$8 sm:$0xf]
    %v1200 = vld [vmem:[%s1198] ss:$8 sm:$0xf0]
    %v1201 = vor.u32 %v1199, %v1200
    %v1203 = vlaneseq
    %v1204 = vshrl.u32 %v1203, 7
    %v1205 = vsub.s32 0, %v1204
    %v1206 = vrot.slane %v1201, %v1205
    %v1207 = vlaneseq
    %v1208 = vshrl.u32 %v1207, 7
    %v1209 = vsub.s32 1, %v1208
    %v1210 = vrot.slane %v1201, %v1209
    %v1211 = vlaneseq
    %v1212 = vshrl.u32 %v1211, 7
    %v1213 = vsub.s32 2, %v1212
    %v1214 = vrot.slane %v1201, %v1213
    %v1215 = vlaneseq
    %v1216 = vshrl.u32 %v1215, 7
    %v1217 = vsub.s32 3, %v1216
    %v1218 = vrot.slane %v1201, %v1217
    %v1219 = vlaneseq
    %v1220 = vshrl.u32 %v1219, 7
    %v1221 = vsub.s32 4, %v1220
    %v1222 = vrot.slane %v1201, %v1221
    %v1223 = vlaneseq
    %v1224 = vshrl.u32 %v1223, 7
    %v1225 = vsub.s32 5, %v1224
    %v1226 = vrot.slane %v1201, %v1225
    %v1227 = vlaneseq
    %v1228 = vshrl.u32 %v1227, 7
    %v1229 = vsub.s32 6, %v1228
    %v1230 = vrot.slane %v1201, %v1229
    %v1231 = vlaneseq
    %v1232 = vshrl.u32 %v1231, 7
    %v1233 = vsub.s32 7, %v1232
    %v1234 = vrot.slane %v1201, %v1233
    %v1499 = vunpack.c.l.b16 %v942
    %v1500 = vunpack.c.h.b16 %v942
    %v1501 = vunpack.c.l.b16 %v943
    %v1502 = vunpack.c.h.b16 %v943
    %v1503 = vunpack.c.l.b16 %v944
    %v1504 = vunpack.c.h.b16 %v944
    %v1505 = vunpack.c.l.b16 %v945
    %v1506 = vunpack.c.h.b16 %v945
    %v1507 = vunpack.c.l.b16 %v946
    %v1508 = vunpack.c.h.b16 %v946
    %v1509 = vunpack.c.l.b16 %v947
    %v1510 = vunpack.c.h.b16 %v947
    %v1511 = vunpack.c.l.b16 %v948
    %v1512 = vunpack.c.h.b16 %v948
    %v1513 = vunpack.c.l.b16 %v949
    %v1514 = vunpack.c.h.b16 %v949
    %v1515 = vunpack.c.l.b16 %v950
    %v1516 = vunpack.c.h.b16 %v950
    %v1517 = vunpack.c.l.b16 %v951
    %v1518 = vunpack.c.h.b16 %v951
    %v1519 = vunpack.c.l.b16 %v952
    %v1520 = vunpack.c.h.b16 %v952
    %v1521 = vunpack.c.l.b16 %v953
    %v1522 = vunpack.c.h.b16 %v953
    %v1523 = vunpack.c.l.b16 %v954
    %v1524 = vunpack.c.h.b16 %v954
    %v1525 = vunpack.c.l.b16 %v955
    %v1526 = vunpack.c.h.b16 %v955
    %v1527 = vunpack.c.l.b16 %v956
    %v1528 = vunpack.c.h.b16 %v956
    %v1529 = vunpack.c.l.b16 %v957
    %v1530 = vunpack.c.h.b16 %v957
    %v1531 = vunpack.c.l.b16 %v958
    %v1532 = vunpack.c.h.b16 %v958
    %v1533 = vunpack.c.l.b16 %v959
    %v1534 = vunpack.c.h.b16 %v959
    %v1535 = vunpack.c.l.b16 %v960
    %v1536 = vunpack.c.h.b16 %v960
    %v1537 = vunpack.c.l.b16 %v961
    %v1538 = vunpack.c.h.b16 %v961
    %v1539 = vunpack.c.l.b16 %v962
    %v1540 = vunpack.c.h.b16 %v962
    %v1541 = vunpack.c.l.b16 %v963
    %v1542 = vunpack.c.h.b16 %v963
    %v1543 = vunpack.c.l.b16 %v964
    %v1544 = vunpack.c.h.b16 %v964
    %v1545 = vunpack.c.l.b16 %v965
    %v1546 = vunpack.c.h.b16 %v965
    %v1547 = vunpack.c.l.b16 %v966
    %v1548 = vunpack.c.h.b16 %v966
    %v1549 = vunpack.c.l.b16 %v967
    %v1550 = vunpack.c.h.b16 %v967
    %v1551 = vunpack.c.l.b16 %v968
    %v1552 = vunpack.c.h.b16 %v968
    %v1553 = vunpack.c.l.b16 %v969
    %v1554 = vunpack.c.h.b16 %v969
    %v1555 = vunpack.c.l.b16 %v970
    %v1556 = vunpack.c.h.b16 %v970
    %v1557 = vunpack.c.l.b16 %v971
    %v1558 = vunpack.c.h.b16 %v971
    %v1559 = vunpack.c.l.b16 %v972
    %v1560 = vunpack.c.h.b16 %v972
    %v1561 = vunpack.c.l.b16 %v973
    %v1562 = vunpack.c.h.b16 %v973
    %v1563 = vunpack.c.l.b16 %v974
    %v1564 = vunpack.c.h.b16 %v974
    %v1565 = vunpack.c.l.b16 %v975
    %v1566 = vunpack.c.h.b16 %v975
    %v1567 = vunpack.c.l.b16 %v976
    %v1568 = vunpack.c.h.b16 %v976
    %v1569 = vunpack.c.l.b16 %v977
    %v1570 = vunpack.c.h.b16 %v977
    %v1571 = vunpack.c.l.b16 %v978
    %v1572 = vunpack.c.h.b16 %v978
    %v1573 = vunpack.c.l.b16 %v979
    %v1574 = vunpack.c.h.b16 %v979
    %v1575 = vunpack.c.l.b16 %v980
    %v1576 = vunpack.c.h.b16 %v980
    %v1577 = vunpack.c.l.b16 %v981
    %v1578 = vunpack.c.h.b16 %v981
    %v1579 = vunpack.c.l.b16 %v982
    %v1580 = vunpack.c.h.b16 %v982
    %v1581 = vunpack.c.l.b16 %v983
    %v1582 = vunpack.c.h.b16 %v983
    %v1583 = vunpack.c.l.b16 %v984
    %v1584 = vunpack.c.h.b16 %v984
    %v1585 = vunpack.c.l.b16 %v985
    %v1586 = vunpack.c.h.b16 %v985
    %v1587 = vunpack.c.l.b16 %v986
    %v1588 = vunpack.c.h.b16 %v986
    %v1589 = vunpack.c.l.b16 %v987
    %v1590 = vunpack.c.h.b16 %v987
    %v1591 = vunpack.c.l.b16 %v988
    %v1592 = vunpack.c.h.b16 %v988
    %v1593 = vunpack.c.l.b16 %v989
    %v1594 = vunpack.c.h.b16 %v989
    %v1595 = vunpack.c.l.b16 %v990
    %v1596 = vunpack.c.h.b16 %v990
    %v1597 = vunpack.c.l.b16 %v991
    %v1598 = vunpack.c.h.b16 %v991
    %v1599 = vunpack.c.l.b16 %v992
    %v1600 = vunpack.c.h.b16 %v992
    %v1601 = vunpack.c.l.b16 %v993
    %v1602 = vunpack.c.h.b16 %v993
    %v1603 = vunpack.c.l.b16 %v994
    %v1604 = vunpack.c.h.b16 %v994
    %v1605 = vunpack.c.l.b16 %v995
    %v1606 = vunpack.c.h.b16 %v995
    %v1607 = vunpack.c.l.b16 %v996
    %v1608 = vunpack.c.h.b16 %v996
    %v1609 = vunpack.c.l.b16 %v997
    %v1610 = vunpack.c.h.b16 %v997
    %v1611 = vunpack.c.l.b16 %v998
    %v1612 = vunpack.c.h.b16 %v998
    %v1613 = vunpack.c.l.b16 %v999
    %v1614 = vunpack.c.h.b16 %v999
    %v1615 = vunpack.c.l.b16 %v1000
    %v1616 = vunpack.c.h.b16 %v1000
    %v1617 = vunpack.c.l.b16 %v1001
    %v1618 = vunpack.c.h.b16 %v1001
    %v1619 = vunpack.c.l.b16 %v1002
    %v1620 = vunpack.c.h.b16 %v1002
    %v1621 = vunpack.c.l.b16 %v1003
    %v1622 = vunpack.c.h.b16 %v1003
    %v1623 = vunpack.c.l.b16 %v1004
    %v1624 = vunpack.c.h.b16 %v1004
    %v1625 = vunpack.c.l.b16 %v1005
    %v1626 = vunpack.c.h.b16 %v1005
    %v1627 = vunpack.c.l.b16 %v1006
    %v1628 = vunpack.c.h.b16 %v1006
    %v1629 = vunpack.c.l.b16 %v1007
    %v1630 = vunpack.c.h.b16 %v1007
    %v1631 = vunpack.c.l.b16 %v1008
    %v1632 = vunpack.c.h.b16 %v1008
    %v1633 = vunpack.c.l.b16 %v1009
    %v1634 = vunpack.c.h.b16 %v1009
    %v1635 = vunpack.c.l.b16 %v1010
    %v1636 = vunpack.c.h.b16 %v1010
    %v1637 = vunpack.c.l.b16 %v1011
    %v1638 = vunpack.c.h.b16 %v1011
    %v1639 = vunpack.c.l.b16 %v1012
    %v1640 = vunpack.c.h.b16 %v1012
    %v1641 = vunpack.c.l.b16 %v1013
    %v1642 = vunpack.c.h.b16 %v1013
    %v1643 = vunpack.c.l.b16 %v1014
    %v1644 = vunpack.c.h.b16 %v1014
    %v1645 = vunpack.c.l.b16 %v1015
    %v1646 = vunpack.c.h.b16 %v1015
    %v1647 = vunpack.c.l.b16 %v1016
    %v1648 = vunpack.c.h.b16 %v1016
    %v1649 = vunpack.c.l.b16 %v1017
    %v1650 = vunpack.c.h.b16 %v1017
    %v1651 = vunpack.c.l.b16 %v1018
    %v1652 = vunpack.c.h.b16 %v1018
    %v1653 = vunpack.c.l.b16 %v1019
    %v1654 = vunpack.c.h.b16 %v1019
    %v1655 = vunpack.c.l.b16 %v1020
    %v1656 = vunpack.c.h.b16 %v1020
    %v1657 = vunpack.c.l.b16 %v1021
    %v1658 = vunpack.c.h.b16 %v1021
    %v1659 = vunpack.c.l.b16 %v1022
    %v1660 = vunpack.c.h.b16 %v1022
    %v1661 = vunpack.c.l.b16 %v1023
    %v1662 = vunpack.c.h.b16 %v1023
    %v1663 = vunpack.c.l.b16 %v1024
    %v1664 = vunpack.c.h.b16 %v1024
    %v1665 = vunpack.c.l.b16 %v1025
    %v1666 = vunpack.c.h.b16 %v1025
    %v1667 = vunpack.c.l.b16 %v1026
    %v1668 = vunpack.c.h.b16 %v1026
    %v1669 = vunpack.c.l.b16 %v1027
    %v1670 = vunpack.c.h.b16 %v1027
    %v1671 = vunpack.c.l.b16 %v1028
    %v1672 = vunpack.c.h.b16 %v1028
    %v1673 = vunpack.c.l.b16 %v1029
    %v1674 = vunpack.c.h.b16 %v1029
    %v1675 = vunpack.c.l.b16 %v1030
    %v1676 = vunpack.c.h.b16 %v1030
    %v1677 = vunpack.c.l.b16 %v1031
    %v1678 = vunpack.c.h.b16 %v1031
    %v1679 = vunpack.c.l.b16 %v1032
    %v1680 = vunpack.c.h.b16 %v1032
    %v1681 = vunpack.c.l.b16 %v1033
    %v1682 = vunpack.c.h.b16 %v1033
    %v1683 = vunpack.c.l.b16 %v1034
    %v1684 = vunpack.c.h.b16 %v1034
    %v1685 = vunpack.c.l.b16 %v1035
    %v1686 = vunpack.c.h.b16 %v1035
    %v1687 = vunpack.c.l.b16 %v1036
    %v1688 = vunpack.c.h.b16 %v1036
    %v1689 = vunpack.c.l.b16 %v1037
    %v1690 = vunpack.c.h.b16 %v1037
    %v1691 = vunpack.c.l.b16 %v1038
    %v1692 = vunpack.c.h.b16 %v1038
    %v1693 = vunpack.c.l.b16 %v1039
    %v1694 = vunpack.c.h.b16 %v1039
    %v1695 = vunpack.c.l.b16 %v1040
    %v1696 = vunpack.c.h.b16 %v1040
    %v1697 = vunpack.c.l.b16 %v1041
    %v1698 = vunpack.c.h.b16 %v1041
    %v1699 = vunpack.c.l.b16 %v1042
    %v1700 = vunpack.c.h.b16 %v1042
    %v1701 = vunpack.c.l.b16 %v1043
    %v1702 = vunpack.c.h.b16 %v1043
    %v1703 = vunpack.c.l.b16 %v1044
    %v1704 = vunpack.c.h.b16 %v1044
    %v1705 = vunpack.c.l.b16 %v1045
    %v1706 = vunpack.c.h.b16 %v1045
    %v1707 = vunpack.c.l.b16 %v1046
    %v1708 = vunpack.c.h.b16 %v1046
    %v1709 = vunpack.c.l.b16 %v1047
    %v1710 = vunpack.c.h.b16 %v1047
    %v1711 = vunpack.c.l.b16 %v1048
    %v1712 = vunpack.c.h.b16 %v1048
    %v1713 = vunpack.c.l.b16 %v1049
    %v1714 = vunpack.c.h.b16 %v1049
    %v1715 = vunpack.c.l.b16 %v1050
    %v1716 = vunpack.c.h.b16 %v1050
    %v1717 = vunpack.c.l.b16 %v1051
    %v1718 = vunpack.c.h.b16 %v1051
    %v1719 = vunpack.c.l.b16 %v1052
    %v1720 = vunpack.c.h.b16 %v1052
    %v1721 = vunpack.c.l.b16 %v1053
    %v1722 = vunpack.c.h.b16 %v1053
    %v1723 = vunpack.c.l.b16 %v1054
    %v1724 = vunpack.c.h.b16 %v1054
    %v1725 = vunpack.c.l.b16 %v1055
    %v1726 = vunpack.c.h.b16 %v1055
    %v1727 = vunpack.c.l.b16 %v1056
    %v1728 = vunpack.c.h.b16 %v1056
    %v1729 = vunpack.c.l.b16 %v1057
    %v1730 = vunpack.c.h.b16 %v1057
    %v1731 = vunpack.c.l.b16 %v1058
    %v1732 = vunpack.c.h.b16 %v1058
    %v1733 = vunpack.c.l.b16 %v1059
    %v1734 = vunpack.c.h.b16 %v1059
    %v1735 = vunpack.c.l.b16 %v1060
    %v1736 = vunpack.c.h.b16 %v1060
    %v1737 = vunpack.c.l.b16 %v1061
    %v1738 = vunpack.c.h.b16 %v1061
    %v1739 = vunpack.c.l.b16 %v1062
    %v1740 = vunpack.c.h.b16 %v1062
    %v1741 = vunpack.c.l.b16 %v1063
    %v1742 = vunpack.c.h.b16 %v1063
    %v1743 = vunpack.c.l.b16 %v1064
    %v1744 = vunpack.c.h.b16 %v1064
    %v1745 = vunpack.c.l.b16 %v1065
    %v1746 = vunpack.c.h.b16 %v1065
    %v1747 = vunpack.c.l.b16 %v1066
    %v1748 = vunpack.c.h.b16 %v1066
    %v1749 = vunpack.c.l.b16 %v1067
    %v1750 = vunpack.c.h.b16 %v1067
    %v1751 = vunpack.c.l.b16 %v1068
    %v1752 = vunpack.c.h.b16 %v1068
    %v1753 = vunpack.c.l.b16 %v1069
    %v1754 = vunpack.c.h.b16 %v1069
    %v1755 = vunpack.c.l.b16 %v1070
    %v1756 = vunpack.c.h.b16 %v1070
    %v1757 = vunpack.c.l.b16 %v1071
    %v1758 = vunpack.c.h.b16 %v1071
    %v1759 = vunpack.c.l.b16 %v1072
    %v1760 = vunpack.c.h.b16 %v1072
    %v1761 = vunpack.c.l.b16 %v1073
    %v1762 = vunpack.c.h.b16 %v1073
    %v1763 = vunpack.c.l.b16 %v1074
    %v1764 = vunpack.c.h.b16 %v1074
    %v1765 = vunpack.c.l.b16 %v1075
    %v1766 = vunpack.c.h.b16 %v1075
    %v1767 = vunpack.c.l.b16 %v1076
    %v1768 = vunpack.c.h.b16 %v1076
    %v1769 = vunpack.c.l.b16 %v1077
    %v1770 = vunpack.c.h.b16 %v1077
    %v1771 = vunpack.c.l.b16 %v1078
    %v1772 = vunpack.c.h.b16 %v1078
    %v1773 = vunpack.c.l.b16 %v1079
    %v1774 = vunpack.c.h.b16 %v1079
    %v1775 = vunpack.c.l.b16 %v1080
    %v1776 = vunpack.c.h.b16 %v1080
    %v1777 = vunpack.c.l.b16 %v1081
    %v1778 = vunpack.c.h.b16 %v1081
    %v1779 = vunpack.c.l.b16 %v1082
    %v1780 = vunpack.c.h.b16 %v1082
    %v1781 = vunpack.c.l.b16 %v1083
    %v1782 = vunpack.c.h.b16 %v1083
    %v1783 = vunpack.c.l.b16 %v1084
    %v1784 = vunpack.c.h.b16 %v1084
    %v1785 = vunpack.c.l.b16 %v1085
    %v1786 = vunpack.c.h.b16 %v1085
    %v1787 = vunpack.c.l.b16 %v1086
    %v1788 = vunpack.c.h.b16 %v1086
    %v1789 = vunpack.c.l.b16 %v1087
    %v1790 = vunpack.c.h.b16 %v1087
    %v1791 = vunpack.c.l.b16 %v1088
    %v1792 = vunpack.c.h.b16 %v1088
    %v1793 = vunpack.c.l.b16 %v1089
    %v1794 = vunpack.c.h.b16 %v1089
    %v1795 = vunpack.c.l.b16 %v1090
    %v1796 = vunpack.c.h.b16 %v1090
    %v1797 = vunpack.c.l.b16 %v1091
    %v1798 = vunpack.c.h.b16 %v1091
    %v1799 = vunpack.c.l.b16 %v1092
    %v1800 = vunpack.c.h.b16 %v1092
    %v1801 = vunpack.c.l.b16 %v1093
    %v1802 = vunpack.c.h.b16 %v1093
    %v1803 = vunpack.c.l.b16 %v1094
    %v1804 = vunpack.c.h.b16 %v1094
    %v1805 = vunpack.c.l.b16 %v1095
    %v1806 = vunpack.c.h.b16 %v1095
    %v1807 = vunpack.c.l.b16 %v1096
    %v1808 = vunpack.c.h.b16 %v1096
    %v1809 = vunpack.c.l.b16 %v1097
    %v1810 = vunpack.c.h.b16 %v1097
    %v1811 = vunpack.c.l.b16 %v1098
    %v1812 = vunpack.c.h.b16 %v1098
    %v1813 = vunpack.c.l.b16 %v1099
    %v1814 = vunpack.c.h.b16 %v1099
    %v1815 = vunpack.c.l.b16 %v1100
    %v1816 = vunpack.c.h.b16 %v1100
    %v1817 = vunpack.c.l.b16 %v1101
    %v1818 = vunpack.c.h.b16 %v1101
    %v1819 = vunpack.c.l.b16 %v1102
    %v1820 = vunpack.c.h.b16 %v1102
    %v1821 = vunpack.c.l.b16 %v1103
    %v1822 = vunpack.c.h.b16 %v1103
    %v1823 = vunpack.c.l.b16 %v1104
    %v1824 = vunpack.c.h.b16 %v1104
    %v1825 = vunpack.c.l.b16 %v1105
    %v1826 = vunpack.c.h.b16 %v1105
    %v1827 = vunpack.c.l.b16 %v1106
    %v1828 = vunpack.c.h.b16 %v1106
    %v1829 = vunpack.c.l.b16 %v1107
    %v1830 = vunpack.c.h.b16 %v1107
    %v1831 = vunpack.c.l.b16 %v1108
    %v1832 = vunpack.c.h.b16 %v1108
    %v1833 = vunpack.c.l.b16 %v1109
    %v1834 = vunpack.c.h.b16 %v1109
    %v1835 = vunpack.c.l.b16 %v1110
    %v1836 = vunpack.c.h.b16 %v1110
    %v1837 = vunpack.c.l.b16 %v1111
    %v1838 = vunpack.c.h.b16 %v1111
    %v1839 = vunpack.c.l.b16 %v1112
    %v1840 = vunpack.c.h.b16 %v1112
    %v1841 = vunpack.c.l.b16 %v1113
    %v1842 = vunpack.c.h.b16 %v1113
    %v1843 = vunpack.c.l.b16 %v1114
    %v1844 = vunpack.c.h.b16 %v1114
    %v1845 = vunpack.c.l.b16 %v1115
    %v1846 = vunpack.c.h.b16 %v1115
    %v1847 = vunpack.c.l.b16 %v1116
    %v1848 = vunpack.c.h.b16 %v1116
    %v1849 = vunpack.c.l.b16 %v1117
    %v1850 = vunpack.c.h.b16 %v1117
    %v1851 = vunpack.c.l.b16 %v1118
    %v1852 = vunpack.c.h.b16 %v1118
    %v1853 = vunpack.c.l.b16 %v1119
    %v1854 = vunpack.c.h.b16 %v1119
    %v1855 = vunpack.c.l.b16 %v1120
    %v1856 = vunpack.c.h.b16 %v1120
    %v1857 = vunpack.c.l.b16 %v1121
    %v1858 = vunpack.c.h.b16 %v1121
    %v1859 = vunpack.c.l.b16 %v1122
    %v1860 = vunpack.c.h.b16 %v1122
    %v1861 = vunpack.c.l.b16 %v1123
    %v1862 = vunpack.c.h.b16 %v1123
    %v1863 = vunpack.c.l.b16 %v1124
    %v1864 = vunpack.c.h.b16 %v1124
    %v1865 = vunpack.c.l.b16 %v1125
    %v1866 = vunpack.c.h.b16 %v1125
    %v1867 = vunpack.c.l.b16 %v1126
    %v1868 = vunpack.c.h.b16 %v1126
    %v1869 = vunpack.c.l.b16 %v1127
    %v1870 = vunpack.c.h.b16 %v1127
    %v1871 = vunpack.c.l.b16 %v1128
    %v1872 = vunpack.c.h.b16 %v1128
    %v1873 = vunpack.c.l.b16 %v1129
    %v1874 = vunpack.c.h.b16 %v1129
    %v1875 = vunpack.c.l.b16 %v1130
    %v1876 = vunpack.c.h.b16 %v1130
    %v1877 = vunpack.c.l.b16 %v1131
    %v1878 = vunpack.c.h.b16 %v1131
    %v1879 = vunpack.c.l.b16 %v1132
    %v1880 = vunpack.c.h.b16 %v1132
    %v1881 = vunpack.c.l.b16 %v1133
    %v1882 = vunpack.c.h.b16 %v1133
    %v1883 = vunpack.c.l.b16 %v1134
    %v1884 = vunpack.c.h.b16 %v1134
    %v1885 = vunpack.c.l.b16 %v1135
    %v1886 = vunpack.c.h.b16 %v1135
    %v1887 = vunpack.c.l.b16 %v1136
    %v1888 = vunpack.c.h.b16 %v1136
    %v1889 = vunpack.c.l.b16 %v1137
    %v1890 = vunpack.c.h.b16 %v1137
    %v1891 = vunpack.c.l.b16 %v1138
    %v1892 = vunpack.c.h.b16 %v1138
    %v1893 = vunpack.c.l.b16 %v1139
    %v1894 = vunpack.c.h.b16 %v1139
    %v1895 = vunpack.c.l.b16 %v1140
    %v1896 = vunpack.c.h.b16 %v1140
    %v1897 = vunpack.c.l.b16 %v1141
    %v1898 = vunpack.c.h.b16 %v1141
    %v1899 = vunpack.c.l.b16 %v1142
    %v1900 = vunpack.c.h.b16 %v1142
    %v1901 = vunpack.c.l.b16 %v1143
    %v1902 = vunpack.c.h.b16 %v1143
    %v1903 = vunpack.c.l.b16 %v1144
    %v1904 = vunpack.c.h.b16 %v1144
    %v1905 = vunpack.c.l.b16 %v1145
    %v1906 = vunpack.c.h.b16 %v1145
    %v1907 = vunpack.c.l.b16 %v1146
    %v1908 = vunpack.c.h.b16 %v1146
    %v1909 = vunpack.c.l.b16 %v1147
    %v1910 = vunpack.c.h.b16 %v1147
    %v1911 = vunpack.c.l.b16 %v1148
    %v1912 = vunpack.c.h.b16 %v1148
    %v1913 = vunpack.c.l.b16 %v1149
    %v1914 = vunpack.c.h.b16 %v1149
    %v1915 = vunpack.c.l.b16 %v1150
    %v1916 = vunpack.c.h.b16 %v1150
    %v1917 = vunpack.c.l.b16 %v1151
    %v1918 = vunpack.c.h.b16 %v1151
    %v1919 = vunpack.c.l.b16 %v1152
    %v1920 = vunpack.c.h.b16 %v1152
    %v1921 = vunpack.c.l.b16 %v1153
    %v1922 = vunpack.c.h.b16 %v1153
    %v1923 = vunpack.c.l.b16 %v1154
    %v1924 = vunpack.c.h.b16 %v1154
    %v1925 = vunpack.c.l.b16 %v1155
    %v1926 = vunpack.c.h.b16 %v1155
    %v1927 = vunpack.c.l.b16 %v1156
    %v1928 = vunpack.c.h.b16 %v1156
    %v1929 = vunpack.c.l.b16 %v1157
    %v1930 = vunpack.c.h.b16 %v1157
    %v1931 = vunpack.c.l.b16 %v1158
    %v1932 = vunpack.c.h.b16 %v1158
    %v1933 = vunpack.c.l.b16 %v1159
    %v1934 = vunpack.c.h.b16 %v1159
    %v1935 = vunpack.c.l.b16 %v1160
    %v1936 = vunpack.c.h.b16 %v1160
    %v1937 = vunpack.c.l.b16 %v1161
    %v1938 = vunpack.c.h.b16 %v1161
    %v1939 = vunpack.c.l.b16 %v1162
    %v1940 = vunpack.c.h.b16 %v1162
    %v1941 = vunpack.c.l.b16 %v1163
    %v1942 = vunpack.c.h.b16 %v1163
    %v1943 = vunpack.c.l.b16 %v1164
    %v1944 = vunpack.c.h.b16 %v1164
    %v1945 = vunpack.c.l.b16 %v1165
    %v1946 = vunpack.c.h.b16 %v1165
    %v1947 = vunpack.c.l.b16 %v1166
    %v1948 = vunpack.c.h.b16 %v1166
    %v1949 = vunpack.c.l.b16 %v1167
    %v1950 = vunpack.c.h.b16 %v1167
    %v1951 = vunpack.c.l.b16 %v1168
    %v1952 = vunpack.c.h.b16 %v1168
    %v1953 = vunpack.c.l.b16 %v1169
    %v1954 = vunpack.c.h.b16 %v1169
    %v1955 = vunpack.c.l.b16 %v1170
    %v1956 = vunpack.c.h.b16 %v1170
    %v1957 = vunpack.c.l.b16 %v1171
    %v1958 = vunpack.c.h.b16 %v1171
    %v1959 = vunpack.c.l.b16 %v1172
    %v1960 = vunpack.c.h.b16 %v1172
    %v1961 = vunpack.c.l.b16 %v1173
    %v1962 = vunpack.c.h.b16 %v1173
    %v1963 = vunpack.c.l.b16 %v1174
    %v1964 = vunpack.c.h.b16 %v1174
    %v1965 = vunpack.c.l.b16 %v1175
    %v1966 = vunpack.c.h.b16 %v1175
    %v1967 = vunpack.c.l.b16 %v1176
    %v1968 = vunpack.c.h.b16 %v1176
    %v1969 = vunpack.c.l.b16 %v1177
    %v1970 = vunpack.c.h.b16 %v1177
    %v1971 = vunpack.c.l.b16 %v1178
    %v1972 = vunpack.c.h.b16 %v1178
    %v1973 = vunpack.c.l.b16 %v1179
    %v1974 = vunpack.c.h.b16 %v1179
    %v1975 = vunpack.c.l.b16 %v1180
    %v1976 = vunpack.c.h.b16 %v1180
    %v1977 = vunpack.c.l.b16 %v1181
    %v1978 = vunpack.c.h.b16 %v1181
    %v1979 = vunpack.c.l.b16 %v1182
    %v1980 = vunpack.c.h.b16 %v1182
    %v1981 = vunpack.c.l.b16 %v1183
    %v1982 = vunpack.c.h.b16 %v1183
    %v1983 = vunpack.c.l.b16 %v1184
    %v1984 = vunpack.c.h.b16 %v1184
    %v1985 = vunpack.c.l.b16 %v1185
    %v1986 = vunpack.c.h.b16 %v1185
    %v1987 = vunpack.c.l.b16 %v1186
    %v1988 = vunpack.c.h.b16 %v1186
    %v1989 = vunpack.c.l.b16 %v1187
    %v1990 = vunpack.c.h.b16 %v1187
    %v1991 = vunpack.c.l.b16 %v1188
    %v1992 = vunpack.c.h.b16 %v1188
    %v1993 = vunpack.c.l.b16 %v1189
    %v1994 = vunpack.c.h.b16 %v1189
    %v1995 = vunpack.c.l.b16 %v1190
    %v1996 = vunpack.c.h.b16 %v1190
    %v1997 = vunpack.c.l.b16 %v1191
    %v1998 = vunpack.c.h.b16 %v1191
    %v1999 = vunpack.c.l.b16 %v1192
    %v2000 = vunpack.c.h.b16 %v1192
    %v2001 = vunpack.c.l.b16 %v1193
    %v2002 = vunpack.c.h.b16 %v1193
    %v2003 = vunpack.c.l.b16 %v1194
    %v2004 = vunpack.c.h.b16 %v1194
    %v2005 = vunpack.c.l.b16 %v1195
    %v2006 = vunpack.c.h.b16 %v1195
    %v2007 = vunpack.c.l.b16 %v1196
    %v2008 = vunpack.c.h.b16 %v1196
    %v2009 = vunpack.c.l.b16 %v1197
    %v2010 = vunpack.c.h.b16 %v1197
    %v2011 = vpack.c.b16 %v1507, %v1499
    %v2012 = vpack.c.b16 %v1508, %v1500
    %v2013 = vpack.c.b16 %v1509, %v1501
    %v2014 = vpack.c.b16 %v1510, %v1502
    %v2015 = vpack.c.b16 %v1511, %v1503
    %v2016 = vpack.c.b16 %v1512, %v1504
    %v2017 = vpack.c.b16 %v1513, %v1505
    %v2018 = vpack.c.b16 %v1514, %v1506
    %v2019 = vpack.c.b16 %v1523, %v1515
    %v2020 = vpack.c.b16 %v1524, %v1516
    %v2021 = vpack.c.b16 %v1525, %v1517
    %v2022 = vpack.c.b16 %v1526, %v1518
    %v2023 = vpack.c.b16 %v1527, %v1519
    %v2024 = vpack.c.b16 %v1528, %v1520
    %v2025 = vpack.c.b16 %v1529, %v1521
    %v2026 = vpack.c.b16 %v1530, %v1522
    %v2027 = vpack.c.b16 %v1539, %v1531
    %v2028 = vpack.c.b16 %v1540, %v1532
    %v2029 = vpack.c.b16 %v1541, %v1533
    %v2030 = vpack.c.b16 %v1542, %v1534
    %v2031 = vpack.c.b16 %v1543, %v1535
    %v2032 = vpack.c.b16 %v1544, %v1536
    %v2033 = vpack.c.b16 %v1545, %v1537
    %v2034 = vpack.c.b16 %v1546, %v1538
    %v2035 = vpack.c.b16 %v1555, %v1547
    %v2036 = vpack.c.b16 %v1556, %v1548
    %v2037 = vpack.c.b16 %v1557, %v1549
    %v2038 = vpack.c.b16 %v1558, %v1550
    %v2039 = vpack.c.b16 %v1559, %v1551
    %v2040 = vpack.c.b16 %v1560, %v1552
    %v2041 = vpack.c.b16 %v1561, %v1553
    %v2042 = vpack.c.b16 %v1562, %v1554
    %v2043 = vpack.c.b16 %v1571, %v1563
    %v2044 = vpack.c.b16 %v1572, %v1564
    %v2045 = vpack.c.b16 %v1573, %v1565
    %v2046 = vpack.c.b16 %v1574, %v1566
    %v2047 = vpack.c.b16 %v1575, %v1567
    %v2048 = vpack.c.b16 %v1576, %v1568
    %v2049 = vpack.c.b16 %v1577, %v1569
    %v2050 = vpack.c.b16 %v1578, %v1570
    %v2051 = vpack.c.b16 %v1587, %v1579
    %v2052 = vpack.c.b16 %v1588, %v1580
    %v2053 = vpack.c.b16 %v1589, %v1581
    %v2054 = vpack.c.b16 %v1590, %v1582
    %v2055 = vpack.c.b16 %v1591, %v1583
    %v2056 = vpack.c.b16 %v1592, %v1584
    %v2057 = vpack.c.b16 %v1593, %v1585
    %v2058 = vpack.c.b16 %v1594, %v1586
    %v2059 = vpack.c.b16 %v1603, %v1595
    %v2060 = vpack.c.b16 %v1604, %v1596
    %v2061 = vpack.c.b16 %v1605, %v1597
    %v2062 = vpack.c.b16 %v1606, %v1598
    %v2063 = vpack.c.b16 %v1607, %v1599
    %v2064 = vpack.c.b16 %v1608, %v1600
    %v2065 = vpack.c.b16 %v1609, %v1601
    %v2066 = vpack.c.b16 %v1610, %v1602
    %v2067 = vpack.c.b16 %v1619, %v1611
    %v2068 = vpack.c.b16 %v1620, %v1612
    %v2069 = vpack.c.b16 %v1621, %v1613
    %v2070 = vpack.c.b16 %v1622, %v1614
    %v2071 = vpack.c.b16 %v1623, %v1615
    %v2072 = vpack.c.b16 %v1624, %v1616
    %v2073 = vpack.c.b16 %v1625, %v1617
    %v2074 = vpack.c.b16 %v1626, %v1618
    %v2075 = vpack.c.b16 %v1635, %v1627
    %v2076 = vpack.c.b16 %v1636, %v1628
    %v2077 = vpack.c.b16 %v1637, %v1629
    %v2078 = vpack.c.b16 %v1638, %v1630
    %v2079 = vpack.c.b16 %v1639, %v1631
    %v2080 = vpack.c.b16 %v1640, %v1632
    %v2081 = vpack.c.b16 %v1641, %v1633
    %v2082 = vpack.c.b16 %v1642, %v1634
    %v2083 = vpack.c.b16 %v1651, %v1643
    %v2084 = vpack.c.b16 %v1652, %v1644
    %v2085 = vpack.c.b16 %v1653, %v1645
    %v2086 = vpack.c.b16 %v1654, %v1646
    %v2087 = vpack.c.b16 %v1655, %v1647
    %v2088 = vpack.c.b16 %v1656, %v1648
    %v2089 = vpack.c.b16 %v1657, %v1649
    %v2090 = vpack.c.b16 %v1658, %v1650
    %v2091 = vpack.c.b16 %v1667, %v1659
    %v2092 = vpack.c.b16 %v1668, %v1660
    %v2093 = vpack.c.b16 %v1669, %v1661
    %v2094 = vpack.c.b16 %v1670, %v1662
    %v2095 = vpack.c.b16 %v1671, %v1663
    %v2096 = vpack.c.b16 %v1672, %v1664
    %v2097 = vpack.c.b16 %v1673, %v1665
    %v2098 = vpack.c.b16 %v1674, %v1666
    %v2099 = vpack.c.b16 %v1683, %v1675
    %v2100 = vpack.c.b16 %v1684, %v1676
    %v2101 = vpack.c.b16 %v1685, %v1677
    %v2102 = vpack.c.b16 %v1686, %v1678
    %v2103 = vpack.c.b16 %v1687, %v1679
    %v2104 = vpack.c.b16 %v1688, %v1680
    %v2105 = vpack.c.b16 %v1689, %v1681
    %v2106 = vpack.c.b16 %v1690, %v1682
    %v2107 = vpack.c.b16 %v1699, %v1691
    %v2108 = vpack.c.b16 %v1700, %v1692
    %v2109 = vpack.c.b16 %v1701, %v1693
    %v2110 = vpack.c.b16 %v1702, %v1694
    %v2111 = vpack.c.b16 %v1703, %v1695
    %v2112 = vpack.c.b16 %v1704, %v1696
    %v2113 = vpack.c.b16 %v1705, %v1697
    %v2114 = vpack.c.b16 %v1706, %v1698
    %v2115 = vpack.c.b16 %v1715, %v1707
    %v2116 = vpack.c.b16 %v1716, %v1708
    %v2117 = vpack.c.b16 %v1717, %v1709
    %v2118 = vpack.c.b16 %v1718, %v1710
    %v2119 = vpack.c.b16 %v1719, %v1711
    %v2120 = vpack.c.b16 %v1720, %v1712
    %v2121 = vpack.c.b16 %v1721, %v1713
    %v2122 = vpack.c.b16 %v1722, %v1714
    %v2123 = vpack.c.b16 %v1731, %v1723
    %v2124 = vpack.c.b16 %v1732, %v1724
    %v2125 = vpack.c.b16 %v1733, %v1725
    %v2126 = vpack.c.b16 %v1734, %v1726
    %v2127 = vpack.c.b16 %v1735, %v1727
    %v2128 = vpack.c.b16 %v1736, %v1728
    %v2129 = vpack.c.b16 %v1737, %v1729
    %v2130 = vpack.c.b16 %v1738, %v1730
    %v2131 = vpack.c.b16 %v1747, %v1739
    %v2132 = vpack.c.b16 %v1748, %v1740
    %v2133 = vpack.c.b16 %v1749, %v1741
    %v2134 = vpack.c.b16 %v1750, %v1742
    %v2135 = vpack.c.b16 %v1751, %v1743
    %v2136 = vpack.c.b16 %v1752, %v1744
    %v2137 = vpack.c.b16 %v1753, %v1745
    %v2138 = vpack.c.b16 %v1754, %v1746
    %v2139 = vpack.c.b16 %v1763, %v1755
    %v2140 = vpack.c.b16 %v1764, %v1756
    %v2141 = vpack.c.b16 %v1765, %v1757
    %v2142 = vpack.c.b16 %v1766, %v1758
    %v2143 = vpack.c.b16 %v1767, %v1759
    %v2144 = vpack.c.b16 %v1768, %v1760
    %v2145 = vpack.c.b16 %v1769, %v1761
    %v2146 = vpack.c.b16 %v1770, %v1762
    %v2147 = vpack.c.b16 %v1779, %v1771
    %v2148 = vpack.c.b16 %v1780, %v1772
    %v2149 = vpack.c.b16 %v1781, %v1773
    %v2150 = vpack.c.b16 %v1782, %v1774
    %v2151 = vpack.c.b16 %v1783, %v1775
    %v2152 = vpack.c.b16 %v1784, %v1776
    %v2153 = vpack.c.b16 %v1785, %v1777
    %v2154 = vpack.c.b16 %v1786, %v1778
    %v2155 = vpack.c.b16 %v1795, %v1787
    %v2156 = vpack.c.b16 %v1796, %v1788
    %v2157 = vpack.c.b16 %v1797, %v1789
    %v2158 = vpack.c.b16 %v1798, %v1790
    %v2159 = vpack.c.b16 %v1799, %v1791
    %v2160 = vpack.c.b16 %v1800, %v1792
    %v2161 = vpack.c.b16 %v1801, %v1793
    %v2162 = vpack.c.b16 %v1802, %v1794
    %v2163 = vpack.c.b16 %v1811, %v1803
    %v2164 = vpack.c.b16 %v1812, %v1804
    %v2165 = vpack.c.b16 %v1813, %v1805
    %v2166 = vpack.c.b16 %v1814, %v1806
    %v2167 = vpack.c.b16 %v1815, %v1807
    %v2168 = vpack.c.b16 %v1816, %v1808
    %v2169 = vpack.c.b16 %v1817, %v1809
    %v2170 = vpack.c.b16 %v1818, %v1810
    %v2171 = vpack.c.b16 %v1827, %v1819
    %v2172 = vpack.c.b16 %v1828, %v1820
    %v2173 = vpack.c.b16 %v1829, %v1821
    %v2174 = vpack.c.b16 %v1830, %v1822
    %v2175 = vpack.c.b16 %v1831, %v1823
    %v2176 = vpack.c.b16 %v1832, %v1824
    %v2177 = vpack.c.b16 %v1833, %v1825
    %v2178 = vpack.c.b16 %v1834, %v1826
    %v2179 = vpack.c.b16 %v1843, %v1835
    %v2180 = vpack.c.b16 %v1844, %v1836
    %v2181 = vpack.c.b16 %v1845, %v1837
    %v2182 = vpack.c.b16 %v1846, %v1838
    %v2183 = vpack.c.b16 %v1847, %v1839
    %v2184 = vpack.c.b16 %v1848, %v1840
    %v2185 = vpack.c.b16 %v1849, %v1841
    %v2186 = vpack.c.b16 %v1850, %v1842
    %v2187 = vpack.c.b16 %v1859, %v1851
    %v2188 = vpack.c.b16 %v1860, %v1852
    %v2189 = vpack.c.b16 %v1861, %v1853
    %v2190 = vpack.c.b16 %v1862, %v1854
    %v2191 = vpack.c.b16 %v1863, %v1855
    %v2192 = vpack.c.b16 %v1864, %v1856
    %v2193 = vpack.c.b16 %v1865, %v1857
    %v2194 = vpack.c.b16 %v1866, %v1858
    %v2195 = vpack.c.b16 %v1875, %v1867
    %v2196 = vpack.c.b16 %v1876, %v1868
    %v2197 = vpack.c.b16 %v1877, %v1869
    %v2198 = vpack.c.b16 %v1878, %v1870
    %v2199 = vpack.c.b16 %v1879, %v1871
    %v2200 = vpack.c.b16 %v1880, %v1872
    %v2201 = vpack.c.b16 %v1881, %v1873
    %v2202 = vpack.c.b16 %v1882, %v1874
    %v2203 = vpack.c.b16 %v1891, %v1883
    %v2204 = vpack.c.b16 %v1892, %v1884
    %v2205 = vpack.c.b16 %v1893, %v1885
    %v2206 = vpack.c.b16 %v1894, %v1886
    %v2207 = vpack.c.b16 %v1895, %v1887
    %v2208 = vpack.c.b16 %v1896, %v1888
    %v2209 = vpack.c.b16 %v1897, %v1889
    %v2210 = vpack.c.b16 %v1898, %v1890
    %v2211 = vpack.c.b16 %v1907, %v1899
    %v2212 = vpack.c.b16 %v1908, %v1900
    %v2213 = vpack.c.b16 %v1909, %v1901
    %v2214 = vpack.c.b16 %v1910, %v1902
    %v2215 = vpack.c.b16 %v1911, %v1903
    %v2216 = vpack.c.b16 %v1912, %v1904
    %v2217 = vpack.c.b16 %v1913, %v1905
    %v2218 = vpack.c.b16 %v1914, %v1906
    %v2219 = vpack.c.b16 %v1923, %v1915
    %v2220 = vpack.c.b16 %v1924, %v1916
    %v2221 = vpack.c.b16 %v1925, %v1917
    %v2222 = vpack.c.b16 %v1926, %v1918
    %v2223 = vpack.c.b16 %v1927, %v1919
    %v2224 = vpack.c.b16 %v1928, %v1920
    %v2225 = vpack.c.b16 %v1929, %v1921
    %v2226 = vpack.c.b16 %v1930, %v1922
    %v2227 = vpack.c.b16 %v1939, %v1931
    %v2228 = vpack.c.b16 %v1940, %v1932
    %v2229 = vpack.c.b16 %v1941, %v1933
    %v2230 = vpack.c.b16 %v1942, %v1934
    %v2231 = vpack.c.b16 %v1943, %v1935
    %v2232 = vpack.c.b16 %v1944, %v1936
    %v2233 = vpack.c.b16 %v1945, %v1937
    %v2234 = vpack.c.b16 %v1946, %v1938
    %v2235 = vpack.c.b16 %v1955, %v1947
    %v2236 = vpack.c.b16 %v1956, %v1948
    %v2237 = vpack.c.b16 %v1957, %v1949
    %v2238 = vpack.c.b16 %v1958, %v1950
    %v2239 = vpack.c.b16 %v1959, %v1951
    %v2240 = vpack.c.b16 %v1960, %v1952
    %v2241 = vpack.c.b16 %v1961, %v1953
    %v2242 = vpack.c.b16 %v1962, %v1954
    %v2243 = vpack.c.b16 %v1971, %v1963
    %v2244 = vpack.c.b16 %v1972, %v1964
    %v2245 = vpack.c.b16 %v1973, %v1965
    %v2246 = vpack.c.b16 %v1974, %v1966
    %v2247 = vpack.c.b16 %v1975, %v1967
    %v2248 = vpack.c.b16 %v1976, %v1968
    %v2249 = vpack.c.b16 %v1977, %v1969
    %v2250 = vpack.c.b16 %v1978, %v1970
    %v2251 = vpack.c.b16 %v1987, %v1979
    %v2252 = vpack.c.b16 %v1988, %v1980
    %v2253 = vpack.c.b16 %v1989, %v1981
    %v2254 = vpack.c.b16 %v1990, %v1982
    %v2255 = vpack.c.b16 %v1991, %v1983
    %v2256 = vpack.c.b16 %v1992, %v1984
    %v2257 = vpack.c.b16 %v1993, %v1985
    %v2258 = vpack.c.b16 %v1994, %v1986
    %v2259 = vpack.c.b16 %v2003, %v1995
    %v2260 = vpack.c.b16 %v2004, %v1996
    %v2261 = vpack.c.b16 %v2005, %v1997
    %v2262 = vpack.c.b16 %v2006, %v1998
    %v2263 = vpack.c.b16 %v2007, %v1999
    %v2264 = vpack.c.b16 %v2008, %v2000
    %v2265 = vpack.c.b16 %v2009, %v2001
    %v2266 = vpack.c.b16 %v2010, %v2002
    %2523 = vmatprep.subr.bf16.mxu0 %v2012
    %2524 = vmatpush1.bf16.msra.mxu0 %v2011
    %2525 = vmatprep.subr.bf16.mxu0 %v2020
    %2526 = vmatpush1.bf16.msra.mxu0 %v2019
    %2527 = vmatprep.subr.bf16.mxu0 %v2028
    %2528 = vmatpush1.bf16.msra.mxu0 %v2027
    %2529 = vmatprep.subr.bf16.mxu0 %v2036
    %2530 = vmatpush1.bf16.msra.mxu0 %v2035
    %2531 = vmatprep.subr.bf16.mxu0 %v2044
    %2532 = vmatpush1.bf16.msra.mxu0 %v2043
    %2533 = vmatprep.subr.bf16.mxu0 %v2052
    %2534 = vmatpush1.bf16.msra.mxu0 %v2051
    %2535 = vmatprep.subr.bf16.mxu0 %v2060
    %2536 = vmatpush1.bf16.msra.mxu0 %v2059
    %2537 = vmatprep.subr.bf16.mxu0 %v2068
    %2538 = vmatpush1.bf16.msra.mxu0 %v2067
    %2539 = vmatprep.subr.bf16.mxu0 %v2076
    %2540 = vmatpush1.bf16.msra.mxu0 %v2075
    %2541 = vmatprep.subr.bf16.mxu0 %v2084
    %2542 = vmatpush1.bf16.msra.mxu0 %v2083
    %2543 = vmatprep.subr.bf16.mxu0 %v2092
    %2544 = vmatpush1.bf16.msra.mxu0 %v2091
    %2545 = vmatprep.subr.bf16.mxu0 %v2100
    %2546 = vmatpush1.bf16.msra.mxu0 %v2099
    %2547 = vmatprep.subr.bf16.mxu0 %v2108
    %2548 = vmatpush1.bf16.msra.mxu0 %v2107
    %2549 = vmatprep.subr.bf16.mxu0 %v2116
    %2550 = vmatpush1.bf16.msra.mxu0 %v2115
    %2551 = vmatprep.subr.bf16.mxu0 %v2124
    %2552 = vmatpush1.bf16.msra.mxu0 %v2123
    %2553 = vmatprep.subr.bf16.mxu0 %v2132
    %2554 = vmatpush1.bf16.msra.mxu0 %v2131
    %2555 = vmatprep.mubr.bf16.mxu0 %v927
    %2556 = vmatmul.mubr.bf16.gmra.mrb[0].mxu0 %v926
    %v2557 = vpop.f32.mrb[0].mxu0
    %v2558 = vadd.f32 %v1206, %v2557
    %v2559 = vpop.f32.mrb[0].mxu0
    %v2560 = vadd.f32 %v1210, %v2559
    %v2561 = vpop.f32.mrb[0].mxu0
    %v2562 = vadd.f32 %v1206, %v2561
    %v2563 = vpop.f32.mrb[0].mxu0
    %v2564 = vadd.f32 %v1210, %v2563
    %2565 = vmatprep.mubr.bf16.mxu0 %v931
    %2566 = vmatmul.mubr.bf16.gmra.mrb[0].mxu0 %v930
    %v2567 = vpop.f32.mrb[0].mxu0
    %v2568 = vadd.f32 %v1206, %v2567
    %v2569 = vpop.f32.mrb[0].mxu0
    %v2570 = vadd.f32 %v1210, %v2569
    %v2571 = vpop.f32.mrb[0].mxu0
    %v2572 = vadd.f32 %v1206, %v2571
    %v2573 = vpop.f32.mrb[0].mxu0
    %v2574 = vadd.f32 %v1210, %v2573
    %2575 = vmatprep.mubr.bf16.mxu0 %v935
    %2576 = vmatmul.mubr.bf16.gmra.mrb[0].mxu0 %v934
    %v2577 = vpop.f32.mrb[0].mxu0
    %v2578 = vadd.f32 %v1206, %v2577
    %v2579 = vpop.f32.mrb[0].mxu0
    %v2580 = vadd.f32 %v1210, %v2579
    %v2581 = vpop.f32.mrb[0].mxu0
    %v2582 = vadd.f32 %v1206, %v2581
    %v2583 = vpop.f32.mrb[0].mxu0
    %v2584 = vadd.f32 %v1210, %v2583
    %2585 = vmatprep.mubr.bf16.mxu0 %v939
    %2586 = vmatmul.mubr.bf16.gmra.mrb[0].mxu0 %v938
    %v2587 = vpop.f32.mrb[0].mxu0
    %v2588 = vadd.f32 %v1206, %v2587
    %v2589 = vpop.f32.mrb[0].mxu0
    %v2590 = vadd.f32 %v1210, %v2589
    %v2591 = vpop.f32.mrb[0].mxu0
    %v2592 = vadd.f32 %v1206, %v2591
    %v2593 = vpop.f32.mrb[0].mxu0
    %v2594 = vadd.f32 %v1210, %v2593
    %2595 = vdwg.mxu0
    %2596 = vmatprep.subr.bf16.mxu0 %v2140
    %2597 = vmatpush1.bf16.msra.mxu0 %v2139
    %2598 = vmatprep.subr.bf16.mxu0 %v2148
    %2599 = vmatpush1.bf16.msra.mxu0 %v2147
    %2600 = vmatprep.subr.bf16.mxu0 %v2156
    %2601 = vmatpush1.bf16.msra.mxu0 %v2155
    %2602 = vmatprep.subr.bf16.mxu0 %v2164
    %2603 = vmatpush1.bf16.msra.mxu0 %v2163
    %2604 = vmatprep.subr.bf16.mxu0 %v2172
    %2605 = vmatpush1.bf16.msra.mxu0 %v2171
    %2606 = vmatprep.subr.bf16.mxu0 %v2180
    %2607 = vmatpush1.bf16.msra.mxu0 %v2179
    %2608 = vmatprep.subr.bf16.mxu0 %v2188
    %2609 = vmatpush1.bf16.msra.mxu0 %v2187
    %2610 = vmatprep.subr.bf16.mxu0 %v2196
    %2611 = vmatpush1.bf16.msra.mxu0 %v2195
    %2612 = vmatprep.subr.bf16.mxu0 %v2204
    %2613 = vmatpush1.bf16.msra.mxu0 %v2203
    %2614 = vmatprep.subr.bf16.mxu0 %v2212
    %2615 = vmatpush1.bf16.msra.mxu0 %v2211
    %2616 = vmatprep.subr.bf16.mxu0 %v2220
    %2617 = vmatpush1.bf16.msra.mxu0 %v2219
    %2618 = vmatprep.subr.bf16.mxu0 %v2228
    %2619 = vmatpush1.bf16.msra.mxu0 %v2227
    %2620 = vmatprep.subr.bf16.mxu0 %v2236
    %2621 = vmatpush1.bf16.msra.mxu0 %v2235
    %2622 = vmatprep.subr.bf16.mxu0 %v2244
    %2623 = vmatpush1.bf16.msra.mxu0 %v2243
    %2624 = vmatprep.subr.bf16.mxu0 %v2252
    %2625 = vmatpush1.bf16.msra.mxu0 %v2251
    %2626 = vmatprep.subr.bf16.mxu0 %v2260
    %2627 = vmatpush1.bf16.msra.mxu0 %v2259
    %2628 = vmatprep.mubr.bf16.mxu0 %v929
    %2629 = vmatmul.mubr.bf16.gmra.mrb[0].mxu0 %v928
    %v2630 = vpop.f32.mrb[0].mxu0
    %v2631 = vadd.f32 %v2558, %v2630
    %v2632 = vpop.f32.mrb[0].mxu0
    %v2633 = vadd.f32 %v2560, %v2632
    %v2634 = vpop.f32.mrb[0].mxu0
    %v2635 = vadd.f32 %v2562, %v2634
    %v2636 = vpop.f32.mrb[0].mxu0
    %v2637 = vadd.f32 %v2564, %v2636
    %2638 = vmatprep.mubr.bf16.mxu0 %v933
    %2639 = vmatmul.mubr.bf16.gmra.mrb[0].mxu0 %v932
    %v2640 = vpop.f32.mrb[0].mxu0
    %v2641 = vadd.f32 %v2568, %v2640
    %v2642 = vpop.f32.mrb[0].mxu0
    %v2643 = vadd.f32 %v2570, %v2642
    %v2644 = vpop.f32.mrb[0].mxu0
    %v2645 = vadd.f32 %v2572, %v2644
    %v2646 = vpop.f32.mrb[0].mxu0
    %v2647 = vadd.f32 %v2574, %v2646
    %2648 = vmatprep.mubr.bf16.mxu0 %v937
    %2649 = vmatmul.mubr.bf16.gmra.mrb[0].mxu0 %v936
    %v2650 = vpop.f32.mrb[0].mxu0
    %v2651 = vadd.f32 %v2578, %v2650
    %v2652 = vpop.f32.mrb[0].mxu0
    %v2653 = vadd.f32 %v2580, %v2652
    %v2654 = vpop.f32.mrb[0].mxu0
    %v2655 = vadd.f32 %v2582, %v2654
    %v2656 = vpop.f32.mrb[0].mxu0
    %v2657 = vadd.f32 %v2584, %v2656
    %2658 = vmatprep.mubr.bf16.mxu0 %v941
    %2659 = vmatmul.mubr.bf16.gmra.mrb[0].mxu0 %v940
    %v2660 = vpop.f32.mrb[0].mxu0
    %v2661 = vadd.f32 %v2588, %v2660
    %v2662 = vpop.f32.mrb[0].mxu0
    %v2663 = vadd.f32 %v2590, %v2662
    %v2664 = vpop.f32.mrb[0].mxu0
    %v2665 = vadd.f32 %v2592, %v2664
    %v2666 = vpop.f32.mrb[0].mxu0
    %v2667 = vadd.f32 %v2594, %v2666
    %2668 = vdwg.mxu0
    %2669 = vmatprep.subr.bf16.mxu0 %v2014
    %2670 = vmatpush1.bf16.msra.mxu0 %v2013
    %2671 = vmatprep.subr.bf16.mxu0 %v2022
    %2672 = vmatpush1.bf16.msra.mxu0 %v2021
    %2673 = vmatprep.subr.bf16.mxu0 %v2030
    %2674 = vmatpush1.bf16.msra.mxu0 %v2029
    %2675 = vmatprep.subr.bf16.mxu0 %v2038
    %2676 = vmatpush1.bf16.msra.mxu0 %v2037
    %2677 = vmatprep.subr.bf16.mxu0 %v2046
    %2678 = vmatpush1.bf16.msra.mxu0 %v2045
    %2679 = vmatprep.subr.bf16.mxu0 %v2054
    %2680 = vmatpush1.bf16.msra.mxu0 %v2053
    %2681 = vmatprep.subr.bf16.mxu0 %v2062
    %2682 = vmatpush1.bf16.msra.mxu0 %v2061
    %2683 = vmatprep.subr.bf16.mxu0 %v2070
    %2684 = vmatpush1.bf16.msra.mxu0 %v2069
    %2685 = vmatprep.subr.bf16.mxu0 %v2078
    %2686 = vmatpush1.bf16.msra.mxu0 %v2077
    %2687 = vmatprep.subr.bf16.mxu0 %v2086
    %2688 = vmatpush1.bf16.msra.mxu0 %v2085
    %2689 = vmatprep.subr.bf16.mxu0 %v2094
    %2690 = vmatpush1.bf16.msra.mxu0 %v2093
    %2691 = vmatprep.subr.bf16.mxu0 %v2102
    %2692 = vmatpush1.bf16.msra.mxu0 %v2101
    %2693 = vmatprep.subr.bf16.mxu0 %v2110
    %2694 = vmatpush1.bf16.msra.mxu0 %v2109
    %2695 = vmatprep.subr.bf16.mxu0 %v2118
    %2696 = vmatpush1.bf16.msra.mxu0 %v2117
    %2697 = vmatprep.subr.bf16.mxu0 %v2126
    %2698 = vmatpush1.bf16.msra.mxu0 %v2125
    %2699 = vmatprep.subr.bf16.mxu0 %v2134
    %2700 = vmatpush1.bf16.msra.mxu0 %v2133
    %2701 = vmatprep.mubr.bf16.mxu0 %v927
    %2702 = vmatmul.mubr.bf16.gmra.mrb[0].mxu0 %v926
    %v2703 = vpop.f32.mrb[0].mxu0
    %v2704 = vadd.f32 %v1214, %v2703
    %v2705 = vpop.f32.mrb[0].mxu0
    %v2706 = vadd.f32 %v1218, %v2705
    %v2707 = vpop.f32.mrb[0].mxu0
    %v2708 = vadd.f32 %v1214, %v2707
    %v2709 = vpop.f32.mrb[0].mxu0
    %v2710 = vadd.f32 %v1218, %v2709
    %2711 = vmatprep.mubr.bf16.mxu0 %v931
    %2712 = vmatmul.mubr.bf16.gmra.mrb[0].mxu0 %v930
    %v2713 = vpop.f32.mrb[0].mxu0
    %v2714 = vadd.f32 %v1214, %v2713
    %v2715 = vpop.f32.mrb[0].mxu0
    %v2716 = vadd.f32 %v1218, %v2715
    %v2717 = vpop.f32.mrb[0].mxu0
    %v2718 = vadd.f32 %v1214, %v2717
    %v2719 = vpop.f32.mrb[0].mxu0
    %v2720 = vadd.f32 %v1218, %v2719
    %2721 = vmatprep.mubr.bf16.mxu0 %v935
    %2722 = vmatmul.mubr.bf16.gmra.mrb[0].mxu0 %v934
    %v2723 = vpop.f32.mrb[0].mxu0
    %v2724 = vadd.f32 %v1214, %v2723
    %v2725 = vpop.f32.mrb[0].mxu0
    %v2726 = vadd.f32 %v1218, %v2725
    %v2727 = vpop.f32.mrb[0].mxu0
    %v2728 = vadd.f32 %v1214, %v2727
    %v2729 = vpop.f32.mrb[0].mxu0
    %v2730 = vadd.f32 %v1218, %v2729
    %2731 = vmatprep.mubr.bf16.mxu0 %v939
    %2732 = vmatmul.mubr.bf16.gmra.mrb[0].mxu0 %v938
    %v2733 = vpop.f32.mrb[0].mxu0
    %v2734 = vadd.f32 %v1214, %v2733
    %v2735 = vpop.f32.mrb[0].mxu0
    %v2736 = vadd.f32 %v1218, %v2735
    %v2737 = vpop.f32.mrb[0].mxu0
    %v2738 = vadd.f32 %v1214, %v2737
    %v2739 = vpop.f32.mrb[0].mxu0
    %v2740 = vadd.f32 %v1218, %v2739
    %2741 = vdwg.mxu0
    %2742 = vmatprep.subr.bf16.mxu0 %v2142
    %2743 = vmatpush1.bf16.msra.mxu0 %v2141
    %2744 = vmatprep.subr.bf16.mxu0 %v2150
    %2745 = vmatpush1.bf16.msra.mxu0 %v2149
    %2746 = vmatprep.subr.bf16.mxu0 %v2158
    %2747 = vmatpush1.bf16.msra.mxu0 %v2157
    %2748 = vmatprep.subr.bf16.mxu0 %v2166
    %2749 = vmatpush1.bf16.msra.mxu0 %v2165
    %2750 = vmatprep.subr.bf16.mxu0 %v2174
    %2751 = vmatpush1.bf16.msra.mxu0 %v2173
    %2752 = vmatprep.subr.bf16.mxu0 %v2182
    %2753 = vmatpush1.bf16.msra.mxu0 %v2181
    %2754 = vmatprep.subr.bf16.mxu0 %v2190
    %2755 = vmatpush1.bf16.msra.mxu0 %v2189
    %2756 = vmatprep.subr.bf16.mxu0 %v2198
    %2757 = vmatpush1.bf16.msra.mxu0 %v2197
    %2758 = vmatprep.subr.bf16.mxu0 %v2206
    %2759 = vmatpush1.bf16.msra.mxu0 %v2205
    %2760 = vmatprep.subr.bf16.mxu0 %v2214
    %2761 = vmatpush1.bf16.msra.mxu0 %v2213
    %2762 = vmatprep.subr.bf16.mxu0 %v2222
    %2763 = vmatpush1.bf16.msra.mxu0 %v2221
    %2764 = vmatprep.subr.bf16.mxu0 %v2230
    %2765 = vmatpush1.bf16.msra.mxu0 %v2229
    %2766 = vmatprep.subr.bf16.mxu0 %v2238
    %2767 = vmatpush1.bf16.msra.mxu0 %v2237
    %2768 = vmatprep.subr.bf16.mxu0 %v2246
    %2769 = vmatpush1.bf16.msra.mxu0 %v2245
    %2770 = vmatprep.subr.bf16.mxu0 %v2254
    %2771 = vmatpush1.bf16.msra.mxu0 %v2253
    %2772 = vmatprep.subr.bf16.mxu0 %v2262
    %2773 = vmatpush1.bf16.msra.mxu0 %v2261
    %2774 = vmatprep.mubr.bf16.mxu0 %v929
    %2775 = vmatmul.mubr.bf16.gmra.mrb[0].mxu0 %v928
    %v2776 = vpop.f32.mrb[0].mxu0
    %v2777 = vadd.f32 %v2704, %v2776
    %v2778 = vpop.f32.mrb[0].mxu0
    %v2779 = vadd.f32 %v2706, %v2778
    %v2780 = vpop.f32.mrb[0].mxu0
    %v2781 = vadd.f32 %v2708, %v2780
    %v2782 = vpop.f32.mrb[0].mxu0
    %v2783 = vadd.f32 %v2710, %v2782
    %2784 = vmatprep.mubr.bf16.mxu0 %v933
    %2785 = vmatmul.mubr.bf16.gmra.mrb[0].mxu0 %v932
    %v2786 = vpop.f32.mrb[0].mxu0
    %v2787 = vadd.f32 %v2714, %v2786
    %v2788 = vpop.f32.mrb[0].mxu0
    %v2789 = vadd.f32 %v2716, %v2788
    %v2790 = vpop.f32.mrb[0].mxu0
    %v2791 = vadd.f32 %v2718, %v2790
    %v2792 = vpop.f32.mrb[0].mxu0
    %v2793 = vadd.f32 %v2720, %v2792
    %2794 = vmatprep.mubr.bf16.mxu0 %v937
    %2795 = vmatmul.mubr.bf16.gmra.mrb[0].mxu0 %v936
    %v2796 = vpop.f32.mrb[0].mxu0
    %v2797 = vadd.f32 %v2724, %v2796
    %v2798 = vpop.f32.mrb[0].mxu0
    %v2799 = vadd.f32 %v2726, %v2798
    %v2800 = vpop.f32.mrb[0].mxu0
    %v2801 = vadd.f32 %v2728, %v2800
    %v2802 = vpop.f32.mrb[0].mxu0
    %v2803 = vadd.f32 %v2730, %v2802
    %2804 = vmatprep.mubr.bf16.mxu0 %v941
    %2805 = vmatmul.mubr.bf16.gmra.mrb[0].mxu0 %v940
    %v2806 = vpop.f32.mrb[0].mxu0
    %v2807 = vadd.f32 %v2734, %v2806
    %v2808 = vpop.f32.mrb[0].mxu0
    %v2809 = vadd.f32 %v2736, %v2808
    %v2810 = vpop.f32.mrb[0].mxu0
    %v2811 = vadd.f32 %v2738, %v2810
    %v2812 = vpop.f32.mrb[0].mxu0
    %v2813 = vadd.f32 %v2740, %v2812
    %2814 = vdwg.mxu0
    %2815 = vmatprep.subr.bf16.mxu0 %v2016
    %2816 = vmatpush1.bf16.msra.mxu0 %v2015
    %2817 = vmatprep.subr.bf16.mxu0 %v2024
    %2818 = vmatpush1.bf16.msra.mxu0 %v2023
    %2819 = vmatprep.subr.bf16.mxu0 %v2032
    %2820 = vmatpush1.bf16.msra.mxu0 %v2031
    %2821 = vmatprep.subr.bf16.mxu0 %v2040
    %2822 = vmatpush1.bf16.msra.mxu0 %v2039
    %2823 = vmatprep.subr.bf16.mxu0 %v2048
    %2824 = vmatpush1.bf16.msra.mxu0 %v2047
    %2825 = vmatprep.subr.bf16.mxu0 %v2056
    %2826 = vmatpush1.bf16.msra.mxu0 %v2055
    %2827 = vmatprep.subr.bf16.mxu0 %v2064
    %2828 = vmatpush1.bf16.msra.mxu0 %v2063
    %2829 = vmatprep.subr.bf16.mxu0 %v2072
    %2830 = vmatpush1.bf16.msra.mxu0 %v2071
    %2831 = vmatprep.subr.bf16.mxu0 %v2080
    %2832 = vmatpush1.bf16.msra.mxu0 %v2079
    %2833 = vmatprep.subr.bf16.mxu0 %v2088
    %2834 = vmatpush1.bf16.msra.mxu0 %v2087
    %2835 = vmatprep.subr.bf16.mxu0 %v2096
    %2836 = vmatpush1.bf16.msra.mxu0 %v2095
    %2837 = vmatprep.subr.bf16.mxu0 %v2104
    %2838 = vmatpush1.bf16.msra.mxu0 %v2103
    %2839 = vmatprep.subr.bf16.mxu0 %v2112
    %2840 = vmatpush1.bf16.msra.mxu0 %v2111
    %2841 = vmatprep.subr.bf16.mxu0 %v2120
    %2842 = vmatpush1.bf16.msra.mxu0 %v2119
    %2843 = vmatprep.subr.bf16.mxu0 %v2128
    %2844 = vmatpush1.bf16.msra.mxu0 %v2127
    %2845 = vmatprep.subr.bf16.mxu0 %v2136
    %2846 = vmatpush1.bf16.msra.mxu0 %v2135
    %2847 = vmatprep.mubr.bf16.mxu0 %v927
    %2848 = vmatmul.mubr.bf16.gmra.mrb[0].mxu0 %v926
    %v2849 = vpop.f32.mrb[0].mxu0
    %v2850 = vadd.f32 %v1222, %v2849
    %v2851 = vpop.f32.mrb[0].mxu0
    %v2852 = vadd.f32 %v1226, %v2851
    %v2853 = vpop.f32.mrb[0].mxu0
    %v2854 = vadd.f32 %v1222, %v2853
    %v2855 = vpop.f32.mrb[0].mxu0
    %v2856 = vadd.f32 %v1226, %v2855
    %2857 = vmatprep.mubr.bf16.mxu0 %v931
    %2858 = vmatmul.mubr.bf16.gmra.mrb[0].mxu0 %v930
    %v2859 = vpop.f32.mrb[0].mxu0
    %v2860 = vadd.f32 %v1222, %v2859
    %v2861 = vpop.f32.mrb[0].mxu0
    %v2862 = vadd.f32 %v1226, %v2861
    %v2863 = vpop.f32.mrb[0].mxu0
    %v2864 = vadd.f32 %v1222, %v2863
    %v2865 = vpop.f32.mrb[0].mxu0
    %v2866 = vadd.f32 %v1226, %v2865
    %2867 = vmatprep.mubr.bf16.mxu0 %v935
    %2868 = vmatmul.mubr.bf16.gmra.mrb[0].mxu0 %v934
    %v2869 = vpop.f32.mrb[0].mxu0
    %v2870 = vadd.f32 %v1222, %v2869
    %v2871 = vpop.f32.mrb[0].mxu0
    %v2872 = vadd.f32 %v1226, %v2871
    %v2873 = vpop.f32.mrb[0].mxu0
    %v2874 = vadd.f32 %v1222, %v2873
    %v2875 = vpop.f32.mrb[0].mxu0
    %v2876 = vadd.f32 %v1226, %v2875
    %2877 = vmatprep.mubr.bf16.mxu0 %v939
    %2878 = vmatmul.mubr.bf16.gmra.mrb[0].mxu0 %v938
    %v2879 = vpop.f32.mrb[0].mxu0
    %v2880 = vadd.f32 %v1222, %v2879
    %v2881 = vpop.f32.mrb[0].mxu0
    %v2882 = vadd.f32 %v1226, %v2881
    %v2883 = vpop.f32.mrb[0].mxu0
    %v2884 = vadd.f32 %v1222, %v2883
    %v2885 = vpop.f32.mrb[0].mxu0
    %v2886 = vadd.f32 %v1226, %v2885
    %2887 = vdwg.mxu0
    %2888 = vmatprep.subr.bf16.mxu0 %v2144
    %2889 = vmatpush1.bf16.msra.mxu0 %v2143
    %2890 = vmatprep.subr.bf16.mxu0 %v2152
    %2891 = vmatpush1.bf16.msra.mxu0 %v2151
    %2892 = vmatprep.subr.bf16.mxu0 %v2160
    %2893 = vmatpush1.bf16.msra.mxu0 %v2159
    %2894 = vmatprep.subr.bf16.mxu0 %v2168
    %2895 = vmatpush1.bf16.msra.mxu0 %v2167
    %2896 = vmatprep.subr.bf16.mxu0 %v2176
    %2897 = vmatpush1.bf16.msra.mxu0 %v2175
    %2898 = vmatprep.subr.bf16.mxu0 %v2184
    %2899 = vmatpush1.bf16.msra.mxu0 %v2183
    %2900 = vmatprep.subr.bf16.mxu0 %v2192
    %2901 = vmatpush1.bf16.msra.mxu0 %v2191
    %2902 = vmatprep.subr.bf16.mxu0 %v2200
    %2903 = vmatpush1.bf16.msra.mxu0 %v2199
    %2904 = vmatprep.subr.bf16.mxu0 %v2208
    %2905 = vmatpush1.bf16.msra.mxu0 %v2207
    %2906 = vmatprep.subr.bf16.mxu0 %v2216
    %2907 = vmatpush1.bf16.msra.mxu0 %v2215
    %2908 = vmatprep.subr.bf16.mxu0 %v2224
    %2909 = vmatpush1.bf16.msra.mxu0 %v2223
    %2910 = vmatprep.subr.bf16.mxu0 %v2232
    %2911 = vmatpush1.bf16.msra.mxu0 %v2231
    %2912 = vmatprep.subr.bf16.mxu0 %v2240
    %2913 = vmatpush1.bf16.msra.mxu0 %v2239
    %2914 = vmatprep.subr.bf16.mxu0 %v2248
    %2915 = vmatpush1.bf16.msra.mxu0 %v2247
    %2916 = vmatprep.subr.bf16.mxu0 %v2256
    %2917 = vmatpush1.bf16.msra.mxu0 %v2255
    %2918 = vmatprep.subr.bf16.mxu0 %v2264
    %2919 = vmatpush1.bf16.msra.mxu0 %v2263
    %2920 = vmatprep.mubr.bf16.mxu0 %v929
    %2921 = vmatmul.mubr.bf16.gmra.mrb[0].mxu0 %v928
    %v2922 = vpop.f32.mrb[0].mxu0
    %v2923 = vadd.f32 %v2850, %v2922
    %v2924 = vpop.f32.mrb[0].mxu0
    %v2925 = vadd.f32 %v2852, %v2924
    %v2926 = vpop.f32.mrb[0].mxu0
    %v2927 = vadd.f32 %v2854, %v2926
    %v2928 = vpop.f32.mrb[0].mxu0
    %v2929 = vadd.f32 %v2856, %v2928
    %2930 = vmatprep.mubr.bf16.mxu0 %v933
    %2931 = vmatmul.mubr.bf16.gmra.mrb[0].mxu0 %v932
    %v2932 = vpop.f32.mrb[0].mxu0
    %v2933 = vadd.f32 %v2860, %v2932
    %v2934 = vpop.f32.mrb[0].mxu0
    %v2935 = vadd.f32 %v2862, %v2934
    %v2936 = vpop.f32.mrb[0].mxu0
    %v2937 = vadd.f32 %v2864, %v2936
    %v2938 = vpop.f32.mrb[0].mxu0
    %v2939 = vadd.f32 %v2866, %v2938
    %2940 = vmatprep.mubr.bf16.mxu0 %v937
    %2941 = vmatmul.mubr.bf16.gmra.mrb[0].mxu0 %v936
    %v2942 = vpop.f32.mrb[0].mxu0
    %v2943 = vadd.f32 %v2870, %v2942
    %v2944 = vpop.f32.mrb[0].mxu0
    %v2945 = vadd.f32 %v2872, %v2944
    %v2946 = vpop.f32.mrb[0].mxu0
    %v2947 = vadd.f32 %v2874, %v2946
    %v2948 = vpop.f32.mrb[0].mxu0
    %v2949 = vadd.f32 %v2876, %v2948
    %2950 = vmatprep.mubr.bf16.mxu0 %v941
    %2951 = vmatmul.mubr.bf16.gmra.mrb[0].mxu0 %v940
    %v2952 = vpop.f32.mrb[0].mxu0
    %v2953 = vadd.f32 %v2880, %v2952
    %v2954 = vpop.f32.mrb[0].mxu0
    %v2955 = vadd.f32 %v2882, %v2954
    %v2956 = vpop.f32.mrb[0].mxu0
    %v2957 = vadd.f32 %v2884, %v2956
    %v2958 = vpop.f32.mrb[0].mxu0
    %v2959 = vadd.f32 %v2886, %v2958
    %2960 = vdwg.mxu0
    %2961 = vmatprep.subr.bf16.mxu0 %v2018
    %2962 = vmatpush1.bf16.msra.mxu0 %v2017
    %2963 = vmatprep.subr.bf16.mxu0 %v2026
    %2964 = vmatpush1.bf16.msra.mxu0 %v2025
    %2965 = vmatprep.subr.bf16.mxu0 %v2034
    %2966 = vmatpush1.bf16.msra.mxu0 %v2033
    %2967 = vmatprep.subr.bf16.mxu0 %v2042
    %2968 = vmatpush1.bf16.msra.mxu0 %v2041
    %2969 = vmatprep.subr.bf16.mxu0 %v2050
    %2970 = vmatpush1.bf16.msra.mxu0 %v2049
    %2971 = vmatprep.subr.bf16.mxu0 %v2058
    %2972 = vmatpush1.bf16.msra.mxu0 %v2057
    %2973 = vmatprep.subr.bf16.mxu0 %v2066
    %2974 = vmatpush1.bf16.msra.mxu0 %v2065
    %2975 = vmatprep.subr.bf16.mxu0 %v2074
    %2976 = vmatpush1.bf16.msra.mxu0 %v2073
    %2977 = vmatprep.subr.bf16.mxu0 %v2082
    %2978 = vmatpush1.bf16.msra.mxu0 %v2081
    %2979 = vmatprep.subr.bf16.mxu0 %v2090
    %2980 = vmatpush1.bf16.msra.mxu0 %v2089
    %2981 = vmatprep.subr.bf16.mxu0 %v2098
    %2982 = vmatpush1.bf16.msra.mxu0 %v2097
    %2983 = vmatprep.subr.bf16.mxu0 %v2106
    %2984 = vmatpush1.bf16.msra.mxu0 %v2105
    %2985 = vmatprep.subr.bf16.mxu0 %v2114
    %2986 = vmatpush1.bf16.msra.mxu0 %v2113
    %2987 = vmatprep.subr.bf16.mxu0 %v2122
    %2988 = vmatpush1.bf16.msra.mxu0 %v2121
    %2989 = vmatprep.subr.bf16.mxu0 %v2130
    %2990 = vmatpush1.bf16.msra.mxu0 %v2129
    %2991 = vmatprep.subr.bf16.mxu0 %v2138
    %2992 = vmatpush1.bf16.msra.mxu0 %v2137
    %2993 = vmatprep.mubr.bf16.mxu0 %v927
    %2994 = vmatmul.mubr.bf16.gmra.mrb[0].mxu0 %v926
    %v2995 = vpop.f32.mrb[0].mxu0
    %v2996 = vadd.f32 %v1230, %v2995
    %v2997 = vpop.f32.mrb[0].mxu0
    %v2998 = vadd.f32 %v1234, %v2997
    %v2999 = vpop.f32.mrb[0].mxu0
    %v3000 = vadd.f32 %v1230, %v2999
    %v3001 = vpop.f32.mrb[0].mxu0
    %v3002 = vadd.f32 %v1234, %v3001
    %3003 = vmatprep.mubr.bf16.mxu0 %v931
    %3004 = vmatmul.mubr.bf16.gmra.mrb[0].mxu0 %v930
    %v3005 = vpop.f32.mrb[0].mxu0
    %v3006 = vadd.f32 %v1230, %v3005
    %v3007 = vpop.f32.mrb[0].mxu0
    %v3008 = vadd.f32 %v1234, %v3007
    %v3009 = vpop.f32.mrb[0].mxu0
    %v3010 = vadd.f32 %v1230, %v3009
    %v3011 = vpop.f32.mrb[0].mxu0
    %v3012 = vadd.f32 %v1234, %v3011
    %3013 = vmatprep.mubr.bf16.mxu0 %v935
    %3014 = vmatmul.mubr.bf16.gmra.mrb[0].mxu0 %v934
    %v3015 = vpop.f32.mrb[0].mxu0
    %v3016 = vadd.f32 %v1230, %v3015
    %v3017 = vpop.f32.mrb[0].mxu0
    %v3018 = vadd.f32 %v1234, %v3017
    %v3019 = vpop.f32.mrb[0].mxu0
    %v3020 = vadd.f32 %v1230, %v3019
    %v3021 = vpop.f32.mrb[0].mxu0
    %v3022 = vadd.f32 %v1234, %v3021
    %3023 = vmatprep.mubr.bf16.mxu0 %v939
    %3024 = vmatmul.mubr.bf16.gmra.mrb[0].mxu0 %v938
    %v3025 = vpop.f32.mrb[0].mxu0
    %v3026 = vadd.f32 %v1230, %v3025
    %v3027 = vpop.f32.mrb[0].mxu0
    %v3028 = vadd.f32 %v1234, %v3027
    %v3029 = vpop.f32.mrb[0].mxu0
    %v3030 = vadd.f32 %v1230, %v3029
    %v3031 = vpop.f32.mrb[0].mxu0
    %v3032 = vadd.f32 %v1234, %v3031
    %3033 = vdwg.mxu0
    %3034 = vmatprep.subr.bf16.mxu0 %v2146
    %3035 = vmatpush1.bf16.msra.mxu0 %v2145
    %3036 = vmatprep.subr.bf16.mxu0 %v2154
    %3037 = vmatpush1.bf16.msra.mxu0 %v2153
    %3038 = vmatprep.subr.bf16.mxu0 %v2162
    %3039 = vmatpush1.bf16.msra.mxu0 %v2161
    %3040 = vmatprep.subr.bf16.mxu0 %v2170
    %3041 = vmatpush1.bf16.msra.mxu0 %v2169
    %3042 = vmatprep.subr.bf16.mxu0 %v2178
    %3043 = vmatpush1.bf16.msra.mxu0 %v2177
    %3044 = vmatprep.subr.bf16.mxu0 %v2186
    %3045 = vmatpush1.bf16.msra.mxu0 %v2185
    %3046 = vmatprep.subr.bf16.mxu0 %v2194
    %3047 = vmatpush1.bf16.msra.mxu0 %v2193
    %3048 = vmatprep.subr.bf16.mxu0 %v2202
    %3049 = vmatpush1.bf16.msra.mxu0 %v2201
    %3050 = vmatprep.subr.bf16.mxu0 %v2210
    %3051 = vmatpush1.bf16.msra.mxu0 %v2209
    %3052 = vmatprep.subr.bf16.mxu0 %v2218
    %3053 = vmatpush1.bf16.msra.mxu0 %v2217
    %3054 = vmatprep.subr.bf16.mxu0 %v2226
    %3055 = vmatpush1.bf16.msra.mxu0 %v2225
    %3056 = vmatprep.subr.bf16.mxu0 %v2234
    %3057 = vmatpush1.bf16.msra.mxu0 %v2233
    %3058 = vmatprep.subr.bf16.mxu0 %v2242
    %3059 = vmatpush1.bf16.msra.mxu0 %v2241
    %3060 = vmatprep.subr.bf16.mxu0 %v2250
    %3061 = vmatpush1.bf16.msra.mxu0 %v2249
    %3062 = vmatprep.subr.bf16.mxu0 %v2258
    %3063 = vmatpush1.bf16.msra.mxu0 %v2257
    %3064 = vmatprep.subr.bf16.mxu0 %v2266
    %3065 = vmatpush1.bf16.msra.mxu0 %v2265
    %3066 = vmatprep.mubr.bf16.mxu0 %v929
    %3067 = vmatmul.mubr.bf16.gmra.mrb[0].mxu0 %v928
    %v3068 = vpop.f32.mrb[0].mxu0
    %v3069 = vadd.f32 %v2996, %v3068
    %v3070 = vpop.f32.mrb[0].mxu0
    %v3071 = vadd.f32 %v2998, %v3070
    %v3072 = vpop.f32.mrb[0].mxu0
    %v3073 = vadd.f32 %v3000, %v3072
    %v3074 = vpop.f32.mrb[0].mxu0
    %v3075 = vadd.f32 %v3002, %v3074
    %3076 = vmatprep.mubr.bf16.mxu0 %v933
    %3077 = vmatmul.mubr.bf16.gmra.mrb[0].mxu0 %v932
    %v3078 = vpop.f32.mrb[0].mxu0
    %v3079 = vadd.f32 %v3006, %v3078
    %v3080 = vpop.f32.mrb[0].mxu0
    %v3081 = vadd.f32 %v3008, %v3080
    %v3082 = vpop.f32.mrb[0].mxu0
    %v3083 = vadd.f32 %v3010, %v3082
    %v3084 = vpop.f32.mrb[0].mxu0
    %v3085 = vadd.f32 %v3012, %v3084
    %3086 = vmatprep.mubr.bf16.mxu0 %v937
    %3087 = vmatmul.mubr.bf16.gmra.mrb[0].mxu0 %v936
    %v3088 = vpop.f32.mrb[0].mxu0
    %v3089 = vadd.f32 %v3016, %v3088
    %v3090 = vpop.f32.mrb[0].mxu0
    %v3091 = vadd.f32 %v3018, %v3090
    %v3092 = vpop.f32.mrb[0].mxu0
    %v3093 = vadd.f32 %v3020, %v3092
    %v3094 = vpop.f32.mrb[0].mxu0
    %v3095 = vadd.f32 %v3022, %v3094
    %3096 = vmatprep.mubr.bf16.mxu0 %v941
    %3097 = vmatmul.mubr.bf16.gmra.mrb[0].mxu0 %v940
    %v3098 = vpop.f32.mrb[0].mxu0
    %v3099 = vadd.f32 %v3026, %v3098
    %v3100 = vpop.f32.mrb[0].mxu0
    %v3101 = vadd.f32 %v3028, %v3100
    %v3102 = vpop.f32.mrb[0].mxu0
    %v3103 = vadd.f32 %v3030, %v3102
    %v3104 = vpop.f32.mrb[0].mxu0
    %v3105 = vadd.f32 %v3032, %v3104
    %3106 = vdwg.mxu0
    %vm3107 = vcmp.ge.f32.partialorder %v2631, 0.0
    %vm3108 = vcmp.ge.f32.partialorder %v2633, 0.0
    %vm3109 = vcmp.ge.f32.partialorder %v2777, 0.0
    %vm3110 = vcmp.ge.f32.partialorder %v2779, 0.0
    %vm3111 = vcmp.ge.f32.partialorder %v2923, 0.0
    %vm3112 = vcmp.ge.f32.partialorder %v2925, 0.0
    %vm3113 = vcmp.ge.f32.partialorder %v3069, 0.0
    %vm3114 = vcmp.ge.f32.partialorder %v3071, 0.0
    %vm3115 = vcmp.ge.f32.partialorder %v2635, 0.0
    %vm3116 = vcmp.ge.f32.partialorder %v2637, 0.0
    %vm3117 = vcmp.ge.f32.partialorder %v2781, 0.0
    %vm3118 = vcmp.ge.f32.partialorder %v2783, 0.0
    %vm3119 = vcmp.ge.f32.partialorder %v2927, 0.0
    %vm3120 = vcmp.ge.f32.partialorder %v2929, 0.0
    %vm3121 = vcmp.ge.f32.partialorder %v3073, 0.0
    %vm3122 = vcmp.ge.f32.partialorder %v3075, 0.0
    %vm3123 = vcmp.ge.f32.partialorder %v2641, 0.0
    %vm3124 = vcmp.ge.f32.partialorder %v2643, 0.0
    %vm3125 = vcmp.ge.f32.partialorder %v2787, 0.0
    %vm3126 = vcmp.ge.f32.partialorder %v2789, 0.0
    %vm3127 = vcmp.ge.f32.partialorder %v2933, 0.0
    %vm3128 = vcmp.ge.f32.partialorder %v2935, 0.0
    %vm3129 = vcmp.ge.f32.partialorder %v3079, 0.0
    %vm3130 = vcmp.ge.f32.partialorder %v3081, 0.0
    %vm3131 = vcmp.ge.f32.partialorder %v2645, 0.0
    %vm3132 = vcmp.ge.f32.partialorder %v2647, 0.0
    %vm3133 = vcmp.ge.f32.partialorder %v2791, 0.0
    %vm3134 = vcmp.ge.f32.partialorder %v2793, 0.0
    %vm3135 = vcmp.ge.f32.partialorder %v2937, 0.0
    %vm3136 = vcmp.ge.f32.partialorder %v2939, 0.0
    %vm3137 = vcmp.ge.f32.partialorder %v3083, 0.0
    %vm3138 = vcmp.ge.f32.partialorder %v3085, 0.0
    %vm3139 = vcmp.ge.f32.partialorder %v2651, 0.0
    %vm3140 = vcmp.ge.f32.partialorder %v2653, 0.0
    %vm3141 = vcmp.ge.f32.partialorder %v2797, 0.0
    %vm3142 = vcmp.ge.f32.partialorder %v2799, 0.0
    %vm3143 = vcmp.ge.f32.partialorder %v2943, 0.0
    %vm3144 = vcmp.ge.f32.partialorder %v2945, 0.0
    %vm3145 = vcmp.ge.f32.partialorder %v3089, 0.0
    %vm3146 = vcmp.ge.f32.partialorder %v3091, 0.0
    %vm3147 = vcmp.ge.f32.partialorder %v2655, 0.0
    %vm3148 = vcmp.ge.f32.partialorder %v2657, 0.0
    %vm3149 = vcmp.ge.f32.partialorder %v2801, 0.0
    %vm3150 = vcmp.ge.f32.partialorder %v2803, 0.0
    %vm3151 = vcmp.ge.f32.partialorder %v2947, 0.0
    %vm3152 = vcmp.ge.f32.partialorder %v2949, 0.0
    %vm3153 = vcmp.ge.f32.partialorder %v3093, 0.0
    %vm3154 = vcmp.ge.f32.partialorder %v3095, 0.0
    %vm3155 = vcmp.ge.f32.partialorder %v2661, 0.0
    %vm3156 = vcmp.ge.f32.partialorder %v2663, 0.0
    %vm3157 = vcmp.ge.f32.partialorder %v2807, 0.0
    %vm3158 = vcmp.ge.f32.partialorder %v2809, 0.0
    %vm3159 = vcmp.ge.f32.partialorder %v2953, 0.0
    %vm3160 = vcmp.ge.f32.partialorder %v2955, 0.0
    %vm3161 = vcmp.ge.f32.partialorder %v3099, 0.0
    %vm3162 = vcmp.ge.f32.partialorder %v3101, 0.0
    %vm3163 = vcmp.ge.f32.partialorder %v2665, 0.0
    %vm3164 = vcmp.ge.f32.partialorder %v2667, 0.0
    %vm3165 = vcmp.ge.f32.partialorder %v2811, 0.0
    %vm3166 = vcmp.ge.f32.partialorder %v2813, 0.0
    %vm3167 = vcmp.ge.f32.partialorder %v2957, 0.0
    %vm3168 = vcmp.ge.f32.partialorder %v2959, 0.0
    %vm3169 = vcmp.ge.f32.partialorder %v3103, 0.0
    %vm3170 = vcmp.ge.f32.partialorder %v3105, 0.0
    %v3171 = vmul.f32 %v2631, 0.01
    %v3172 = vmul.f32 %v2633, 0.01
    %v3173 = vmul.f32 %v2777, 0.01
    %v3174 = vmul.f32 %v2779, 0.01
    %v3175 = vmul.f32 %v2923, 0.01
    %v3176 = vmul.f32 %v2925, 0.01
    %v3177 = vmul.f32 %v3069, 0.01
    %v3178 = vmul.f32 %v3071, 0.01
    %v3179 = vmul.f32 %v2635, 0.01
    %v3180 = vmul.f32 %v2637, 0.01
    %v3181 = vmul.f32 %v2781, 0.01
    %v3182 = vmul.f32 %v2783, 0.01
    %v3183 = vmul.f32 %v2927, 0.01
    %v3184 = vmul.f32 %v2929, 0.01
    %v3185 = vmul.f32 %v3073, 0.01
    %v3186 = vmul.f32 %v3075, 0.01
    %v3187 = vmul.f32 %v2641, 0.01
    %v3188 = vmul.f32 %v2643, 0.01
    %v3189 = vmul.f32 %v2787, 0.01
    %v3190 = vmul.f32 %v2789, 0.01
    %v3191 = vmul.f32 %v2933, 0.01
    %v3192 = vmul.f32 %v2935, 0.01
    %v3193 = vmul.f32 %v3079, 0.01
    %v3194 = vmul.f32 %v3081, 0.01
    %v3195 = vmul.f32 %v2645, 0.01
    %v3196 = vmul.f32 %v2647, 0.01
    %v3197 = vmul.f32 %v2791, 0.01
    %v3198 = vmul.f32 %v2793, 0.01
    %v3199 = vmul.f32 %v2937, 0.01
    %v3200 = vmul.f32 %v2939, 0.01
    %v3201 = vmul.f32 %v3083, 0.01
    %v3202 = vmul.f32 %v3085, 0.01
    %v3203 = vmul.f32 %v2651, 0.01
    %v3204 = vmul.f32 %v2653, 0.01
    %v3205 = vmul.f32 %v2797, 0.01
    %v3206 = vmul.f32 %v2799, 0.01
    %v3207 = vmul.f32 %v2943, 0.01
    %v3208 = vmul.f32 %v2945, 0.01
    %v3209 = vmul.f32 %v3089, 0.01
    %v3210 = vmul.f32 %v3091, 0.01
    %v3211 = vmul.f32 %v2655, 0.01
    %v3212 = vmul.f32 %v2657, 0.01
    %v3213 = vmul.f32 %v2801, 0.01
    %v3214 = vmul.f32 %v2803, 0.01
    %v3215 = vmul.f32 %v2947, 0.01
    %v3216 = vmul.f32 %v2949, 0.01
    %v3217 = vmul.f32 %v3093, 0.01
    %v3218 = vmul.f32 %v3095, 0.01
    %v3219 = vmul.f32 %v2661, 0.01
    %v3220 = vmul.f32 %v2663, 0.01
    %v3221 = vmul.f32 %v2807, 0.01
    %v3222 = vmul.f32 %v2809, 0.01
    %v3223 = vmul.f32 %v2953, 0.01
    %v3224 = vmul.f32 %v2955, 0.01
    %v3225 = vmul.f32 %v3099, 0.01
    %v3226 = vmul.f32 %v3101, 0.01
    %v3227 = vmul.f32 %v2665, 0.01
    %v3228 = vmul.f32 %v2667, 0.01
    %v3229 = vmul.f32 %v2811, 0.01
    %v3230 = vmul.f32 %v2813, 0.01
    %v3231 = vmul.f32 %v2957, 0.01
    %v3232 = vmul.f32 %v2959, 0.01
    %v3233 = vmul.f32 %v3103, 0.01
    %v3234 = vmul.f32 %v3105, 0.01
    %v3235 = vsel %vm3107, %v2631, %v3171
    %v3236 = vsel %vm3108, %v2633, %v3172
    %v3237 = vsel %vm3109, %v2777, %v3173
    %v3238 = vsel %vm3110, %v2779, %v3174
    %v3239 = vsel %vm3111, %v2923, %v3175
    %v3240 = vsel %vm3112, %v2925, %v3176
    %v3241 = vsel %vm3113, %v3069, %v3177
    %v3242 = vsel %vm3114, %v3071, %v3178
    %v3243 = vsel %vm3115, %v2635, %v3179
    %v3244 = vsel %vm3116, %v2637, %v3180
    %v3245 = vsel %vm3117, %v2781, %v3181
    %v3246 = vsel %vm3118, %v2783, %v3182
    %v3247 = vsel %vm3119, %v2927, %v3183
    %v3248 = vsel %vm3120, %v2929, %v3184
    %v3249 = vsel %vm3121, %v3073, %v3185
    %v3250 = vsel %vm3122, %v3075, %v3186
    %v3251 = vsel %vm3123, %v2641, %v3187
    %v3252 = vsel %vm3124, %v2643, %v3188
    %v3253 = vsel %vm3125, %v2787, %v3189
    %v3254 = vsel %vm3126, %v2789, %v3190
    %v3255 = vsel %vm3127, %v2933, %v3191
    %v3256 = vsel %vm3128, %v2935, %v3192
    %v3257 = vsel %vm3129, %v3079, %v3193
    %v3258 = vsel %vm3130, %v3081, %v3194
    %v3259 = vsel %vm3131, %v2645, %v3195
    %v3260 = vsel %vm3132, %v2647, %v3196
    %v3261 = vsel %vm3133, %v2791, %v3197
    %v3262 = vsel %vm3134, %v2793, %v3198
    %v3263 = vsel %vm3135, %v2937, %v3199
    %v3264 = vsel %vm3136, %v2939, %v3200
    %v3265 = vsel %vm3137, %v3083, %v3201
    %v3266 = vsel %vm3138, %v3085, %v3202
    %v3267 = vsel %vm3139, %v2651, %v3203
    %v3268 = vsel %vm3140, %v2653, %v3204
    %v3269 = vsel %vm3141, %v2797, %v3205
    %v3270 = vsel %vm3142, %v2799, %v3206
    %v3271 = vsel %vm3143, %v2943, %v3207
    %v3272 = vsel %vm3144, %v2945, %v3208
    %v3273 = vsel %vm3145, %v3089, %v3209
    %v3274 = vsel %vm3146, %v3091, %v3210
    %v3275 = vsel %vm3147, %v2655, %v3211
    %v3276 = vsel %vm3148, %v2657, %v3212
    %v3277 = vsel %vm3149, %v2801, %v3213
    %v3278 = vsel %vm3150, %v2803, %v3214
    %v3279 = vsel %vm3151, %v2947, %v3215
    %v3280 = vsel %vm3152, %v2949, %v3216
    %v3281 = vsel %vm3153, %v3093, %v3217
    %v3282 = vsel %vm3154, %v3095, %v3218
    %v3283 = vsel %vm3155, %v2661, %v3219
    %v3284 = vsel %vm3156, %v2663, %v3220
    %v3285 = vsel %vm3157, %v2807, %v3221
    %v3286 = vsel %vm3158, %v2809, %v3222
    %v3287 = vsel %vm3159, %v2953, %v3223
    %v3288 = vsel %vm3160, %v2955, %v3224
    %v3289 = vsel %vm3161, %v3099, %v3225
    %v3290 = vsel %vm3162, %v3101, %v3226
    %v3291 = vsel %vm3163, %v2665, %v3227
    %v3292 = vsel %vm3164, %v2667, %v3228
    %v3293 = vsel %vm3165, %v2811, %v3229
    %v3294 = vsel %vm3166, %v2813, %v3230
    %v3295 = vsel %vm3167, %v2957, %v3231
    %v3296 = vsel %vm3168, %v2959, %v3232
    %v3297 = vsel %vm3169, %v3103, %v3233
    %v3298 = vsel %vm3170, %v3105, %v3234
    %v3299 = vpack.c.bf16 %v3243, %v3235
    %v3300 = vpack.c.bf16 %v3244, %v3236
    %v3301 = vpack.c.bf16 %v3245, %v3237
    %v3302 = vpack.c.bf16 %v3246, %v3238
    %v3303 = vpack.c.bf16 %v3247, %v3239
    %v3304 = vpack.c.bf16 %v3248, %v3240
    %v3305 = vpack.c.bf16 %v3249, %v3241
    %v3306 = vpack.c.bf16 %v3250, %v3242
    %v3307 = vpack.c.bf16 %v3259, %v3251
    %v3308 = vpack.c.bf16 %v3260, %v3252
    %v3309 = vpack.c.bf16 %v3261, %v3253
    %v3310 = vpack.c.bf16 %v3262, %v3254
    %v3311 = vpack.c.bf16 %v3263, %v3255
    %v3312 = vpack.c.bf16 %v3264, %v3256
    %v3313 = vpack.c.bf16 %v3265, %v3257
    %v3314 = vpack.c.bf16 %v3266, %v3258
    %v3315 = vpack.c.bf16 %v3275, %v3267
    %v3316 = vpack.c.bf16 %v3276, %v3268
    %v3317 = vpack.c.bf16 %v3277, %v3269
    %v3318 = vpack.c.bf16 %v3278, %v3270
    %v3319 = vpack.c.bf16 %v3279, %v3271
    %v3320 = vpack.c.bf16 %v3280, %v3272
    %v3321 = vpack.c.bf16 %v3281, %v3273
    %v3322 = vpack.c.bf16 %v3282, %v3274
    %v3323 = vpack.c.bf16 %v3291, %v3283
    %v3324 = vpack.c.bf16 %v3292, %v3284
    %v3325 = vpack.c.bf16 %v3293, %v3285
    %v3326 = vpack.c.bf16 %v3294, %v3286
    %v3327 = vpack.c.bf16 %v3295, %v3287
    %v3328 = vpack.c.bf16 %v3296, %v3288
    %v3329 = vpack.c.bf16 %v3297, %v3289
    %v3330 = vpack.c.bf16 %v3298, %v3290
    %v3331 = vunpack.i.l.bf16 %v3299
    %v3332 = vunpack.i.h.bf16 %v3299
    %v3333 = vmax.f32 %v3331, %v3332
    %v3334 = vrot.slane %v3333, 4
    %v3335 = vmax.f32 %v3333, %v3334
    %v3336 = vrot.slane %v3335, 2
    %v3337 = vmax.f32 %v3335, %v3336
    %v3338 = vrot.slane %v3337, 1
    %v3339 = vmax.f32 %v3337, %v3338
    %v3340 = vpack.i.bf16 %v3339, %v3339
    %v3341 = vunpack.i.l.bf16 %v3300
    %v3342 = vunpack.i.h.bf16 %v3300
    %v3343 = vmax.f32 %v3341, %v3342
    %v3344 = vrot.slane %v3343, 4
    %v3345 = vmax.f32 %v3343, %v3344
    %v3346 = vrot.slane %v3345, 2
    %v3347 = vmax.f32 %v3345, %v3346
    %v3348 = vrot.slane %v3347, 1
    %v3349 = vmax.f32 %v3347, %v3348
    %v3350 = vpack.i.bf16 %v3349, %v3349
    %v3351 = vunpack.i.l.bf16 %v3301
    %v3352 = vunpack.i.h.bf16 %v3301
    %v3353 = vmax.f32 %v3351, %v3352
    %v3354 = vrot.slane %v3353, 4
    %v3355 = vmax.f32 %v3353, %v3354
    %v3356 = vrot.slane %v3355, 2
    %v3357 = vmax.f32 %v3355, %v3356
    %v3358 = vrot.slane %v3357, 1
    %v3359 = vmax.f32 %v3357, %v3358
    %v3360 = vpack.i.bf16 %v3359, %v3359
    %v3361 = vunpack.i.l.bf16 %v3302
    %v3362 = vunpack.i.h.bf16 %v3302
    %v3363 = vmax.f32 %v3361, %v3362
    %v3364 = vrot.slane %v3363, 4
    %v3365 = vmax.f32 %v3363, %v3364
    %v3366 = vrot.slane %v3365, 2
    %v3367 = vmax.f32 %v3365, %v3366
    %v3368 = vrot.slane %v3367, 1
    %v3369 = vmax.f32 %v3367, %v3368
    %v3370 = vpack.i.bf16 %v3369, %v3369
    %v3371 = vunpack.i.l.bf16 %v3303
    %v3372 = vunpack.i.h.bf16 %v3303
    %v3373 = vmax.f32 %v3371, %v3372
    %v3374 = vrot.slane %v3373, 4
    %v3375 = vmax.f32 %v3373, %v3374
    %v3376 = vrot.slane %v3375, 2
    %v3377 = vmax.f32 %v3375, %v3376
    %v3378 = vrot.slane %v3377, 1
    %v3379 = vmax.f32 %v3377, %v3378
    %v3380 = vpack.i.bf16 %v3379, %v3379
    %v3381 = vunpack.i.l.bf16 %v3304
    %v3382 = vunpack.i.h.bf16 %v3304
    %v3383 = vmax.f32 %v3381, %v3382
    %v3384 = vrot.slane %v3383, 4
    %v3385 = vmax.f32 %v3383, %v3384
    %v3386 = vrot.slane %v3385, 2
    %v3387 = vmax.f32 %v3385, %v3386
    %v3388 = vrot.slane %v3387, 1
    %v3389 = vmax.f32 %v3387, %v3388
    %v3390 = vpack.i.bf16 %v3389, %v3389
    %v3391 = vunpack.i.l.bf16 %v3305
    %v3392 = vunpack.i.h.bf16 %v3305
    %v3393 = vmax.f32 %v3391, %v3392
    %v3394 = vrot.slane %v3393, 4
    %v3395 = vmax.f32 %v3393, %v3394
    %v3396 = vrot.slane %v3395, 2
    %v3397 = vmax.f32 %v3395, %v3396
    %v3398 = vrot.slane %v3397, 1
    %v3399 = vmax.f32 %v3397, %v3398
    %v3400 = vpack.i.bf16 %v3399, %v3399
    %v3401 = vunpack.i.l.bf16 %v3306
    %v3402 = vunpack.i.h.bf16 %v3306
    %v3403 = vmax.f32 %v3401, %v3402
    %v3404 = vrot.slane %v3403, 4
    %v3405 = vmax.f32 %v3403, %v3404
    %v3406 = vrot.slane %v3405, 2
    %v3407 = vmax.f32 %v3405, %v3406
    %v3408 = vrot.slane %v3407, 1
    %v3409 = vmax.f32 %v3407, %v3408
    %v3410 = vpack.i.bf16 %v3409, %v3409
    %v3411 = vunpack.i.l.bf16 %v3307
    %v3412 = vunpack.i.h.bf16 %v3307
    %v3413 = vmax.f32 %v3411, %v3412
    %v3414 = vrot.slane %v3413, 4
    %v3415 = vmax.f32 %v3413, %v3414
    %v3416 = vrot.slane %v3415, 2
    %v3417 = vmax.f32 %v3415, %v3416
    %v3418 = vrot.slane %v3417, 1
    %v3419 = vmax.f32 %v3417, %v3418
    %v3420 = vpack.i.bf16 %v3419, %v3419
    %v3421 = vunpack.i.l.bf16 %v3308
    %v3422 = vunpack.i.h.bf16 %v3308
    %v3423 = vmax.f32 %v3421, %v3422
    %v3424 = vrot.slane %v3423, 4
    %v3425 = vmax.f32 %v3423, %v3424
    %v3426 = vrot.slane %v3425, 2
    %v3427 = vmax.f32 %v3425, %v3426
    %v3428 = vrot.slane %v3427, 1
    %v3429 = vmax.f32 %v3427, %v3428
    %v3430 = vpack.i.bf16 %v3429, %v3429
    %v3431 = vunpack.i.l.bf16 %v3309
    %v3432 = vunpack.i.h.bf16 %v3309
    %v3433 = vmax.f32 %v3431, %v3432
    %v3434 = vrot.slane %v3433, 4
    %v3435 = vmax.f32 %v3433, %v3434
    %v3436 = vrot.slane %v3435, 2
    %v3437 = vmax.f32 %v3435, %v3436
    %v3438 = vrot.slane %v3437, 1
    %v3439 = vmax.f32 %v3437, %v3438
    %v3440 = vpack.i.bf16 %v3439, %v3439
    %v3441 = vunpack.i.l.bf16 %v3310
    %v3442 = vunpack.i.h.bf16 %v3310
    %v3443 = vmax.f32 %v3441, %v3442
    %v3444 = vrot.slane %v3443, 4
    %v3445 = vmax.f32 %v3443, %v3444
    %v3446 = vrot.slane %v3445, 2
    %v3447 = vmax.f32 %v3445, %v3446
    %v3448 = vrot.slane %v3447, 1
    %v3449 = vmax.f32 %v3447, %v3448
    %v3450 = vpack.i.bf16 %v3449, %v3449
    %v3451 = vunpack.i.l.bf16 %v3311
    %v3452 = vunpack.i.h.bf16 %v3311
    %v3453 = vmax.f32 %v3451, %v3452
    %v3454 = vrot.slane %v3453, 4
    %v3455 = vmax.f32 %v3453, %v3454
    %v3456 = vrot.slane %v3455, 2
    %v3457 = vmax.f32 %v3455, %v3456
    %v3458 = vrot.slane %v3457, 1
    %v3459 = vmax.f32 %v3457, %v3458
    %v3460 = vpack.i.bf16 %v3459, %v3459
    %v3461 = vunpack.i.l.bf16 %v3312
    %v3462 = vunpack.i.h.bf16 %v3312
    %v3463 = vmax.f32 %v3461, %v3462
    %v3464 = vrot.slane %v3463, 4
    %v3465 = vmax.f32 %v3463, %v3464
    %v3466 = vrot.slane %v3465, 2
    %v3467 = vmax.f32 %v3465, %v3466
    %v3468 = vrot.slane %v3467, 1
    %v3469 = vmax.f32 %v3467, %v3468
    %v3470 = vpack.i.bf16 %v3469, %v3469
    %v3471 = vunpack.i.l.bf16 %v3313
    %v3472 = vunpack.i.h.bf16 %v3313
    %v3473 = vmax.f32 %v3471, %v3472
    %v3474 = vrot.slane %v3473, 4
    %v3475 = vmax.f32 %v3473, %v3474
    %v3476 = vrot.slane %v3475, 2
    %v3477 = vmax.f32 %v3475, %v3476
    %v3478 = vrot.slane %v3477, 1
    %v3479 = vmax.f32 %v3477, %v3478
    %v3480 = vpack.i.bf16 %v3479, %v3479
    %v3481 = vunpack.i.l.bf16 %v3314
    %v3482 = vunpack.i.h.bf16 %v3314
    %v3483 = vmax.f32 %v3481, %v3482
    %v3484 = vrot.slane %v3483, 4
    %v3485 = vmax.f32 %v3483, %v3484
    %v3486 = vrot.slane %v3485, 2
    %v3487 = vmax.f32 %v3485, %v3486
    %v3488 = vrot.slane %v3487, 1
    %v3489 = vmax.f32 %v3487, %v3488
    %v3490 = vpack.i.bf16 %v3489, %v3489
    %v3491 = vunpack.i.l.bf16 %v3315
    %v3492 = vunpack.i.h.bf16 %v3315
    %v3493 = vmax.f32 %v3491, %v3492
    %v3494 = vrot.slane %v3493, 4
    %v3495 = vmax.f32 %v3493, %v3494
    %v3496 = vrot.slane %v3495, 2
    %v3497 = vmax.f32 %v3495, %v3496
    %v3498 = vrot.slane %v3497, 1
    %v3499 = vmax.f32 %v3497, %v3498
    %v3500 = vpack.i.bf16 %v3499, %v3499
    %v3501 = vunpack.i.l.bf16 %v3316
    %v3502 = vunpack.i.h.bf16 %v3316
    %v3503 = vmax.f32 %v3501, %v3502
    %v3504 = vrot.slane %v3503, 4
    %v3505 = vmax.f32 %v3503, %v3504
    %v3506 = vrot.slane %v3505, 2
    %v3507 = vmax.f32 %v3505, %v3506
    %v3508 = vrot.slane %v3507, 1
    %v3509 = vmax.f32 %v3507, %v3508
    %v3510 = vpack.i.bf16 %v3509, %v3509
    %v3511 = vunpack.i.l.bf16 %v3317
    %v3512 = vunpack.i.h.bf16 %v3317
    %v3513 = vmax.f32 %v3511, %v3512
    %v3514 = vrot.slane %v3513, 4
    %v3515 = vmax.f32 %v3513, %v3514
    %v3516 = vrot.slane %v3515, 2
    %v3517 = vmax.f32 %v3515, %v3516
    %v3518 = vrot.slane %v3517, 1
    %v3519 = vmax.f32 %v3517, %v3518
    %v3520 = vpack.i.bf16 %v3519, %v3519
    %v3521 = vunpack.i.l.bf16 %v3318
    %v3522 = vunpack.i.h.bf16 %v3318
    %v3523 = vmax.f32 %v3521, %v3522
    %v3524 = vrot.slane %v3523, 4
    %v3525 = vmax.f32 %v3523, %v3524
    %v3526 = vrot.slane %v3525, 2
    %v3527 = vmax.f32 %v3525, %v3526
    %v3528 = vrot.slane %v3527, 1
    %v3529 = vmax.f32 %v3527, %v3528
    %v3530 = vpack.i.bf16 %v3529, %v3529
    %v3531 = vunpack.i.l.bf16 %v3319
    %v3532 = vunpack.i.h.bf16 %v3319
    %v3533 = vmax.f32 %v3531, %v3532
    %v3534 = vrot.slane %v3533, 4
    %v3535 = vmax.f32 %v3533, %v3534
    %v3536 = vrot.slane %v3535, 2
    %v3537 = vmax.f32 %v3535, %v3536
    %v3538 = vrot.slane %v3537, 1
    %v3539 = vmax.f32 %v3537, %v3538
    %v3540 = vpack.i.bf16 %v3539, %v3539
    %v3541 = vunpack.i.l.bf16 %v3320
    %v3542 = vunpack.i.h.bf16 %v3320
    %v3543 = vmax.f32 %v3541, %v3542
    %v3544 = vrot.slane %v3543, 4
    %v3545 = vmax.f32 %v3543, %v3544
    %v3546 = vrot.slane %v3545, 2
    %v3547 = vmax.f32 %v3545, %v3546
    %v3548 = vrot.slane %v3547, 1
    %v3549 = vmax.f32 %v3547, %v3548
    %v3550 = vpack.i.bf16 %v3549, %v3549
    %v3551 = vunpack.i.l.bf16 %v3321
    %v3552 = vunpack.i.h.bf16 %v3321
    %v3553 = vmax.f32 %v3551, %v3552
    %v3554 = vrot.slane %v3553, 4
    %v3555 = vmax.f32 %v3553, %v3554
    %v3556 = vrot.slane %v3555, 2
    %v3557 = vmax.f32 %v3555, %v3556
    %v3558 = vrot.slane %v3557, 1
    %v3559 = vmax.f32 %v3557, %v3558
    %v3560 = vpack.i.bf16 %v3559, %v3559
    %v3561 = vunpack.i.l.bf16 %v3322
    %v3562 = vunpack.i.h.bf16 %v3322
    %v3563 = vmax.f32 %v3561, %v3562
    %v3564 = vrot.slane %v3563, 4
    %v3565 = vmax.f32 %v3563, %v3564
    %v3566 = vrot.slane %v3565, 2
    %v3567 = vmax.f32 %v3565, %v3566
    %v3568 = vrot.slane %v3567, 1
    %v3569 = vmax.f32 %v3567, %v3568
    %v3570 = vpack.i.bf16 %v3569, %v3569
    %v3571 = vunpack.i.l.bf16 %v3323
    %v3572 = vunpack.i.h.bf16 %v3323
    %v3573 = vmax.f32 %v3571, %v3572
    %v3574 = vrot.slane %v3573, 4
    %v3575 = vmax.f32 %v3573, %v3574
    %v3576 = vrot.slane %v3575, 2
    %v3577 = vmax.f32 %v3575, %v3576
    %v3578 = vrot.slane %v3577, 1
    %v3579 = vmax.f32 %v3577, %v3578
    %v3580 = vpack.i.bf16 %v3579, %v3579
    %v3581 = vunpack.i.l.bf16 %v3324
    %v3582 = vunpack.i.h.bf16 %v3324
    %v3583 = vmax.f32 %v3581, %v3582
    %v3584 = vrot.slane %v3583, 4
    %v3585 = vmax.f32 %v3583, %v3584
    %v3586 = vrot.slane %v3585, 2
    %v3587 = vmax.f32 %v3585, %v3586
    %v3588 = vrot.slane %v3587, 1
    %v3589 = vmax.f32 %v3587, %v3588
    %v3590 = vpack.i.bf16 %v3589, %v3589
    %v3591 = vunpack.i.l.bf16 %v3325
    %v3592 = vunpack.i.h.bf16 %v3325
    %v3593 = vmax.f32 %v3591, %v3592
    %v3594 = vrot.slane %v3593, 4
    %v3595 = vmax.f32 %v3593, %v3594
    %v3596 = vrot.slane %v3595, 2
    %v3597 = vmax.f32 %v3595, %v3596
    %v3598 = vrot.slane %v3597, 1
    %v3599 = vmax.f32 %v3597, %v3598
    %v3600 = vpack.i.bf16 %v3599, %v3599
    %v3601 = vunpack.i.l.bf16 %v3326
    %v3602 = vunpack.i.h.bf16 %v3326
    %v3603 = vmax.f32 %v3601, %v3602
    %v3604 = vrot.slane %v3603, 4
    %v3605 = vmax.f32 %v3603, %v3604
    %v3606 = vrot.slane %v3605, 2
    %v3607 = vmax.f32 %v3605, %v3606
    %v3608 = vrot.slane %v3607, 1
    %v3609 = vmax.f32 %v3607, %v3608
    %v3610 = vpack.i.bf16 %v3609, %v3609
    %v3611 = vunpack.i.l.bf16 %v3327
    %v3612 = vunpack.i.h.bf16 %v3327
    %v3613 = vmax.f32 %v3611, %v3612
    %v3614 = vrot.slane %v3613, 4
    %v3615 = vmax.f32 %v3613, %v3614
    %v3616 = vrot.slane %v3615, 2
    %v3617 = vmax.f32 %v3615, %v3616
    %v3618 = vrot.slane %v3617, 1
    %v3619 = vmax.f32 %v3617, %v3618
    %v3620 = vpack.i.bf16 %v3619, %v3619
    %v3621 = vunpack.i.l.bf16 %v3328
    %v3622 = vunpack.i.h.bf16 %v3328
    %v3623 = vmax.f32 %v3621, %v3622
    %v3624 = vrot.slane %v3623, 4
    %v3625 = vmax.f32 %v3623, %v3624
    %v3626 = vrot.slane %v3625, 2
    %v3627 = vmax.f32 %v3625, %v3626
    %v3628 = vrot.slane %v3627, 1
    %v3629 = vmax.f32 %v3627, %v3628
    %v3630 = vpack.i.bf16 %v3629, %v3629
    %v3631 = vunpack.i.l.bf16 %v3329
    %v3632 = vunpack.i.h.bf16 %v3329
    %v3633 = vmax.f32 %v3631, %v3632
    %v3634 = vrot.slane %v3633, 4
    %v3635 = vmax.f32 %v3633, %v3634
    %v3636 = vrot.slane %v3635, 2
    %v3637 = vmax.f32 %v3635, %v3636
    %v3638 = vrot.slane %v3637, 1
    %v3639 = vmax.f32 %v3637, %v3638
    %v3640 = vpack.i.bf16 %v3639, %v3639
    %v3641 = vunpack.i.l.bf16 %v3330
    %v3642 = vunpack.i.h.bf16 %v3330
    %v3643 = vmax.f32 %v3641, %v3642
    %v3644 = vrot.slane %v3643, 4
    %v3645 = vmax.f32 %v3643, %v3644
    %v3646 = vrot.slane %v3645, 2
    %v3647 = vmax.f32 %v3645, %v3646
    %v3648 = vrot.slane %v3647, 1
    %v3649 = vmax.f32 %v3647, %v3648
    %v3650 = vpack.i.bf16 %v3649, %v3649
    %v3667 = vunpack.c.l.b16 %v3340
    %v3668 = vunpack.c.l.b16 %v3350
    %v3669 = vunpack.c.l.b16 %v3360
    %v3670 = vunpack.c.l.b16 %v3370
    %v3671 = vunpack.c.l.b16 %v3380
    %v3672 = vunpack.c.l.b16 %v3390
    %v3673 = vunpack.c.l.b16 %v3400
    %v3674 = vunpack.c.l.b16 %v3410
    %v3675 = vunpack.c.l.b16 %v3420
    %v3676 = vunpack.c.l.b16 %v3430
    %v3677 = vunpack.c.l.b16 %v3440
    %v3678 = vunpack.c.l.b16 %v3450
    %v3679 = vunpack.c.l.b16 %v3460
    %v3680 = vunpack.c.l.b16 %v3470
    %v3681 = vunpack.c.l.b16 %v3480
    %v3682 = vunpack.c.l.b16 %v3490
    %vm3683 = vcmask 1041409
    %v3684 = vsel %vm3683, %v3675, %v3667
    %v3685 = vsel %vm3683, %v3676, %v3668
    %v3686 = vsel %vm3683, %v3677, %v3669
    %v3687 = vsel %vm3683, %v3678, %v3670
    %v3688 = vsel %vm3683, %v3679, %v3671
    %v3689 = vsel %vm3683, %v3680, %v3672
    %v3690 = vsel %vm3683, %v3681, %v3673
    %v3691 = vsel %vm3683, %v3682, %v3674
    %v3692 = vpack.c.b16 %v3684, %v3684
    %v3693 = vpack.c.b16 %v3685, %v3685
    %v3694 = vpack.c.b16 %v3686, %v3686
    %v3695 = vpack.c.b16 %v3687, %v3687
    %v3696 = vpack.c.b16 %v3688, %v3688
    %v3697 = vpack.c.b16 %v3689, %v3689
    %v3698 = vpack.c.b16 %v3690, %v3690
    %v3699 = vpack.c.b16 %v3691, %v3691
    %v3724 = vunpack.c.l.b16 %v3500
    %v3725 = vunpack.c.l.b16 %v3510
    %v3726 = vunpack.c.l.b16 %v3520
    %v3727 = vunpack.c.l.b16 %v3530
    %v3728 = vunpack.c.l.b16 %v3540
    %v3729 = vunpack.c.l.b16 %v3550
    %v3730 = vunpack.c.l.b16 %v3560
    %v3731 = vunpack.c.l.b16 %v3570
    %v3732 = vunpack.c.l.b16 %v3580
    %v3733 = vunpack.c.l.b16 %v3590
    %v3734 = vunpack.c.l.b16 %v3600
    %v3735 = vunpack.c.l.b16 %v3610
    %v3736 = vunpack.c.l.b16 %v3620
    %v3737 = vunpack.c.l.b16 %v3630
    %v3738 = vunpack.c.l.b16 %v3640
    %v3739 = vunpack.c.l.b16 %v3650
    %v3740 = vsel %vm3683, %v3732, %v3724
    %v3741 = vsel %vm3683, %v3733, %v3725
    %v3742 = vsel %vm3683, %v3734, %v3726
    %v3743 = vsel %vm3683, %v3735, %v3727
    %v3744 = vsel %vm3683, %v3736, %v3728
    %v3745 = vsel %vm3683, %v3737, %v3729
    %v3746 = vsel %vm3683, %v3738, %v3730
    %v3747 = vsel %vm3683, %v3739, %v3731
    %v3748 = vpack.c.b16 %v3740, %v3740
    %v3749 = vpack.c.b16 %v3741, %v3741
    %v3750 = vpack.c.b16 %v3742, %v3742
    %v3751 = vpack.c.b16 %v3743, %v3743
    %v3752 = vpack.c.b16 %v3744, %v3744
    %v3753 = vpack.c.b16 %v3745, %v3745
    %v3754 = vpack.c.b16 %v3746, %v3746
    %v3755 = vpack.c.b16 %v3747, %v3747
    %v3764 = vld [vmem:[#allocation10] sm:$0xff]
    %v3765 = vld [vmem:[#allocation10 + $0x8] sm:$0xff]
    %v3766 = vld [vmem:[#allocation10 + $0x10] sm:$0xff]
    %v3767 = vld [vmem:[#allocation10 + $0x18] sm:$0xff]
    %v3768 = vld [vmem:[#allocation10 + $0x20] sm:$0xff]
    %v3769 = vld [vmem:[#allocation10 + $0x28] sm:$0xff]
    %v3770 = vld [vmem:[#allocation10 + $0x30] sm:$0xff]
    %v3771 = vld [vmem:[#allocation10 + $0x38] sm:$0xff]
    %v3772 = vld [vmem:[#allocation10 + $0x40] sm:$0xff]
    %v3773 = vld [vmem:[#allocation10 + $0x48] sm:$0xff]
    %v3774 = vld [vmem:[#allocation10 + $0x50] sm:$0xff]
    %v3775 = vld [vmem:[#allocation10 + $0x58] sm:$0xff]
    %v3776 = vld [vmem:[#allocation10 + $0x60] sm:$0xff]
    %v3777 = vld [vmem:[#allocation10 + $0x68] sm:$0xff]
    %v3778 = vld [vmem:[#allocation10 + $0x70] sm:$0xff]
    %v3779 = vld [vmem:[#allocation10 + $0x78] sm:$0xff]
    %v3780 = vld [vmem:[#allocation10 + $0x80] sm:$0xff]
    %v3781 = vld [vmem:[#allocation10 + $0x88] sm:$0xff]
    %v3782 = vld [vmem:[#allocation10 + $0x90] sm:$0xff]
    %v3783 = vld [vmem:[#allocation10 + $0x98] sm:$0xff]
    %v3784 = vld [vmem:[#allocation10 + $0xa0] sm:$0xff]
    %v3785 = vld [vmem:[#allocation10 + $0xa8] sm:$0xff]
    %v3786 = vld [vmem:[#allocation10 + $0xb0] sm:$0xff]
    %v3787 = vld [vmem:[#allocation10 + $0xb8] sm:$0xff]
    %v3788 = vld [vmem:[#allocation10 + $0xc0] sm:$0xff]
    %v3789 = vld [vmem:[#allocation10 + $0xc8] sm:$0xff]
    %v3790 = vld [vmem:[#allocation10 + $0xd0] sm:$0xff]
    %v3791 = vld [vmem:[#allocation10 + $0xd8] sm:$0xff]
    %v3792 = vld [vmem:[#allocation10 + $0xe0] sm:$0xff]
    %v3793 = vld [vmem:[#allocation10 + $0xe8] sm:$0xff]
    %v3794 = vld [vmem:[#allocation10 + $0xf0] sm:$0xff]
    %v3795 = vld [vmem:[#allocation10 + $0xf8] sm:$0xff]
    %v3796 = vld [vmem:[#allocation10 + $0x100] sm:$0xff]
    %v3797 = vld [vmem:[#allocation10 + $0x108] sm:$0xff]
    %v3798 = vld [vmem:[#allocation10 + $0x110] sm:$0xff]
    %v3799 = vld [vmem:[#allocation10 + $0x118] sm:$0xff]
    %v3800 = vld [vmem:[#allocation10 + $0x120] sm:$0xff]
    %v3801 = vld [vmem:[#allocation10 + $0x128] sm:$0xff]
    %v3802 = vld [vmem:[#allocation10 + $0x130] sm:$0xff]
    %v3803 = vld [vmem:[#allocation10 + $0x138] sm:$0xff]
    %v3804 = vld [vmem:[#allocation10 + $0x140] sm:$0xff]
    %v3805 = vld [vmem:[#allocation10 + $0x148] sm:$0xff]
    %v3806 = vld [vmem:[#allocation10 + $0x150] sm:$0xff]
    %v3807 = vld [vmem:[#allocation10 + $0x158] sm:$0xff]
    %v3808 = vld [vmem:[#allocation10 + $0x160] sm:$0xff]
    %v3809 = vld [vmem:[#allocation10 + $0x168] sm:$0xff]
    %v3810 = vld [vmem:[#allocation10 + $0x170] sm:$0xff]
    %v3811 = vld [vmem:[#allocation10 + $0x178] sm:$0xff]
    %v3812 = vld [vmem:[#allocation10 + $0x180] sm:$0xff]
    %v3813 = vld [vmem:[#allocation10 + $0x188] sm:$0xff]
    %v3814 = vld [vmem:[#allocation10 + $0x190] sm:$0xff]
    %v3815 = vld [vmem:[#allocation10 + $0x198] sm:$0xff]
    %v3816 = vld [vmem:[#allocation10 + $0x1a0] sm:$0xff]
    %v3817 = vld [vmem:[#allocation10 + $0x1a8] sm:$0xff]
    %v3818 = vld [vmem:[#allocation10 + $0x1b0] sm:$0xff]
    %v3819 = vld [vmem:[#allocation10 + $0x1b8] sm:$0xff]
    %v3820 = vld [vmem:[#allocation10 + $0x1c0] sm:$0xff]
    %v3821 = vld [vmem:[#allocation10 + $0x1c8] sm:$0xff]
    %v3822 = vld [vmem:[#allocation10 + $0x1d0] sm:$0xff]
    %v3823 = vld [vmem:[#allocation10 + $0x1d8] sm:$0xff]
    %v3824 = vld [vmem:[#allocation10 + $0x1e0] sm:$0xff]
    %v3825 = vld [vmem:[#allocation10 + $0x1e8] sm:$0xff]
    %v3826 = vld [vmem:[#allocation10 + $0x1f0] sm:$0xff]
    %v3827 = vld [vmem:[#allocation10 + $0x1f8] sm:$0xff]
    %v3828 = vld [vmem:[#allocation10 + $0x200] sm:$0xff]
    %v3829 = vld [vmem:[#allocation10 + $0x208] sm:$0xff]
    %v3830 = vld [vmem:[#allocation10 + $0x210] sm:$0xff]
    %v3831 = vld [vmem:[#allocation10 + $0x218] sm:$0xff]
    %v3832 = vld [vmem:[#allocation10 + $0x220] sm:$0xff]
    %v3833 = vld [vmem:[#allocation10 + $0x228] sm:$0xff]
    %v3834 = vld [vmem:[#allocation10 + $0x230] sm:$0xff]
    %v3835 = vld [vmem:[#allocation10 + $0x238] sm:$0xff]
    %v3836 = vld [vmem:[#allocation10 + $0x240] sm:$0xff]
    %v3837 = vld [vmem:[#allocation10 + $0x248] sm:$0xff]
    %v3838 = vld [vmem:[#allocation10 + $0x250] sm:$0xff]
    %v3839 = vld [vmem:[#allocation10 + $0x258] sm:$0xff]
    %v3840 = vld [vmem:[#allocation10 + $0x260] sm:$0xff]
    %v3841 = vld [vmem:[#allocation10 + $0x268] sm:$0xff]
    %v3842 = vld [vmem:[#allocation10 + $0x270] sm:$0xff]
    %v3843 = vld [vmem:[#allocation10 + $0x278] sm:$0xff]
    %v3844 = vld [vmem:[#allocation10 + $0x280] sm:$0xff]
    %v3845 = vld [vmem:[#allocation10 + $0x288] sm:$0xff]
    %v3846 = vld [vmem:[#allocation10 + $0x290] sm:$0xff]
    %v3847 = vld [vmem:[#allocation10 + $0x298] sm:$0xff]
    %v3848 = vld [vmem:[#allocation10 + $0x2a0] sm:$0xff]
    %v3849 = vld [vmem:[#allocation10 + $0x2a8] sm:$0xff]
    %v3850 = vld [vmem:[#allocation10 + $0x2b0] sm:$0xff]
    %v3851 = vld [vmem:[#allocation10 + $0x2b8] sm:$0xff]
    %v3852 = vld [vmem:[#allocation10 + $0x2c0] sm:$0xff]
    %v3853 = vld [vmem:[#allocation10 + $0x2c8] sm:$0xff]
    %v3854 = vld [vmem:[#allocation10 + $0x2d0] sm:$0xff]
    %v3855 = vld [vmem:[#allocation10 + $0x2d8] sm:$0xff]
    %v3856 = vld [vmem:[#allocation10 + $0x2e0] sm:$0xff]
    %v3857 = vld [vmem:[#allocation10 + $0x2e8] sm:$0xff]
    %v3858 = vld [vmem:[#allocation10 + $0x2f0] sm:$0xff]
    %v3859 = vld [vmem:[#allocation10 + $0x2f8] sm:$0xff]
    %v3860 = vld [vmem:[#allocation10 + $0x300] sm:$0xff]
    %v3861 = vld [vmem:[#allocation10 + $0x308] sm:$0xff]
    %v3862 = vld [vmem:[#allocation10 + $0x310] sm:$0xff]
    %v3863 = vld [vmem:[#allocation10 + $0x318] sm:$0xff]
    %v3864 = vld [vmem:[#allocation10 + $0x320] sm:$0xff]
    %v3865 = vld [vmem:[#allocation10 + $0x328] sm:$0xff]
    %v3866 = vld [vmem:[#allocation10 + $0x330] sm:$0xff]
    %v3867 = vld [vmem:[#allocation10 + $0x338] sm:$0xff]
    %v3868 = vld [vmem:[#allocation10 + $0x340] sm:$0xff]
    %v3869 = vld [vmem:[#allocation10 + $0x348] sm:$0xff]
    %v3870 = vld [vmem:[#allocation10 + $0x350] sm:$0xff]
    %v3871 = vld [vmem:[#allocation10 + $0x358] sm:$0xff]
    %v3872 = vld [vmem:[#allocation10 + $0x360] sm:$0xff]
    %v3873 = vld [vmem:[#allocation10 + $0x368] sm:$0xff]
    %v3874 = vld [vmem:[#allocation10 + $0x370] sm:$0xff]
    %v3875 = vld [vmem:[#allocation10 + $0x378] sm:$0xff]
    %v3876 = vld [vmem:[#allocation10 + $0x380] sm:$0xff]
    %v3877 = vld [vmem:[#allocation10 + $0x388] sm:$0xff]
    %v3878 = vld [vmem:[#allocation10 + $0x390] sm:$0xff]
    %v3879 = vld [vmem:[#allocation10 + $0x398] sm:$0xff]
    %v3880 = vld [vmem:[#allocation10 + $0x3a0] sm:$0xff]
    %v3881 = vld [vmem:[#allocation10 + $0x3a8] sm:$0xff]
    %v3882 = vld [vmem:[#allocation10 + $0x3b0] sm:$0xff]
    %v3883 = vld [vmem:[#allocation10 + $0x3b8] sm:$0xff]
    %v3884 = vld [vmem:[#allocation10 + $0x3c0] sm:$0xff]
    %v3885 = vld [vmem:[#allocation10 + $0x3c8] sm:$0xff]
    %v3886 = vld [vmem:[#allocation10 + $0x3d0] sm:$0xff]
    %v3887 = vld [vmem:[#allocation10 + $0x3d8] sm:$0xff]
    %v3888 = vld [vmem:[#allocation10 + $0x3e0] sm:$0xff]
    %v3889 = vld [vmem:[#allocation10 + $0x3e8] sm:$0xff]
    %v3890 = vld [vmem:[#allocation10 + $0x3f0] sm:$0xff]
    %v3891 = vld [vmem:[#allocation10 + $0x3f8] sm:$0xff]
    %v3892 = vld [vmem:[#allocation10 + $0x400] sm:$0xff]
    %v3893 = vld [vmem:[#allocation10 + $0x408] sm:$0xff]
    %v3894 = vld [vmem:[#allocation10 + $0x410] sm:$0xff]
    %v3895 = vld [vmem:[#allocation10 + $0x418] sm:$0xff]
    %v3896 = vld [vmem:[#allocation10 + $0x420] sm:$0xff]
    %v3897 = vld [vmem:[#allocation10 + $0x428] sm:$0xff]
    %v3898 = vld [vmem:[#allocation10 + $0x430] sm:$0xff]
    %v3899 = vld [vmem:[#allocation10 + $0x438] sm:$0xff]
    %v3900 = vld [vmem:[#allocation10 + $0x440] sm:$0xff]
    %v3901 = vld [vmem:[#allocation10 + $0x448] sm:$0xff]
    %v3902 = vld [vmem:[#allocation10 + $0x450] sm:$0xff]
    %v3903 = vld [vmem:[#allocation10 + $0x458] sm:$0xff]
    %v3904 = vld [vmem:[#allocation10 + $0x460] sm:$0xff]
    %v3905 = vld [vmem:[#allocation10 + $0x468] sm:$0xff]
    %v3906 = vld [vmem:[#allocation10 + $0x470] sm:$0xff]
    %v3907 = vld [vmem:[#allocation10 + $0x478] sm:$0xff]
    %v3908 = vld [vmem:[#allocation10 + $0x480] sm:$0xff]
    %v3909 = vld [vmem:[#allocation10 + $0x488] sm:$0xff]
    %v3910 = vld [vmem:[#allocation10 + $0x490] sm:$0xff]
    %v3911 = vld [vmem:[#allocation10 + $0x498] sm:$0xff]
    %v3912 = vld [vmem:[#allocation10 + $0x4a0] sm:$0xff]
    %v3913 = vld [vmem:[#allocation10 + $0x4a8] sm:$0xff]
    %v3914 = vld [vmem:[#allocation10 + $0x4b0] sm:$0xff]
    %v3915 = vld [vmem:[#allocation10 + $0x4b8] sm:$0xff]
    %v3916 = vld [vmem:[#allocation10 + $0x4c0] sm:$0xff]
    %v3917 = vld [vmem:[#allocation10 + $0x4c8] sm:$0xff]
    %v3918 = vld [vmem:[#allocation10 + $0x4d0] sm:$0xff]
    %v3919 = vld [vmem:[#allocation10 + $0x4d8] sm:$0xff]
    %v3920 = vld [vmem:[#allocation10 + $0x4e0] sm:$0xff]
    %v3921 = vld [vmem:[#allocation10 + $0x4e8] sm:$0xff]
    %v3922 = vld [vmem:[#allocation10 + $0x4f0] sm:$0xff]
    %v3923 = vld [vmem:[#allocation10 + $0x4f8] sm:$0xff]
    %v3924 = vld [vmem:[#allocation10 + $0x500] sm:$0xff]
    %v3925 = vld [vmem:[#allocation10 + $0x508] sm:$0xff]
    %v3926 = vld [vmem:[#allocation10 + $0x510] sm:$0xff]
    %v3927 = vld [vmem:[#allocation10 + $0x518] sm:$0xff]
    %v3928 = vld [vmem:[#allocation10 + $0x520] sm:$0xff]
    %v3929 = vld [vmem:[#allocation10 + $0x528] sm:$0xff]
    %v3930 = vld [vmem:[#allocation10 + $0x530] sm:$0xff]
    %v3931 = vld [vmem:[#allocation10 + $0x538] sm:$0xff]
    %v3932 = vld [vmem:[#allocation10 + $0x540] sm:$0xff]
    %v3933 = vld [vmem:[#allocation10 + $0x548] sm:$0xff]
    %v3934 = vld [vmem:[#allocation10 + $0x550] sm:$0xff]
    %v3935 = vld [vmem:[#allocation10 + $0x558] sm:$0xff]
    %v3936 = vld [vmem:[#allocation10 + $0x560] sm:$0xff]
    %v3937 = vld [vmem:[#allocation10 + $0x568] sm:$0xff]
    %v3938 = vld [vmem:[#allocation10 + $0x570] sm:$0xff]
    %v3939 = vld [vmem:[#allocation10 + $0x578] sm:$0xff]
    %v3940 = vld [vmem:[#allocation10 + $0x580] sm:$0xff]
    %v3941 = vld [vmem:[#allocation10 + $0x588] sm:$0xff]
    %v3942 = vld [vmem:[#allocation10 + $0x590] sm:$0xff]
    %v3943 = vld [vmem:[#allocation10 + $0x598] sm:$0xff]
    %v3944 = vld [vmem:[#allocation10 + $0x5a0] sm:$0xff]
    %v3945 = vld [vmem:[#allocation10 + $0x5a8] sm:$0xff]
    %v3946 = vld [vmem:[#allocation10 + $0x5b0] sm:$0xff]
    %v3947 = vld [vmem:[#allocation10 + $0x5b8] sm:$0xff]
    %v3948 = vld [vmem:[#allocation10 + $0x5c0] sm:$0xff]
    %v3949 = vld [vmem:[#allocation10 + $0x5c8] sm:$0xff]
    %v3950 = vld [vmem:[#allocation10 + $0x5d0] sm:$0xff]
    %v3951 = vld [vmem:[#allocation10 + $0x5d8] sm:$0xff]
    %v3952 = vld [vmem:[#allocation10 + $0x5e0] sm:$0xff]
    %v3953 = vld [vmem:[#allocation10 + $0x5e8] sm:$0xff]
    %v3954 = vld [vmem:[#allocation10 + $0x5f0] sm:$0xff]
    %v3955 = vld [vmem:[#allocation10 + $0x5f8] sm:$0xff]
    %v3956 = vld [vmem:[#allocation10 + $0x600] sm:$0xff]
    %v3957 = vld [vmem:[#allocation10 + $0x608] sm:$0xff]
    %v3958 = vld [vmem:[#allocation10 + $0x610] sm:$0xff]
    %v3959 = vld [vmem:[#allocation10 + $0x618] sm:$0xff]
    %v3960 = vld [vmem:[#allocation10 + $0x620] sm:$0xff]
    %v3961 = vld [vmem:[#allocation10 + $0x628] sm:$0xff]
    %v3962 = vld [vmem:[#allocation10 + $0x630] sm:$0xff]
    %v3963 = vld [vmem:[#allocation10 + $0x638] sm:$0xff]
    %v3964 = vld [vmem:[#allocation10 + $0x640] sm:$0xff]
    %v3965 = vld [vmem:[#allocation10 + $0x648] sm:$0xff]
    %v3966 = vld [vmem:[#allocation10 + $0x650] sm:$0xff]
    %v3967 = vld [vmem:[#allocation10 + $0x658] sm:$0xff]
    %v3968 = vld [vmem:[#allocation10 + $0x660] sm:$0xff]
    %v3969 = vld [vmem:[#allocation10 + $0x668] sm:$0xff]
    %v3970 = vld [vmem:[#allocation10 + $0x670] sm:$0xff]
    %v3971 = vld [vmem:[#allocation10 + $0x678] sm:$0xff]
    %v3972 = vld [vmem:[#allocation10 + $0x680] sm:$0xff]
    %v3973 = vld [vmem:[#allocation10 + $0x688] sm:$0xff]
    %v3974 = vld [vmem:[#allocation10 + $0x690] sm:$0xff]
    %v3975 = vld [vmem:[#allocation10 + $0x698] sm:$0xff]
    %v3976 = vld [vmem:[#allocation10 + $0x6a0] sm:$0xff]
    %v3977 = vld [vmem:[#allocation10 + $0x6a8] sm:$0xff]
    %v3978 = vld [vmem:[#allocation10 + $0x6b0] sm:$0xff]
    %v3979 = vld [vmem:[#allocation10 + $0x6b8] sm:$0xff]
    %v3980 = vld [vmem:[#allocation10 + $0x6c0] sm:$0xff]
    %v3981 = vld [vmem:[#allocation10 + $0x6c8] sm:$0xff]
    %v3982 = vld [vmem:[#allocation10 + $0x6d0] sm:$0xff]
    %v3983 = vld [vmem:[#allocation10 + $0x6d8] sm:$0xff]
    %v3984 = vld [vmem:[#allocation10 + $0x6e0] sm:$0xff]
    %v3985 = vld [vmem:[#allocation10 + $0x6e8] sm:$0xff]
    %v3986 = vld [vmem:[#allocation10 + $0x6f0] sm:$0xff]
    %v3987 = vld [vmem:[#allocation10 + $0x6f8] sm:$0xff]
    %v3988 = vld [vmem:[#allocation10 + $0x700] sm:$0xff]
    %v3989 = vld [vmem:[#allocation10 + $0x708] sm:$0xff]
    %v3990 = vld [vmem:[#allocation10 + $0x710] sm:$0xff]
    %v3991 = vld [vmem:[#allocation10 + $0x718] sm:$0xff]
    %v3992 = vld [vmem:[#allocation10 + $0x720] sm:$0xff]
    %v3993 = vld [vmem:[#allocation10 + $0x728] sm:$0xff]
    %v3994 = vld [vmem:[#allocation10 + $0x730] sm:$0xff]
    %v3995 = vld [vmem:[#allocation10 + $0x738] sm:$0xff]
    %v3996 = vld [vmem:[#allocation10 + $0x740] sm:$0xff]
    %v3997 = vld [vmem:[#allocation10 + $0x748] sm:$0xff]
    %v3998 = vld [vmem:[#allocation10 + $0x750] sm:$0xff]
    %v3999 = vld [vmem:[#allocation10 + $0x758] sm:$0xff]
    %v4000 = vld [vmem:[#allocation10 + $0x760] sm:$0xff]
    %v4001 = vld [vmem:[#allocation10 + $0x768] sm:$0xff]
    %v4002 = vld [vmem:[#allocation10 + $0x770] sm:$0xff]
    %v4003 = vld [vmem:[#allocation10 + $0x778] sm:$0xff]
    %v4004 = vld [vmem:[#allocation10 + $0x780] sm:$0xff]
    %v4005 = vld [vmem:[#allocation10 + $0x788] sm:$0xff]
    %v4006 = vld [vmem:[#allocation10 + $0x790] sm:$0xff]
    %v4007 = vld [vmem:[#allocation10 + $0x798] sm:$0xff]
    %v4008 = vld [vmem:[#allocation10 + $0x7a0] sm:$0xff]
    %v4009 = vld [vmem:[#allocation10 + $0x7a8] sm:$0xff]
    %v4010 = vld [vmem:[#allocation10 + $0x7b0] sm:$0xff]
    %v4011 = vld [vmem:[#allocation10 + $0x7b8] sm:$0xff]
    %v4012 = vld [vmem:[#allocation10 + $0x7c0] sm:$0xff]
    %v4013 = vld [vmem:[#allocation10 + $0x7c8] sm:$0xff]
    %v4014 = vld [vmem:[#allocation10 + $0x7d0] sm:$0xff]
    %v4015 = vld [vmem:[#allocation10 + $0x7d8] sm:$0xff]
    %v4016 = vld [vmem:[#allocation10 + $0x7e0] sm:$0xff]
    %v4017 = vld [vmem:[#allocation10 + $0x7e8] sm:$0xff]
    %v4018 = vld [vmem:[#allocation10 + $0x7f0] sm:$0xff]
    %v4019 = vld [vmem:[#allocation10 + $0x7f8] sm:$0xff]
    %v4020 = vld [vmem:[#allocation10 + $0x800] sm:$0xff]
    %v4021 = vld [vmem:[#allocation10 + $0x808] sm:$0xff]
    %v4022 = vld [vmem:[#allocation10 + $0x810] sm:$0xff]
    %v4023 = vld [vmem:[#allocation10 + $0x818] sm:$0xff]
    %v4024 = vld [vmem:[#allocation10 + $0x820] sm:$0xff]
    %v4025 = vld [vmem:[#allocation10 + $0x828] sm:$0xff]
    %v4026 = vld [vmem:[#allocation10 + $0x830] sm:$0xff]
    %v4027 = vld [vmem:[#allocation10 + $0x838] sm:$0xff]
    %v4028 = vld [vmem:[#allocation10 + $0x840] sm:$0xff]
    %v4029 = vld [vmem:[#allocation10 + $0x848] sm:$0xff]
    %v4030 = vld [vmem:[#allocation10 + $0x850] sm:$0xff]
    %v4031 = vld [vmem:[#allocation10 + $0x858] sm:$0xff]
    %v4032 = vld [vmem:[#allocation10 + $0x860] sm:$0xff]
    %v4033 = vld [vmem:[#allocation10 + $0x868] sm:$0xff]
    %v4034 = vld [vmem:[#allocation10 + $0x870] sm:$0xff]
    %v4035 = vld [vmem:[#allocation10 + $0x878] sm:$0xff]
    %v4036 = vld [vmem:[#allocation10 + $0x880] sm:$0xff]
    %v4037 = vld [vmem:[#allocation10 + $0x888] sm:$0xff]
    %v4038 = vld [vmem:[#allocation10 + $0x890] sm:$0xff]
    %v4039 = vld [vmem:[#allocation10 + $0x898] sm:$0xff]
    %v4040 = vld [vmem:[#allocation10 + $0x8a0] sm:$0xff]
    %v4041 = vld [vmem:[#allocation10 + $0x8a8] sm:$0xff]
    %v4042 = vld [vmem:[#allocation10 + $0x8b0] sm:$0xff]
    %v4043 = vld [vmem:[#allocation10 + $0x8b8] sm:$0xff]
    %v4044 = vld [vmem:[#allocation10 + $0x8c0] sm:$0xff]
    %v4045 = vld [vmem:[#allocation10 + $0x8c8] sm:$0xff]
    %v4046 = vld [vmem:[#allocation10 + $0x8d0] sm:$0xff]
    %v4047 = vld [vmem:[#allocation10 + $0x8d8] sm:$0xff]
    %v4048 = vld [vmem:[#allocation10 + $0x8e0] sm:$0xff]
    %v4049 = vld [vmem:[#allocation10 + $0x8e8] sm:$0xff]
    %v4050 = vld [vmem:[#allocation10 + $0x8f0] sm:$0xff]
    %v4051 = vld [vmem:[#allocation10 + $0x8f8] sm:$0xff]
    %v4052 = vld [vmem:[#allocation10 + $0x900] sm:$0xff]
    %v4053 = vld [vmem:[#allocation10 + $0x908] sm:$0xff]
    %v4054 = vld [vmem:[#allocation10 + $0x910] sm:$0xff]
    %v4055 = vld [vmem:[#allocation10 + $0x918] sm:$0xff]
    %v4056 = vld [vmem:[#allocation10 + $0x920] sm:$0xff]
    %v4057 = vld [vmem:[#allocation10 + $0x928] sm:$0xff]
    %v4058 = vld [vmem:[#allocation10 + $0x930] sm:$0xff]
    %v4059 = vld [vmem:[#allocation10 + $0x938] sm:$0xff]
    %v4060 = vld [vmem:[#allocation10 + $0x940] sm:$0xff]
    %v4061 = vld [vmem:[#allocation10 + $0x948] sm:$0xff]
    %v4062 = vld [vmem:[#allocation10 + $0x950] sm:$0xff]
    %v4063 = vld [vmem:[#allocation10 + $0x958] sm:$0xff]
    %v4064 = vld [vmem:[#allocation10 + $0x960] sm:$0xff]
    %v4065 = vld [vmem:[#allocation10 + $0x968] sm:$0xff]
    %v4066 = vld [vmem:[#allocation10 + $0x970] sm:$0xff]
    %v4067 = vld [vmem:[#allocation10 + $0x978] sm:$0xff]
    %v4068 = vld [vmem:[#allocation10 + $0x980] sm:$0xff]
    %v4069 = vld [vmem:[#allocation10 + $0x988] sm:$0xff]
    %v4070 = vld [vmem:[#allocation10 + $0x990] sm:$0xff]
    %v4071 = vld [vmem:[#allocation10 + $0x998] sm:$0xff]
    %v4072 = vld [vmem:[#allocation10 + $0x9a0] sm:$0xff]
    %v4073 = vld [vmem:[#allocation10 + $0x9a8] sm:$0xff]
    %v4074 = vld [vmem:[#allocation10 + $0x9b0] sm:$0xff]
    %v4075 = vld [vmem:[#allocation10 + $0x9b8] sm:$0xff]
    %v4076 = vld [vmem:[#allocation10 + $0x9c0] sm:$0xff]
    %v4077 = vld [vmem:[#allocation10 + $0x9c8] sm:$0xff]
    %v4078 = vld [vmem:[#allocation10 + $0x9d0] sm:$0xff]
    %v4079 = vld [vmem:[#allocation10 + $0x9d8] sm:$0xff]
    %v4080 = vld [vmem:[#allocation10 + $0x9e0] sm:$0xff]
    %v4081 = vld [vmem:[#allocation10 + $0x9e8] sm:$0xff]
    %v4082 = vld [vmem:[#allocation10 + $0x9f0] sm:$0xff]
    %v4083 = vld [vmem:[#allocation10 + $0x9f8] sm:$0xff]
    %v4084 = vld [vmem:[#allocation10 + $0xa00] sm:$0xff]
    %v4085 = vld [vmem:[#allocation10 + $0xa08] sm:$0xff]
    %v4086 = vld [vmem:[#allocation10 + $0xa10] sm:$0xff]
    %v4087 = vld [vmem:[#allocation10 + $0xa18] sm:$0xff]
    %v4088 = vld [vmem:[#allocation10 + $0xa20] sm:$0xff]
    %v4089 = vld [vmem:[#allocation10 + $0xa28] sm:$0xff]
    %v4090 = vld [vmem:[#allocation10 + $0xa30] sm:$0xff]
    %v4091 = vld [vmem:[#allocation10 + $0xa38] sm:$0xff]
    %v4092 = vld [vmem:[#allocation10 + $0xa40] sm:$0xff]
    %v4093 = vld [vmem:[#allocation10 + $0xa48] sm:$0xff]
    %v4094 = vld [vmem:[#allocation10 + $0xa50] sm:$0xff]
    %v4095 = vld [vmem:[#allocation10 + $0xa58] sm:$0xff]
    %v4096 = vld [vmem:[#allocation10 + $0xa60] sm:$0xff]
    %v4097 = vld [vmem:[#allocation10 + $0xa68] sm:$0xff]
    %v4098 = vld [vmem:[#allocation10 + $0xa70] sm:$0xff]
    %v4099 = vld [vmem:[#allocation10 + $0xa78] sm:$0xff]
    %v4100 = vld [vmem:[#allocation10 + $0xa80] sm:$0xff]
    %v4101 = vld [vmem:[#allocation10 + $0xa88] sm:$0xff]
    %v4102 = vld [vmem:[#allocation10 + $0xa90] sm:$0xff]
    %v4103 = vld [vmem:[#allocation10 + $0xa98] sm:$0xff]
    %v4104 = vld [vmem:[#allocation10 + $0xaa0] sm:$0xff]
    %v4105 = vld [vmem:[#allocation10 + $0xaa8] sm:$0xff]
    %v4106 = vld [vmem:[#allocation10 + $0xab0] sm:$0xff]
    %v4107 = vld [vmem:[#allocation10 + $0xab8] sm:$0xff]
    %v4108 = vld [vmem:[#allocation10 + $0xac0] sm:$0xff]
    %v4109 = vld [vmem:[#allocation10 + $0xac8] sm:$0xff]
    %v4110 = vld [vmem:[#allocation10 + $0xad0] sm:$0xff]
    %v4111 = vld [vmem:[#allocation10 + $0xad8] sm:$0xff]
    %v4112 = vld [vmem:[#allocation10 + $0xae0] sm:$0xff]
    %v4113 = vld [vmem:[#allocation10 + $0xae8] sm:$0xff]
    %v4114 = vld [vmem:[#allocation10 + $0xaf0] sm:$0xff]
    %v4115 = vld [vmem:[#allocation10 + $0xaf8] sm:$0xff]
    %v4116 = vld [vmem:[#allocation10 + $0xb00] sm:$0xff]
    %v4117 = vld [vmem:[#allocation10 + $0xb08] sm:$0xff]
    %v4118 = vld [vmem:[#allocation10 + $0xb10] sm:$0xff]
    %v4119 = vld [vmem:[#allocation10 + $0xb18] sm:$0xff]
    %v4120 = vld [vmem:[#allocation10 + $0xb20] sm:$0xff]
    %v4121 = vld [vmem:[#allocation10 + $0xb28] sm:$0xff]
    %v4122 = vld [vmem:[#allocation10 + $0xb30] sm:$0xff]
    %v4123 = vld [vmem:[#allocation10 + $0xb38] sm:$0xff]
    %v4124 = vld [vmem:[#allocation10 + $0xb40] sm:$0xff]
    %v4125 = vld [vmem:[#allocation10 + $0xb48] sm:$0xff]
    %v4126 = vld [vmem:[#allocation10 + $0xb50] sm:$0xff]
    %v4127 = vld [vmem:[#allocation10 + $0xb58] sm:$0xff]
    %v4128 = vld [vmem:[#allocation10 + $0xb60] sm:$0xff]
    %v4129 = vld [vmem:[#allocation10 + $0xb68] sm:$0xff]
    %v4130 = vld [vmem:[#allocation10 + $0xb70] sm:$0xff]
    %v4131 = vld [vmem:[#allocation10 + $0xb78] sm:$0xff]
    %v4132 = vld [vmem:[#allocation10 + $0xb80] sm:$0xff]
    %v4133 = vld [vmem:[#allocation10 + $0xb88] sm:$0xff]
    %v4134 = vld [vmem:[#allocation10 + $0xb90] sm:$0xff]
    %v4135 = vld [vmem:[#allocation10 + $0xb98] sm:$0xff]
    %v4136 = vld [vmem:[#allocation10 + $0xba0] sm:$0xff]
    %v4137 = vld [vmem:[#allocation10 + $0xba8] sm:$0xff]
    %v4138 = vld [vmem:[#allocation10 + $0xbb0] sm:$0xff]
    %v4139 = vld [vmem:[#allocation10 + $0xbb8] sm:$0xff]
    %v4140 = vld [vmem:[#allocation10 + $0xbc0] sm:$0xff]
    %v4141 = vld [vmem:[#allocation10 + $0xbc8] sm:$0xff]
    %v4142 = vld [vmem:[#allocation10 + $0xbd0] sm:$0xff]
    %v4143 = vld [vmem:[#allocation10 + $0xbd8] sm:$0xff]
    %v4144 = vld [vmem:[#allocation10 + $0xbe0] sm:$0xff]
    %v4145 = vld [vmem:[#allocation10 + $0xbe8] sm:$0xff]
    %v4146 = vld [vmem:[#allocation10 + $0xbf0] sm:$0xff]
    %v4147 = vld [vmem:[#allocation10 + $0xbf8] sm:$0xff]
    %v4148 = vld [vmem:[#allocation10 + $0xc00] sm:$0xff]
    %v4149 = vld [vmem:[#allocation10 + $0xc08] sm:$0xff]
    %v4150 = vld [vmem:[#allocation10 + $0xc10] sm:$0xff]
    %v4151 = vld [vmem:[#allocation10 + $0xc18] sm:$0xff]
    %v4152 = vld [vmem:[#allocation10 + $0xc20] sm:$0xff]
    %v4153 = vld [vmem:[#allocation10 + $0xc28] sm:$0xff]
    %v4154 = vld [vmem:[#allocation10 + $0xc30] sm:$0xff]
    %v4155 = vld [vmem:[#allocation10 + $0xc38] sm:$0xff]
    %v4156 = vld [vmem:[#allocation10 + $0xc40] sm:$0xff]
    %v4157 = vld [vmem:[#allocation10 + $0xc48] sm:$0xff]
    %v4158 = vld [vmem:[#allocation10 + $0xc50] sm:$0xff]
    %v4159 = vld [vmem:[#allocation10 + $0xc58] sm:$0xff]
    %v4160 = vld [vmem:[#allocation10 + $0xc60] sm:$0xff]
    %v4161 = vld [vmem:[#allocation10 + $0xc68] sm:$0xff]
    %v4162 = vld [vmem:[#allocation10 + $0xc70] sm:$0xff]
    %v4163 = vld [vmem:[#allocation10 + $0xc78] sm:$0xff]
    %v4164 = vld [vmem:[#allocation10 + $0xc80] sm:$0xff]
    %v4165 = vld [vmem:[#allocation10 + $0xc88] sm:$0xff]
    %v4166 = vld [vmem:[#allocation10 + $0xc90] sm:$0xff]
    %v4167 = vld [vmem:[#allocation10 + $0xc98] sm:$0xff]
    %v4168 = vld [vmem:[#allocation10 + $0xca0] sm:$0xff]
    %v4169 = vld [vmem:[#allocation10 + $0xca8] sm:$0xff]
    %v4170 = vld [vmem:[#allocation10 + $0xcb0] sm:$0xff]
    %v4171 = vld [vmem:[#allocation10 + $0xcb8] sm:$0xff]
    %v4172 = vld [vmem:[#allocation10 + $0xcc0] sm:$0xff]
    %v4173 = vld [vmem:[#allocation10 + $0xcc8] sm:$0xff]
    %v4174 = vld [vmem:[#allocation10 + $0xcd0] sm:$0xff]
    %v4175 = vld [vmem:[#allocation10 + $0xcd8] sm:$0xff]
    %v4176 = vld [vmem:[#allocation10 + $0xce0] sm:$0xff]
    %v4177 = vld [vmem:[#allocation10 + $0xce8] sm:$0xff]
    %v4178 = vld [vmem:[#allocation10 + $0xcf0] sm:$0xff]
    %v4179 = vld [vmem:[#allocation10 + $0xcf8] sm:$0xff]
    %v4180 = vld [vmem:[#allocation10 + $0xd00] sm:$0xff]
    %v4181 = vld [vmem:[#allocation10 + $0xd08] sm:$0xff]
    %v4182 = vld [vmem:[#allocation10 + $0xd10] sm:$0xff]
    %v4183 = vld [vmem:[#allocation10 + $0xd18] sm:$0xff]
    %v4184 = vld [vmem:[#allocation10 + $0xd20] sm:$0xff]
    %v4185 = vld [vmem:[#allocation10 + $0xd28] sm:$0xff]
    %v4186 = vld [vmem:[#allocation10 + $0xd30] sm:$0xff]
    %v4187 = vld [vmem:[#allocation10 + $0xd38] sm:$0xff]
    %v4188 = vld [vmem:[#allocation10 + $0xd40] sm:$0xff]
    %v4189 = vld [vmem:[#allocation10 + $0xd48] sm:$0xff]
    %v4190 = vld [vmem:[#allocation10 + $0xd50] sm:$0xff]
    %v4191 = vld [vmem:[#allocation10 + $0xd58] sm:$0xff]
    %v4192 = vld [vmem:[#allocation10 + $0xd60] sm:$0xff]
    %v4193 = vld [vmem:[#allocation10 + $0xd68] sm:$0xff]
    %v4194 = vld [vmem:[#allocation10 + $0xd70] sm:$0xff]
    %v4195 = vld [vmem:[#allocation10 + $0xd78] sm:$0xff]
    %v4196 = vld [vmem:[#allocation10 + $0xd80] sm:$0xff]
    %v4197 = vld [vmem:[#allocation10 + $0xd88] sm:$0xff]
    %v4198 = vld [vmem:[#allocation10 + $0xd90] sm:$0xff]
    %v4199 = vld [vmem:[#allocation10 + $0xd98] sm:$0xff]
    %v4200 = vld [vmem:[#allocation10 + $0xda0] sm:$0xff]
    %v4201 = vld [vmem:[#allocation10 + $0xda8] sm:$0xff]
    %v4202 = vld [vmem:[#allocation10 + $0xdb0] sm:$0xff]
    %v4203 = vld [vmem:[#allocation10 + $0xdb8] sm:$0xff]
    %v4204 = vld [vmem:[#allocation10 + $0xdc0] sm:$0xff]
    %v4205 = vld [vmem:[#allocation10 + $0xdc8] sm:$0xff]
    %v4206 = vld [vmem:[#allocation10 + $0xdd0] sm:$0xff]
    %v4207 = vld [vmem:[#allocation10 + $0xdd8] sm:$0xff]
    %v4208 = vld [vmem:[#allocation10 + $0xde0] sm:$0xff]
    %v4209 = vld [vmem:[#allocation10 + $0xde8] sm:$0xff]
    %v4210 = vld [vmem:[#allocation10 + $0xdf0] sm:$0xff]
    %v4211 = vld [vmem:[#allocation10 + $0xdf8] sm:$0xff]
    %v4212 = vld [vmem:[#allocation10 + $0xe00] sm:$0xff]
    %v4213 = vld [vmem:[#allocation10 + $0xe08] sm:$0xff]
    %v4214 = vld [vmem:[#allocation10 + $0xe10] sm:$0xff]
    %v4215 = vld [vmem:[#allocation10 + $0xe18] sm:$0xff]
    %v4216 = vld [vmem:[#allocation10 + $0xe20] sm:$0xff]
    %v4217 = vld [vmem:[#allocation10 + $0xe28] sm:$0xff]
    %v4218 = vld [vmem:[#allocation10 + $0xe30] sm:$0xff]
    %v4219 = vld [vmem:[#allocation10 + $0xe38] sm:$0xff]
    %v4220 = vld [vmem:[#allocation10 + $0xe40] sm:$0xff]
    %v4221 = vld [vmem:[#allocation10 + $0xe48] sm:$0xff]
    %v4222 = vld [vmem:[#allocation10 + $0xe50] sm:$0xff]
    %v4223 = vld [vmem:[#allocation10 + $0xe58] sm:$0xff]
    %v4224 = vld [vmem:[#allocation10 + $0xe60] sm:$0xff]
    %v4225 = vld [vmem:[#allocation10 + $0xe68] sm:$0xff]
    %v4226 = vld [vmem:[#allocation10 + $0xe70] sm:$0xff]
    %v4227 = vld [vmem:[#allocation10 + $0xe78] sm:$0xff]
    %v4228 = vld [vmem:[#allocation10 + $0xe80] sm:$0xff]
    %v4229 = vld [vmem:[#allocation10 + $0xe88] sm:$0xff]
    %v4230 = vld [vmem:[#allocation10 + $0xe90] sm:$0xff]
    %v4231 = vld [vmem:[#allocation10 + $0xe98] sm:$0xff]
    %v4232 = vld [vmem:[#allocation10 + $0xea0] sm:$0xff]
    %v4233 = vld [vmem:[#allocation10 + $0xea8] sm:$0xff]
    %v4234 = vld [vmem:[#allocation10 + $0xeb0] sm:$0xff]
    %v4235 = vld [vmem:[#allocation10 + $0xeb8] sm:$0xff]
    %v4236 = vld [vmem:[#allocation10 + $0xec0] sm:$0xff]
    %v4237 = vld [vmem:[#allocation10 + $0xec8] sm:$0xff]
    %v4238 = vld [vmem:[#allocation10 + $0xed0] sm:$0xff]
    %v4239 = vld [vmem:[#allocation10 + $0xed8] sm:$0xff]
    %v4240 = vld [vmem:[#allocation10 + $0xee0] sm:$0xff]
    %v4241 = vld [vmem:[#allocation10 + $0xee8] sm:$0xff]
    %v4242 = vld [vmem:[#allocation10 + $0xef0] sm:$0xff]
    %v4243 = vld [vmem:[#allocation10 + $0xef8] sm:$0xff]
    %v4244 = vld [vmem:[#allocation10 + $0xf00] sm:$0xff]
    %v4245 = vld [vmem:[#allocation10 + $0xf08] sm:$0xff]
    %v4246 = vld [vmem:[#allocation10 + $0xf10] sm:$0xff]
    %v4247 = vld [vmem:[#allocation10 + $0xf18] sm:$0xff]
    %v4248 = vld [vmem:[#allocation10 + $0xf20] sm:$0xff]
    %v4249 = vld [vmem:[#allocation10 + $0xf28] sm:$0xff]
    %v4250 = vld [vmem:[#allocation10 + $0xf30] sm:$0xff]
    %v4251 = vld [vmem:[#allocation10 + $0xf38] sm:$0xff]
    %v4252 = vld [vmem:[#allocation10 + $0xf40] sm:$0xff]
    %v4253 = vld [vmem:[#allocation10 + $0xf48] sm:$0xff]
    %v4254 = vld [vmem:[#allocation10 + $0xf50] sm:$0xff]
    %v4255 = vld [vmem:[#allocation10 + $0xf58] sm:$0xff]
    %v4256 = vld [vmem:[#allocation10 + $0xf60] sm:$0xff]
    %v4257 = vld [vmem:[#allocation10 + $0xf68] sm:$0xff]
    %v4258 = vld [vmem:[#allocation10 + $0xf70] sm:$0xff]
    %v4259 = vld [vmem:[#allocation10 + $0xf78] sm:$0xff]
    %v4260 = vld [vmem:[#allocation10 + $0xf80] sm:$0xff]
    %v4261 = vld [vmem:[#allocation10 + $0xf88] sm:$0xff]
    %v4262 = vld [vmem:[#allocation10 + $0xf90] sm:$0xff]
    %v4263 = vld [vmem:[#allocation10 + $0xf98] sm:$0xff]
    %v4264 = vld [vmem:[#allocation10 + $0xfa0] sm:$0xff]
    %v4265 = vld [vmem:[#allocation10 + $0xfa8] sm:$0xff]
    %v4266 = vld [vmem:[#allocation10 + $0xfb0] sm:$0xff]
    %v4267 = vld [vmem:[#allocation10 + $0xfb8] sm:$0xff]
    %v4268 = vld [vmem:[#allocation10 + $0xfc0] sm:$0xff]
    %v4269 = vld [vmem:[#allocation10 + $0xfc8] sm:$0xff]
    %v4270 = vld [vmem:[#allocation10 + $0xfd0] sm:$0xff]
    %v4271 = vld [vmem:[#allocation10 + $0xfd8] sm:$0xff]
    %v4272 = vld [vmem:[#allocation10 + $0xfe0] sm:$0xff]
    %v4273 = vld [vmem:[#allocation10 + $0xfe8] sm:$0xff]
    %v4274 = vld [vmem:[#allocation10 + $0xff0] sm:$0xff]
    %v4275 = vld [vmem:[#allocation10 + $0xff8] sm:$0xff]
    %v4276 = vld [vmem:[#allocation10 + $0x1000] sm:$0xff]
    %v4277 = vld [vmem:[#allocation10 + $0x1008] sm:$0xff]
    %v4278 = vld [vmem:[#allocation10 + $0x1010] sm:$0xff]
    %v4279 = vld [vmem:[#allocation10 + $0x1018] sm:$0xff]
    %v4280 = vld [vmem:[#allocation10 + $0x1020] sm:$0xff]
    %v4281 = vld [vmem:[#allocation10 + $0x1028] sm:$0xff]
    %v4282 = vld [vmem:[#allocation10 + $0x1030] sm:$0xff]
    %v4283 = vld [vmem:[#allocation10 + $0x1038] sm:$0xff]
    %v4284 = vld [vmem:[#allocation10 + $0x1040] sm:$0xff]
    %v4285 = vld [vmem:[#allocation10 + $0x1048] sm:$0xff]
    %v4286 = vld [vmem:[#allocation10 + $0x1050] sm:$0xff]
    %v4287 = vld [vmem:[#allocation10 + $0x1058] sm:$0xff]
    %v4288 = vld [vmem:[#allocation10 + $0x1060] sm:$0xff]
    %v4289 = vld [vmem:[#allocation10 + $0x1068] sm:$0xff]
    %v4290 = vld [vmem:[#allocation10 + $0x1070] sm:$0xff]
    %v4291 = vld [vmem:[#allocation10 + $0x1078] sm:$0xff]
    %v4292 = vld [vmem:[#allocation10 + $0x1080] sm:$0xff]
    %v4293 = vld [vmem:[#allocation10 + $0x1088] sm:$0xff]
    %v4294 = vld [vmem:[#allocation10 + $0x1090] sm:$0xff]
    %v4295 = vld [vmem:[#allocation10 + $0x1098] sm:$0xff]
    %v4296 = vld [vmem:[#allocation10 + $0x10a0] sm:$0xff]
    %v4297 = vld [vmem:[#allocation10 + $0x10a8] sm:$0xff]
    %v4298 = vld [vmem:[#allocation10 + $0x10b0] sm:$0xff]
    %v4299 = vld [vmem:[#allocation10 + $0x10b8] sm:$0xff]
    %v4300 = vld [vmem:[#allocation10 + $0x10c0] sm:$0xff]
    %v4301 = vld [vmem:[#allocation10 + $0x10c8] sm:$0xff]
    %v4302 = vld [vmem:[#allocation10 + $0x10d0] sm:$0xff]
    %v4303 = vld [vmem:[#allocation10 + $0x10d8] sm:$0xff]
    %v4304 = vld [vmem:[#allocation10 + $0x10e0] sm:$0xff]
    %v4305 = vld [vmem:[#allocation10 + $0x10e8] sm:$0xff]
    %v4306 = vld [vmem:[#allocation10 + $0x10f0] sm:$0xff]
    %v4307 = vld [vmem:[#allocation10 + $0x10f8] sm:$0xff]
    %v4308 = vld [vmem:[#allocation10 + $0x1100] sm:$0xff]
    %v4309 = vld [vmem:[#allocation10 + $0x1108] sm:$0xff]
    %v4310 = vld [vmem:[#allocation10 + $0x1110] sm:$0xff]
    %v4311 = vld [vmem:[#allocation10 + $0x1118] sm:$0xff]
    %v4312 = vld [vmem:[#allocation10 + $0x1120] sm:$0xff]
    %v4313 = vld [vmem:[#allocation10 + $0x1128] sm:$0xff]
    %v4314 = vld [vmem:[#allocation10 + $0x1130] sm:$0xff]
    %v4315 = vld [vmem:[#allocation10 + $0x1138] sm:$0xff]
    %v4316 = vld [vmem:[#allocation10 + $0x1140] sm:$0xff]
    %v4317 = vld [vmem:[#allocation10 + $0x1148] sm:$0xff]
    %v4318 = vld [vmem:[#allocation10 + $0x1150] sm:$0xff]
    %v4319 = vld [vmem:[#allocation10 + $0x1158] sm:$0xff]
    %v4320 = vld [vmem:[#allocation10 + $0x1160] sm:$0xff]
    %v4321 = vld [vmem:[#allocation10 + $0x1168] sm:$0xff]
    %v4322 = vld [vmem:[#allocation10 + $0x1170] sm:$0xff]
    %v4323 = vld [vmem:[#allocation10 + $0x1178] sm:$0xff]
    %v4324 = vld [vmem:[#allocation10 + $0x1180] sm:$0xff]
    %v4325 = vld [vmem:[#allocation10 + $0x1188] sm:$0xff]
    %v4326 = vld [vmem:[#allocation10 + $0x1190] sm:$0xff]
    %v4327 = vld [vmem:[#allocation10 + $0x1198] sm:$0xff]
    %v4328 = vld [vmem:[#allocation10 + $0x11a0] sm:$0xff]
    %v4329 = vld [vmem:[#allocation10 + $0x11a8] sm:$0xff]
    %v4330 = vld [vmem:[#allocation10 + $0x11b0] sm:$0xff]
    %v4331 = vld [vmem:[#allocation10 + $0x11b8] sm:$0xff]
    %v4332 = vld [vmem:[#allocation10 + $0x11c0] sm:$0xff]
    %v4333 = vld [vmem:[#allocation10 + $0x11c8] sm:$0xff]
    %v4334 = vld [vmem:[#allocation10 + $0x11d0] sm:$0xff]
    %v4335 = vld [vmem:[#allocation10 + $0x11d8] sm:$0xff]
    %v4336 = vld [vmem:[#allocation10 + $0x11e0] sm:$0xff]
    %v4337 = vld [vmem:[#allocation10 + $0x11e8] sm:$0xff]
    %v4338 = vld [vmem:[#allocation10 + $0x11f0] sm:$0xff]
    %v4339 = vld [vmem:[#allocation10 + $0x11f8] sm:$0xff]
    %v4340 = vld [vmem:[#allocation10 + $0x1200] sm:$0xff]
    %v4341 = vld [vmem:[#allocation10 + $0x1208] sm:$0xff]
    %v4342 = vld [vmem:[#allocation10 + $0x1210] sm:$0xff]
    %v4343 = vld [vmem:[#allocation10 + $0x1218] sm:$0xff]
    %v4344 = vld [vmem:[#allocation10 + $0x1220] sm:$0xff]
    %v4345 = vld [vmem:[#allocation10 + $0x1228] sm:$0xff]
    %v4346 = vld [vmem:[#allocation10 + $0x1230] sm:$0xff]
    %v4347 = vld [vmem:[#allocation10 + $0x1238] sm:$0xff]
    %v4348 = vld [vmem:[#allocation10 + $0x1240] sm:$0xff]
    %v4349 = vld [vmem:[#allocation10 + $0x1248] sm:$0xff]
    %v4350 = vld [vmem:[#allocation10 + $0x1250] sm:$0xff]
    %v4351 = vld [vmem:[#allocation10 + $0x1258] sm:$0xff]
    %v4352 = vld [vmem:[#allocation10 + $0x1260] sm:$0xff]
    %v4353 = vld [vmem:[#allocation10 + $0x1268] sm:$0xff]
    %v4354 = vld [vmem:[#allocation10 + $0x1270] sm:$0xff]
    %v4355 = vld [vmem:[#allocation10 + $0x1278] sm:$0xff]
    %v4356 = vld [vmem:[#allocation10 + $0x1280] sm:$0xff]
    %v4357 = vld [vmem:[#allocation10 + $0x1288] sm:$0xff]
    %v4358 = vld [vmem:[#allocation10 + $0x1290] sm:$0xff]
    %v4359 = vld [vmem:[#allocation10 + $0x1298] sm:$0xff]
    %v4360 = vld [vmem:[#allocation10 + $0x12a0] sm:$0xff]
    %v4361 = vld [vmem:[#allocation10 + $0x12a8] sm:$0xff]
    %v4362 = vld [vmem:[#allocation10 + $0x12b0] sm:$0xff]
    %v4363 = vld [vmem:[#allocation10 + $0x12b8] sm:$0xff]
    %v4364 = vld [vmem:[#allocation10 + $0x12c0] sm:$0xff]
    %v4365 = vld [vmem:[#allocation10 + $0x12c8] sm:$0xff]
    %v4366 = vld [vmem:[#allocation10 + $0x12d0] sm:$0xff]
    %v4367 = vld [vmem:[#allocation10 + $0x12d8] sm:$0xff]
    %v4368 = vld [vmem:[#allocation10 + $0x12e0] sm:$0xff]
    %v4369 = vld [vmem:[#allocation10 + $0x12e8] sm:$0xff]
    %v4370 = vld [vmem:[#allocation10 + $0x12f0] sm:$0xff]
    %v4371 = vld [vmem:[#allocation10 + $0x12f8] sm:$0xff]
    %v4372 = vld [vmem:[#allocation10 + $0x1300] sm:$0xff]
    %v4373 = vld [vmem:[#allocation10 + $0x1308] sm:$0xff]
    %v4374 = vld [vmem:[#allocation10 + $0x1310] sm:$0xff]
    %v4375 = vld [vmem:[#allocation10 + $0x1318] sm:$0xff]
    %v4376 = vld [vmem:[#allocation10 + $0x1320] sm:$0xff]
    %v4377 = vld [vmem:[#allocation10 + $0x1328] sm:$0xff]
    %v4378 = vld [vmem:[#allocation10 + $0x1330] sm:$0xff]
    %v4379 = vld [vmem:[#allocation10 + $0x1338] sm:$0xff]
    %v4380 = vld [vmem:[#allocation10 + $0x1340] sm:$0xff]
    %v4381 = vld [vmem:[#allocation10 + $0x1348] sm:$0xff]
    %v4382 = vld [vmem:[#allocation10 + $0x1350] sm:$0xff]
    %v4383 = vld [vmem:[#allocation10 + $0x1358] sm:$0xff]
    %v4384 = vld [vmem:[#allocation10 + $0x1360] sm:$0xff]
    %v4385 = vld [vmem:[#allocation10 + $0x1368] sm:$0xff]
    %v4386 = vld [vmem:[#allocation10 + $0x1370] sm:$0xff]
    %v4387 = vld [vmem:[#allocation10 + $0x1378] sm:$0xff]
    %v4388 = vld [vmem:[#allocation10 + $0x1380] sm:$0xff]
    %v4389 = vld [vmem:[#allocation10 + $0x1388] sm:$0xff]
    %v4390 = vld [vmem:[#allocation10 + $0x1390] sm:$0xff]
    %v4391 = vld [vmem:[#allocation10 + $0x1398] sm:$0xff]
    %v4392 = vld [vmem:[#allocation10 + $0x13a0] sm:$0xff]
    %v4393 = vld [vmem:[#allocation10 + $0x13a8] sm:$0xff]
    %v4394 = vld [vmem:[#allocation10 + $0x13b0] sm:$0xff]
    %v4395 = vld [vmem:[#allocation10 + $0x13b8] sm:$0xff]
    %v4396 = vld [vmem:[#allocation10 + $0x13c0] sm:$0xff]
    %v4397 = vld [vmem:[#allocation10 + $0x13c8] sm:$0xff]
    %v4398 = vld [vmem:[#allocation10 + $0x13d0] sm:$0xff]
    %v4399 = vld [vmem:[#allocation10 + $0x13d8] sm:$0xff]
    %v4400 = vld [vmem:[#allocation10 + $0x13e0] sm:$0xff]
    %v4401 = vld [vmem:[#allocation10 + $0x13e8] sm:$0xff]
    %v4402 = vld [vmem:[#allocation10 + $0x13f0] sm:$0xff]
    %v4403 = vld [vmem:[#allocation10 + $0x13f8] sm:$0xff]
    %v4404 = vld [vmem:[#allocation10 + $0x1400] sm:$0xff]
    %v4405 = vld [vmem:[#allocation10 + $0x1408] sm:$0xff]
    %v4406 = vld [vmem:[#allocation10 + $0x1410] sm:$0xff]
    %v4407 = vld [vmem:[#allocation10 + $0x1418] sm:$0xff]
    %v4408 = vld [vmem:[#allocation10 + $0x1420] sm:$0xff]
    %v4409 = vld [vmem:[#allocation10 + $0x1428] sm:$0xff]
    %v4410 = vld [vmem:[#allocation10 + $0x1430] sm:$0xff]
    %v4411 = vld [vmem:[#allocation10 + $0x1438] sm:$0xff]
    %v4412 = vld [vmem:[#allocation10 + $0x1440] sm:$0xff]
    %v4413 = vld [vmem:[#allocation10 + $0x1448] sm:$0xff]
    %v4414 = vld [vmem:[#allocation10 + $0x1450] sm:$0xff]
    %v4415 = vld [vmem:[#allocation10 + $0x1458] sm:$0xff]
    %v4416 = vld [vmem:[#allocation10 + $0x1460] sm:$0xff]
    %v4417 = vld [vmem:[#allocation10 + $0x1468] sm:$0xff]
    %v4418 = vld [vmem:[#allocation10 + $0x1470] sm:$0xff]
    %v4419 = vld [vmem:[#allocation10 + $0x1478] sm:$0xff]
    %v4420 = vld [vmem:[#allocation10 + $0x1480] sm:$0xff]
    %v4421 = vld [vmem:[#allocation10 + $0x1488] sm:$0xff]
    %v4422 = vld [vmem:[#allocation10 + $0x1490] sm:$0xff]
    %v4423 = vld [vmem:[#allocation10 + $0x1498] sm:$0xff]
    %v4424 = vld [vmem:[#allocation10 + $0x14a0] sm:$0xff]
    %v4425 = vld [vmem:[#allocation10 + $0x14a8] sm:$0xff]
    %v4426 = vld [vmem:[#allocation10 + $0x14b0] sm:$0xff]
    %v4427 = vld [vmem:[#allocation10 + $0x14b8] sm:$0xff]
    %v4428 = vld [vmem:[#allocation10 + $0x14c0] sm:$0xff]
    %v4429 = vld [vmem:[#allocation10 + $0x14c8] sm:$0xff]
    %v4430 = vld [vmem:[#allocation10 + $0x14d0] sm:$0xff]
    %v4431 = vld [vmem:[#allocation10 + $0x14d8] sm:$0xff]
    %v4432 = vld [vmem:[#allocation10 + $0x14e0] sm:$0xff]
    %v4433 = vld [vmem:[#allocation10 + $0x14e8] sm:$0xff]
    %v4434 = vld [vmem:[#allocation10 + $0x14f0] sm:$0xff]
    %v4435 = vld [vmem:[#allocation10 + $0x14f8] sm:$0xff]
    %v4436 = vld [vmem:[#allocation10 + $0x1500] sm:$0xff]
    %v4437 = vld [vmem:[#allocation10 + $0x1508] sm:$0xff]
    %v4438 = vld [vmem:[#allocation10 + $0x1510] sm:$0xff]
    %v4439 = vld [vmem:[#allocation10 + $0x1518] sm:$0xff]
    %v4440 = vld [vmem:[#allocation10 + $0x1520] sm:$0xff]
    %v4441 = vld [vmem:[#allocation10 + $0x1528] sm:$0xff]
    %v4442 = vld [vmem:[#allocation10 + $0x1530] sm:$0xff]
    %v4443 = vld [vmem:[#allocation10 + $0x1538] sm:$0xff]
    %v4444 = vld [vmem:[#allocation10 + $0x1540] sm:$0xff]
    %v4445 = vld [vmem:[#allocation10 + $0x1548] sm:$0xff]
    %v4446 = vld [vmem:[#allocation10 + $0x1550] sm:$0xff]
    %v4447 = vld [vmem:[#allocation10 + $0x1558] sm:$0xff]
    %v4448 = vld [vmem:[#allocation10 + $0x1560] sm:$0xff]
    %v4449 = vld [vmem:[#allocation10 + $0x1568] sm:$0xff]
    %v4450 = vld [vmem:[#allocation10 + $0x1570] sm:$0xff]
    %v4451 = vld [vmem:[#allocation10 + $0x1578] sm:$0xff]
    %v4452 = vld [vmem:[#allocation10 + $0x1580] sm:$0xff]
    %v4453 = vld [vmem:[#allocation10 + $0x1588] sm:$0xff]
    %v4454 = vld [vmem:[#allocation10 + $0x1590] sm:$0xff]
    %v4455 = vld [vmem:[#allocation10 + $0x1598] sm:$0xff]
    %v4456 = vld [vmem:[#allocation10 + $0x15a0] sm:$0xff]
    %v4457 = vld [vmem:[#allocation10 + $0x15a8] sm:$0xff]
    %v4458 = vld [vmem:[#allocation10 + $0x15b0] sm:$0xff]
    %v4459 = vld [vmem:[#allocation10 + $0x15b8] sm:$0xff]
    %v4460 = vld [vmem:[#allocation10 + $0x15c0] sm:$0xff]
    %v4461 = vld [vmem:[#allocation10 + $0x15c8] sm:$0xff]
    %v4462 = vld [vmem:[#allocation10 + $0x15d0] sm:$0xff]
    %v4463 = vld [vmem:[#allocation10 + $0x15d8] sm:$0xff]
    %v4464 = vld [vmem:[#allocation10 + $0x15e0] sm:$0xff]
    %v4465 = vld [vmem:[#allocation10 + $0x15e8] sm:$0xff]
    %v4466 = vld [vmem:[#allocation10 + $0x15f0] sm:$0xff]
    %v4467 = vld [vmem:[#allocation10 + $0x15f8] sm:$0xff]
    %v4468 = vld [vmem:[#allocation10 + $0x1600] sm:$0xff]
    %v4469 = vld [vmem:[#allocation10 + $0x1608] sm:$0xff]
    %v4470 = vld [vmem:[#allocation10 + $0x1610] sm:$0xff]
    %v4471 = vld [vmem:[#allocation10 + $0x1618] sm:$0xff]
    %v4472 = vld [vmem:[#allocation10 + $0x1620] sm:$0xff]
    %v4473 = vld [vmem:[#allocation10 + $0x1628] sm:$0xff]
    %v4474 = vld [vmem:[#allocation10 + $0x1630] sm:$0xff]
    %v4475 = vld [vmem:[#allocation10 + $0x1638] sm:$0xff]
    %v4476 = vld [vmem:[#allocation10 + $0x1640] sm:$0xff]
    %v4477 = vld [vmem:[#allocation10 + $0x1648] sm:$0xff]
    %v4478 = vld [vmem:[#allocation10 + $0x1650] sm:$0xff]
    %v4479 = vld [vmem:[#allocation10 + $0x1658] sm:$0xff]
    %v4480 = vld [vmem:[#allocation10 + $0x1660] sm:$0xff]
    %v4481 = vld [vmem:[#allocation10 + $0x1668] sm:$0xff]
    %v4482 = vld [vmem:[#allocation10 + $0x1670] sm:$0xff]
    %v4483 = vld [vmem:[#allocation10 + $0x1678] sm:$0xff]
    %v4484 = vld [vmem:[#allocation10 + $0x1680] sm:$0xff]
    %v4485 = vld [vmem:[#allocation10 + $0x1688] sm:$0xff]
    %v4486 = vld [vmem:[#allocation10 + $0x1690] sm:$0xff]
    %v4487 = vld [vmem:[#allocation10 + $0x1698] sm:$0xff]
    %v4488 = vld [vmem:[#allocation10 + $0x16a0] sm:$0xff]
    %v4489 = vld [vmem:[#allocation10 + $0x16a8] sm:$0xff]
    %v4490 = vld [vmem:[#allocation10 + $0x16b0] sm:$0xff]
    %v4491 = vld [vmem:[#allocation10 + $0x16b8] sm:$0xff]
    %v4492 = vld [vmem:[#allocation10 + $0x16c0] sm:$0xff]
    %v4493 = vld [vmem:[#allocation10 + $0x16c8] sm:$0xff]
    %v4494 = vld [vmem:[#allocation10 + $0x16d0] sm:$0xff]
    %v4495 = vld [vmem:[#allocation10 + $0x16d8] sm:$0xff]
    %v4496 = vld [vmem:[#allocation10 + $0x16e0] sm:$0xff]
    %v4497 = vld [vmem:[#allocation10 + $0x16e8] sm:$0xff]
    %v4498 = vld [vmem:[#allocation10 + $0x16f0] sm:$0xff]
    %v4499 = vld [vmem:[#allocation10 + $0x16f8] sm:$0xff]
    %v4500 = vld [vmem:[#allocation10 + $0x1700] sm:$0xff]
    %v4501 = vld [vmem:[#allocation10 + $0x1708] sm:$0xff]
    %v4502 = vld [vmem:[#allocation10 + $0x1710] sm:$0xff]
    %v4503 = vld [vmem:[#allocation10 + $0x1718] sm:$0xff]
    %v4504 = vld [vmem:[#allocation10 + $0x1720] sm:$0xff]
    %v4505 = vld [vmem:[#allocation10 + $0x1728] sm:$0xff]
    %v4506 = vld [vmem:[#allocation10 + $0x1730] sm:$0xff]
    %v4507 = vld [vmem:[#allocation10 + $0x1738] sm:$0xff]
    %v4508 = vld [vmem:[#allocation10 + $0x1740] sm:$0xff]
    %v4509 = vld [vmem:[#allocation10 + $0x1748] sm:$0xff]
    %v4510 = vld [vmem:[#allocation10 + $0x1750] sm:$0xff]
    %v4511 = vld [vmem:[#allocation10 + $0x1758] sm:$0xff]
    %v4512 = vld [vmem:[#allocation10 + $0x1760] sm:$0xff]
    %v4513 = vld [vmem:[#allocation10 + $0x1768] sm:$0xff]
    %v4514 = vld [vmem:[#allocation10 + $0x1770] sm:$0xff]
    %v4515 = vld [vmem:[#allocation10 + $0x1778] sm:$0xff]
    %v4516 = vld [vmem:[#allocation10 + $0x1780] sm:$0xff]
    %v4517 = vld [vmem:[#allocation10 + $0x1788] sm:$0xff]
    %v4518 = vld [vmem:[#allocation10 + $0x1790] sm:$0xff]
    %v4519 = vld [vmem:[#allocation10 + $0x1798] sm:$0xff]
    %v4520 = vld [vmem:[#allocation10 + $0x17a0] sm:$0xff]
    %v4521 = vld [vmem:[#allocation10 + $0x17a8] sm:$0xff]
    %v4522 = vld [vmem:[#allocation10 + $0x17b0] sm:$0xff]
    %v4523 = vld [vmem:[#allocation10 + $0x17b8] sm:$0xff]
    %v4524 = vld [vmem:[#allocation10 + $0x17c0] sm:$0xff]
    %v4525 = vld [vmem:[#allocation10 + $0x17c8] sm:$0xff]
    %v4526 = vld [vmem:[#allocation10 + $0x17d0] sm:$0xff]
    %v4527 = vld [vmem:[#allocation10 + $0x17d8] sm:$0xff]
    %v4528 = vld [vmem:[#allocation10 + $0x17e0] sm:$0xff]
    %v4529 = vld [vmem:[#allocation10 + $0x17e8] sm:$0xff]
    %v4530 = vld [vmem:[#allocation10 + $0x17f0] sm:$0xff]
    %v4531 = vld [vmem:[#allocation10 + $0x17f8] sm:$0xff]
    %v4532 = vld [vmem:[#allocation10 + $0x1800] sm:$0xff]
    %v4533 = vld [vmem:[#allocation10 + $0x1808] sm:$0xff]
    %v4534 = vld [vmem:[#allocation10 + $0x1810] sm:$0xff]
    %v4535 = vld [vmem:[#allocation10 + $0x1818] sm:$0xff]
    %v4536 = vld [vmem:[#allocation10 + $0x1820] sm:$0xff]
    %v4537 = vld [vmem:[#allocation10 + $0x1828] sm:$0xff]
    %v4538 = vld [vmem:[#allocation10 + $0x1830] sm:$0xff]
    %v4539 = vld [vmem:[#allocation10 + $0x1838] sm:$0xff]
    %v4540 = vld [vmem:[#allocation10 + $0x1840] sm:$0xff]
    %v4541 = vld [vmem:[#allocation10 + $0x1848] sm:$0xff]
    %v4542 = vld [vmem:[#allocation10 + $0x1850] sm:$0xff]
    %v4543 = vld [vmem:[#allocation10 + $0x1858] sm:$0xff]
    %v4544 = vld [vmem:[#allocation10 + $0x1860] sm:$0xff]
    %v4545 = vld [vmem:[#allocation10 + $0x1868] sm:$0xff]
    %v4546 = vld [vmem:[#allocation10 + $0x1870] sm:$0xff]
    %v4547 = vld [vmem:[#allocation10 + $0x1878] sm:$0xff]
    %v4548 = vld [vmem:[#allocation10 + $0x1880] sm:$0xff]
    %v4549 = vld [vmem:[#allocation10 + $0x1888] sm:$0xff]
    %v4550 = vld [vmem:[#allocation10 + $0x1890] sm:$0xff]
    %v4551 = vld [vmem:[#allocation10 + $0x1898] sm:$0xff]
    %v4552 = vld [vmem:[#allocation10 + $0x18a0] sm:$0xff]
    %v4553 = vld [vmem:[#allocation10 + $0x18a8] sm:$0xff]
    %v4554 = vld [vmem:[#allocation10 + $0x18b0] sm:$0xff]
    %v4555 = vld [vmem:[#allocation10 + $0x18b8] sm:$0xff]
    %v4556 = vld [vmem:[#allocation10 + $0x18c0] sm:$0xff]
    %v4557 = vld [vmem:[#allocation10 + $0x18c8] sm:$0xff]
    %v4558 = vld [vmem:[#allocation10 + $0x18d0] sm:$0xff]
    %v4559 = vld [vmem:[#allocation10 + $0x18d8] sm:$0xff]
    %v4560 = vld [vmem:[#allocation10 + $0x18e0] sm:$0xff]
    %v4561 = vld [vmem:[#allocation10 + $0x18e8] sm:$0xff]
    %v4562 = vld [vmem:[#allocation10 + $0x18f0] sm:$0xff]
    %v4563 = vld [vmem:[#allocation10 + $0x18f8] sm:$0xff]
    %v4564 = vld [vmem:[#allocation10 + $0x1900] sm:$0xff]
    %v4565 = vld [vmem:[#allocation10 + $0x1908] sm:$0xff]
    %v4566 = vld [vmem:[#allocation10 + $0x1910] sm:$0xff]
    %v4567 = vld [vmem:[#allocation10 + $0x1918] sm:$0xff]
    %v4568 = vld [vmem:[#allocation10 + $0x1920] sm:$0xff]
    %v4569 = vld [vmem:[#allocation10 + $0x1928] sm:$0xff]
    %v4570 = vld [vmem:[#allocation10 + $0x1930] sm:$0xff]
    %v4571 = vld [vmem:[#allocation10 + $0x1938] sm:$0xff]
    %v4572 = vld [vmem:[#allocation10 + $0x1940] sm:$0xff]
    %v4573 = vld [vmem:[#allocation10 + $0x1948] sm:$0xff]
    %v4574 = vld [vmem:[#allocation10 + $0x1950] sm:$0xff]
    %v4575 = vld [vmem:[#allocation10 + $0x1958] sm:$0xff]
    %v4576 = vld [vmem:[#allocation10 + $0x1960] sm:$0xff]
    %v4577 = vld [vmem:[#allocation10 + $0x1968] sm:$0xff]
    %v4578 = vld [vmem:[#allocation10 + $0x1970] sm:$0xff]
    %v4579 = vld [vmem:[#allocation10 + $0x1978] sm:$0xff]
    %v4580 = vld [vmem:[#allocation10 + $0x1980] sm:$0xff]
    %v4581 = vld [vmem:[#allocation10 + $0x1988] sm:$0xff]
    %v4582 = vld [vmem:[#allocation10 + $0x1990] sm:$0xff]
    %v4583 = vld [vmem:[#allocation10 + $0x1998] sm:$0xff]
    %v4584 = vld [vmem:[#allocation10 + $0x19a0] sm:$0xff]
    %v4585 = vld [vmem:[#allocation10 + $0x19a8] sm:$0xff]
    %v4586 = vld [vmem:[#allocation10 + $0x19b0] sm:$0xff]
    %v4587 = vld [vmem:[#allocation10 + $0x19b8] sm:$0xff]
    %v4588 = vld [vmem:[#allocation10 + $0x19c0] sm:$0xff]
    %v4589 = vld [vmem:[#allocation10 + $0x19c8] sm:$0xff]
    %v4590 = vld [vmem:[#allocation10 + $0x19d0] sm:$0xff]
    %v4591 = vld [vmem:[#allocation10 + $0x19d8] sm:$0xff]
    %v4592 = vld [vmem:[#allocation10 + $0x19e0] sm:$0xff]
    %v4593 = vld [vmem:[#allocation10 + $0x19e8] sm:$0xff]
    %v4594 = vld [vmem:[#allocation10 + $0x19f0] sm:$0xff]
    %v4595 = vld [vmem:[#allocation10 + $0x19f8] sm:$0xff]
    %v4596 = vld [vmem:[#allocation10 + $0x1a00] sm:$0xff]
    %v4597 = vld [vmem:[#allocation10 + $0x1a08] sm:$0xff]
    %v4598 = vld [vmem:[#allocation10 + $0x1a10] sm:$0xff]
    %v4599 = vld [vmem:[#allocation10 + $0x1a18] sm:$0xff]
    %v4600 = vld [vmem:[#allocation10 + $0x1a20] sm:$0xff]
    %v4601 = vld [vmem:[#allocation10 + $0x1a28] sm:$0xff]
    %v4602 = vld [vmem:[#allocation10 + $0x1a30] sm:$0xff]
    %v4603 = vld [vmem:[#allocation10 + $0x1a38] sm:$0xff]
    %v4604 = vld [vmem:[#allocation10 + $0x1a40] sm:$0xff]
    %v4605 = vld [vmem:[#allocation10 + $0x1a48] sm:$0xff]
    %v4606 = vld [vmem:[#allocation10 + $0x1a50] sm:$0xff]
    %v4607 = vld [vmem:[#allocation10 + $0x1a58] sm:$0xff]
    %v4608 = vld [vmem:[#allocation10 + $0x1a60] sm:$0xff]
    %v4609 = vld [vmem:[#allocation10 + $0x1a68] sm:$0xff]
    %v4610 = vld [vmem:[#allocation10 + $0x1a70] sm:$0xff]
    %v4611 = vld [vmem:[#allocation10 + $0x1a78] sm:$0xff]
    %v4612 = vld [vmem:[#allocation10 + $0x1a80] sm:$0xff]
    %v4613 = vld [vmem:[#allocation10 + $0x1a88] sm:$0xff]
    %v4614 = vld [vmem:[#allocation10 + $0x1a90] sm:$0xff]
    %v4615 = vld [vmem:[#allocation10 + $0x1a98] sm:$0xff]
    %v4616 = vld [vmem:[#allocation10 + $0x1aa0] sm:$0xff]
    %v4617 = vld [vmem:[#allocation10 + $0x1aa8] sm:$0xff]
    %v4618 = vld [vmem:[#allocation10 + $0x1ab0] sm:$0xff]
    %v4619 = vld [vmem:[#allocation10 + $0x1ab8] sm:$0xff]
    %v4620 = vld [vmem:[#allocation10 + $0x1ac0] sm:$0xff]
    %v4621 = vld [vmem:[#allocation10 + $0x1ac8] sm:$0xff]
    %v4622 = vld [vmem:[#allocation10 + $0x1ad0] sm:$0xff]
    %v4623 = vld [vmem:[#allocation10 + $0x1ad8] sm:$0xff]
    %v4624 = vld [vmem:[#allocation10 + $0x1ae0] sm:$0xff]
    %v4625 = vld [vmem:[#allocation10 + $0x1ae8] sm:$0xff]
    %v4626 = vld [vmem:[#allocation10 + $0x1af0] sm:$0xff]
    %v4627 = vld [vmem:[#allocation10 + $0x1af8] sm:$0xff]
    %v4628 = vld [vmem:[#allocation10 + $0x1b00] sm:$0xff]
    %v4629 = vld [vmem:[#allocation10 + $0x1b08] sm:$0xff]
    %v4630 = vld [vmem:[#allocation10 + $0x1b10] sm:$0xff]
    %v4631 = vld [vmem:[#allocation10 + $0x1b18] sm:$0xff]
    %v4632 = vld [vmem:[#allocation10 + $0x1b20] sm:$0xff]
    %v4633 = vld [vmem:[#allocation10 + $0x1b28] sm:$0xff]
    %v4634 = vld [vmem:[#allocation10 + $0x1b30] sm:$0xff]
    %v4635 = vld [vmem:[#allocation10 + $0x1b38] sm:$0xff]
    %v4636 = vld [vmem:[#allocation10 + $0x1b40] sm:$0xff]
    %v4637 = vld [vmem:[#allocation10 + $0x1b48] sm:$0xff]
    %v4638 = vld [vmem:[#allocation10 + $0x1b50] sm:$0xff]
    %v4639 = vld [vmem:[#allocation10 + $0x1b58] sm:$0xff]
    %v4640 = vld [vmem:[#allocation10 + $0x1b60] sm:$0xff]
    %v4641 = vld [vmem:[#allocation10 + $0x1b68] sm:$0xff]
    %v4642 = vld [vmem:[#allocation10 + $0x1b70] sm:$0xff]
    %v4643 = vld [vmem:[#allocation10 + $0x1b78] sm:$0xff]
    %v4644 = vld [vmem:[#allocation10 + $0x1b80] sm:$0xff]
    %v4645 = vld [vmem:[#allocation10 + $0x1b88] sm:$0xff]
    %v4646 = vld [vmem:[#allocation10 + $0x1b90] sm:$0xff]
    %v4647 = vld [vmem:[#allocation10 + $0x1b98] sm:$0xff]
    %v4648 = vld [vmem:[#allocation10 + $0x1ba0] sm:$0xff]
    %v4649 = vld [vmem:[#allocation10 + $0x1ba8] sm:$0xff]
    %v4650 = vld [vmem:[#allocation10 + $0x1bb0] sm:$0xff]
    %v4651 = vld [vmem:[#allocation10 + $0x1bb8] sm:$0xff]
    %v4652 = vld [vmem:[#allocation10 + $0x1bc0] sm:$0xff]
    %v4653 = vld [vmem:[#allocation10 + $0x1bc8] sm:$0xff]
    %v4654 = vld [vmem:[#allocation10 + $0x1bd0] sm:$0xff]
    %v4655 = vld [vmem:[#allocation10 + $0x1bd8] sm:$0xff]
    %v4656 = vld [vmem:[#allocation10 + $0x1be0] sm:$0xff]
    %v4657 = vld [vmem:[#allocation10 + $0x1be8] sm:$0xff]
    %v4658 = vld [vmem:[#allocation10 + $0x1bf0] sm:$0xff]
    %v4659 = vld [vmem:[#allocation10 + $0x1bf8] sm:$0xff]
    %v4660 = vld [vmem:[#allocation10 + $0x1c00] sm:$0xff]
    %v4661 = vld [vmem:[#allocation10 + $0x1c08] sm:$0xff]
    %v4662 = vld [vmem:[#allocation10 + $0x1c10] sm:$0xff]
    %v4663 = vld [vmem:[#allocation10 + $0x1c18] sm:$0xff]
    %v4664 = vld [vmem:[#allocation10 + $0x1c20] sm:$0xff]
    %v4665 = vld [vmem:[#allocation10 + $0x1c28] sm:$0xff]
    %v4666 = vld [vmem:[#allocation10 + $0x1c30] sm:$0xff]
    %v4667 = vld [vmem:[#allocation10 + $0x1c38] sm:$0xff]
    %v4668 = vld [vmem:[#allocation10 + $0x1c40] sm:$0xff]
    %v4669 = vld [vmem:[#allocation10 + $0x1c48] sm:$0xff]
    %v4670 = vld [vmem:[#allocation10 + $0x1c50] sm:$0xff]
    %v4671 = vld [vmem:[#allocation10 + $0x1c58] sm:$0xff]
    %v4672 = vld [vmem:[#allocation10 + $0x1c60] sm:$0xff]
    %v4673 = vld [vmem:[#allocation10 + $0x1c68] sm:$0xff]
    %v4674 = vld [vmem:[#allocation10 + $0x1c70] sm:$0xff]
    %v4675 = vld [vmem:[#allocation10 + $0x1c78] sm:$0xff]
    %v4676 = vld [vmem:[#allocation10 + $0x1c80] sm:$0xff]
    %v4677 = vld [vmem:[#allocation10 + $0x1c88] sm:$0xff]
    %v4678 = vld [vmem:[#allocation10 + $0x1c90] sm:$0xff]
    %v4679 = vld [vmem:[#allocation10 + $0x1c98] sm:$0xff]
    %v4680 = vld [vmem:[#allocation10 + $0x1ca0] sm:$0xff]
    %v4681 = vld [vmem:[#allocation10 + $0x1ca8] sm:$0xff]
    %v4682 = vld [vmem:[#allocation10 + $0x1cb0] sm:$0xff]
    %v4683 = vld [vmem:[#allocation10 + $0x1cb8] sm:$0xff]
    %v4684 = vld [vmem:[#allocation10 + $0x1cc0] sm:$0xff]
    %v4685 = vld [vmem:[#allocation10 + $0x1cc8] sm:$0xff]
    %v4686 = vld [vmem:[#allocation10 + $0x1cd0] sm:$0xff]
    %v4687 = vld [vmem:[#allocation10 + $0x1cd8] sm:$0xff]
    %v4688 = vld [vmem:[#allocation10 + $0x1ce0] sm:$0xff]
    %v4689 = vld [vmem:[#allocation10 + $0x1ce8] sm:$0xff]
    %v4690 = vld [vmem:[#allocation10 + $0x1cf0] sm:$0xff]
    %v4691 = vld [vmem:[#allocation10 + $0x1cf8] sm:$0xff]
    %v4692 = vld [vmem:[#allocation10 + $0x1d00] sm:$0xff]
    %v4693 = vld [vmem:[#allocation10 + $0x1d08] sm:$0xff]
    %v4694 = vld [vmem:[#allocation10 + $0x1d10] sm:$0xff]
    %v4695 = vld [vmem:[#allocation10 + $0x1d18] sm:$0xff]
    %v4696 = vld [vmem:[#allocation10 + $0x1d20] sm:$0xff]
    %v4697 = vld [vmem:[#allocation10 + $0x1d28] sm:$0xff]
    %v4698 = vld [vmem:[#allocation10 + $0x1d30] sm:$0xff]
    %v4699 = vld [vmem:[#allocation10 + $0x1d38] sm:$0xff]
    %v4700 = vld [vmem:[#allocation10 + $0x1d40] sm:$0xff]
    %v4701 = vld [vmem:[#allocation10 + $0x1d48] sm:$0xff]
    %v4702 = vld [vmem:[#allocation10 + $0x1d50] sm:$0xff]
    %v4703 = vld [vmem:[#allocation10 + $0x1d58] sm:$0xff]
    %v4704 = vld [vmem:[#allocation10 + $0x1d60] sm:$0xff]
    %v4705 = vld [vmem:[#allocation10 + $0x1d68] sm:$0xff]
    %v4706 = vld [vmem:[#allocation10 + $0x1d70] sm:$0xff]
    %v4707 = vld [vmem:[#allocation10 + $0x1d78] sm:$0xff]
    %v4708 = vld [vmem:[#allocation10 + $0x1d80] sm:$0xff]
    %v4709 = vld [vmem:[#allocation10 + $0x1d88] sm:$0xff]
    %v4710 = vld [vmem:[#allocation10 + $0x1d90] sm:$0xff]
    %v4711 = vld [vmem:[#allocation10 + $0x1d98] sm:$0xff]
    %v4712 = vld [vmem:[#allocation10 + $0x1da0] sm:$0xff]
    %v4713 = vld [vmem:[#allocation10 + $0x1da8] sm:$0xff]
    %v4714 = vld [vmem:[#allocation10 + $0x1db0] sm:$0xff]
    %v4715 = vld [vmem:[#allocation10 + $0x1db8] sm:$0xff]
    %v4716 = vld [vmem:[#allocation10 + $0x1dc0] sm:$0xff]
    %v4717 = vld [vmem:[#allocation10 + $0x1dc8] sm:$0xff]
    %v4718 = vld [vmem:[#allocation10 + $0x1dd0] sm:$0xff]
    %v4719 = vld [vmem:[#allocation10 + $0x1dd8] sm:$0xff]
    %v4720 = vld [vmem:[#allocation10 + $0x1de0] sm:$0xff]
    %v4721 = vld [vmem:[#allocation10 + $0x1de8] sm:$0xff]
    %v4722 = vld [vmem:[#allocation10 + $0x1df0] sm:$0xff]
    %v4723 = vld [vmem:[#allocation10 + $0x1df8] sm:$0xff]
    %v4724 = vld [vmem:[#allocation10 + $0x1e00] sm:$0xff]
    %v4725 = vld [vmem:[#allocation10 + $0x1e08] sm:$0xff]
    %v4726 = vld [vmem:[#allocation10 + $0x1e10] sm:$0xff]
    %v4727 = vld [vmem:[#allocation10 + $0x1e18] sm:$0xff]
    %v4728 = vld [vmem:[#allocation10 + $0x1e20] sm:$0xff]
    %v4729 = vld [vmem:[#allocation10 + $0x1e28] sm:$0xff]
    %v4730 = vld [vmem:[#allocation10 + $0x1e30] sm:$0xff]
    %v4731 = vld [vmem:[#allocation10 + $0x1e38] sm:$0xff]
    %v4732 = vld [vmem:[#allocation10 + $0x1e40] sm:$0xff]
    %v4733 = vld [vmem:[#allocation10 + $0x1e48] sm:$0xff]
    %v4734 = vld [vmem:[#allocation10 + $0x1e50] sm:$0xff]
    %v4735 = vld [vmem:[#allocation10 + $0x1e58] sm:$0xff]
    %v4736 = vld [vmem:[#allocation10 + $0x1e60] sm:$0xff]
    %v4737 = vld [vmem:[#allocation10 + $0x1e68] sm:$0xff]
    %v4738 = vld [vmem:[#allocation10 + $0x1e70] sm:$0xff]
    %v4739 = vld [vmem:[#allocation10 + $0x1e78] sm:$0xff]
    %v4740 = vld [vmem:[#allocation10 + $0x1e80] sm:$0xff]
    %v4741 = vld [vmem:[#allocation10 + $0x1e88] sm:$0xff]
    %v4742 = vld [vmem:[#allocation10 + $0x1e90] sm:$0xff]
    %v4743 = vld [vmem:[#allocation10 + $0x1e98] sm:$0xff]
    %v4744 = vld [vmem:[#allocation10 + $0x1ea0] sm:$0xff]
    %v4745 = vld [vmem:[#allocation10 + $0x1ea8] sm:$0xff]
    %v4746 = vld [vmem:[#allocation10 + $0x1eb0] sm:$0xff]
    %v4747 = vld [vmem:[#allocation10 + $0x1eb8] sm:$0xff]
    %v4748 = vld [vmem:[#allocation10 + $0x1ec0] sm:$0xff]
    %v4749 = vld [vmem:[#allocation10 + $0x1ec8] sm:$0xff]
    %v4750 = vld [vmem:[#allocation10 + $0x1ed0] sm:$0xff]
    %v4751 = vld [vmem:[#allocation10 + $0x1ed8] sm:$0xff]
    %v4752 = vld [vmem:[#allocation10 + $0x1ee0] sm:$0xff]
    %v4753 = vld [vmem:[#allocation10 + $0x1ee8] sm:$0xff]
    %v4754 = vld [vmem:[#allocation10 + $0x1ef0] sm:$0xff]
    %v4755 = vld [vmem:[#allocation10 + $0x1ef8] sm:$0xff]
    %v4756 = vld [vmem:[#allocation10 + $0x1f00] sm:$0xff]
    %v4757 = vld [vmem:[#allocation10 + $0x1f08] sm:$0xff]
    %v4758 = vld [vmem:[#allocation10 + $0x1f10] sm:$0xff]
    %v4759 = vld [vmem:[#allocation10 + $0x1f18] sm:$0xff]
    %v4760 = vld [vmem:[#allocation10 + $0x1f20] sm:$0xff]
    %v4761 = vld [vmem:[#allocation10 + $0x1f28] sm:$0xff]
    %v4762 = vld [vmem:[#allocation10 + $0x1f30] sm:$0xff]
    %v4763 = vld [vmem:[#allocation10 + $0x1f38] sm:$0xff]
    %v4764 = vld [vmem:[#allocation10 + $0x1f40] sm:$0xff]
    %v4765 = vld [vmem:[#allocation10 + $0x1f48] sm:$0xff]
    %v4766 = vld [vmem:[#allocation10 + $0x1f50] sm:$0xff]
    %v4767 = vld [vmem:[#allocation10 + $0x1f58] sm:$0xff]
    %v4768 = vld [vmem:[#allocation10 + $0x1f60] sm:$0xff]
    %v4769 = vld [vmem:[#allocation10 + $0x1f68] sm:$0xff]
    %v4770 = vld [vmem:[#allocation10 + $0x1f70] sm:$0xff]
    %v4771 = vld [vmem:[#allocation10 + $0x1f78] sm:$0xff]
    %v4772 = vld [vmem:[#allocation10 + $0x1f80] sm:$0xff]
    %v4773 = vld [vmem:[#allocation10 + $0x1f88] sm:$0xff]
    %v4774 = vld [vmem:[#allocation10 + $0x1f90] sm:$0xff]
    %v4775 = vld [vmem:[#allocation10 + $0x1f98] sm:$0xff]
    %v4776 = vld [vmem:[#allocation10 + $0x1fa0] sm:$0xff]
    %v4777 = vld [vmem:[#allocation10 + $0x1fa8] sm:$0xff]
    %v4778 = vld [vmem:[#allocation10 + $0x1fb0] sm:$0xff]
    %v4779 = vld [vmem:[#allocation10 + $0x1fb8] sm:$0xff]
    %v4780 = vld [vmem:[#allocation10 + $0x1fc0] sm:$0xff]
    %v4781 = vld [vmem:[#allocation10 + $0x1fc8] sm:$0xff]
    %v4782 = vld [vmem:[#allocation10 + $0x1fd0] sm:$0xff]
    %v4783 = vld [vmem:[#allocation10 + $0x1fd8] sm:$0xff]
    %v4784 = vld [vmem:[#allocation10 + $0x1fe0] sm:$0xff]
    %v4785 = vld [vmem:[#allocation10 + $0x1fe8] sm:$0xff]
    %v4786 = vld [vmem:[#allocation10 + $0x1ff0] sm:$0xff]
    %v4787 = vld [vmem:[#allocation10 + $0x1ff8] sm:$0xff]
    %s4788 = scalar_lea.vmem [#allocation13], 4
    %v4789 = vld [vmem:[%s4788] ss:$8 sm:$0xf]
    %v4790 = vld [vmem:[%s4788] ss:$8 sm:$0xf0]
    %v4791 = vor.u32 %v4789, %v4790
    %v4793 = vlaneseq
    %v4794 = vshrl.u32 %v4793, 7
    %v4795 = vsub.s32 0, %v4794
    %v4796 = vrot.slane %v4791, %v4795
    %v4797 = vlaneseq
    %v4798 = vshrl.u32 %v4797, 7
    %v4799 = vsub.s32 1, %v4798
    %v4800 = vrot.slane %v4791, %v4799
    %v4801 = vlaneseq
    %v4802 = vshrl.u32 %v4801, 7
    %v4803 = vsub.s32 2, %v4802
    %v4804 = vrot.slane %v4791, %v4803
    %v4805 = vlaneseq
    %v4806 = vshrl.u32 %v4805, 7
    %v4807 = vsub.s32 3, %v4806
    %v4808 = vrot.slane %v4791, %v4807
    %v4809 = vlaneseq
    %v4810 = vshrl.u32 %v4809, 7
    %v4811 = vsub.s32 4, %v4810
    %v4812 = vrot.slane %v4791, %v4811
    %v4813 = vlaneseq
    %v4814 = vshrl.u32 %v4813, 7
    %v4815 = vsub.s32 5, %v4814
    %v4816 = vrot.slane %v4791, %v4815
    %v4817 = vlaneseq
    %v4818 = vshrl.u32 %v4817, 7
    %v4819 = vsub.s32 6, %v4818
    %v4820 = vrot.slane %v4791, %v4819
    %v4821 = vlaneseq
    %v4822 = vshrl.u32 %v4821, 7
    %v4823 = vsub.s32 7, %v4822
    %v4824 = vrot.slane %v4791, %v4823
    %v5857 = vunpack.c.l.b16 %v3764
    %v5858 = vunpack.c.h.b16 %v3764
    %v5859 = vunpack.c.l.b16 %v3765
    %v5860 = vunpack.c.h.b16 %v3765
    %v5861 = vunpack.c.l.b16 %v3766
    %v5862 = vunpack.c.h.b16 %v3766
    %v5863 = vunpack.c.l.b16 %v3767
    %v5864 = vunpack.c.h.b16 %v3767
    %v5865 = vunpack.c.l.b16 %v3768
    %v5866 = vunpack.c.h.b16 %v3768
    %v5867 = vunpack.c.l.b16 %v3769
    %v5868 = vunpack.c.h.b16 %v3769
    %v5869 = vunpack.c.l.b16 %v3770
    %v5870 = vunpack.c.h.b16 %v3770
    %v5871 = vunpack.c.l.b16 %v3771
    %v5872 = vunpack.c.h.b16 %v3771
    %v5873 = vunpack.c.l.b16 %v3772
    %v5874 = vunpack.c.h.b16 %v3772
    %v5875 = vunpack.c.l.b16 %v3773
    %v5876 = vunpack.c.h.b16 %v3773
    %v5877 = vunpack.c.l.b16 %v3774
    %v5878 = vunpack.c.h.b16 %v3774
    %v5879 = vunpack.c.l.b16 %v3775
    %v5880 = vunpack.c.h.b16 %v3775
    %v5881 = vunpack.c.l.b16 %v3776
    %v5882 = vunpack.c.h.b16 %v3776
    %v5883 = vunpack.c.l.b16 %v3777
    %v5884 = vunpack.c.h.b16 %v3777
    %v5885 = vunpack.c.l.b16 %v3778
    %v5886 = vunpack.c.h.b16 %v3778
    %v5887 = vunpack.c.l.b16 %v3779
    %v5888 = vunpack.c.h.b16 %v3779
    %v5889 = vunpack.c.l.b16 %v3780
    %v5890 = vunpack.c.h.b16 %v3780
    %v5891 = vunpack.c.l.b16 %v3781
    %v5892 = vunpack.c.h.b16 %v3781
    %v5893 = vunpack.c.l.b16 %v3782
    %v5894 = vunpack.c.h.b16 %v3782
    %v5895 = vunpack.c.l.b16 %v3783
    %v5896 = vunpack.c.h.b16 %v3783
    %v5897 = vunpack.c.l.b16 %v3784
    %v5898 = vunpack.c.h.b16 %v3784
    %v5899 = vunpack.c.l.b16 %v3785
    %v5900 = vunpack.c.h.b16 %v3785
    %v5901 = vunpack.c.l.b16 %v3786
    %v5902 = vunpack.c.h.b16 %v3786
    %v5903 = vunpack.c.l.b16 %v3787
    %v5904 = vunpack.c.h.b16 %v3787
    %v5905 = vunpack.c.l.b16 %v3788
    %v5906 = vunpack.c.h.b16 %v3788
    %v5907 = vunpack.c.l.b16 %v3789
    %v5908 = vunpack.c.h.b16 %v3789
    %v5909 = vunpack.c.l.b16 %v3790
    %v5910 = vunpack.c.h.b16 %v3790
    %v5911 = vunpack.c.l.b16 %v3791
    %v5912 = vunpack.c.h.b16 %v3791
    %v5913 = vunpack.c.l.b16 %v3792
    %v5914 = vunpack.c.h.b16 %v3792
    %v5915 = vunpack.c.l.b16 %v3793
    %v5916 = vunpack.c.h.b16 %v3793
    %v5917 = vunpack.c.l.b16 %v3794
    %v5918 = vunpack.c.h.b16 %v3794
    %v5919 = vunpack.c.l.b16 %v3795
    %v5920 = vunpack.c.h.b16 %v3795
    %v5921 = vunpack.c.l.b16 %v3796
    %v5922 = vunpack.c.h.b16 %v3796
    %v5923 = vunpack.c.l.b16 %v3797
    %v5924 = vunpack.c.h.b16 %v3797
    %v5925 = vunpack.c.l.b16 %v3798
    %v5926 = vunpack.c.h.b16 %v3798
    %v5927 = vunpack.c.l.b16 %v3799
    %v5928 = vunpack.c.h.b16 %v3799
    %v5929 = vunpack.c.l.b16 %v3800
    %v5930 = vunpack.c.h.b16 %v3800
    %v5931 = vunpack.c.l.b16 %v3801
    %v5932 = vunpack.c.h.b16 %v3801
    %v5933 = vunpack.c.l.b16 %v3802
    %v5934 = vunpack.c.h.b16 %v3802
    %v5935 = vunpack.c.l.b16 %v3803
    %v5936 = vunpack.c.h.b16 %v3803
    %v5937 = vunpack.c.l.b16 %v3804
    %v5938 = vunpack.c.h.b16 %v3804
    %v5939 = vunpack.c.l.b16 %v3805
    %v5940 = vunpack.c.h.b16 %v3805
    %v5941 = vunpack.c.l.b16 %v3806
    %v5942 = vunpack.c.h.b16 %v3806
    %v5943 = vunpack.c.l.b16 %v3807
    %v5944 = vunpack.c.h.b16 %v3807
    %v5945 = vunpack.c.l.b16 %v3808
    %v5946 = vunpack.c.h.b16 %v3808
    %v5947 = vunpack.c.l.b16 %v3809
    %v5948 = vunpack.c.h.b16 %v3809
    %v5949 = vunpack.c.l.b16 %v3810
    %v5950 = vunpack.c.h.b16 %v3810
    %v5951 = vunpack.c.l.b16 %v3811
    %v5952 = vunpack.c.h.b16 %v3811
    %v5953 = vunpack.c.l.b16 %v3812
    %v5954 = vunpack.c.h.b16 %v3812
    %v5955 = vunpack.c.l.b16 %v3813
    %v5956 = vunpack.c.h.b16 %v3813
    %v5957 = vunpack.c.l.b16 %v3814
    %v5958 = vunpack.c.h.b16 %v3814
    %v5959 = vunpack.c.l.b16 %v3815
    %v5960 = vunpack.c.h.b16 %v3815
    %v5961 = vunpack.c.l.b16 %v3816
    %v5962 = vunpack.c.h.b16 %v3816
    %v5963 = vunpack.c.l.b16 %v3817
    %v5964 = vunpack.c.h.b16 %v3817
    %v5965 = vunpack.c.l.b16 %v3818
    %v5966 = vunpack.c.h.b16 %v3818
    %v5967 = vunpack.c.l.b16 %v3819
    %v5968 = vunpack.c.h.b16 %v3819
    %v5969 = vunpack.c.l.b16 %v3820
    %v5970 = vunpack.c.h.b16 %v3820
    %v5971 = vunpack.c.l.b16 %v3821
    %v5972 = vunpack.c.h.b16 %v3821
    %v5973 = vunpack.c.l.b16 %v3822
    %v5974 = vunpack.c.h.b16 %v3822
    %v5975 = vunpack.c.l.b16 %v3823
    %v5976 = vunpack.c.h.b16 %v3823
    %v5977 = vunpack.c.l.b16 %v3824
    %v5978 = vunpack.c.h.b16 %v3824
    %v5979 = vunpack.c.l.b16 %v3825
    %v5980 = vunpack.c.h.b16 %v3825
    %v5981 = vunpack.c.l.b16 %v3826
    %v5982 = vunpack.c.h.b16 %v3826
    %v5983 = vunpack.c.l.b16 %v3827
    %v5984 = vunpack.c.h.b16 %v3827
    %v5985 = vunpack.c.l.b16 %v3828
    %v5986 = vunpack.c.h.b16 %v3828
    %v5987 = vunpack.c.l.b16 %v3829
    %v5988 = vunpack.c.h.b16 %v3829
    %v5989 = vunpack.c.l.b16 %v3830
    %v5990 = vunpack.c.h.b16 %v3830
    %v5991 = vunpack.c.l.b16 %v3831
    %v5992 = vunpack.c.h.b16 %v3831
    %v5993 = vunpack.c.l.b16 %v3832
    %v5994 = vunpack.c.h.b16 %v3832
    %v5995 = vunpack.c.l.b16 %v3833
    %v5996 = vunpack.c.h.b16 %v3833
    %v5997 = vunpack.c.l.b16 %v3834
    %v5998 = vunpack.c.h.b16 %v3834
    %v5999 = vunpack.c.l.b16 %v3835
    %v6000 = vunpack.c.h.b16 %v3835
    %v6001 = vunpack.c.l.b16 %v3836
    %v6002 = vunpack.c.h.b16 %v3836
    %v6003 = vunpack.c.l.b16 %v3837
    %v6004 = vunpack.c.h.b16 %v3837
    %v6005 = vunpack.c.l.b16 %v3838
    %v6006 = vunpack.c.h.b16 %v3838
    %v6007 = vunpack.c.l.b16 %v3839
    %v6008 = vunpack.c.h.b16 %v3839
    %v6009 = vunpack.c.l.b16 %v3840
    %v6010 = vunpack.c.h.b16 %v3840
    %v6011 = vunpack.c.l.b16 %v3841
    %v6012 = vunpack.c.h.b16 %v3841
    %v6013 = vunpack.c.l.b16 %v3842
    %v6014 = vunpack.c.h.b16 %v3842
    %v6015 = vunpack.c.l.b16 %v3843
    %v6016 = vunpack.c.h.b16 %v3843
    %v6017 = vunpack.c.l.b16 %v3844
    %v6018 = vunpack.c.h.b16 %v3844
    %v6019 = vunpack.c.l.b16 %v3845
    %v6020 = vunpack.c.h.b16 %v3845
    %v6021 = vunpack.c.l.b16 %v3846
    %v6022 = vunpack.c.h.b16 %v3846
    %v6023 = vunpack.c.l.b16 %v3847
    %v6024 = vunpack.c.h.b16 %v3847
    %v6025 = vunpack.c.l.b16 %v3848
    %v6026 = vunpack.c.h.b16 %v3848
    %v6027 = vunpack.c.l.b16 %v3849
    %v6028 = vunpack.c.h.b16 %v3849
    %v6029 = vunpack.c.l.b16 %v3850
    %v6030 = vunpack.c.h.b16 %v3850
    %v6031 = vunpack.c.l.b16 %v3851
    %v6032 = vunpack.c.h.b16 %v3851
    %v6033 = vunpack.c.l.b16 %v3852
    %v6034 = vunpack.c.h.b16 %v3852
    %v6035 = vunpack.c.l.b16 %v3853
    %v6036 = vunpack.c.h.b16 %v3853
    %v6037 = vunpack.c.l.b16 %v3854
    %v6038 = vunpack.c.h.b16 %v3854
    %v6039 = vunpack.c.l.b16 %v3855
    %v6040 = vunpack.c.h.b16 %v3855
    %v6041 = vunpack.c.l.b16 %v3856
    %v6042 = vunpack.c.h.b16 %v3856
    %v6043 = vunpack.c.l.b16 %v3857
    %v6044 = vunpack.c.h.b16 %v3857
    %v6045 = vunpack.c.l.b16 %v3858
    %v6046 = vunpack.c.h.b16 %v3858
    %v6047 = vunpack.c.l.b16 %v3859
    %v6048 = vunpack.c.h.b16 %v3859
    %v6049 = vunpack.c.l.b16 %v3860
    %v6050 = vunpack.c.h.b16 %v3860
    %v6051 = vunpack.c.l.b16 %v3861
    %v6052 = vunpack.c.h.b16 %v3861
    %v6053 = vunpack.c.l.b16 %v3862
    %v6054 = vunpack.c.h.b16 %v3862
    %v6055 = vunpack.c.l.b16 %v3863
    %v6056 = vunpack.c.h.b16 %v3863
    %v6057 = vunpack.c.l.b16 %v3864
    %v6058 = vunpack.c.h.b16 %v3864
    %v6059 = vunpack.c.l.b16 %v3865
    %v6060 = vunpack.c.h.b16 %v3865
    %v6061 = vunpack.c.l.b16 %v3866
    %v6062 = vunpack.c.h.b16 %v3866
    %v6063 = vunpack.c.l.b16 %v3867
    %v6064 = vunpack.c.h.b16 %v3867
    %v6065 = vunpack.c.l.b16 %v3868
    %v6066 = vunpack.c.h.b16 %v3868
    %v6067 = vunpack.c.l.b16 %v3869
    %v6068 = vunpack.c.h.b16 %v3869
    %v6069 = vunpack.c.l.b16 %v3870
    %v6070 = vunpack.c.h.b16 %v3870
    %v6071 = vunpack.c.l.b16 %v3871
    %v6072 = vunpack.c.h.b16 %v3871
    %v6073 = vunpack.c.l.b16 %v3872
    %v6074 = vunpack.c.h.b16 %v3872
    %v6075 = vunpack.c.l.b16 %v3873
    %v6076 = vunpack.c.h.b16 %v3873
    %v6077 = vunpack.c.l.b16 %v3874
    %v6078 = vunpack.c.h.b16 %v3874
    %v6079 = vunpack.c.l.b16 %v3875
    %v6080 = vunpack.c.h.b16 %v3875
    %v6081 = vunpack.c.l.b16 %v3876
    %v6082 = vunpack.c.h.b16 %v3876
    %v6083 = vunpack.c.l.b16 %v3877
    %v6084 = vunpack.c.h.b16 %v3877
    %v6085 = vunpack.c.l.b16 %v3878
    %v6086 = vunpack.c.h.b16 %v3878
    %v6087 = vunpack.c.l.b16 %v3879
    %v6088 = vunpack.c.h.b16 %v3879
    %v6089 = vunpack.c.l.b16 %v3880
    %v6090 = vunpack.c.h.b16 %v3880
    %v6091 = vunpack.c.l.b16 %v3881
    %v6092 = vunpack.c.h.b16 %v3881
    %v6093 = vunpack.c.l.b16 %v3882
    %v6094 = vunpack.c.h.b16 %v3882
    %v6095 = vunpack.c.l.b16 %v3883
    %v6096 = vunpack.c.h.b16 %v3883
    %v6097 = vunpack.c.l.b16 %v3884
    %v6098 = vunpack.c.h.b16 %v3884
    %v6099 = vunpack.c.l.b16 %v3885
    %v6100 = vunpack.c.h.b16 %v3885
    %v6101 = vunpack.c.l.b16 %v3886
    %v6102 = vunpack.c.h.b16 %v3886
    %v6103 = vunpack.c.l.b16 %v3887
    %v6104 = vunpack.c.h.b16 %v3887
    %v6105 = vunpack.c.l.b16 %v3888
    %v6106 = vunpack.c.h.b16 %v3888
    %v6107 = vunpack.c.l.b16 %v3889
    %v6108 = vunpack.c.h.b16 %v3889
    %v6109 = vunpack.c.l.b16 %v3890
    %v6110 = vunpack.c.h.b16 %v3890
    %v6111 = vunpack.c.l.b16 %v3891
    %v6112 = vunpack.c.h.b16 %v3891
    %v6113 = vunpack.c.l.b16 %v3892
    %v6114 = vunpack.c.h.b16 %v3892
    %v6115 = vunpack.c.l.b16 %v3893
    %v6116 = vunpack.c.h.b16 %v3893
    %v6117 = vunpack.c.l.b16 %v3894
    %v6118 = vunpack.c.h.b16 %v3894
    %v6119 = vunpack.c.l.b16 %v3895
    %v6120 = vunpack.c.h.b16 %v3895
    %v6121 = vunpack.c.l.b16 %v3896
    %v6122 = vunpack.c.h.b16 %v3896
    %v6123 = vunpack.c.l.b16 %v3897
    %v6124 = vunpack.c.h.b16 %v3897
    %v6125 = vunpack.c.l.b16 %v3898
    %v6126 = vunpack.c.h.b16 %v3898
    %v6127 = vunpack.c.l.b16 %v3899
    %v6128 = vunpack.c.h.b16 %v3899
    %v6129 = vunpack.c.l.b16 %v3900
    %v6130 = vunpack.c.h.b16 %v3900
    %v6131 = vunpack.c.l.b16 %v3901
    %v6132 = vunpack.c.h.b16 %v3901
    %v6133 = vunpack.c.l.b16 %v3902
    %v6134 = vunpack.c.h.b16 %v3902
    %v6135 = vunpack.c.l.b16 %v3903
    %v6136 = vunpack.c.h.b16 %v3903
    %v6137 = vunpack.c.l.b16 %v3904
    %v6138 = vunpack.c.h.b16 %v3904
    %v6139 = vunpack.c.l.b16 %v3905
    %v6140 = vunpack.c.h.b16 %v3905
    %v6141 = vunpack.c.l.b16 %v3906
    %v6142 = vunpack.c.h.b16 %v3906
    %v6143 = vunpack.c.l.b16 %v3907
    %v6144 = vunpack.c.h.b16 %v3907
    %v6145 = vunpack.c.l.b16 %v3908
    %v6146 = vunpack.c.h.b16 %v3908
    %v6147 = vunpack.c.l.b16 %v3909
    %v6148 = vunpack.c.h.b16 %v3909
    %v6149 = vunpack.c.l.b16 %v3910
    %v6150 = vunpack.c.h.b16 %v3910
    %v6151 = vunpack.c.l.b16 %v3911
    %v6152 = vunpack.c.h.b16 %v3911
    %v6153 = vunpack.c.l.b16 %v3912
    %v6154 = vunpack.c.h.b16 %v3912
    %v6155 = vunpack.c.l.b16 %v3913
    %v6156 = vunpack.c.h.b16 %v3913
    %v6157 = vunpack.c.l.b16 %v3914
    %v6158 = vunpack.c.h.b16 %v3914
    %v6159 = vunpack.c.l.b16 %v3915
    %v6160 = vunpack.c.h.b16 %v3915
    %v6161 = vunpack.c.l.b16 %v3916
    %v6162 = vunpack.c.h.b16 %v3916
    %v6163 = vunpack.c.l.b16 %v3917
    %v6164 = vunpack.c.h.b16 %v3917
    %v6165 = vunpack.c.l.b16 %v3918
    %v6166 = vunpack.c.h.b16 %v3918
    %v6167 = vunpack.c.l.b16 %v3919
    %v6168 = vunpack.c.h.b16 %v3919
    %v6169 = vunpack.c.l.b16 %v3920
    %v6170 = vunpack.c.h.b16 %v3920
    %v6171 = vunpack.c.l.b16 %v3921
    %v6172 = vunpack.c.h.b16 %v3921
    %v6173 = vunpack.c.l.b16 %v3922
    %v6174 = vunpack.c.h.b16 %v3922
    %v6175 = vunpack.c.l.b16 %v3923
    %v6176 = vunpack.c.h.b16 %v3923
    %v6177 = vunpack.c.l.b16 %v3924
    %v6178 = vunpack.c.h.b16 %v3924
    %v6179 = vunpack.c.l.b16 %v3925
    %v6180 = vunpack.c.h.b16 %v3925
    %v6181 = vunpack.c.l.b16 %v3926
    %v6182 = vunpack.c.h.b16 %v3926
    %v6183 = vunpack.c.l.b16 %v3927
    %v6184 = vunpack.c.h.b16 %v3927
    %v6185 = vunpack.c.l.b16 %v3928
    %v6186 = vunpack.c.h.b16 %v3928
    %v6187 = vunpack.c.l.b16 %v3929
    %v6188 = vunpack.c.h.b16 %v3929
    %v6189 = vunpack.c.l.b16 %v3930
    %v6190 = vunpack.c.h.b16 %v3930
    %v6191 = vunpack.c.l.b16 %v3931
    %v6192 = vunpack.c.h.b16 %v3931
    %v6193 = vunpack.c.l.b16 %v3932
    %v6194 = vunpack.c.h.b16 %v3932
    %v6195 = vunpack.c.l.b16 %v3933
    %v6196 = vunpack.c.h.b16 %v3933
    %v6197 = vunpack.c.l.b16 %v3934
    %v6198 = vunpack.c.h.b16 %v3934
    %v6199 = vunpack.c.l.b16 %v3935
    %v6200 = vunpack.c.h.b16 %v3935
    %v6201 = vunpack.c.l.b16 %v3936
    %v6202 = vunpack.c.h.b16 %v3936
    %v6203 = vunpack.c.l.b16 %v3937
    %v6204 = vunpack.c.h.b16 %v3937
    %v6205 = vunpack.c.l.b16 %v3938
    %v6206 = vunpack.c.h.b16 %v3938
    %v6207 = vunpack.c.l.b16 %v3939
    %v6208 = vunpack.c.h.b16 %v3939
    %v6209 = vunpack.c.l.b16 %v3940
    %v6210 = vunpack.c.h.b16 %v3940
    %v6211 = vunpack.c.l.b16 %v3941
    %v6212 = vunpack.c.h.b16 %v3941
    %v6213 = vunpack.c.l.b16 %v3942
    %v6214 = vunpack.c.h.b16 %v3942
    %v6215 = vunpack.c.l.b16 %v3943
    %v6216 = vunpack.c.h.b16 %v3943
    %v6217 = vunpack.c.l.b16 %v3944
    %v6218 = vunpack.c.h.b16 %v3944
    %v6219 = vunpack.c.l.b16 %v3945
    %v6220 = vunpack.c.h.b16 %v3945
    %v6221 = vunpack.c.l.b16 %v3946
    %v6222 = vunpack.c.h.b16 %v3946
    %v6223 = vunpack.c.l.b16 %v3947
    %v6224 = vunpack.c.h.b16 %v3947
    %v6225 = vunpack.c.l.b16 %v3948
    %v6226 = vunpack.c.h.b16 %v3948
    %v6227 = vunpack.c.l.b16 %v3949
    %v6228 = vunpack.c.h.b16 %v3949
    %v6229 = vunpack.c.l.b16 %v3950
    %v6230 = vunpack.c.h.b16 %v3950
    %v6231 = vunpack.c.l.b16 %v3951
    %v6232 = vunpack.c.h.b16 %v3951
    %v6233 = vunpack.c.l.b16 %v3952
    %v6234 = vunpack.c.h.b16 %v3952
    %v6235 = vunpack.c.l.b16 %v3953
    %v6236 = vunpack.c.h.b16 %v3953
    %v6237 = vunpack.c.l.b16 %v3954
    %v6238 = vunpack.c.h.b16 %v3954
    %v6239 = vunpack.c.l.b16 %v3955
    %v6240 = vunpack.c.h.b16 %v3955
    %v6241 = vunpack.c.l.b16 %v3956
    %v6242 = vunpack.c.h.b16 %v3956
    %v6243 = vunpack.c.l.b16 %v3957
    %v6244 = vunpack.c.h.b16 %v3957
    %v6245 = vunpack.c.l.b16 %v3958
    %v6246 = vunpack.c.h.b16 %v3958
    %v6247 = vunpack.c.l.b16 %v3959
    %v6248 = vunpack.c.h.b16 %v3959
    %v6249 = vunpack.c.l.b16 %v3960
    %v6250 = vunpack.c.h.b16 %v3960
    %v6251 = vunpack.c.l.b16 %v3961
    %v6252 = vunpack.c.h.b16 %v3961
    %v6253 = vunpack.c.l.b16 %v3962
    %v6254 = vunpack.c.h.b16 %v3962
    %v6255 = vunpack.c.l.b16 %v3963
    %v6256 = vunpack.c.h.b16 %v3963
    %v6257 = vunpack.c.l.b16 %v3964
    %v6258 = vunpack.c.h.b16 %v3964
    %v6259 = vunpack.c.l.b16 %v3965
    %v6260 = vunpack.c.h.b16 %v3965
    %v6261 = vunpack.c.l.b16 %v3966
    %v6262 = vunpack.c.h.b16 %v3966
    %v6263 = vunpack.c.l.b16 %v3967
    %v6264 = vunpack.c.h.b16 %v3967
    %v6265 = vunpack.c.l.b16 %v3968
    %v6266 = vunpack.c.h.b16 %v3968
    %v6267 = vunpack.c.l.b16 %v3969
    %v6268 = vunpack.c.h.b16 %v3969
    %v6269 = vunpack.c.l.b16 %v3970
    %v6270 = vunpack.c.h.b16 %v3970
    %v6271 = vunpack.c.l.b16 %v3971
    %v6272 = vunpack.c.h.b16 %v3971
    %v6273 = vunpack.c.l.b16 %v3972
    %v6274 = vunpack.c.h.b16 %v3972
    %v6275 = vunpack.c.l.b16 %v3973
    %v6276 = vunpack.c.h.b16 %v3973
    %v6277 = vunpack.c.l.b16 %v3974
    %v6278 = vunpack.c.h.b16 %v3974
    %v6279 = vunpack.c.l.b16 %v3975
    %v6280 = vunpack.c.h.b16 %v3975
    %v6281 = vunpack.c.l.b16 %v3976
    %v6282 = vunpack.c.h.b16 %v3976
    %v6283 = vunpack.c.l.b16 %v3977
    %v6284 = vunpack.c.h.b16 %v3977
    %v6285 = vunpack.c.l.b16 %v3978
    %v6286 = vunpack.c.h.b16 %v3978
    %v6287 = vunpack.c.l.b16 %v3979
    %v6288 = vunpack.c.h.b16 %v3979
    %v6289 = vunpack.c.l.b16 %v3980
    %v6290 = vunpack.c.h.b16 %v3980
    %v6291 = vunpack.c.l.b16 %v3981
    %v6292 = vunpack.c.h.b16 %v3981
    %v6293 = vunpack.c.l.b16 %v3982
    %v6294 = vunpack.c.h.b16 %v3982
    %v6295 = vunpack.c.l.b16 %v3983
    %v6296 = vunpack.c.h.b16 %v3983
    %v6297 = vunpack.c.l.b16 %v3984
    %v6298 = vunpack.c.h.b16 %v3984
    %v6299 = vunpack.c.l.b16 %v3985
    %v6300 = vunpack.c.h.b16 %v3985
    %v6301 = vunpack.c.l.b16 %v3986
    %v6302 = vunpack.c.h.b16 %v3986
    %v6303 = vunpack.c.l.b16 %v3987
    %v6304 = vunpack.c.h.b16 %v3987
    %v6305 = vunpack.c.l.b16 %v3988
    %v6306 = vunpack.c.h.b16 %v3988
    %v6307 = vunpack.c.l.b16 %v3989
    %v6308 = vunpack.c.h.b16 %v3989
    %v6309 = vunpack.c.l.b16 %v3990
    %v6310 = vunpack.c.h.b16 %v3990
    %v6311 = vunpack.c.l.b16 %v3991
    %v6312 = vunpack.c.h.b16 %v3991
    %v6313 = vunpack.c.l.b16 %v3992
    %v6314 = vunpack.c.h.b16 %v3992
    %v6315 = vunpack.c.l.b16 %v3993
    %v6316 = vunpack.c.h.b16 %v3993
    %v6317 = vunpack.c.l.b16 %v3994
    %v6318 = vunpack.c.h.b16 %v3994
    %v6319 = vunpack.c.l.b16 %v3995
    %v6320 = vunpack.c.h.b16 %v3995
    %v6321 = vunpack.c.l.b16 %v3996
    %v6322 = vunpack.c.h.b16 %v3996
    %v6323 = vunpack.c.l.b16 %v3997
    %v6324 = vunpack.c.h.b16 %v3997
    %v6325 = vunpack.c.l.b16 %v3998
    %v6326 = vunpack.c.h.b16 %v3998
    %v6327 = vunpack.c.l.b16 %v3999
    %v6328 = vunpack.c.h.b16 %v3999
    %v6329 = vunpack.c.l.b16 %v4000
    %v6330 = vunpack.c.h.b16 %v4000
    %v6331 = vunpack.c.l.b16 %v4001
    %v6332 = vunpack.c.h.b16 %v4001
    %v6333 = vunpack.c.l.b16 %v4002
    %v6334 = vunpack.c.h.b16 %v4002
    %v6335 = vunpack.c.l.b16 %v4003
    %v6336 = vunpack.c.h.b16 %v4003
    %v6337 = vunpack.c.l.b16 %v4004
    %v6338 = vunpack.c.h.b16 %v4004
    %v6339 = vunpack.c.l.b16 %v4005
    %v6340 = vunpack.c.h.b16 %v4005
    %v6341 = vunpack.c.l.b16 %v4006
    %v6342 = vunpack.c.h.b16 %v4006
    %v6343 = vunpack.c.l.b16 %v4007
    %v6344 = vunpack.c.h.b16 %v4007
    %v6345 = vunpack.c.l.b16 %v4008
    %v6346 = vunpack.c.h.b16 %v4008
    %v6347 = vunpack.c.l.b16 %v4009
    %v6348 = vunpack.c.h.b16 %v4009
    %v6349 = vunpack.c.l.b16 %v4010
    %v6350 = vunpack.c.h.b16 %v4010
    %v6351 = vunpack.c.l.b16 %v4011
    %v6352 = vunpack.c.h.b16 %v4011
    %v6353 = vunpack.c.l.b16 %v4012
    %v6354 = vunpack.c.h.b16 %v4012
    %v6355 = vunpack.c.l.b16 %v4013
    %v6356 = vunpack.c.h.b16 %v4013
    %v6357 = vunpack.c.l.b16 %v4014
    %v6358 = vunpack.c.h.b16 %v4014
    %v6359 = vunpack.c.l.b16 %v4015
    %v6360 = vunpack.c.h.b16 %v4015
    %v6361 = vunpack.c.l.b16 %v4016
    %v6362 = vunpack.c.h.b16 %v4016
    %v6363 = vunpack.c.l.b16 %v4017
    %v6364 = vunpack.c.h.b16 %v4017
    %v6365 = vunpack.c.l.b16 %v4018
    %v6366 = vunpack.c.h.b16 %v4018
    %v6367 = vunpack.c.l.b16 %v4019
    %v6368 = vunpack.c.h.b16 %v4019
    %v6369 = vunpack.c.l.b16 %v4020
    %v6370 = vunpack.c.h.b16 %v4020
    %v6371 = vunpack.c.l.b16 %v4021
    %v6372 = vunpack.c.h.b16 %v4021
    %v6373 = vunpack.c.l.b16 %v4022
    %v6374 = vunpack.c.h.b16 %v4022
    %v6375 = vunpack.c.l.b16 %v4023
    %v6376 = vunpack.c.h.b16 %v4023
    %v6377 = vunpack.c.l.b16 %v4024
    %v6378 = vunpack.c.h.b16 %v4024
    %v6379 = vunpack.c.l.b16 %v4025
    %v6380 = vunpack.c.h.b16 %v4025
    %v6381 = vunpack.c.l.b16 %v4026
    %v6382 = vunpack.c.h.b16 %v4026
    %v6383 = vunpack.c.l.b16 %v4027
    %v6384 = vunpack.c.h.b16 %v4027
    %v6385 = vunpack.c.l.b16 %v4028
    %v6386 = vunpack.c.h.b16 %v4028
    %v6387 = vunpack.c.l.b16 %v4029
    %v6388 = vunpack.c.h.b16 %v4029
    %v6389 = vunpack.c.l.b16 %v4030
    %v6390 = vunpack.c.h.b16 %v4030
    %v6391 = vunpack.c.l.b16 %v4031
    %v6392 = vunpack.c.h.b16 %v4031
    %v6393 = vunpack.c.l.b16 %v4032
    %v6394 = vunpack.c.h.b16 %v4032
    %v6395 = vunpack.c.l.b16 %v4033
    %v6396 = vunpack.c.h.b16 %v4033
    %v6397 = vunpack.c.l.b16 %v4034
    %v6398 = vunpack.c.h.b16 %v4034
    %v6399 = vunpack.c.l.b16 %v4035
    %v6400 = vunpack.c.h.b16 %v4035
    %v6401 = vunpack.c.l.b16 %v4036
    %v6402 = vunpack.c.h.b16 %v4036
    %v6403 = vunpack.c.l.b16 %v4037
    %v6404 = vunpack.c.h.b16 %v4037
    %v6405 = vunpack.c.l.b16 %v4038
    %v6406 = vunpack.c.h.b16 %v4038
    %v6407 = vunpack.c.l.b16 %v4039
    %v6408 = vunpack.c.h.b16 %v4039
    %v6409 = vunpack.c.l.b16 %v4040
    %v6410 = vunpack.c.h.b16 %v4040
    %v6411 = vunpack.c.l.b16 %v4041
    %v6412 = vunpack.c.h.b16 %v4041
    %v6413 = vunpack.c.l.b16 %v4042
    %v6414 = vunpack.c.h.b16 %v4042
    %v6415 = vunpack.c.l.b16 %v4043
    %v6416 = vunpack.c.h.b16 %v4043
    %v6417 = vunpack.c.l.b16 %v4044
    %v6418 = vunpack.c.h.b16 %v4044
    %v6419 = vunpack.c.l.b16 %v4045
    %v6420 = vunpack.c.h.b16 %v4045
    %v6421 = vunpack.c.l.b16 %v4046
    %v6422 = vunpack.c.h.b16 %v4046
    %v6423 = vunpack.c.l.b16 %v4047
    %v6424 = vunpack.c.h.b16 %v4047
    %v6425 = vunpack.c.l.b16 %v4048
    %v6426 = vunpack.c.h.b16 %v4048
    %v6427 = vunpack.c.l.b16 %v4049
    %v6428 = vunpack.c.h.b16 %v4049
    %v6429 = vunpack.c.l.b16 %v4050
    %v6430 = vunpack.c.h.b16 %v4050
    %v6431 = vunpack.c.l.b16 %v4051
    %v6432 = vunpack.c.h.b16 %v4051
    %v6433 = vunpack.c.l.b16 %v4052
    %v6434 = vunpack.c.h.b16 %v4052
    %v6435 = vunpack.c.l.b16 %v4053
    %v6436 = vunpack.c.h.b16 %v4053
    %v6437 = vunpack.c.l.b16 %v4054
    %v6438 = vunpack.c.h.b16 %v4054
    %v6439 = vunpack.c.l.b16 %v4055
    %v6440 = vunpack.c.h.b16 %v4055
    %v6441 = vunpack.c.l.b16 %v4056
    %v6442 = vunpack.c.h.b16 %v4056
    %v6443 = vunpack.c.l.b16 %v4057
    %v6444 = vunpack.c.h.b16 %v4057
    %v6445 = vunpack.c.l.b16 %v4058
    %v6446 = vunpack.c.h.b16 %v4058
    %v6447 = vunpack.c.l.b16 %v4059
    %v6448 = vunpack.c.h.b16 %v4059
    %v6449 = vunpack.c.l.b16 %v4060
    %v6450 = vunpack.c.h.b16 %v4060
    %v6451 = vunpack.c.l.b16 %v4061
    %v6452 = vunpack.c.h.b16 %v4061
    %v6453 = vunpack.c.l.b16 %v4062
    %v6454 = vunpack.c.h.b16 %v4062
    %v6455 = vunpack.c.l.b16 %v4063
    %v6456 = vunpack.c.h.b16 %v4063
    %v6457 = vunpack.c.l.b16 %v4064
    %v6458 = vunpack.c.h.b16 %v4064
    %v6459 = vunpack.c.l.b16 %v4065
    %v6460 = vunpack.c.h.b16 %v4065
    %v6461 = vunpack.c.l.b16 %v4066
    %v6462 = vunpack.c.h.b16 %v4066
    %v6463 = vunpack.c.l.b16 %v4067
    %v6464 = vunpack.c.h.b16 %v4067
    %v6465 = vunpack.c.l.b16 %v4068
    %v6466 = vunpack.c.h.b16 %v4068
    %v6467 = vunpack.c.l.b16 %v4069
    %v6468 = vunpack.c.h.b16 %v4069
    %v6469 = vunpack.c.l.b16 %v4070
    %v6470 = vunpack.c.h.b16 %v4070
    %v6471 = vunpack.c.l.b16 %v4071
    %v6472 = vunpack.c.h.b16 %v4071
    %v6473 = vunpack.c.l.b16 %v4072
    %v6474 = vunpack.c.h.b16 %v4072
    %v6475 = vunpack.c.l.b16 %v4073
    %v6476 = vunpack.c.h.b16 %v4073
    %v6477 = vunpack.c.l.b16 %v4074
    %v6478 = vunpack.c.h.b16 %v4074
    %v6479 = vunpack.c.l.b16 %v4075
    %v6480 = vunpack.c.h.b16 %v4075
    %v6481 = vunpack.c.l.b16 %v4076
    %v6482 = vunpack.c.h.b16 %v4076
    %v6483 = vunpack.c.l.b16 %v4077
    %v6484 = vunpack.c.h.b16 %v4077
    %v6485 = vunpack.c.l.b16 %v4078
    %v6486 = vunpack.c.h.b16 %v4078
    %v6487 = vunpack.c.l.b16 %v4079
    %v6488 = vunpack.c.h.b16 %v4079
    %v6489 = vunpack.c.l.b16 %v4080
    %v6490 = vunpack.c.h.b16 %v4080
    %v6491 = vunpack.c.l.b16 %v4081
    %v6492 = vunpack.c.h.b16 %v4081
    %v6493 = vunpack.c.l.b16 %v4082
    %v6494 = vunpack.c.h.b16 %v4082
    %v6495 = vunpack.c.l.b16 %v4083
    %v6496 = vunpack.c.h.b16 %v4083
    %v6497 = vunpack.c.l.b16 %v4084
    %v6498 = vunpack.c.h.b16 %v4084
    %v6499 = vunpack.c.l.b16 %v4085
    %v6500 = vunpack.c.h.b16 %v4085
    %v6501 = vunpack.c.l.b16 %v4086
    %v6502 = vunpack.c.h.b16 %v4086
    %v6503 = vunpack.c.l.b16 %v4087
    %v6504 = vunpack.c.h.b16 %v4087
    %v6505 = vunpack.c.l.b16 %v4088
    %v6506 = vunpack.c.h.b16 %v4088
    %v6507 = vunpack.c.l.b16 %v4089
    %v6508 = vunpack.c.h.b16 %v4089
    %v6509 = vunpack.c.l.b16 %v4090
    %v6510 = vunpack.c.h.b16 %v4090
    %v6511 = vunpack.c.l.b16 %v4091
    %v6512 = vunpack.c.h.b16 %v4091
    %v6513 = vunpack.c.l.b16 %v4092
    %v6514 = vunpack.c.h.b16 %v4092
    %v6515 = vunpack.c.l.b16 %v4093
    %v6516 = vunpack.c.h.b16 %v4093
    %v6517 = vunpack.c.l.b16 %v4094
    %v6518 = vunpack.c.h.b16 %v4094
    %v6519 = vunpack.c.l.b16 %v4095
    %v6520 = vunpack.c.h.b16 %v4095
    %v6521 = vunpack.c.l.b16 %v4096
    %v6522 = vunpack.c.h.b16 %v4096
    %v6523 = vunpack.c.l.b16 %v4097
    %v6524 = vunpack.c.h.b16 %v4097
    %v6525 = vunpack.c.l.b16 %v4098
    %v6526 = vunpack.c.h.b16 %v4098
    %v6527 = vunpack.c.l.b16 %v4099
    %v6528 = vunpack.c.h.b16 %v4099
    %v6529 = vunpack.c.l.b16 %v4100
    %v6530 = vunpack.c.h.b16 %v4100
    %v6531 = vunpack.c.l.b16 %v4101
    %v6532 = vunpack.c.h.b16 %v4101
    %v6533 = vunpack.c.l.b16 %v4102
    %v6534 = vunpack.c.h.b16 %v4102
    %v6535 = vunpack.c.l.b16 %v4103
    %v6536 = vunpack.c.h.b16 %v4103
    %v6537 = vunpack.c.l.b16 %v4104
    %v6538 = vunpack.c.h.b16 %v4104
    %v6539 = vunpack.c.l.b16 %v4105
    %v6540 = vunpack.c.h.b16 %v4105
    %v6541 = vunpack.c.l.b16 %v4106
    %v6542 = vunpack.c.h.b16 %v4106
    %v6543 = vunpack.c.l.b16 %v4107
    %v6544 = vunpack.c.h.b16 %v4107
    %v6545 = vunpack.c.l.b16 %v4108
    %v6546 = vunpack.c.h.b16 %v4108
    %v6547 = vunpack.c.l.b16 %v4109
    %v6548 = vunpack.c.h.b16 %v4109
    %v6549 = vunpack.c.l.b16 %v4110
    %v6550 = vunpack.c.h.b16 %v4110
    %v6551 = vunpack.c.l.b16 %v4111
    %v6552 = vunpack.c.h.b16 %v4111
    %v6553 = vunpack.c.l.b16 %v4112
    %v6554 = vunpack.c.h.b16 %v4112
    %v6555 = vunpack.c.l.b16 %v4113
    %v6556 = vunpack.c.h.b16 %v4113
    %v6557 = vunpack.c.l.b16 %v4114
    %v6558 = vunpack.c.h.b16 %v4114
    %v6559 = vunpack.c.l.b16 %v4115
    %v6560 = vunpack.c.h.b16 %v4115
    %v6561 = vunpack.c.l.b16 %v4116
    %v6562 = vunpack.c.h.b16 %v4116
    %v6563 = vunpack.c.l.b16 %v4117
    %v6564 = vunpack.c.h.b16 %v4117
    %v6565 = vunpack.c.l.b16 %v4118
    %v6566 = vunpack.c.h.b16 %v4118
    %v6567 = vunpack.c.l.b16 %v4119
    %v6568 = vunpack.c.h.b16 %v4119
    %v6569 = vunpack.c.l.b16 %v4120
    %v6570 = vunpack.c.h.b16 %v4120
    %v6571 = vunpack.c.l.b16 %v4121
    %v6572 = vunpack.c.h.b16 %v4121
    %v6573 = vunpack.c.l.b16 %v4122
    %v6574 = vunpack.c.h.b16 %v4122
    %v6575 = vunpack.c.l.b16 %v4123
    %v6576 = vunpack.c.h.b16 %v4123
    %v6577 = vunpack.c.l.b16 %v4124
    %v6578 = vunpack.c.h.b16 %v4124
    %v6579 = vunpack.c.l.b16 %v4125
    %v6580 = vunpack.c.h.b16 %v4125
    %v6581 = vunpack.c.l.b16 %v4126
    %v6582 = vunpack.c.h.b16 %v4126
    %v6583 = vunpack.c.l.b16 %v4127
    %v6584 = vunpack.c.h.b16 %v4127
    %v6585 = vunpack.c.l.b16 %v4128
    %v6586 = vunpack.c.h.b16 %v4128
    %v6587 = vunpack.c.l.b16 %v4129
    %v6588 = vunpack.c.h.b16 %v4129
    %v6589 = vunpack.c.l.b16 %v4130
    %v6590 = vunpack.c.h.b16 %v4130
    %v6591 = vunpack.c.l.b16 %v4131
    %v6592 = vunpack.c.h.b16 %v4131
    %v6593 = vunpack.c.l.b16 %v4132
    %v6594 = vunpack.c.h.b16 %v4132
    %v6595 = vunpack.c.l.b16 %v4133
    %v6596 = vunpack.c.h.b16 %v4133
    %v6597 = vunpack.c.l.b16 %v4134
    %v6598 = vunpack.c.h.b16 %v4134
    %v6599 = vunpack.c.l.b16 %v4135
    %v6600 = vunpack.c.h.b16 %v4135
    %v6601 = vunpack.c.l.b16 %v4136
    %v6602 = vunpack.c.h.b16 %v4136
    %v6603 = vunpack.c.l.b16 %v4137
    %v6604 = vunpack.c.h.b16 %v4137
    %v6605 = vunpack.c.l.b16 %v4138
    %v6606 = vunpack.c.h.b16 %v4138
    %v6607 = vunpack.c.l.b16 %v4139
    %v6608 = vunpack.c.h.b16 %v4139
    %v6609 = vunpack.c.l.b16 %v4140
    %v6610 = vunpack.c.h.b16 %v4140
    %v6611 = vunpack.c.l.b16 %v4141
    %v6612 = vunpack.c.h.b16 %v4141
    %v6613 = vunpack.c.l.b16 %v4142
    %v6614 = vunpack.c.h.b16 %v4142
    %v6615 = vunpack.c.l.b16 %v4143
    %v6616 = vunpack.c.h.b16 %v4143
    %v6617 = vunpack.c.l.b16 %v4144
    %v6618 = vunpack.c.h.b16 %v4144
    %v6619 = vunpack.c.l.b16 %v4145
    %v6620 = vunpack.c.h.b16 %v4145
    %v6621 = vunpack.c.l.b16 %v4146
    %v6622 = vunpack.c.h.b16 %v4146
    %v6623 = vunpack.c.l.b16 %v4147
    %v6624 = vunpack.c.h.b16 %v4147
    %v6625 = vunpack.c.l.b16 %v4148
    %v6626 = vunpack.c.h.b16 %v4148
    %v6627 = vunpack.c.l.b16 %v4149
    %v6628 = vunpack.c.h.b16 %v4149
    %v6629 = vunpack.c.l.b16 %v4150
    %v6630 = vunpack.c.h.b16 %v4150
    %v6631 = vunpack.c.l.b16 %v4151
    %v6632 = vunpack.c.h.b16 %v4151
    %v6633 = vunpack.c.l.b16 %v4152
    %v6634 = vunpack.c.h.b16 %v4152
    %v6635 = vunpack.c.l.b16 %v4153
    %v6636 = vunpack.c.h.b16 %v4153
    %v6637 = vunpack.c.l.b16 %v4154
    %v6638 = vunpack.c.h.b16 %v4154
    %v6639 = vunpack.c.l.b16 %v4155
    %v6640 = vunpack.c.h.b16 %v4155
    %v6641 = vunpack.c.l.b16 %v4156
    %v6642 = vunpack.c.h.b16 %v4156
    %v6643 = vunpack.c.l.b16 %v4157
    %v6644 = vunpack.c.h.b16 %v4157
    %v6645 = vunpack.c.l.b16 %v4158
    %v6646 = vunpack.c.h.b16 %v4158
    %v6647 = vunpack.c.l.b16 %v4159
    %v6648 = vunpack.c.h.b16 %v4159
    %v6649 = vunpack.c.l.b16 %v4160
    %v6650 = vunpack.c.h.b16 %v4160
    %v6651 = vunpack.c.l.b16 %v4161
    %v6652 = vunpack.c.h.b16 %v4161
    %v6653 = vunpack.c.l.b16 %v4162
    %v6654 = vunpack.c.h.b16 %v4162
    %v6655 = vunpack.c.l.b16 %v4163
    %v6656 = vunpack.c.h.b16 %v4163
    %v6657 = vunpack.c.l.b16 %v4164
    %v6658 = vunpack.c.h.b16 %v4164
    %v6659 = vunpack.c.l.b16 %v4165
    %v6660 = vunpack.c.h.b16 %v4165
    %v6661 = vunpack.c.l.b16 %v4166
    %v6662 = vunpack.c.h.b16 %v4166
    %v6663 = vunpack.c.l.b16 %v4167
    %v6664 = vunpack.c.h.b16 %v4167
    %v6665 = vunpack.c.l.b16 %v4168
    %v6666 = vunpack.c.h.b16 %v4168
    %v6667 = vunpack.c.l.b16 %v4169
    %v6668 = vunpack.c.h.b16 %v4169
    %v6669 = vunpack.c.l.b16 %v4170
    %v6670 = vunpack.c.h.b16 %v4170
    %v6671 = vunpack.c.l.b16 %v4171
    %v6672 = vunpack.c.h.b16 %v4171
    %v6673 = vunpack.c.l.b16 %v4172
    %v6674 = vunpack.c.h.b16 %v4172
    %v6675 = vunpack.c.l.b16 %v4173
    %v6676 = vunpack.c.h.b16 %v4173
    %v6677 = vunpack.c.l.b16 %v4174
    %v6678 = vunpack.c.h.b16 %v4174
    %v6679 = vunpack.c.l.b16 %v4175
    %v6680 = vunpack.c.h.b16 %v4175
    %v6681 = vunpack.c.l.b16 %v4176
    %v6682 = vunpack.c.h.b16 %v4176
    %v6683 = vunpack.c.l.b16 %v4177
    %v6684 = vunpack.c.h.b16 %v4177
    %v6685 = vunpack.c.l.b16 %v4178
    %v6686 = vunpack.c.h.b16 %v4178
    %v6687 = vunpack.c.l.b16 %v4179
    %v6688 = vunpack.c.h.b16 %v4179
    %v6689 = vunpack.c.l.b16 %v4180
    %v6690 = vunpack.c.h.b16 %v4180
    %v6691 = vunpack.c.l.b16 %v4181
    %v6692 = vunpack.c.h.b16 %v4181
    %v6693 = vunpack.c.l.b16 %v4182
    %v6694 = vunpack.c.h.b16 %v4182
    %v6695 = vunpack.c.l.b16 %v4183
    %v6696 = vunpack.c.h.b16 %v4183
    %v6697 = vunpack.c.l.b16 %v4184
    %v6698 = vunpack.c.h.b16 %v4184
    %v6699 = vunpack.c.l.b16 %v4185
    %v6700 = vunpack.c.h.b16 %v4185
    %v6701 = vunpack.c.l.b16 %v4186
    %v6702 = vunpack.c.h.b16 %v4186
    %v6703 = vunpack.c.l.b16 %v4187
    %v6704 = vunpack.c.h.b16 %v4187
    %v6705 = vunpack.c.l.b16 %v4188
    %v6706 = vunpack.c.h.b16 %v4188
    %v6707 = vunpack.c.l.b16 %v4189
    %v6708 = vunpack.c.h.b16 %v4189
    %v6709 = vunpack.c.l.b16 %v4190
    %v6710 = vunpack.c.h.b16 %v4190
    %v6711 = vunpack.c.l.b16 %v4191
    %v6712 = vunpack.c.h.b16 %v4191
    %v6713 = vunpack.c.l.b16 %v4192
    %v6714 = vunpack.c.h.b16 %v4192
    %v6715 = vunpack.c.l.b16 %v4193
    %v6716 = vunpack.c.h.b16 %v4193
    %v6717 = vunpack.c.l.b16 %v4194
    %v6718 = vunpack.c.h.b16 %v4194
    %v6719 = vunpack.c.l.b16 %v4195
    %v6720 = vunpack.c.h.b16 %v4195
    %v6721 = vunpack.c.l.b16 %v4196
    %v6722 = vunpack.c.h.b16 %v4196
    %v6723 = vunpack.c.l.b16 %v4197
    %v6724 = vunpack.c.h.b16 %v4197
    %v6725 = vunpack.c.l.b16 %v4198
    %v6726 = vunpack.c.h.b16 %v4198
    %v6727 = vunpack.c.l.b16 %v4199
    %v6728 = vunpack.c.h.b16 %v4199
    %v6729 = vunpack.c.l.b16 %v4200
    %v6730 = vunpack.c.h.b16 %v4200
    %v6731 = vunpack.c.l.b16 %v4201
    %v6732 = vunpack.c.h.b16 %v4201
    %v6733 = vunpack.c.l.b16 %v4202
    %v6734 = vunpack.c.h.b16 %v4202
    %v6735 = vunpack.c.l.b16 %v4203
    %v6736 = vunpack.c.h.b16 %v4203
    %v6737 = vunpack.c.l.b16 %v4204
    %v6738 = vunpack.c.h.b16 %v4204
    %v6739 = vunpack.c.l.b16 %v4205
    %v6740 = vunpack.c.h.b16 %v4205
    %v6741 = vunpack.c.l.b16 %v4206
    %v6742 = vunpack.c.h.b16 %v4206
    %v6743 = vunpack.c.l.b16 %v4207
    %v6744 = vunpack.c.h.b16 %v4207
    %v6745 = vunpack.c.l.b16 %v4208
    %v6746 = vunpack.c.h.b16 %v4208
    %v6747 = vunpack.c.l.b16 %v4209
    %v6748 = vunpack.c.h.b16 %v4209
    %v6749 = vunpack.c.l.b16 %v4210
    %v6750 = vunpack.c.h.b16 %v4210
    %v6751 = vunpack.c.l.b16 %v4211
    %v6752 = vunpack.c.h.b16 %v4211
    %v6753 = vunpack.c.l.b16 %v4212
    %v6754 = vunpack.c.h.b16 %v4212
    %v6755 = vunpack.c.l.b16 %v4213
    %v6756 = vunpack.c.h.b16 %v4213
    %v6757 = vunpack.c.l.b16 %v4214
    %v6758 = vunpack.c.h.b16 %v4214
    %v6759 = vunpack.c.l.b16 %v4215
    %v6760 = vunpack.c.h.b16 %v4215
    %v6761 = vunpack.c.l.b16 %v4216
    %v6762 = vunpack.c.h.b16 %v4216
    %v6763 = vunpack.c.l.b16 %v4217
    %v6764 = vunpack.c.h.b16 %v4217
    %v6765 = vunpack.c.l.b16 %v4218
    %v6766 = vunpack.c.h.b16 %v4218
    %v6767 = vunpack.c.l.b16 %v4219
    %v6768 = vunpack.c.h.b16 %v4219
    %v6769 = vunpack.c.l.b16 %v4220
    %v6770 = vunpack.c.h.b16 %v4220
    %v6771 = vunpack.c.l.b16 %v4221
    %v6772 = vunpack.c.h.b16 %v4221
    %v6773 = vunpack.c.l.b16 %v4222
    %v6774 = vunpack.c.h.b16 %v4222
    %v6775 = vunpack.c.l.b16 %v4223
    %v6776 = vunpack.c.h.b16 %v4223
    %v6777 = vunpack.c.l.b16 %v4224
    %v6778 = vunpack.c.h.b16 %v4224
    %v6779 = vunpack.c.l.b16 %v4225
    %v6780 = vunpack.c.h.b16 %v4225
    %v6781 = vunpack.c.l.b16 %v4226
    %v6782 = vunpack.c.h.b16 %v4226
    %v6783 = vunpack.c.l.b16 %v4227
    %v6784 = vunpack.c.h.b16 %v4227
    %v6785 = vunpack.c.l.b16 %v4228
    %v6786 = vunpack.c.h.b16 %v4228
    %v6787 = vunpack.c.l.b16 %v4229
    %v6788 = vunpack.c.h.b16 %v4229
    %v6789 = vunpack.c.l.b16 %v4230
    %v6790 = vunpack.c.h.b16 %v4230
    %v6791 = vunpack.c.l.b16 %v4231
    %v6792 = vunpack.c.h.b16 %v4231
    %v6793 = vunpack.c.l.b16 %v4232
    %v6794 = vunpack.c.h.b16 %v4232
    %v6795 = vunpack.c.l.b16 %v4233
    %v6796 = vunpack.c.h.b16 %v4233
    %v6797 = vunpack.c.l.b16 %v4234
    %v6798 = vunpack.c.h.b16 %v4234
    %v6799 = vunpack.c.l.b16 %v4235
    %v6800 = vunpack.c.h.b16 %v4235
    %v6801 = vunpack.c.l.b16 %v4236
    %v6802 = vunpack.c.h.b16 %v4236
    %v6803 = vunpack.c.l.b16 %v4237
    %v6804 = vunpack.c.h.b16 %v4237
    %v6805 = vunpack.c.l.b16 %v4238
    %v6806 = vunpack.c.h.b16 %v4238
    %v6807 = vunpack.c.l.b16 %v4239
    %v6808 = vunpack.c.h.b16 %v4239
    %v6809 = vunpack.c.l.b16 %v4240
    %v6810 = vunpack.c.h.b16 %v4240
    %v6811 = vunpack.c.l.b16 %v4241
    %v6812 = vunpack.c.h.b16 %v4241
    %v6813 = vunpack.c.l.b16 %v4242
    %v6814 = vunpack.c.h.b16 %v4242
    %v6815 = vunpack.c.l.b16 %v4243
    %v6816 = vunpack.c.h.b16 %v4243
    %v6817 = vunpack.c.l.b16 %v4244
    %v6818 = vunpack.c.h.b16 %v4244
    %v6819 = vunpack.c.l.b16 %v4245
    %v6820 = vunpack.c.h.b16 %v4245
    %v6821 = vunpack.c.l.b16 %v4246
    %v6822 = vunpack.c.h.b16 %v4246
    %v6823 = vunpack.c.l.b16 %v4247
    %v6824 = vunpack.c.h.b16 %v4247
    %v6825 = vunpack.c.l.b16 %v4248
    %v6826 = vunpack.c.h.b16 %v4248
    %v6827 = vunpack.c.l.b16 %v4249
    %v6828 = vunpack.c.h.b16 %v4249
    %v6829 = vunpack.c.l.b16 %v4250
    %v6830 = vunpack.c.h.b16 %v4250
    %v6831 = vunpack.c.l.b16 %v4251
    %v6832 = vunpack.c.h.b16 %v4251
    %v6833 = vunpack.c.l.b16 %v4252
    %v6834 = vunpack.c.h.b16 %v4252
    %v6835 = vunpack.c.l.b16 %v4253
    %v6836 = vunpack.c.h.b16 %v4253
    %v6837 = vunpack.c.l.b16 %v4254
    %v6838 = vunpack.c.h.b16 %v4254
    %v6839 = vunpack.c.l.b16 %v4255
    %v6840 = vunpack.c.h.b16 %v4255
    %v6841 = vunpack.c.l.b16 %v4256
    %v6842 = vunpack.c.h.b16 %v4256
    %v6843 = vunpack.c.l.b16 %v4257
    %v6844 = vunpack.c.h.b16 %v4257
    %v6845 = vunpack.c.l.b16 %v4258
    %v6846 = vunpack.c.h.b16 %v4258
    %v6847 = vunpack.c.l.b16 %v4259
    %v6848 = vunpack.c.h.b16 %v4259
    %v6849 = vunpack.c.l.b16 %v4260
    %v6850 = vunpack.c.h.b16 %v4260
    %v6851 = vunpack.c.l.b16 %v4261
    %v6852 = vunpack.c.h.b16 %v4261
    %v6853 = vunpack.c.l.b16 %v4262
    %v6854 = vunpack.c.h.b16 %v4262
    %v6855 = vunpack.c.l.b16 %v4263
    %v6856 = vunpack.c.h.b16 %v4263
    %v6857 = vunpack.c.l.b16 %v4264
    %v6858 = vunpack.c.h.b16 %v4264
    %v6859 = vunpack.c.l.b16 %v4265
    %v6860 = vunpack.c.h.b16 %v4265
    %v6861 = vunpack.c.l.b16 %v4266
    %v6862 = vunpack.c.h.b16 %v4266
    %v6863 = vunpack.c.l.b16 %v4267
    %v6864 = vunpack.c.h.b16 %v4267
    %v6865 = vunpack.c.l.b16 %v4268
    %v6866 = vunpack.c.h.b16 %v4268
    %v6867 = vunpack.c.l.b16 %v4269
    %v6868 = vunpack.c.h.b16 %v4269
    %v6869 = vunpack.c.l.b16 %v4270
    %v6870 = vunpack.c.h.b16 %v4270
    %v6871 = vunpack.c.l.b16 %v4271
    %v6872 = vunpack.c.h.b16 %v4271
    %v6873 = vunpack.c.l.b16 %v4272
    %v6874 = vunpack.c.h.b16 %v4272
    %v6875 = vunpack.c.l.b16 %v4273
    %v6876 = vunpack.c.h.b16 %v4273
    %v6877 = vunpack.c.l.b16 %v4274
    %v6878 = vunpack.c.h.b16 %v4274
    %v6879 = vunpack.c.l.b16 %v4275
    %v6880 = vunpack.c.h.b16 %v4275
    %v6881 = vunpack.c.l.b16 %v4276
    %v6882 = vunpack.c.h.b16 %v4276
    %v6883 = vunpack.c.l.b16 %v4277
    %v6884 = vunpack.c.h.b16 %v4277
    %v6885 = vunpack.c.l.b16 %v4278
    %v6886 = vunpack.c.h.b16 %v4278
    %v6887 = vunpack.c.l.b16 %v4279
    %v6888 = vunpack.c.h.b16 %v4279
    %v6889 = vunpack.c.l.b16 %v4280
    %v6890 = vunpack.c.h.b16 %v4280
    %v6891 = vunpack.c.l.b16 %v4281
    %v6892 = vunpack.c.h.b16 %v4281
    %v6893 = vunpack.c.l.b16 %v4282
    %v6894 = vunpack.c.h.b16 %v4282
    %v6895 = vunpack.c.l.b16 %v4283
    %v6896 = vunpack.c.h.b16 %v4283
    %v6897 = vunpack.c.l.b16 %v4284
    %v6898 = vunpack.c.h.b16 %v4284
    %v6899 = vunpack.c.l.b16 %v4285
    %v6900 = vunpack.c.h.b16 %v4285
    %v6901 = vunpack.c.l.b16 %v4286
    %v6902 = vunpack.c.h.b16 %v4286
    %v6903 = vunpack.c.l.b16 %v4287
    %v6904 = vunpack.c.h.b16 %v4287
    %v6905 = vunpack.c.l.b16 %v4288
    %v6906 = vunpack.c.h.b16 %v4288
    %v6907 = vunpack.c.l.b16 %v4289
    %v6908 = vunpack.c.h.b16 %v4289
    %v6909 = vunpack.c.l.b16 %v4290
    %v6910 = vunpack.c.h.b16 %v4290
    %v6911 = vunpack.c.l.b16 %v4291
    %v6912 = vunpack.c.h.b16 %v4291
    %v6913 = vunpack.c.l.b16 %v4292
    %v6914 = vunpack.c.h.b16 %v4292
    %v6915 = vunpack.c.l.b16 %v4293
    %v6916 = vunpack.c.h.b16 %v4293
    %v6917 = vunpack.c.l.b16 %v4294
    %v6918 = vunpack.c.h.b16 %v4294
    %v6919 = vunpack.c.l.b16 %v4295
    %v6920 = vunpack.c.h.b16 %v4295
    %v6921 = vunpack.c.l.b16 %v4296
    %v6922 = vunpack.c.h.b16 %v4296
    %v6923 = vunpack.c.l.b16 %v4297
    %v6924 = vunpack.c.h.b16 %v4297
    %v6925 = vunpack.c.l.b16 %v4298
    %v6926 = vunpack.c.h.b16 %v4298
    %v6927 = vunpack.c.l.b16 %v4299
    %v6928 = vunpack.c.h.b16 %v4299
    %v6929 = vunpack.c.l.b16 %v4300
    %v6930 = vunpack.c.h.b16 %v4300
    %v6931 = vunpack.c.l.b16 %v4301
    %v6932 = vunpack.c.h.b16 %v4301
    %v6933 = vunpack.c.l.b16 %v4302
    %v6934 = vunpack.c.h.b16 %v4302
    %v6935 = vunpack.c.l.b16 %v4303
    %v6936 = vunpack.c.h.b16 %v4303
    %v6937 = vunpack.c.l.b16 %v4304
    %v6938 = vunpack.c.h.b16 %v4304
    %v6939 = vunpack.c.l.b16 %v4305
    %v6940 = vunpack.c.h.b16 %v4305
    %v6941 = vunpack.c.l.b16 %v4306
    %v6942 = vunpack.c.h.b16 %v4306
    %v6943 = vunpack.c.l.b16 %v4307
    %v6944 = vunpack.c.h.b16 %v4307
    %v6945 = vunpack.c.l.b16 %v4308
    %v6946 = vunpack.c.h.b16 %v4308
    %v6947 = vunpack.c.l.b16 %v4309
    %v6948 = vunpack.c.h.b16 %v4309
    %v6949 = vunpack.c.l.b16 %v4310
    %v6950 = vunpack.c.h.b16 %v4310
    %v6951 = vunpack.c.l.b16 %v4311
    %v6952 = vunpack.c.h.b16 %v4311
    %v6953 = vunpack.c.l.b16 %v4312
    %v6954 = vunpack.c.h.b16 %v4312
    %v6955 = vunpack.c.l.b16 %v4313
    %v6956 = vunpack.c.h.b16 %v4313
    %v6957 = vunpack.c.l.b16 %v4314
    %v6958 = vunpack.c.h.b16 %v4314
    %v6959 = vunpack.c.l.b16 %v4315
    %v6960 = vunpack.c.h.b16 %v4315
    %v6961 = vunpack.c.l.b16 %v4316
    %v6962 = vunpack.c.h.b16 %v4316
    %v6963 = vunpack.c.l.b16 %v4317
    %v6964 = vunpack.c.h.b16 %v4317
    %v6965 = vunpack.c.l.b16 %v4318
    %v6966 = vunpack.c.h.b16 %v4318
    %v6967 = vunpack.c.l.b16 %v4319
    %v6968 = vunpack.c.h.b16 %v4319
    %v6969 = vunpack.c.l.b16 %v4320
    %v6970 = vunpack.c.h.b16 %v4320
    %v6971 = vunpack.c.l.b16 %v4321
    %v6972 = vunpack.c.h.b16 %v4321
    %v6973 = vunpack.c.l.b16 %v4322
    %v6974 = vunpack.c.h.b16 %v4322
    %v6975 = vunpack.c.l.b16 %v4323
    %v6976 = vunpack.c.h.b16 %v4323
    %v6977 = vunpack.c.l.b16 %v4324
    %v6978 = vunpack.c.h.b16 %v4324
    %v6979 = vunpack.c.l.b16 %v4325
    %v6980 = vunpack.c.h.b16 %v4325
    %v6981 = vunpack.c.l.b16 %v4326
    %v6982 = vunpack.c.h.b16 %v4326
    %v6983 = vunpack.c.l.b16 %v4327
    %v6984 = vunpack.c.h.b16 %v4327
    %v6985 = vunpack.c.l.b16 %v4328
    %v6986 = vunpack.c.h.b16 %v4328
    %v6987 = vunpack.c.l.b16 %v4329
    %v6988 = vunpack.c.h.b16 %v4329
    %v6989 = vunpack.c.l.b16 %v4330
    %v6990 = vunpack.c.h.b16 %v4330
    %v6991 = vunpack.c.l.b16 %v4331
    %v6992 = vunpack.c.h.b16 %v4331
    %v6993 = vunpack.c.l.b16 %v4332
    %v6994 = vunpack.c.h.b16 %v4332
    %v6995 = vunpack.c.l.b16 %v4333
    %v6996 = vunpack.c.h.b16 %v4333
    %v6997 = vunpack.c.l.b16 %v4334
    %v6998 = vunpack.c.h.b16 %v4334
    %v6999 = vunpack.c.l.b16 %v4335
    %v7000 = vunpack.c.h.b16 %v4335
    %v7001 = vunpack.c.l.b16 %v4336
    %v7002 = vunpack.c.h.b16 %v4336
    %v7003 = vunpack.c.l.b16 %v4337
    %v7004 = vunpack.c.h.b16 %v4337
    %v7005 = vunpack.c.l.b16 %v4338
    %v7006 = vunpack.c.h.b16 %v4338
    %v7007 = vunpack.c.l.b16 %v4339
    %v7008 = vunpack.c.h.b16 %v4339
    %v7009 = vunpack.c.l.b16 %v4340
    %v7010 = vunpack.c.h.b16 %v4340
    %v7011 = vunpack.c.l.b16 %v4341
    %v7012 = vunpack.c.h.b16 %v4341
    %v7013 = vunpack.c.l.b16 %v4342
    %v7014 = vunpack.c.h.b16 %v4342
    %v7015 = vunpack.c.l.b16 %v4343
    %v7016 = vunpack.c.h.b16 %v4343
    %v7017 = vunpack.c.l.b16 %v4344
    %v7018 = vunpack.c.h.b16 %v4344
    %v7019 = vunpack.c.l.b16 %v4345
    %v7020 = vunpack.c.h.b16 %v4345
    %v7021 = vunpack.c.l.b16 %v4346
    %v7022 = vunpack.c.h.b16 %v4346
    %v7023 = vunpack.c.l.b16 %v4347
    %v7024 = vunpack.c.h.b16 %v4347
    %v7025 = vunpack.c.l.b16 %v4348
    %v7026 = vunpack.c.h.b16 %v4348
    %v7027 = vunpack.c.l.b16 %v4349
    %v7028 = vunpack.c.h.b16 %v4349
    %v7029 = vunpack.c.l.b16 %v4350
    %v7030 = vunpack.c.h.b16 %v4350
    %v7031 = vunpack.c.l.b16 %v4351
    %v7032 = vunpack.c.h.b16 %v4351
    %v7033 = vunpack.c.l.b16 %v4352
    %v7034 = vunpack.c.h.b16 %v4352
    %v7035 = vunpack.c.l.b16 %v4353
    %v7036 = vunpack.c.h.b16 %v4353
    %v7037 = vunpack.c.l.b16 %v4354
    %v7038 = vunpack.c.h.b16 %v4354
    %v7039 = vunpack.c.l.b16 %v4355
    %v7040 = vunpack.c.h.b16 %v4355
    %v7041 = vunpack.c.l.b16 %v4356
    %v7042 = vunpack.c.h.b16 %v4356
    %v7043 = vunpack.c.l.b16 %v4357
    %v7044 = vunpack.c.h.b16 %v4357
    %v7045 = vunpack.c.l.b16 %v4358
    %v7046 = vunpack.c.h.b16 %v4358
    %v7047 = vunpack.c.l.b16 %v4359
    %v7048 = vunpack.c.h.b16 %v4359
    %v7049 = vunpack.c.l.b16 %v4360
    %v7050 = vunpack.c.h.b16 %v4360
    %v7051 = vunpack.c.l.b16 %v4361
    %v7052 = vunpack.c.h.b16 %v4361
    %v7053 = vunpack.c.l.b16 %v4362
    %v7054 = vunpack.c.h.b16 %v4362
    %v7055 = vunpack.c.l.b16 %v4363
    %v7056 = vunpack.c.h.b16 %v4363
    %v7057 = vunpack.c.l.b16 %v4364
    %v7058 = vunpack.c.h.b16 %v4364
    %v7059 = vunpack.c.l.b16 %v4365
    %v7060 = vunpack.c.h.b16 %v4365
    %v7061 = vunpack.c.l.b16 %v4366
    %v7062 = vunpack.c.h.b16 %v4366
    %v7063 = vunpack.c.l.b16 %v4367
    %v7064 = vunpack.c.h.b16 %v4367
    %v7065 = vunpack.c.l.b16 %v4368
    %v7066 = vunpack.c.h.b16 %v4368
    %v7067 = vunpack.c.l.b16 %v4369
    %v7068 = vunpack.c.h.b16 %v4369
    %v7069 = vunpack.c.l.b16 %v4370
    %v7070 = vunpack.c.h.b16 %v4370
    %v7071 = vunpack.c.l.b16 %v4371
    %v7072 = vunpack.c.h.b16 %v4371
    %v7073 = vunpack.c.l.b16 %v4372
    %v7074 = vunpack.c.h.b16 %v4372
    %v7075 = vunpack.c.l.b16 %v4373
    %v7076 = vunpack.c.h.b16 %v4373
    %v7077 = vunpack.c.l.b16 %v4374
    %v7078 = vunpack.c.h.b16 %v4374
    %v7079 = vunpack.c.l.b16 %v4375
    %v7080 = vunpack.c.h.b16 %v4375
    %v7081 = vunpack.c.l.b16 %v4376
    %v7082 = vunpack.c.h.b16 %v4376
    %v7083 = vunpack.c.l.b16 %v4377
    %v7084 = vunpack.c.h.b16 %v4377
    %v7085 = vunpack.c.l.b16 %v4378
    %v7086 = vunpack.c.h.b16 %v4378
    %v7087 = vunpack.c.l.b16 %v4379
    %v7088 = vunpack.c.h.b16 %v4379
    %v7089 = vunpack.c.l.b16 %v4380
    %v7090 = vunpack.c.h.b16 %v4380
    %v7091 = vunpack.c.l.b16 %v4381
    %v7092 = vunpack.c.h.b16 %v4381
    %v7093 = vunpack.c.l.b16 %v4382
    %v7094 = vunpack.c.h.b16 %v4382
    %v7095 = vunpack.c.l.b16 %v4383
    %v7096 = vunpack.c.h.b16 %v4383
    %v7097 = vunpack.c.l.b16 %v4384
    %v7098 = vunpack.c.h.b16 %v4384
    %v7099 = vunpack.c.l.b16 %v4385
    %v7100 = vunpack.c.h.b16 %v4385
    %v7101 = vunpack.c.l.b16 %v4386
    %v7102 = vunpack.c.h.b16 %v4386
    %v7103 = vunpack.c.l.b16 %v4387
    %v7104 = vunpack.c.h.b16 %v4387
    %v7105 = vunpack.c.l.b16 %v4388
    %v7106 = vunpack.c.h.b16 %v4388
    %v7107 = vunpack.c.l.b16 %v4389
    %v7108 = vunpack.c.h.b16 %v4389
    %v7109 = vunpack.c.l.b16 %v4390
    %v7110 = vunpack.c.h.b16 %v4390
    %v7111 = vunpack.c.l.b16 %v4391
    %v7112 = vunpack.c.h.b16 %v4391
    %v7113 = vunpack.c.l.b16 %v4392
    %v7114 = vunpack.c.h.b16 %v4392
    %v7115 = vunpack.c.l.b16 %v4393
    %v7116 = vunpack.c.h.b16 %v4393
    %v7117 = vunpack.c.l.b16 %v4394
    %v7118 = vunpack.c.h.b16 %v4394
    %v7119 = vunpack.c.l.b16 %v4395
    %v7120 = vunpack.c.h.b16 %v4395
    %v7121 = vunpack.c.l.b16 %v4396
    %v7122 = vunpack.c.h.b16 %v4396
    %v7123 = vunpack.c.l.b16 %v4397
    %v7124 = vunpack.c.h.b16 %v4397
    %v7125 = vunpack.c.l.b16 %v4398
    %v7126 = vunpack.c.h.b16 %v4398
    %v7127 = vunpack.c.l.b16 %v4399
    %v7128 = vunpack.c.h.b16 %v4399
    %v7129 = vunpack.c.l.b16 %v4400
    %v7130 = vunpack.c.h.b16 %v4400
    %v7131 = vunpack.c.l.b16 %v4401
    %v7132 = vunpack.c.h.b16 %v4401
    %v7133 = vunpack.c.l.b16 %v4402
    %v7134 = vunpack.c.h.b16 %v4402
    %v7135 = vunpack.c.l.b16 %v4403
    %v7136 = vunpack.c.h.b16 %v4403
    %v7137 = vunpack.c.l.b16 %v4404
    %v7138 = vunpack.c.h.b16 %v4404
    %v7139 = vunpack.c.l.b16 %v4405
    %v7140 = vunpack.c.h.b16 %v4405
    %v7141 = vunpack.c.l.b16 %v4406
    %v7142 = vunpack.c.h.b16 %v4406
    %v7143 = vunpack.c.l.b16 %v4407
    %v7144 = vunpack.c.h.b16 %v4407
    %v7145 = vunpack.c.l.b16 %v4408
    %v7146 = vunpack.c.h.b16 %v4408
    %v7147 = vunpack.c.l.b16 %v4409
    %v7148 = vunpack.c.h.b16 %v4409
    %v7149 = vunpack.c.l.b16 %v4410
    %v7150 = vunpack.c.h.b16 %v4410
    %v7151 = vunpack.c.l.b16 %v4411
    %v7152 = vunpack.c.h.b16 %v4411
    %v7153 = vunpack.c.l.b16 %v4412
    %v7154 = vunpack.c.h.b16 %v4412
    %v7155 = vunpack.c.l.b16 %v4413
    %v7156 = vunpack.c.h.b16 %v4413
    %v7157 = vunpack.c.l.b16 %v4414
    %v7158 = vunpack.c.h.b16 %v4414
    %v7159 = vunpack.c.l.b16 %v4415
    %v7160 = vunpack.c.h.b16 %v4415
    %v7161 = vunpack.c.l.b16 %v4416
    %v7162 = vunpack.c.h.b16 %v4416
    %v7163 = vunpack.c.l.b16 %v4417
    %v7164 = vunpack.c.h.b16 %v4417
    %v7165 = vunpack.c.l.b16 %v4418
    %v7166 = vunpack.c.h.b16 %v4418
    %v7167 = vunpack.c.l.b16 %v4419
    %v7168 = vunpack.c.h.b16 %v4419
    %v7169 = vunpack.c.l.b16 %v4420
    %v7170 = vunpack.c.h.b16 %v4420
    %v7171 = vunpack.c.l.b16 %v4421
    %v7172 = vunpack.c.h.b16 %v4421
    %v7173 = vunpack.c.l.b16 %v4422
    %v7174 = vunpack.c.h.b16 %v4422
    %v7175 = vunpack.c.l.b16 %v4423
    %v7176 = vunpack.c.h.b16 %v4423
    %v7177 = vunpack.c.l.b16 %v4424
    %v7178 = vunpack.c.h.b16 %v4424
    %v7179 = vunpack.c.l.b16 %v4425
    %v7180 = vunpack.c.h.b16 %v4425
    %v7181 = vunpack.c.l.b16 %v4426
    %v7182 = vunpack.c.h.b16 %v4426
    %v7183 = vunpack.c.l.b16 %v4427
    %v7184 = vunpack.c.h.b16 %v4427
    %v7185 = vunpack.c.l.b16 %v4428
    %v7186 = vunpack.c.h.b16 %v4428
    %v7187 = vunpack.c.l.b16 %v4429
    %v7188 = vunpack.c.h.b16 %v4429
    %v7189 = vunpack.c.l.b16 %v4430
    %v7190 = vunpack.c.h.b16 %v4430
    %v7191 = vunpack.c.l.b16 %v4431
    %v7192 = vunpack.c.h.b16 %v4431
    %v7193 = vunpack.c.l.b16 %v4432
    %v7194 = vunpack.c.h.b16 %v4432
    %v7195 = vunpack.c.l.b16 %v4433
    %v7196 = vunpack.c.h.b16 %v4433
    %v7197 = vunpack.c.l.b16 %v4434
    %v7198 = vunpack.c.h.b16 %v4434
    %v7199 = vunpack.c.l.b16 %v4435
    %v7200 = vunpack.c.h.b16 %v4435
    %v7201 = vunpack.c.l.b16 %v4436
    %v7202 = vunpack.c.h.b16 %v4436
    %v7203 = vunpack.c.l.b16 %v4437
    %v7204 = vunpack.c.h.b16 %v4437
    %v7205 = vunpack.c.l.b16 %v4438
    %v7206 = vunpack.c.h.b16 %v4438
    %v7207 = vunpack.c.l.b16 %v4439
    %v7208 = vunpack.c.h.b16 %v4439
    %v7209 = vunpack.c.l.b16 %v4440
    %v7210 = vunpack.c.h.b16 %v4440
    %v7211 = vunpack.c.l.b16 %v4441
    %v7212 = vunpack.c.h.b16 %v4441
    %v7213 = vunpack.c.l.b16 %v4442
    %v7214 = vunpack.c.h.b16 %v4442
    %v7215 = vunpack.c.l.b16 %v4443
    %v7216 = vunpack.c.h.b16 %v4443
    %v7217 = vunpack.c.l.b16 %v4444
    %v7218 = vunpack.c.h.b16 %v4444
    %v7219 = vunpack.c.l.b16 %v4445
    %v7220 = vunpack.c.h.b16 %v4445
    %v7221 = vunpack.c.l.b16 %v4446
    %v7222 = vunpack.c.h.b16 %v4446
    %v7223 = vunpack.c.l.b16 %v4447
    %v7224 = vunpack.c.h.b16 %v4447
    %v7225 = vunpack.c.l.b16 %v4448
    %v7226 = vunpack.c.h.b16 %v4448
    %v7227 = vunpack.c.l.b16 %v4449
    %v7228 = vunpack.c.h.b16 %v4449
    %v7229 = vunpack.c.l.b16 %v4450
    %v7230 = vunpack.c.h.b16 %v4450
    %v7231 = vunpack.c.l.b16 %v4451
    %v7232 = vunpack.c.h.b16 %v4451
    %v7233 = vunpack.c.l.b16 %v4452
    %v7234 = vunpack.c.h.b16 %v4452
    %v7235 = vunpack.c.l.b16 %v4453
    %v7236 = vunpack.c.h.b16 %v4453
    %v7237 = vunpack.c.l.b16 %v4454
    %v7238 = vunpack.c.h.b16 %v4454
    %v7239 = vunpack.c.l.b16 %v4455
    %v7240 = vunpack.c.h.b16 %v4455
    %v7241 = vunpack.c.l.b16 %v4456
    %v7242 = vunpack.c.h.b16 %v4456
    %v7243 = vunpack.c.l.b16 %v4457
    %v7244 = vunpack.c.h.b16 %v4457
    %v7245 = vunpack.c.l.b16 %v4458
    %v7246 = vunpack.c.h.b16 %v4458
    %v7247 = vunpack.c.l.b16 %v4459
    %v7248 = vunpack.c.h.b16 %v4459
    %v7249 = vunpack.c.l.b16 %v4460
    %v7250 = vunpack.c.h.b16 %v4460
    %v7251 = vunpack.c.l.b16 %v4461
    %v7252 = vunpack.c.h.b16 %v4461
    %v7253 = vunpack.c.l.b16 %v4462
    %v7254 = vunpack.c.h.b16 %v4462
    %v7255 = vunpack.c.l.b16 %v4463
    %v7256 = vunpack.c.h.b16 %v4463
    %v7257 = vunpack.c.l.b16 %v4464
    %v7258 = vunpack.c.h.b16 %v4464
    %v7259 = vunpack.c.l.b16 %v4465
    %v7260 = vunpack.c.h.b16 %v4465
    %v7261 = vunpack.c.l.b16 %v4466
    %v7262 = vunpack.c.h.b16 %v4466
    %v7263 = vunpack.c.l.b16 %v4467
    %v7264 = vunpack.c.h.b16 %v4467
    %v7265 = vunpack.c.l.b16 %v4468
    %v7266 = vunpack.c.h.b16 %v4468
    %v7267 = vunpack.c.l.b16 %v4469
    %v7268 = vunpack.c.h.b16 %v4469
    %v7269 = vunpack.c.l.b16 %v4470
    %v7270 = vunpack.c.h.b16 %v4470
    %v7271 = vunpack.c.l.b16 %v4471
    %v7272 = vunpack.c.h.b16 %v4471
    %v7273 = vunpack.c.l.b16 %v4472
    %v7274 = vunpack.c.h.b16 %v4472
    %v7275 = vunpack.c.l.b16 %v4473
    %v7276 = vunpack.c.h.b16 %v4473
    %v7277 = vunpack.c.l.b16 %v4474
    %v7278 = vunpack.c.h.b16 %v4474
    %v7279 = vunpack.c.l.b16 %v4475
    %v7280 = vunpack.c.h.b16 %v4475
    %v7281 = vunpack.c.l.b16 %v4476
    %v7282 = vunpack.c.h.b16 %v4476
    %v7283 = vunpack.c.l.b16 %v4477
    %v7284 = vunpack.c.h.b16 %v4477
    %v7285 = vunpack.c.l.b16 %v4478
    %v7286 = vunpack.c.h.b16 %v4478
    %v7287 = vunpack.c.l.b16 %v4479
    %v7288 = vunpack.c.h.b16 %v4479
    %v7289 = vunpack.c.l.b16 %v4480
    %v7290 = vunpack.c.h.b16 %v4480
    %v7291 = vunpack.c.l.b16 %v4481
    %v7292 = vunpack.c.h.b16 %v4481
    %v7293 = vunpack.c.l.b16 %v4482
    %v7294 = vunpack.c.h.b16 %v4482
    %v7295 = vunpack.c.l.b16 %v4483
    %v7296 = vunpack.c.h.b16 %v4483
    %v7297 = vunpack.c.l.b16 %v4484
    %v7298 = vunpack.c.h.b16 %v4484
    %v7299 = vunpack.c.l.b16 %v4485
    %v7300 = vunpack.c.h.b16 %v4485
    %v7301 = vunpack.c.l.b16 %v4486
    %v7302 = vunpack.c.h.b16 %v4486
    %v7303 = vunpack.c.l.b16 %v4487
    %v7304 = vunpack.c.h.b16 %v4487
    %v7305 = vunpack.c.l.b16 %v4488
    %v7306 = vunpack.c.h.b16 %v4488
    %v7307 = vunpack.c.l.b16 %v4489
    %v7308 = vunpack.c.h.b16 %v4489
    %v7309 = vunpack.c.l.b16 %v4490
    %v7310 = vunpack.c.h.b16 %v4490
    %v7311 = vunpack.c.l.b16 %v4491
    %v7312 = vunpack.c.h.b16 %v4491
    %v7313 = vunpack.c.l.b16 %v4492
    %v7314 = vunpack.c.h.b16 %v4492
    %v7315 = vunpack.c.l.b16 %v4493
    %v7316 = vunpack.c.h.b16 %v4493
    %v7317 = vunpack.c.l.b16 %v4494
    %v7318 = vunpack.c.h.b16 %v4494
    %v7319 = vunpack.c.l.b16 %v4495
    %v7320 = vunpack.c.h.b16 %v4495
    %v7321 = vunpack.c.l.b16 %v4496
    %v7322 = vunpack.c.h.b16 %v4496
    %v7323 = vunpack.c.l.b16 %v4497
    %v7324 = vunpack.c.h.b16 %v4497
    %v7325 = vunpack.c.l.b16 %v4498
    %v7326 = vunpack.c.h.b16 %v4498
    %v7327 = vunpack.c.l.b16 %v4499
    %v7328 = vunpack.c.h.b16 %v4499
    %v7329 = vunpack.c.l.b16 %v4500
    %v7330 = vunpack.c.h.b16 %v4500
    %v7331 = vunpack.c.l.b16 %v4501
    %v7332 = vunpack.c.h.b16 %v4501
    %v7333 = vunpack.c.l.b16 %v4502
    %v7334 = vunpack.c.h.b16 %v4502
    %v7335 = vunpack.c.l.b16 %v4503
    %v7336 = vunpack.c.h.b16 %v4503
    %v7337 = vunpack.c.l.b16 %v4504
    %v7338 = vunpack.c.h.b16 %v4504
    %v7339 = vunpack.c.l.b16 %v4505
    %v7340 = vunpack.c.h.b16 %v4505
    %v7341 = vunpack.c.l.b16 %v4506
    %v7342 = vunpack.c.h.b16 %v4506
    %v7343 = vunpack.c.l.b16 %v4507
    %v7344 = vunpack.c.h.b16 %v4507
    %v7345 = vunpack.c.l.b16 %v4508
    %v7346 = vunpack.c.h.b16 %v4508
    %v7347 = vunpack.c.l.b16 %v4509
    %v7348 = vunpack.c.h.b16 %v4509
    %v7349 = vunpack.c.l.b16 %v4510
    %v7350 = vunpack.c.h.b16 %v4510
    %v7351 = vunpack.c.l.b16 %v4511
    %v7352 = vunpack.c.h.b16 %v4511
    %v7353 = vunpack.c.l.b16 %v4512
    %v7354 = vunpack.c.h.b16 %v4512
    %v7355 = vunpack.c.l.b16 %v4513
    %v7356 = vunpack.c.h.b16 %v4513
    %v7357 = vunpack.c.l.b16 %v4514
    %v7358 = vunpack.c.h.b16 %v4514
    %v7359 = vunpack.c.l.b16 %v4515
    %v7360 = vunpack.c.h.b16 %v4515
    %v7361 = vunpack.c.l.b16 %v4516
    %v7362 = vunpack.c.h.b16 %v4516
    %v7363 = vunpack.c.l.b16 %v4517
    %v7364 = vunpack.c.h.b16 %v4517
    %v7365 = vunpack.c.l.b16 %v4518
    %v7366 = vunpack.c.h.b16 %v4518
    %v7367 = vunpack.c.l.b16 %v4519
    %v7368 = vunpack.c.h.b16 %v4519
    %v7369 = vunpack.c.l.b16 %v4520
    %v7370 = vunpack.c.h.b16 %v4520
    %v7371 = vunpack.c.l.b16 %v4521
    %v7372 = vunpack.c.h.b16 %v4521
    %v7373 = vunpack.c.l.b16 %v4522
    %v7374 = vunpack.c.h.b16 %v4522
    %v7375 = vunpack.c.l.b16 %v4523
    %v7376 = vunpack.c.h.b16 %v4523
    %v7377 = vunpack.c.l.b16 %v4524
    %v7378 = vunpack.c.h.b16 %v4524
    %v7379 = vunpack.c.l.b16 %v4525
    %v7380 = vunpack.c.h.b16 %v4525
    %v7381 = vunpack.c.l.b16 %v4526
    %v7382 = vunpack.c.h.b16 %v4526
    %v7383 = vunpack.c.l.b16 %v4527
    %v7384 = vunpack.c.h.b16 %v4527
    %v7385 = vunpack.c.l.b16 %v4528
    %v7386 = vunpack.c.h.b16 %v4528
    %v7387 = vunpack.c.l.b16 %v4529
    %v7388 = vunpack.c.h.b16 %v4529
    %v7389 = vunpack.c.l.b16 %v4530
    %v7390 = vunpack.c.h.b16 %v4530
    %v7391 = vunpack.c.l.b16 %v4531
    %v7392 = vunpack.c.h.b16 %v4531
    %v7393 = vunpack.c.l.b16 %v4532
    %v7394 = vunpack.c.h.b16 %v4532
    %v7395 = vunpack.c.l.b16 %v4533
    %v7396 = vunpack.c.h.b16 %v4533
    %v7397 = vunpack.c.l.b16 %v4534
    %v7398 = vunpack.c.h.b16 %v4534
    %v7399 = vunpack.c.l.b16 %v4535
    %v7400 = vunpack.c.h.b16 %v4535
    %v7401 = vunpack.c.l.b16 %v4536
    %v7402 = vunpack.c.h.b16 %v4536
    %v7403 = vunpack.c.l.b16 %v4537
    %v7404 = vunpack.c.h.b16 %v4537
    %v7405 = vunpack.c.l.b16 %v4538
    %v7406 = vunpack.c.h.b16 %v4538
    %v7407 = vunpack.c.l.b16 %v4539
    %v7408 = vunpack.c.h.b16 %v4539
    %v7409 = vunpack.c.l.b16 %v4540
    %v7410 = vunpack.c.h.b16 %v4540
    %v7411 = vunpack.c.l.b16 %v4541
    %v7412 = vunpack.c.h.b16 %v4541
    %v7413 = vunpack.c.l.b16 %v4542
    %v7414 = vunpack.c.h.b16 %v4542
    %v7415 = vunpack.c.l.b16 %v4543
    %v7416 = vunpack.c.h.b16 %v4543
    %v7417 = vunpack.c.l.b16 %v4544
    %v7418 = vunpack.c.h.b16 %v4544
    %v7419 = vunpack.c.l.b16 %v4545
    %v7420 = vunpack.c.h.b16 %v4545
    %v7421 = vunpack.c.l.b16 %v4546
    %v7422 = vunpack.c.h.b16 %v4546
    %v7423 = vunpack.c.l.b16 %v4547
    %v7424 = vunpack.c.h.b16 %v4547
    %v7425 = vunpack.c.l.b16 %v4548
    %v7426 = vunpack.c.h.b16 %v4548
    %v7427 = vunpack.c.l.b16 %v4549
    %v7428 = vunpack.c.h.b16 %v4549
    %v7429 = vunpack.c.l.b16 %v4550
    %v7430 = vunpack.c.h.b16 %v4550
    %v7431 = vunpack.c.l.b16 %v4551
    %v7432 = vunpack.c.h.b16 %v4551
    %v7433 = vunpack.c.l.b16 %v4552
    %v7434 = vunpack.c.h.b16 %v4552
    %v7435 = vunpack.c.l.b16 %v4553
    %v7436 = vunpack.c.h.b16 %v4553
    %v7437 = vunpack.c.l.b16 %v4554
    %v7438 = vunpack.c.h.b16 %v4554
    %v7439 = vunpack.c.l.b16 %v4555
    %v7440 = vunpack.c.h.b16 %v4555
    %v7441 = vunpack.c.l.b16 %v4556
    %v7442 = vunpack.c.h.b16 %v4556
    %v7443 = vunpack.c.l.b16 %v4557
    %v7444 = vunpack.c.h.b16 %v4557
    %v7445 = vunpack.c.l.b16 %v4558
    %v7446 = vunpack.c.h.b16 %v4558
    %v7447 = vunpack.c.l.b16 %v4559
    %v7448 = vunpack.c.h.b16 %v4559
    %v7449 = vunpack.c.l.b16 %v4560
    %v7450 = vunpack.c.h.b16 %v4560
    %v7451 = vunpack.c.l.b16 %v4561
    %v7452 = vunpack.c.h.b16 %v4561
    %v7453 = vunpack.c.l.b16 %v4562
    %v7454 = vunpack.c.h.b16 %v4562
    %v7455 = vunpack.c.l.b16 %v4563
    %v7456 = vunpack.c.h.b16 %v4563
    %v7457 = vunpack.c.l.b16 %v4564
    %v7458 = vunpack.c.h.b16 %v4564
    %v7459 = vunpack.c.l.b16 %v4565
    %v7460 = vunpack.c.h.b16 %v4565
    %v7461 = vunpack.c.l.b16 %v4566
    %v7462 = vunpack.c.h.b16 %v4566
    %v7463 = vunpack.c.l.b16 %v4567
    %v7464 = vunpack.c.h.b16 %v4567
    %v7465 = vunpack.c.l.b16 %v4568
    %v7466 = vunpack.c.h.b16 %v4568
    %v7467 = vunpack.c.l.b16 %v4569
    %v7468 = vunpack.c.h.b16 %v4569
    %v7469 = vunpack.c.l.b16 %v4570
    %v7470 = vunpack.c.h.b16 %v4570
    %v7471 = vunpack.c.l.b16 %v4571
    %v7472 = vunpack.c.h.b16 %v4571
    %v7473 = vunpack.c.l.b16 %v4572
    %v7474 = vunpack.c.h.b16 %v4572
    %v7475 = vunpack.c.l.b16 %v4573
    %v7476 = vunpack.c.h.b16 %v4573
    %v7477 = vunpack.c.l.b16 %v4574
    %v7478 = vunpack.c.h.b16 %v4574
    %v7479 = vunpack.c.l.b16 %v4575
    %v7480 = vunpack.c.h.b16 %v4575
    %v7481 = vunpack.c.l.b16 %v4576
    %v7482 = vunpack.c.h.b16 %v4576
    %v7483 = vunpack.c.l.b16 %v4577
    %v7484 = vunpack.c.h.b16 %v4577
    %v7485 = vunpack.c.l.b16 %v4578
    %v7486 = vunpack.c.h.b16 %v4578
    %v7487 = vunpack.c.l.b16 %v4579
    %v7488 = vunpack.c.h.b16 %v4579
    %v7489 = vunpack.c.l.b16 %v4580
    %v7490 = vunpack.c.h.b16 %v4580
    %v7491 = vunpack.c.l.b16 %v4581
    %v7492 = vunpack.c.h.b16 %v4581
    %v7493 = vunpack.c.l.b16 %v4582
    %v7494 = vunpack.c.h.b16 %v4582
    %v7495 = vunpack.c.l.b16 %v4583
    %v7496 = vunpack.c.h.b16 %v4583
    %v7497 = vunpack.c.l.b16 %v4584
    %v7498 = vunpack.c.h.b16 %v4584
    %v7499 = vunpack.c.l.b16 %v4585
    %v7500 = vunpack.c.h.b16 %v4585
    %v7501 = vunpack.c.l.b16 %v4586
    %v7502 = vunpack.c.h.b16 %v4586
    %v7503 = vunpack.c.l.b16 %v4587
    %v7504 = vunpack.c.h.b16 %v4587
    %v7505 = vunpack.c.l.b16 %v4588
    %v7506 = vunpack.c.h.b16 %v4588
    %v7507 = vunpack.c.l.b16 %v4589
    %v7508 = vunpack.c.h.b16 %v4589
    %v7509 = vunpack.c.l.b16 %v4590
    %v7510 = vunpack.c.h.b16 %v4590
    %v7511 = vunpack.c.l.b16 %v4591
    %v7512 = vunpack.c.h.b16 %v4591
    %v7513 = vunpack.c.l.b16 %v4592
    %v7514 = vunpack.c.h.b16 %v4592
    %v7515 = vunpack.c.l.b16 %v4593
    %v7516 = vunpack.c.h.b16 %v4593
    %v7517 = vunpack.c.l.b16 %v4594
    %v7518 = vunpack.c.h.b16 %v4594
    %v7519 = vunpack.c.l.b16 %v4595
    %v7520 = vunpack.c.h.b16 %v4595
    %v7521 = vunpack.c.l.b16 %v4596
    %v7522 = vunpack.c.h.b16 %v4596
    %v7523 = vunpack.c.l.b16 %v4597
    %v7524 = vunpack.c.h.b16 %v4597
    %v7525 = vunpack.c.l.b16 %v4598
    %v7526 = vunpack.c.h.b16 %v4598
    %v7527 = vunpack.c.l.b16 %v4599
    %v7528 = vunpack.c.h.b16 %v4599
    %v7529 = vunpack.c.l.b16 %v4600
    %v7530 = vunpack.c.h.b16 %v4600
    %v7531 = vunpack.c.l.b16 %v4601
    %v7532 = vunpack.c.h.b16 %v4601
    %v7533 = vunpack.c.l.b16 %v4602
    %v7534 = vunpack.c.h.b16 %v4602
    %v7535 = vunpack.c.l.b16 %v4603
    %v7536 = vunpack.c.h.b16 %v4603
    %v7537 = vunpack.c.l.b16 %v4604
    %v7538 = vunpack.c.h.b16 %v4604
    %v7539 = vunpack.c.l.b16 %v4605
    %v7540 = vunpack.c.h.b16 %v4605
    %v7541 = vunpack.c.l.b16 %v4606
    %v7542 = vunpack.c.h.b16 %v4606
    %v7543 = vunpack.c.l.b16 %v4607
    %v7544 = vunpack.c.h.b16 %v4607
    %v7545 = vunpack.c.l.b16 %v4608
    %v7546 = vunpack.c.h.b16 %v4608
    %v7547 = vunpack.c.l.b16 %v4609
    %v7548 = vunpack.c.h.b16 %v4609
    %v7549 = vunpack.c.l.b16 %v4610
    %v7550 = vunpack.c.h.b16 %v4610
    %v7551 = vunpack.c.l.b16 %v4611
    %v7552 = vunpack.c.h.b16 %v4611
    %v7553 = vunpack.c.l.b16 %v4612
    %v7554 = vunpack.c.h.b16 %v4612
    %v7555 = vunpack.c.l.b16 %v4613
    %v7556 = vunpack.c.h.b16 %v4613
    %v7557 = vunpack.c.l.b16 %v4614
    %v7558 = vunpack.c.h.b16 %v4614
    %v7559 = vunpack.c.l.b16 %v4615
    %v7560 = vunpack.c.h.b16 %v4615
    %v7561 = vunpack.c.l.b16 %v4616
    %v7562 = vunpack.c.h.b16 %v4616
    %v7563 = vunpack.c.l.b16 %v4617
    %v7564 = vunpack.c.h.b16 %v4617
    %v7565 = vunpack.c.l.b16 %v4618
    %v7566 = vunpack.c.h.b16 %v4618
    %v7567 = vunpack.c.l.b16 %v4619
    %v7568 = vunpack.c.h.b16 %v4619
    %v7569 = vunpack.c.l.b16 %v4620
    %v7570 = vunpack.c.h.b16 %v4620
    %v7571 = vunpack.c.l.b16 %v4621
    %v7572 = vunpack.c.h.b16 %v4621
    %v7573 = vunpack.c.l.b16 %v4622
    %v7574 = vunpack.c.h.b16 %v4622
    %v7575 = vunpack.c.l.b16 %v4623
    %v7576 = vunpack.c.h.b16 %v4623
    %v7577 = vunpack.c.l.b16 %v4624
    %v7578 = vunpack.c.h.b16 %v4624
    %v7579 = vunpack.c.l.b16 %v4625
    %v7580 = vunpack.c.h.b16 %v4625
    %v7581 = vunpack.c.l.b16 %v4626
    %v7582 = vunpack.c.h.b16 %v4626
    %v7583 = vunpack.c.l.b16 %v4627
    %v7584 = vunpack.c.h.b16 %v4627
    %v7585 = vunpack.c.l.b16 %v4628
    %v7586 = vunpack.c.h.b16 %v4628
    %v7587 = vunpack.c.l.b16 %v4629
    %v7588 = vunpack.c.h.b16 %v4629
    %v7589 = vunpack.c.l.b16 %v4630
    %v7590 = vunpack.c.h.b16 %v4630
    %v7591 = vunpack.c.l.b16 %v4631
    %v7592 = vunpack.c.h.b16 %v4631
    %v7593 = vunpack.c.l.b16 %v4632
    %v7594 = vunpack.c.h.b16 %v4632
    %v7595 = vunpack.c.l.b16 %v4633
    %v7596 = vunpack.c.h.b16 %v4633
    %v7597 = vunpack.c.l.b16 %v4634
    %v7598 = vunpack.c.h.b16 %v4634
    %v7599 = vunpack.c.l.b16 %v4635
    %v7600 = vunpack.c.h.b16 %v4635
    %v7601 = vunpack.c.l.b16 %v4636
    %v7602 = vunpack.c.h.b16 %v4636
    %v7603 = vunpack.c.l.b16 %v4637
    %v7604 = vunpack.c.h.b16 %v4637
    %v7605 = vunpack.c.l.b16 %v4638
    %v7606 = vunpack.c.h.b16 %v4638
    %v7607 = vunpack.c.l.b16 %v4639
    %v7608 = vunpack.c.h.b16 %v4639
    %v7609 = vunpack.c.l.b16 %v4640
    %v7610 = vunpack.c.h.b16 %v4640
    %v7611 = vunpack.c.l.b16 %v4641
    %v7612 = vunpack.c.h.b16 %v4641
    %v7613 = vunpack.c.l.b16 %v4642
    %v7614 = vunpack.c.h.b16 %v4642
    %v7615 = vunpack.c.l.b16 %v4643
    %v7616 = vunpack.c.h.b16 %v4643
    %v7617 = vunpack.c.l.b16 %v4644
    %v7618 = vunpack.c.h.b16 %v4644
    %v7619 = vunpack.c.l.b16 %v4645
    %v7620 = vunpack.c.h.b16 %v4645
    %v7621 = vunpack.c.l.b16 %v4646
    %v7622 = vunpack.c.h.b16 %v4646
    %v7623 = vunpack.c.l.b16 %v4647
    %v7624 = vunpack.c.h.b16 %v4647
    %v7625 = vunpack.c.l.b16 %v4648
    %v7626 = vunpack.c.h.b16 %v4648
    %v7627 = vunpack.c.l.b16 %v4649
    %v7628 = vunpack.c.h.b16 %v4649
    %v7629 = vunpack.c.l.b16 %v4650
    %v7630 = vunpack.c.h.b16 %v4650
    %v7631 = vunpack.c.l.b16 %v4651
    %v7632 = vunpack.c.h.b16 %v4651
    %v7633 = vunpack.c.l.b16 %v4652
    %v7634 = vunpack.c.h.b16 %v4652
    %v7635 = vunpack.c.l.b16 %v4653
    %v7636 = vunpack.c.h.b16 %v4653
    %v7637 = vunpack.c.l.b16 %v4654
    %v7638 = vunpack.c.h.b16 %v4654
    %v7639 = vunpack.c.l.b16 %v4655
    %v7640 = vunpack.c.h.b16 %v4655
    %v7641 = vunpack.c.l.b16 %v4656
    %v7642 = vunpack.c.h.b16 %v4656
    %v7643 = vunpack.c.l.b16 %v4657
    %v7644 = vunpack.c.h.b16 %v4657
    %v7645 = vunpack.c.l.b16 %v4658
    %v7646 = vunpack.c.h.b16 %v4658
    %v7647 = vunpack.c.l.b16 %v4659
    %v7648 = vunpack.c.h.b16 %v4659
    %v7649 = vunpack.c.l.b16 %v4660
    %v7650 = vunpack.c.h.b16 %v4660
    %v7651 = vunpack.c.l.b16 %v4661
    %v7652 = vunpack.c.h.b16 %v4661
    %v7653 = vunpack.c.l.b16 %v4662
    %v7654 = vunpack.c.h.b16 %v4662
    %v7655 = vunpack.c.l.b16 %v4663
    %v7656 = vunpack.c.h.b16 %v4663
    %v7657 = vunpack.c.l.b16 %v4664
    %v7658 = vunpack.c.h.b16 %v4664
    %v7659 = vunpack.c.l.b16 %v4665
    %v7660 = vunpack.c.h.b16 %v4665
    %v7661 = vunpack.c.l.b16 %v4666
    %v7662 = vunpack.c.h.b16 %v4666
    %v7663 = vunpack.c.l.b16 %v4667
    %v7664 = vunpack.c.h.b16 %v4667
    %v7665 = vunpack.c.l.b16 %v4668
    %v7666 = vunpack.c.h.b16 %v4668
    %v7667 = vunpack.c.l.b16 %v4669
    %v7668 = vunpack.c.h.b16 %v4669
    %v7669 = vunpack.c.l.b16 %v4670
    %v7670 = vunpack.c.h.b16 %v4670
    %v7671 = vunpack.c.l.b16 %v4671
    %v7672 = vunpack.c.h.b16 %v4671
    %v7673 = vunpack.c.l.b16 %v4672
    %v7674 = vunpack.c.h.b16 %v4672
    %v7675 = vunpack.c.l.b16 %v4673
    %v7676 = vunpack.c.h.b16 %v4673
    %v7677 = vunpack.c.l.b16 %v4674
    %v7678 = vunpack.c.h.b16 %v4674
    %v7679 = vunpack.c.l.b16 %v4675
    %v7680 = vunpack.c.h.b16 %v4675
    %v7681 = vunpack.c.l.b16 %v4676
    %v7682 = vunpack.c.h.b16 %v4676
    %v7683 = vunpack.c.l.b16 %v4677
    %v7684 = vunpack.c.h.b16 %v4677
    %v7685 = vunpack.c.l.b16 %v4678
    %v7686 = vunpack.c.h.b16 %v4678
    %v7687 = vunpack.c.l.b16 %v4679
    %v7688 = vunpack.c.h.b16 %v4679
    %v7689 = vunpack.c.l.b16 %v4680
    %v7690 = vunpack.c.h.b16 %v4680
    %v7691 = vunpack.c.l.b16 %v4681
    %v7692 = vunpack.c.h.b16 %v4681
    %v7693 = vunpack.c.l.b16 %v4682
    %v7694 = vunpack.c.h.b16 %v4682
    %v7695 = vunpack.c.l.b16 %v4683
    %v7696 = vunpack.c.h.b16 %v4683
    %v7697 = vunpack.c.l.b16 %v4684
    %v7698 = vunpack.c.h.b16 %v4684
    %v7699 = vunpack.c.l.b16 %v4685
    %v7700 = vunpack.c.h.b16 %v4685
    %v7701 = vunpack.c.l.b16 %v4686
    %v7702 = vunpack.c.h.b16 %v4686
    %v7703 = vunpack.c.l.b16 %v4687
    %v7704 = vunpack.c.h.b16 %v4687
    %v7705 = vunpack.c.l.b16 %v4688
    %v7706 = vunpack.c.h.b16 %v4688
    %v7707 = vunpack.c.l.b16 %v4689
    %v7708 = vunpack.c.h.b16 %v4689
    %v7709 = vunpack.c.l.b16 %v4690
    %v7710 = vunpack.c.h.b16 %v4690
    %v7711 = vunpack.c.l.b16 %v4691
    %v7712 = vunpack.c.h.b16 %v4691
    %v7713 = vunpack.c.l.b16 %v4692
    %v7714 = vunpack.c.h.b16 %v4692
    %v7715 = vunpack.c.l.b16 %v4693
    %v7716 = vunpack.c.h.b16 %v4693
    %v7717 = vunpack.c.l.b16 %v4694
    %v7718 = vunpack.c.h.b16 %v4694
    %v7719 = vunpack.c.l.b16 %v4695
    %v7720 = vunpack.c.h.b16 %v4695
    %v7721 = vunpack.c.l.b16 %v4696
    %v7722 = vunpack.c.h.b16 %v4696
    %v7723 = vunpack.c.l.b16 %v4697
    %v7724 = vunpack.c.h.b16 %v4697
    %v7725 = vunpack.c.l.b16 %v4698
    %v7726 = vunpack.c.h.b16 %v4698
    %v7727 = vunpack.c.l.b16 %v4699
    %v7728 = vunpack.c.h.b16 %v4699
    %v7729 = vunpack.c.l.b16 %v4700
    %v7730 = vunpack.c.h.b16 %v4700
    %v7731 = vunpack.c.l.b16 %v4701
    %v7732 = vunpack.c.h.b16 %v4701
    %v7733 = vunpack.c.l.b16 %v4702
    %v7734 = vunpack.c.h.b16 %v4702
    %v7735 = vunpack.c.l.b16 %v4703
    %v7736 = vunpack.c.h.b16 %v4703
    %v7737 = vunpack.c.l.b16 %v4704
    %v7738 = vunpack.c.h.b16 %v4704
    %v7739 = vunpack.c.l.b16 %v4705
    %v7740 = vunpack.c.h.b16 %v4705
    %v7741 = vunpack.c.l.b16 %v4706
    %v7742 = vunpack.c.h.b16 %v4706
    %v7743 = vunpack.c.l.b16 %v4707
    %v7744 = vunpack.c.h.b16 %v4707
    %v7745 = vunpack.c.l.b16 %v4708
    %v7746 = vunpack.c.h.b16 %v4708
    %v7747 = vunpack.c.l.b16 %v4709
    %v7748 = vunpack.c.h.b16 %v4709
    %v7749 = vunpack.c.l.b16 %v4710
    %v7750 = vunpack.c.h.b16 %v4710
    %v7751 = vunpack.c.l.b16 %v4711
    %v7752 = vunpack.c.h.b16 %v4711
    %v7753 = vunpack.c.l.b16 %v4712
    %v7754 = vunpack.c.h.b16 %v4712
    %v7755 = vunpack.c.l.b16 %v4713
    %v7756 = vunpack.c.h.b16 %v4713
    %v7757 = vunpack.c.l.b16 %v4714
    %v7758 = vunpack.c.h.b16 %v4714
    %v7759 = vunpack.c.l.b16 %v4715
    %v7760 = vunpack.c.h.b16 %v4715
    %v7761 = vunpack.c.l.b16 %v4716
    %v7762 = vunpack.c.h.b16 %v4716
    %v7763 = vunpack.c.l.b16 %v4717
    %v7764 = vunpack.c.h.b16 %v4717
    %v7765 = vunpack.c.l.b16 %v4718
    %v7766 = vunpack.c.h.b16 %v4718
    %v7767 = vunpack.c.l.b16 %v4719
    %v7768 = vunpack.c.h.b16 %v4719
    %v7769 = vunpack.c.l.b16 %v4720
    %v7770 = vunpack.c.h.b16 %v4720
    %v7771 = vunpack.c.l.b16 %v4721
    %v7772 = vunpack.c.h.b16 %v4721
    %v7773 = vunpack.c.l.b16 %v4722
    %v7774 = vunpack.c.h.b16 %v4722
    %v7775 = vunpack.c.l.b16 %v4723
    %v7776 = vunpack.c.h.b16 %v4723
    %v7777 = vunpack.c.l.b16 %v4724
    %v7778 = vunpack.c.h.b16 %v4724
    %v7779 = vunpack.c.l.b16 %v4725
    %v7780 = vunpack.c.h.b16 %v4725
    %v7781 = vunpack.c.l.b16 %v4726
    %v7782 = vunpack.c.h.b16 %v4726
    %v7783 = vunpack.c.l.b16 %v4727
    %v7784 = vunpack.c.h.b16 %v4727
    %v7785 = vunpack.c.l.b16 %v4728
    %v7786 = vunpack.c.h.b16 %v4728
    %v7787 = vunpack.c.l.b16 %v4729
    %v7788 = vunpack.c.h.b16 %v4729
    %v7789 = vunpack.c.l.b16 %v4730
    %v7790 = vunpack.c.h.b16 %v4730
    %v7791 = vunpack.c.l.b16 %v4731
    %v7792 = vunpack.c.h.b16 %v4731
    %v7793 = vunpack.c.l.b16 %v4732
    %v7794 = vunpack.c.h.b16 %v4732
    %v7795 = vunpack.c.l.b16 %v4733
    %v7796 = vunpack.c.h.b16 %v4733
    %v7797 = vunpack.c.l.b16 %v4734
    %v7798 = vunpack.c.h.b16 %v4734
    %v7799 = vunpack.c.l.b16 %v4735
    %v7800 = vunpack.c.h.b16 %v4735
    %v7801 = vunpack.c.l.b16 %v4736
    %v7802 = vunpack.c.h.b16 %v4736
    %v7803 = vunpack.c.l.b16 %v4737
    %v7804 = vunpack.c.h.b16 %v4737
    %v7805 = vunpack.c.l.b16 %v4738
    %v7806 = vunpack.c.h.b16 %v4738
    %v7807 = vunpack.c.l.b16 %v4739
    %v7808 = vunpack.c.h.b16 %v4739
    %v7809 = vunpack.c.l.b16 %v4740
    %v7810 = vunpack.c.h.b16 %v4740
    %v7811 = vunpack.c.l.b16 %v4741
    %v7812 = vunpack.c.h.b16 %v4741
    %v7813 = vunpack.c.l.b16 %v4742
    %v7814 = vunpack.c.h.b16 %v4742
    %v7815 = vunpack.c.l.b16 %v4743
    %v7816 = vunpack.c.h.b16 %v4743
    %v7817 = vunpack.c.l.b16 %v4744
    %v7818 = vunpack.c.h.b16 %v4744
    %v7819 = vunpack.c.l.b16 %v4745
    %v7820 = vunpack.c.h.b16 %v4745
    %v7821 = vunpack.c.l.b16 %v4746
    %v7822 = vunpack.c.h.b16 %v4746
    %v7823 = vunpack.c.l.b16 %v4747
    %v7824 = vunpack.c.h.b16 %v4747
    %v7825 = vunpack.c.l.b16 %v4748
    %v7826 = vunpack.c.h.b16 %v4748
    %v7827 = vunpack.c.l.b16 %v4749
    %v7828 = vunpack.c.h.b16 %v4749
    %v7829 = vunpack.c.l.b16 %v4750
    %v7830 = vunpack.c.h.b16 %v4750
    %v7831 = vunpack.c.l.b16 %v4751
    %v7832 = vunpack.c.h.b16 %v4751
    %v7833 = vunpack.c.l.b16 %v4752
    %v7834 = vunpack.c.h.b16 %v4752
    %v7835 = vunpack.c.l.b16 %v4753
    %v7836 = vunpack.c.h.b16 %v4753
    %v7837 = vunpack.c.l.b16 %v4754
    %v7838 = vunpack.c.h.b16 %v4754
    %v7839 = vunpack.c.l.b16 %v4755
    %v7840 = vunpack.c.h.b16 %v4755
    %v7841 = vunpack.c.l.b16 %v4756
    %v7842 = vunpack.c.h.b16 %v4756
    %v7843 = vunpack.c.l.b16 %v4757
    %v7844 = vunpack.c.h.b16 %v4757
    %v7845 = vunpack.c.l.b16 %v4758
    %v7846 = vunpack.c.h.b16 %v4758
    %v7847 = vunpack.c.l.b16 %v4759
    %v7848 = vunpack.c.h.b16 %v4759
    %v7849 = vunpack.c.l.b16 %v4760
    %v7850 = vunpack.c.h.b16 %v4760
    %v7851 = vunpack.c.l.b16 %v4761
    %v7852 = vunpack.c.h.b16 %v4761
    %v7853 = vunpack.c.l.b16 %v4762
    %v7854 = vunpack.c.h.b16 %v4762
    %v7855 = vunpack.c.l.b16 %v4763
    %v7856 = vunpack.c.h.b16 %v4763
    %v7857 = vunpack.c.l.b16 %v4764
    %v7858 = vunpack.c.h.b16 %v4764
    %v7859 = vunpack.c.l.b16 %v4765
    %v7860 = vunpack.c.h.b16 %v4765
    %v7861 = vunpack.c.l.b16 %v4766
    %v7862 = vunpack.c.h.b16 %v4766
    %v7863 = vunpack.c.l.b16 %v4767
    %v7864 = vunpack.c.h.b16 %v4767
    %v7865 = vunpack.c.l.b16 %v4768
    %v7866 = vunpack.c.h.b16 %v4768
    %v7867 = vunpack.c.l.b16 %v4769
    %v7868 = vunpack.c.h.b16 %v4769
    %v7869 = vunpack.c.l.b16 %v4770
    %v7870 = vunpack.c.h.b16 %v4770
    %v7871 = vunpack.c.l.b16 %v4771
    %v7872 = vunpack.c.h.b16 %v4771
    %v7873 = vunpack.c.l.b16 %v4772
    %v7874 = vunpack.c.h.b16 %v4772
    %v7875 = vunpack.c.l.b16 %v4773
    %v7876 = vunpack.c.h.b16 %v4773
    %v7877 = vunpack.c.l.b16 %v4774
    %v7878 = vunpack.c.h.b16 %v4774
    %v7879 = vunpack.c.l.b16 %v4775
    %v7880 = vunpack.c.h.b16 %v4775
    %v7881 = vunpack.c.l.b16 %v4776
    %v7882 = vunpack.c.h.b16 %v4776
    %v7883 = vunpack.c.l.b16 %v4777
    %v7884 = vunpack.c.h.b16 %v4777
    %v7885 = vunpack.c.l.b16 %v4778
    %v7886 = vunpack.c.h.b16 %v4778
    %v7887 = vunpack.c.l.b16 %v4779
    %v7888 = vunpack.c.h.b16 %v4779
    %v7889 = vunpack.c.l.b16 %v4780
    %v7890 = vunpack.c.h.b16 %v4780
    %v7891 = vunpack.c.l.b16 %v4781
    %v7892 = vunpack.c.h.b16 %v4781
    %v7893 = vunpack.c.l.b16 %v4782
    %v7894 = vunpack.c.h.b16 %v4782
    %v7895 = vunpack.c.l.b16 %v4783
    %v7896 = vunpack.c.h.b16 %v4783
    %v7897 = vunpack.c.l.b16 %v4784
    %v7898 = vunpack.c.h.b16 %v4784
    %v7899 = vunpack.c.l.b16 %v4785
    %v7900 = vunpack.c.h.b16 %v4785
    %v7901 = vunpack.c.l.b16 %v4786
    %v7902 = vunpack.c.h.b16 %v4786
    %v7903 = vunpack.c.l.b16 %v4787
    %v7904 = vunpack.c.h.b16 %v4787
    %v7905 = vpack.c.b16 %v5865, %v5857
    %v7906 = vpack.c.b16 %v5866, %v5858
    %v7907 = vpack.c.b16 %v5867, %v5859
    %v7908 = vpack.c.b16 %v5868, %v5860
    %v7909 = vpack.c.b16 %v5869, %v5861
    %v7910 = vpack.c.b16 %v5870, %v5862
    %v7911 = vpack.c.b16 %v5871, %v5863
    %v7912 = vpack.c.b16 %v5872, %v5864
    %v7913 = vpack.c.b16 %v5881, %v5873
    %v7914 = vpack.c.b16 %v5882, %v5874
    %v7915 = vpack.c.b16 %v5883, %v5875
    %v7916 = vpack.c.b16 %v5884, %v5876
    %v7917 = vpack.c.b16 %v5885, %v5877
    %v7918 = vpack.c.b16 %v5886, %v5878
    %v7919 = vpack.c.b16 %v5887, %v5879
    %v7920 = vpack.c.b16 %v5888, %v5880
    %v7921 = vpack.c.b16 %v5897, %v5889
    %v7922 = vpack.c.b16 %v5898, %v5890
    %v7923 = vpack.c.b16 %v5899, %v5891
    %v7924 = vpack.c.b16 %v5900, %v5892
    %v7925 = vpack.c.b16 %v5901, %v5893
    %v7926 = vpack.c.b16 %v5902, %v5894
    %v7927 = vpack.c.b16 %v5903, %v5895
    %v7928 = vpack.c.b16 %v5904, %v5896
    %v7929 = vpack.c.b16 %v5913, %v5905
    %v7930 = vpack.c.b16 %v5914, %v5906
    %v7931 = vpack.c.b16 %v5915, %v5907
    %v7932 = vpack.c.b16 %v5916, %v5908
    %v7933 = vpack.c.b16 %v5917, %v5909
    %v7934 = vpack.c.b16 %v5918, %v5910
    %v7935 = vpack.c.b16 %v5919, %v5911
    %v7936 = vpack.c.b16 %v5920, %v5912
    %v7937 = vpack.c.b16 %v5929, %v5921
    %v7938 = vpack.c.b16 %v5930, %v5922
    %v7939 = vpack.c.b16 %v5931, %v5923
    %v7940 = vpack.c.b16 %v5932, %v5924
    %v7941 = vpack.c.b16 %v5933, %v5925
    %v7942 = vpack.c.b16 %v5934, %v5926
    %v7943 = vpack.c.b16 %v5935, %v5927
    %v7944 = vpack.c.b16 %v5936, %v5928
    %v7945 = vpack.c.b16 %v5945, %v5937
    %v7946 = vpack.c.b16 %v5946, %v5938
    %v7947 = vpack.c.b16 %v5947, %v5939
    %v7948 = vpack.c.b16 %v5948, %v5940
    %v7949 = vpack.c.b16 %v5949, %v5941
    %v7950 = vpack.c.b16 %v5950, %v5942
    %v7951 = vpack.c.b16 %v5951, %v5943
    %v7952 = vpack.c.b16 %v5952, %v5944
    %v7953 = vpack.c.b16 %v5961, %v5953
    %v7954 = vpack.c.b16 %v5962, %v5954
    %v7955 = vpack.c.b16 %v5963, %v5955
    %v7956 = vpack.c.b16 %v5964, %v5956
    %v7957 = vpack.c.b16 %v5965, %v5957
    %v7958 = vpack.c.b16 %v5966, %v5958
    %v7959 = vpack.c.b16 %v5967, %v5959
    %v7960 = vpack.c.b16 %v5968, %v5960
    %v7961 = vpack.c.b16 %v5977, %v5969
    %v7962 = vpack.c.b16 %v5978, %v5970
    %v7963 = vpack.c.b16 %v5979, %v5971
    %v7964 = vpack.c.b16 %v5980, %v5972
    %v7965 = vpack.c.b16 %v5981, %v5973
    %v7966 = vpack.c.b16 %v5982, %v5974
    %v7967 = vpack.c.b16 %v5983, %v5975
    %v7968 = vpack.c.b16 %v5984, %v5976
    %v7969 = vpack.c.b16 %v5993, %v5985
    %v7970 = vpack.c.b16 %v5994, %v5986
    %v7971 = vpack.c.b16 %v5995, %v5987
    %v7972 = vpack.c.b16 %v5996, %v5988
    %v7973 = vpack.c.b16 %v5997, %v5989
    %v7974 = vpack.c.b16 %v5998, %v5990
    %v7975 = vpack.c.b16 %v5999, %v5991
    %v7976 = vpack.c.b16 %v6000, %v5992
    %v7977 = vpack.c.b16 %v6009, %v6001
    %v7978 = vpack.c.b16 %v6010, %v6002
    %v7979 = vpack.c.b16 %v6011, %v6003
    %v7980 = vpack.c.b16 %v6012, %v6004
    %v7981 = vpack.c.b16 %v6013, %v6005
    %v7982 = vpack.c.b16 %v6014, %v6006
    %v7983 = vpack.c.b16 %v6015, %v6007
    %v7984 = vpack.c.b16 %v6016, %v6008
    %v7985 = vpack.c.b16 %v6025, %v6017
    %v7986 = vpack.c.b16 %v6026, %v6018
    %v7987 = vpack.c.b16 %v6027, %v6019
    %v7988 = vpack.c.b16 %v6028, %v6020
    %v7989 = vpack.c.b16 %v6029, %v6021
    %v7990 = vpack.c.b16 %v6030, %v6022
    %v7991 = vpack.c.b16 %v6031, %v6023
    %v7992 = vpack.c.b16 %v6032, %v6024
    %v7993 = vpack.c.b16 %v6041, %v6033
    %v7994 = vpack.c.b16 %v6042, %v6034
    %v7995 = vpack.c.b16 %v6043, %v6035
    %v7996 = vpack.c.b16 %v6044, %v6036
    %v7997 = vpack.c.b16 %v6045, %v6037
    %v7998 = vpack.c.b16 %v6046, %v6038
    %v7999 = vpack.c.b16 %v6047, %v6039
    %v8000 = vpack.c.b16 %v6048, %v6040
    %v8001 = vpack.c.b16 %v6057, %v6049
    %v8002 = vpack.c.b16 %v6058, %v6050
    %v8003 = vpack.c.b16 %v6059, %v6051
    %v8004 = vpack.c.b16 %v6060, %v6052
    %v8005 = vpack.c.b16 %v6061, %v6053
    %v8006 = vpack.c.b16 %v6062, %v6054
    %v8007 = vpack.c.b16 %v6063, %v6055
    %v8008 = vpack.c.b16 %v6064, %v6056
    %v8009 = vpack.c.b16 %v6073, %v6065
    %v8010 = vpack.c.b16 %v6074, %v6066
    %v8011 = vpack.c.b16 %v6075, %v6067
    %v8012 = vpack.c.b16 %v6076, %v6068
    %v8013 = vpack.c.b16 %v6077, %v6069
    %v8014 = vpack.c.b16 %v6078, %v6070
    %v8015 = vpack.c.b16 %v6079, %v6071
    %v8016 = vpack.c.b16 %v6080, %v6072
    %v8017 = vpack.c.b16 %v6089, %v6081
    %v8018 = vpack.c.b16 %v6090, %v6082
    %v8019 = vpack.c.b16 %v6091, %v6083
    %v8020 = vpack.c.b16 %v6092, %v6084
    %v8021 = vpack.c.b16 %v6093, %v6085
    %v8022 = vpack.c.b16 %v6094, %v6086
    %v8023 = vpack.c.b16 %v6095, %v6087
    %v8024 = vpack.c.b16 %v6096, %v6088
    %v8025 = vpack.c.b16 %v6105, %v6097
    %v8026 = vpack.c.b16 %v6106, %v6098
    %v8027 = vpack.c.b16 %v6107, %v6099
    %v8028 = vpack.c.b16 %v6108, %v6100
    %v8029 = vpack.c.b16 %v6109, %v6101
    %v8030 = vpack.c.b16 %v6110, %v6102
    %v8031 = vpack.c.b16 %v6111, %v6103
    %v8032 = vpack.c.b16 %v6112, %v6104
    %v8033 = vpack.c.b16 %v6121, %v6113
    %v8034 = vpack.c.b16 %v6122, %v6114
    %v8035 = vpack.c.b16 %v6123, %v6115
    %v8036 = vpack.c.b16 %v6124, %v6116
    %v8037 = vpack.c.b16 %v6125, %v6117
    %v8038 = vpack.c.b16 %v6126, %v6118
    %v8039 = vpack.c.b16 %v6127, %v6119
    %v8040 = vpack.c.b16 %v6128, %v6120
    %v8041 = vpack.c.b16 %v6137, %v6129
    %v8042 = vpack.c.b16 %v6138, %v6130
    %v8043 = vpack.c.b16 %v6139, %v6131
    %v8044 = vpack.c.b16 %v6140, %v6132
    %v8045 = vpack.c.b16 %v6141, %v6133
    %v8046 = vpack.c.b16 %v6142, %v6134
    %v8047 = vpack.c.b16 %v6143, %v6135
    %v8048 = vpack.c.b16 %v6144, %v6136
    %v8049 = vpack.c.b16 %v6153, %v6145
    %v8050 = vpack.c.b16 %v6154, %v6146
    %v8051 = vpack.c.b16 %v6155, %v6147
    %v8052 = vpack.c.b16 %v6156, %v6148
    %v8053 = vpack.c.b16 %v6157, %v6149
    %v8054 = vpack.c.b16 %v6158, %v6150
    %v8055 = vpack.c.b16 %v6159, %v6151
    %v8056 = vpack.c.b16 %v6160, %v6152
    %v8057 = vpack.c.b16 %v6169, %v6161
    %v8058 = vpack.c.b16 %v6170, %v6162
    %v8059 = vpack.c.b16 %v6171, %v6163
    %v8060 = vpack.c.b16 %v6172, %v6164
    %v8061 = vpack.c.b16 %v6173, %v6165
    %v8062 = vpack.c.b16 %v6174, %v6166
    %v8063 = vpack.c.b16 %v6175, %v6167
    %v8064 = vpack.c.b16 %v6176, %v6168
    %v8065 = vpack.c.b16 %v6185, %v6177
    %v8066 = vpack.c.b16 %v6186, %v6178
    %v8067 = vpack.c.b16 %v6187, %v6179
    %v8068 = vpack.c.b16 %v6188, %v6180
    %v8069 = vpack.c.b16 %v6189, %v6181
    %v8070 = vpack.c.b16 %v6190, %v6182
    %v8071 = vpack.c.b16 %v6191, %v6183
    %v8072 = vpack.c.b16 %v6192, %v6184
    %v8073 = vpack.c.b16 %v6201, %v6193
    %v8074 = vpack.c.b16 %v6202, %v6194
    %v8075 = vpack.c.b16 %v6203, %v6195
    %v8076 = vpack.c.b16 %v6204, %v6196
    %v8077 = vpack.c.b16 %v6205, %v6197
    %v8078 = vpack.c.b16 %v6206, %v6198
    %v8079 = vpack.c.b16 %v6207, %v6199
    %v8080 = vpack.c.b16 %v6208, %v6200
    %v8081 = vpack.c.b16 %v6217, %v6209
    %v8082 = vpack.c.b16 %v6218, %v6210
    %v8083 = vpack.c.b16 %v6219, %v6211
    %v8084 = vpack.c.b16 %v6220, %v6212
    %v8085 = vpack.c.b16 %v6221, %v6213
    %v8086 = vpack.c.b16 %v6222, %v6214
    %v8087 = vpack.c.b16 %v6223, %v6215
    %v8088 = vpack.c.b16 %v6224, %v6216
    %v8089 = vpack.c.b16 %v6233, %v6225
    %v8090 = vpack.c.b16 %v6234, %v6226
    %v8091 = vpack.c.b16 %v6235, %v6227
    %v8092 = vpack.c.b16 %v6236, %v6228
    %v8093 = vpack.c.b16 %v6237, %v6229
    %v8094 = vpack.c.b16 %v6238, %v6230
    %v8095 = vpack.c.b16 %v6239, %v6231
    %v8096 = vpack.c.b16 %v6240, %v6232
    %v8097 = vpack.c.b16 %v6249, %v6241
    %v8098 = vpack.c.b16 %v6250, %v6242
    %v8099 = vpack.c.b16 %v6251, %v6243
    %v8100 = vpack.c.b16 %v6252, %v6244
    %v8101 = vpack.c.b16 %v6253, %v6245
    %v8102 = vpack.c.b16 %v6254, %v6246
    %v8103 = vpack.c.b16 %v6255, %v6247
    %v8104 = vpack.c.b16 %v6256, %v6248
    %v8105 = vpack.c.b16 %v6265, %v6257
    %v8106 = vpack.c.b16 %v6266, %v6258
    %v8107 = vpack.c.b16 %v6267, %v6259
    %v8108 = vpack.c.b16 %v6268, %v6260
    %v8109 = vpack.c.b16 %v6269, %v6261
    %v8110 = vpack.c.b16 %v6270, %v6262
    %v8111 = vpack.c.b16 %v6271, %v6263
    %v8112 = vpack.c.b16 %v6272, %v6264
    %v8113 = vpack.c.b16 %v6281, %v6273
    %v8114 = vpack.c.b16 %v6282, %v6274
    %v8115 = vpack.c.b16 %v6283, %v6275
    %v8116 = vpack.c.b16 %v6284, %v6276
    %v8117 = vpack.c.b16 %v6285, %v6277
    %v8118 = vpack.c.b16 %v6286, %v6278
    %v8119 = vpack.c.b16 %v6287, %v6279
    %v8120 = vpack.c.b16 %v6288, %v6280
    %v8121 = vpack.c.b16 %v6297, %v6289
    %v8122 = vpack.c.b16 %v6298, %v6290
    %v8123 = vpack.c.b16 %v6299, %v6291
    %v8124 = vpack.c.b16 %v6300, %v6292
    %v8125 = vpack.c.b16 %v6301, %v6293
    %v8126 = vpack.c.b16 %v6302, %v6294
    %v8127 = vpack.c.b16 %v6303, %v6295
    %v8128 = vpack.c.b16 %v6304, %v6296
    %v8129 = vpack.c.b16 %v6313, %v6305
    %v8130 = vpack.c.b16 %v6314, %v6306
    %v8131 = vpack.c.b16 %v6315, %v6307
    %v8132 = vpack.c.b16 %v6316, %v6308
    %v8133 = vpack.c.b16 %v6317, %v6309
    %v8134 = vpack.c.b16 %v6318, %v6310
    %v8135 = vpack.c.b16 %v6319, %v6311
    %v8136 = vpack.c.b16 %v6320, %v6312
    %v8137 = vpack.c.b16 %v6329, %v6321
    %v8138 = vpack.c.b16 %v6330, %v6322
    %v8139 = vpack.c.b16 %v6331, %v6323
    %v8140 = vpack.c.b16 %v6332, %v6324
    %v8141 = vpack.c.b16 %v6333, %v6325
    %v8142 = vpack.c.b16 %v6334, %v6326
    %v8143 = vpack.c.b16 %v6335, %v6327
    %v8144 = vpack.c.b16 %v6336, %v6328
    %v8145 = vpack.c.b16 %v6345, %v6337
    %v8146 = vpack.c.b16 %v6346, %v6338
    %v8147 = vpack.c.b16 %v6347, %v6339
    %v8148 = vpack.c.b16 %v6348, %v6340
    %v8149 = vpack.c.b16 %v6349, %v6341
    %v8150 = vpack.c.b16 %v6350, %v6342
    %v8151 = vpack.c.b16 %v6351, %v6343
    %v8152 = vpack.c.b16 %v6352, %v6344
    %v8153 = vpack.c.b16 %v6361, %v6353
    %v8154 = vpack.c.b16 %v6362, %v6354
    %v8155 = vpack.c.b16 %v6363, %v6355
    %v8156 = vpack.c.b16 %v6364, %v6356
    %v8157 = vpack.c.b16 %v6365, %v6357
    %v8158 = vpack.c.b16 %v6366, %v6358
    %v8159 = vpack.c.b16 %v6367, %v6359
    %v8160 = vpack.c.b16 %v6368, %v6360
    %v8161 = vpack.c.b16 %v6377, %v6369
    %v8162 = vpack.c.b16 %v6378, %v6370
    %v8163 = vpack.c.b16 %v6379, %v6371
    %v8164 = vpack.c.b16 %v6380, %v6372
    %v8165 = vpack.c.b16 %v6381, %v6373
    %v8166 = vpack.c.b16 %v6382, %v6374
    %v8167 = vpack.c.b16 %v6383, %v6375
    %v8168 = vpack.c.b16 %v6384, %v6376
    %v8169 = vpack.c.b16 %v6393, %v6385
    %v8170 = vpack.c.b16 %v6394, %v6386
    %v8171 = vpack.c.b16 %v6395, %v6387
    %v8172 = vpack.c.b16 %v6396, %v6388
    %v8173 = vpack.c.b16 %v6397, %v6389
    %v8174 = vpack.c.b16 %v6398, %v6390
    %v8175 = vpack.c.b16 %v6399, %v6391
    %v8176 = vpack.c.b16 %v6400, %v6392
    %v8177 = vpack.c.b16 %v6409, %v6401
    %v8178 = vpack.c.b16 %v6410, %v6402
    %v8179 = vpack.c.b16 %v6411, %v6403
    %v8180 = vpack.c.b16 %v6412, %v6404
    %v8181 = vpack.c.b16 %v6413, %v6405
    %v8182 = vpack.c.b16 %v6414, %v6406
    %v8183 = vpack.c.b16 %v6415, %v6407
    %v8184 = vpack.c.b16 %v6416, %v6408
    %v8185 = vpack.c.b16 %v6425, %v6417
    %v8186 = vpack.c.b16 %v6426, %v6418
    %v8187 = vpack.c.b16 %v6427, %v6419
    %v8188 = vpack.c.b16 %v6428, %v6420
    %v8189 = vpack.c.b16 %v6429, %v6421
    %v8190 = vpack.c.b16 %v6430, %v6422
    %v8191 = vpack.c.b16 %v6431, %v6423
    %v8192 = vpack.c.b16 %v6432, %v6424
    %v8193 = vpack.c.b16 %v6441, %v6433
    %v8194 = vpack.c.b16 %v6442, %v6434
    %v8195 = vpack.c.b16 %v6443, %v6435
    %v8196 = vpack.c.b16 %v6444, %v6436
    %v8197 = vpack.c.b16 %v6445, %v6437
    %v8198 = vpack.c.b16 %v6446, %v6438
    %v8199 = vpack.c.b16 %v6447, %v6439
    %v8200 = vpack.c.b16 %v6448, %v6440
    %v8201 = vpack.c.b16 %v6457, %v6449
    %v8202 = vpack.c.b16 %v6458, %v6450
    %v8203 = vpack.c.b16 %v6459, %v6451
    %v8204 = vpack.c.b16 %v6460, %v6452
    %v8205 = vpack.c.b16 %v6461, %v6453
    %v8206 = vpack.c.b16 %v6462, %v6454
    %v8207 = vpack.c.b16 %v6463, %v6455
    %v8208 = vpack.c.b16 %v6464, %v6456
    %v8209 = vpack.c.b16 %v6473, %v6465
    %v8210 = vpack.c.b16 %v6474, %v6466
    %v8211 = vpack.c.b16 %v6475, %v6467
    %v8212 = vpack.c.b16 %v6476, %v6468
    %v8213 = vpack.c.b16 %v6477, %v6469
    %v8214 = vpack.c.b16 %v6478, %v6470
    %v8215 = vpack.c.b16 %v6479, %v6471
    %v8216 = vpack.c.b16 %v6480, %v6472
    %v8217 = vpack.c.b16 %v6489, %v6481
    %v8218 = vpack.c.b16 %v6490, %v6482
    %v8219 = vpack.c.b16 %v6491, %v6483
    %v8220 = vpack.c.b16 %v6492, %v6484
    %v8221 = vpack.c.b16 %v6493, %v6485
    %v8222 = vpack.c.b16 %v6494, %v6486
    %v8223 = vpack.c.b16 %v6495, %v6487
    %v8224 = vpack.c.b16 %v6496, %v6488
    %v8225 = vpack.c.b16 %v6505, %v6497
    %v8226 = vpack.c.b16 %v6506, %v6498
    %v8227 = vpack.c.b16 %v6507, %v6499
    %v8228 = vpack.c.b16 %v6508, %v6500
    %v8229 = vpack.c.b16 %v6509, %v6501
    %v8230 = vpack.c.b16 %v6510, %v6502
    %v8231 = vpack.c.b16 %v6511, %v6503
    %v8232 = vpack.c.b16 %v6512, %v6504
    %v8233 = vpack.c.b16 %v6521, %v6513
    %v8234 = vpack.c.b16 %v6522, %v6514
    %v8235 = vpack.c.b16 %v6523, %v6515
    %v8236 = vpack.c.b16 %v6524, %v6516
    %v8237 = vpack.c.b16 %v6525, %v6517
    %v8238 = vpack.c.b16 %v6526, %v6518
    %v8239 = vpack.c.b16 %v6527, %v6519
    %v8240 = vpack.c.b16 %v6528, %v6520
    %v8241 = vpack.c.b16 %v6537, %v6529
    %v8242 = vpack.c.b16 %v6538, %v6530
    %v8243 = vpack.c.b16 %v6539, %v6531
    %v8244 = vpack.c.b16 %v6540, %v6532
    %v8245 = vpack.c.b16 %v6541, %v6533
    %v8246 = vpack.c.b16 %v6542, %v6534
    %v8247 = vpack.c.b16 %v6543, %v6535
    %v8248 = vpack.c.b16 %v6544, %v6536
    %v8249 = vpack.c.b16 %v6553, %v6545
    %v8250 = vpack.c.b16 %v6554, %v6546
    %v8251 = vpack.c.b16 %v6555, %v6547
    %v8252 = vpack.c.b16 %v6556, %v6548
    %v8253 = vpack.c.b16 %v6557, %v6549
    %v8254 = vpack.c.b16 %v6558, %v6550
    %v8255 = vpack.c.b16 %v6559, %v6551
    %v8256 = vpack.c.b16 %v6560, %v6552
    %v8257 = vpack.c.b16 %v6569, %v6561
    %v8258 = vpack.c.b16 %v6570, %v6562
    %v8259 = vpack.c.b16 %v6571, %v6563
    %v8260 = vpack.c.b16 %v6572, %v6564
    %v8261 = vpack.c.b16 %v6573, %v6565
    %v8262 = vpack.c.b16 %v6574, %v6566
    %v8263 = vpack.c.b16 %v6575, %v6567
    %v8264 = vpack.c.b16 %v6576, %v6568
    %v8265 = vpack.c.b16 %v6585, %v6577
    %v8266 = vpack.c.b16 %v6586, %v6578
    %v8267 = vpack.c.b16 %v6587, %v6579
    %v8268 = vpack.c.b16 %v6588, %v6580
    %v8269 = vpack.c.b16 %v6589, %v6581
    %v8270 = vpack.c.b16 %v6590, %v6582
    %v8271 = vpack.c.b16 %v6591, %v6583
    %v8272 = vpack.c.b16 %v6592, %v6584
    %v8273 = vpack.c.b16 %v6601, %v6593
    %v8274 = vpack.c.b16 %v6602, %v6594
    %v8275 = vpack.c.b16 %v6603, %v6595
    %v8276 = vpack.c.b16 %v6604, %v6596
    %v8277 = vpack.c.b16 %v6605, %v6597
    %v8278 = vpack.c.b16 %v6606, %v6598
    %v8279 = vpack.c.b16 %v6607, %v6599
    %v8280 = vpack.c.b16 %v6608, %v6600
    %v8281 = vpack.c.b16 %v6617, %v6609
    %v8282 = vpack.c.b16 %v6618, %v6610
    %v8283 = vpack.c.b16 %v6619, %v6611
    %v8284 = vpack.c.b16 %v6620, %v6612
    %v8285 = vpack.c.b16 %v6621, %v6613
    %v8286 = vpack.c.b16 %v6622, %v6614
    %v8287 = vpack.c.b16 %v6623, %v6615
    %v8288 = vpack.c.b16 %v6624, %v6616
    %v8289 = vpack.c.b16 %v6633, %v6625
    %v8290 = vpack.c.b16 %v6634, %v6626
    %v8291 = vpack.c.b16 %v6635, %v6627
    %v8292 = vpack.c.b16 %v6636, %v6628
    %v8293 = vpack.c.b16 %v6637, %v6629
    %v8294 = vpack.c.b16 %v6638, %v6630
    %v8295 = vpack.c.b16 %v6639, %v6631
    %v8296 = vpack.c.b16 %v6640, %v6632
    %v8297 = vpack.c.b16 %v6649, %v6641
    %v8298 = vpack.c.b16 %v6650, %v6642
    %v8299 = vpack.c.b16 %v6651, %v6643
    %v8300 = vpack.c.b16 %v6652, %v6644
    %v8301 = vpack.c.b16 %v6653, %v6645
    %v8302 = vpack.c.b16 %v6654, %v6646
    %v8303 = vpack.c.b16 %v6655, %v6647
    %v8304 = vpack.c.b16 %v6656, %v6648
    %v8305 = vpack.c.b16 %v6665, %v6657
    %v8306 = vpack.c.b16 %v6666, %v6658
    %v8307 = vpack.c.b16 %v6667, %v6659
    %v8308 = vpack.c.b16 %v6668, %v6660
    %v8309 = vpack.c.b16 %v6669, %v6661
    %v8310 = vpack.c.b16 %v6670, %v6662
    %v8311 = vpack.c.b16 %v6671, %v6663
    %v8312 = vpack.c.b16 %v6672, %v6664
    %v8313 = vpack.c.b16 %v6681, %v6673
    %v8314 = vpack.c.b16 %v6682, %v6674
    %v8315 = vpack.c.b16 %v6683, %v6675
    %v8316 = vpack.c.b16 %v6684, %v6676
    %v8317 = vpack.c.b16 %v6685, %v6677
    %v8318 = vpack.c.b16 %v6686, %v6678
    %v8319 = vpack.c.b16 %v6687, %v6679
    %v8320 = vpack.c.b16 %v6688, %v6680
    %v8321 = vpack.c.b16 %v6697, %v6689
    %v8322 = vpack.c.b16 %v6698, %v6690
    %v8323 = vpack.c.b16 %v6699, %v6691
    %v8324 = vpack.c.b16 %v6700, %v6692
    %v8325 = vpack.c.b16 %v6701, %v6693
    %v8326 = vpack.c.b16 %v6702, %v6694
    %v8327 = vpack.c.b16 %v6703, %v6695
    %v8328 = vpack.c.b16 %v6704, %v6696
    %v8329 = vpack.c.b16 %v6713, %v6705
    %v8330 = vpack.c.b16 %v6714, %v6706
    %v8331 = vpack.c.b16 %v6715, %v6707
    %v8332 = vpack.c.b16 %v6716, %v6708
    %v8333 = vpack.c.b16 %v6717, %v6709
    %v8334 = vpack.c.b16 %v6718, %v6710
    %v8335 = vpack.c.b16 %v6719, %v6711
    %v8336 = vpack.c.b16 %v6720, %v6712
    %v8337 = vpack.c.b16 %v6729, %v6721
    %v8338 = vpack.c.b16 %v6730, %v6722
    %v8339 = vpack.c.b16 %v6731, %v6723
    %v8340 = vpack.c.b16 %v6732, %v6724
    %v8341 = vpack.c.b16 %v6733, %v6725
    %v8342 = vpack.c.b16 %v6734, %v6726
    %v8343 = vpack.c.b16 %v6735, %v6727
    %v8344 = vpack.c.b16 %v6736, %v6728
    %v8345 = vpack.c.b16 %v6745, %v6737
    %v8346 = vpack.c.b16 %v6746, %v6738
    %v8347 = vpack.c.b16 %v6747, %v6739
    %v8348 = vpack.c.b16 %v6748, %v6740
    %v8349 = vpack.c.b16 %v6749, %v6741
    %v8350 = vpack.c.b16 %v6750, %v6742
    %v8351 = vpack.c.b16 %v6751, %v6743
    %v8352 = vpack.c.b16 %v6752, %v6744
    %v8353 = vpack.c.b16 %v6761, %v6753
    %v8354 = vpack.c.b16 %v6762, %v6754
    %v8355 = vpack.c.b16 %v6763, %v6755
    %v8356 = vpack.c.b16 %v6764, %v6756
    %v8357 = vpack.c.b16 %v6765, %v6757
    %v8358 = vpack.c.b16 %v6766, %v6758
    %v8359 = vpack.c.b16 %v6767, %v6759
    %v8360 = vpack.c.b16 %v6768, %v6760
    %v8361 = vpack.c.b16 %v6777, %v6769
    %v8362 = vpack.c.b16 %v6778, %v6770
    %v8363 = vpack.c.b16 %v6779, %v6771
    %v8364 = vpack.c.b16 %v6780, %v6772
    %v8365 = vpack.c.b16 %v6781, %v6773
    %v8366 = vpack.c.b16 %v6782, %v6774
    %v8367 = vpack.c.b16 %v6783, %v6775
    %v8368 = vpack.c.b16 %v6784, %v6776
    %v8369 = vpack.c.b16 %v6793, %v6785
    %v8370 = vpack.c.b16 %v6794, %v6786
    %v8371 = vpack.c.b16 %v6795, %v6787
    %v8372 = vpack.c.b16 %v6796, %v6788
    %v8373 = vpack.c.b16 %v6797, %v6789
    %v8374 = vpack.c.b16 %v6798, %v6790
    %v8375 = vpack.c.b16 %v6799, %v6791
    %v8376 = vpack.c.b16 %v6800, %v6792
    %v8377 = vpack.c.b16 %v6809, %v6801
    %v8378 = vpack.c.b16 %v6810, %v6802
    %v8379 = vpack.c.b16 %v6811, %v6803
    %v8380 = vpack.c.b16 %v6812, %v6804
    %v8381 = vpack.c.b16 %v6813, %v6805
    %v8382 = vpack.c.b16 %v6814, %v6806
    %v8383 = vpack.c.b16 %v6815, %v6807
    %v8384 = vpack.c.b16 %v6816, %v6808
    %v8385 = vpack.c.b16 %v6825, %v6817
    %v8386 = vpack.c.b16 %v6826, %v6818
    %v8387 = vpack.c.b16 %v6827, %v6819
    %v8388 = vpack.c.b16 %v6828, %v6820
    %v8389 = vpack.c.b16 %v6829, %v6821
    %v8390 = vpack.c.b16 %v6830, %v6822
    %v8391 = vpack.c.b16 %v6831, %v6823
    %v8392 = vpack.c.b16 %v6832, %v6824
    %v8393 = vpack.c.b16 %v6841, %v6833
    %v8394 = vpack.c.b16 %v6842, %v6834
    %v8395 = vpack.c.b16 %v6843, %v6835
    %v8396 = vpack.c.b16 %v6844, %v6836
    %v8397 = vpack.c.b16 %v6845, %v6837
    %v8398 = vpack.c.b16 %v6846, %v6838
    %v8399 = vpack.c.b16 %v6847, %v6839
    %v8400 = vpack.c.b16 %v6848, %v6840
    %v8401 = vpack.c.b16 %v6857, %v6849
    %v8402 = vpack.c.b16 %v6858, %v6850
    %v8403 = vpack.c.b16 %v6859, %v6851
    %v8404 = vpack.c.b16 %v6860, %v6852
    %v8405 = vpack.c.b16 %v6861, %v6853
    %v8406 = vpack.c.b16 %v6862, %v6854
    %v8407 = vpack.c.b16 %v6863, %v6855
    %v8408 = vpack.c.b16 %v6864, %v6856
    %v8409 = vpack.c.b16 %v6873, %v6865
    %v8410 = vpack.c.b16 %v6874, %v6866
    %v8411 = vpack.c.b16 %v6875, %v6867
    %v8412 = vpack.c.b16 %v6876, %v6868
    %v8413 = vpack.c.b16 %v6877, %v6869
    %v8414 = vpack.c.b16 %v6878, %v6870
    %v8415 = vpack.c.b16 %v6879, %v6871
    %v8416 = vpack.c.b16 %v6880, %v6872
    %v8417 = vpack.c.b16 %v6889, %v6881
    %v8418 = vpack.c.b16 %v6890, %v6882
    %v8419 = vpack.c.b16 %v6891, %v6883
    %v8420 = vpack.c.b16 %v6892, %v6884
    %v8421 = vpack.c.b16 %v6893, %v6885
    %v8422 = vpack.c.b16 %v6894, %v6886
    %v8423 = vpack.c.b16 %v6895, %v6887
    %v8424 = vpack.c.b16 %v6896, %v6888
    %v8425 = vpack.c.b16 %v6905, %v6897
    %v8426 = vpack.c.b16 %v6906, %v6898
    %v8427 = vpack.c.b16 %v6907, %v6899
    %v8428 = vpack.c.b16 %v6908, %v6900
    %v8429 = vpack.c.b16 %v6909, %v6901
    %v8430 = vpack.c.b16 %v6910, %v6902
    %v8431 = vpack.c.b16 %v6911, %v6903
    %v8432 = vpack.c.b16 %v6912, %v6904
    %v8433 = vpack.c.b16 %v6921, %v6913
    %v8434 = vpack.c.b16 %v6922, %v6914
    %v8435 = vpack.c.b16 %v6923, %v6915
    %v8436 = vpack.c.b16 %v6924, %v6916
    %v8437 = vpack.c.b16 %v6925, %v6917
    %v8438 = vpack.c.b16 %v6926, %v6918
    %v8439 = vpack.c.b16 %v6927, %v6919
    %v8440 = vpack.c.b16 %v6928, %v6920
    %v8441 = vpack.c.b16 %v6937, %v6929
    %v8442 = vpack.c.b16 %v6938, %v6930
    %v8443 = vpack.c.b16 %v6939, %v6931
    %v8444 = vpack.c.b16 %v6940, %v6932
    %v8445 = vpack.c.b16 %v6941, %v6933
    %v8446 = vpack.c.b16 %v6942, %v6934
    %v8447 = vpack.c.b16 %v6943, %v6935
    %v8448 = vpack.c.b16 %v6944, %v6936
    %v8449 = vpack.c.b16 %v6953, %v6945
    %v8450 = vpack.c.b16 %v6954, %v6946
    %v8451 = vpack.c.b16 %v6955, %v6947
    %v8452 = vpack.c.b16 %v6956, %v6948
    %v8453 = vpack.c.b16 %v6957, %v6949
    %v8454 = vpack.c.b16 %v6958, %v6950
    %v8455 = vpack.c.b16 %v6959, %v6951
    %v8456 = vpack.c.b16 %v6960, %v6952
    %v8457 = vpack.c.b16 %v6969, %v6961
    %v8458 = vpack.c.b16 %v6970, %v6962
    %v8459 = vpack.c.b16 %v6971, %v6963
    %v8460 = vpack.c.b16 %v6972, %v6964
    %v8461 = vpack.c.b16 %v6973, %v6965
    %v8462 = vpack.c.b16 %v6974, %v6966
    %v8463 = vpack.c.b16 %v6975, %v6967
    %v8464 = vpack.c.b16 %v6976, %v6968
    %v8465 = vpack.c.b16 %v6985, %v6977
    %v8466 = vpack.c.b16 %v6986, %v6978
    %v8467 = vpack.c.b16 %v6987, %v6979
    %v8468 = vpack.c.b16 %v6988, %v6980
    %v8469 = vpack.c.b16 %v6989, %v6981
    %v8470 = vpack.c.b16 %v6990, %v6982
    %v8471 = vpack.c.b16 %v6991, %v6983
    %v8472 = vpack.c.b16 %v6992, %v6984
    %v8473 = vpack.c.b16 %v7001, %v6993
    %v8474 = vpack.c.b16 %v7002, %v6994
    %v8475 = vpack.c.b16 %v7003, %v6995
    %v8476 = vpack.c.b16 %v7004, %v6996
    %v8477 = vpack.c.b16 %v7005, %v6997
    %v8478 = vpack.c.b16 %v7006, %v6998
    %v8479 = vpack.c.b16 %v7007, %v6999
    %v8480 = vpack.c.b16 %v7008, %v7000
    %v8481 = vpack.c.b16 %v7017, %v7009
    %v8482 = vpack.c.b16 %v7018, %v7010
    %v8483 = vpack.c.b16 %v7019, %v7011
    %v8484 = vpack.c.b16 %v7020, %v7012
    %v8485 = vpack.c.b16 %v7021, %v7013
    %v8486 = vpack.c.b16 %v7022, %v7014
    %v8487 = vpack.c.b16 %v7023, %v7015
    %v8488 = vpack.c.b16 %v7024, %v7016
    %v8489 = vpack.c.b16 %v7033, %v7025
    %v8490 = vpack.c.b16 %v7034, %v7026
    %v8491 = vpack.c.b16 %v7035, %v7027
    %v8492 = vpack.c.b16 %v7036, %v7028
    %v8493 = vpack.c.b16 %v7037, %v7029
    %v8494 = vpack.c.b16 %v7038, %v7030
    %v8495 = vpack.c.b16 %v7039, %v7031
    %v8496 = vpack.c.b16 %v7040, %v7032
    %v8497 = vpack.c.b16 %v7049, %v7041
    %v8498 = vpack.c.b16 %v7050, %v7042
    %v8499 = vpack.c.b16 %v7051, %v7043
    %v8500 = vpack.c.b16 %v7052, %v7044
    %v8501 = vpack.c.b16 %v7053, %v7045
    %v8502 = vpack.c.b16 %v7054, %v7046
    %v8503 = vpack.c.b16 %v7055, %v7047
    %v8504 = vpack.c.b16 %v7056, %v7048
    %v8505 = vpack.c.b16 %v7065, %v7057
    %v8506 = vpack.c.b16 %v7066, %v7058
    %v8507 = vpack.c.b16 %v7067, %v7059
    %v8508 = vpack.c.b16 %v7068, %v7060
    %v8509 = vpack.c.b16 %v7069, %v7061
    %v8510 = vpack.c.b16 %v7070, %v7062
    %v8511 = vpack.c.b16 %v7071, %v7063
    %v8512 = vpack.c.b16 %v7072, %v7064
    %v8513 = vpack.c.b16 %v7081, %v7073
    %v8514 = vpack.c.b16 %v7082, %v7074
    %v8515 = vpack.c.b16 %v7083, %v7075
    %v8516 = vpack.c.b16 %v7084, %v7076
    %v8517 = vpack.c.b16 %v7085, %v7077
    %v8518 = vpack.c.b16 %v7086, %v7078
    %v8519 = vpack.c.b16 %v7087, %v7079
    %v8520 = vpack.c.b16 %v7088, %v7080
    %v8521 = vpack.c.b16 %v7097, %v7089
    %v8522 = vpack.c.b16 %v7098, %v7090
    %v8523 = vpack.c.b16 %v7099, %v7091
    %v8524 = vpack.c.b16 %v7100, %v7092
    %v8525 = vpack.c.b16 %v7101, %v7093
    %v8526 = vpack.c.b16 %v7102, %v7094
    %v8527 = vpack.c.b16 %v7103, %v7095
    %v8528 = vpack.c.b16 %v7104, %v7096
    %v8529 = vpack.c.b16 %v7113, %v7105
    %v8530 = vpack.c.b16 %v7114, %v7106
    %v8531 = vpack.c.b16 %v7115, %v7107
    %v8532 = vpack.c.b16 %v7116, %v7108
    %v8533 = vpack.c.b16 %v7117, %v7109
    %v8534 = vpack.c.b16 %v7118, %v7110
    %v8535 = vpack.c.b16 %v7119, %v7111
    %v8536 = vpack.c.b16 %v7120, %v7112
    %v8537 = vpack.c.b16 %v7129, %v7121
    %v8538 = vpack.c.b16 %v7130, %v7122
    %v8539 = vpack.c.b16 %v7131, %v7123
    %v8540 = vpack.c.b16 %v7132, %v7124
    %v8541 = vpack.c.b16 %v7133, %v7125
    %v8542 = vpack.c.b16 %v7134, %v7126
    %v8543 = vpack.c.b16 %v7135, %v7127
    %v8544 = vpack.c.b16 %v7136, %v7128
    %v8545 = vpack.c.b16 %v7145, %v7137
    %v8546 = vpack.c.b16 %v7146, %v7138
    %v8547 = vpack.c.b16 %v7147, %v7139
    %v8548 = vpack.c.b16 %v7148, %v7140
    %v8549 = vpack.c.b16 %v7149, %v7141
    %v8550 = vpack.c.b16 %v7150, %v7142
    %v8551 = vpack.c.b16 %v7151, %v7143
    %v8552 = vpack.c.b16 %v7152, %v7144
    %v8553 = vpack.c.b16 %v7161, %v7153
    %v8554 = vpack.c.b16 %v7162, %v7154
    %v8555 = vpack.c.b16 %v7163, %v7155
    %v8556 = vpack.c.b16 %v7164, %v7156
    %v8557 = vpack.c.b16 %v7165, %v7157
    %v8558 = vpack.c.b16 %v7166, %v7158
    %v8559 = vpack.c.b16 %v7167, %v7159
    %v8560 = vpack.c.b16 %v7168, %v7160
    %v8561 = vpack.c.b16 %v7177, %v7169
    %v8562 = vpack.c.b16 %v7178, %v7170
    %v8563 = vpack.c.b16 %v7179, %v7171
    %v8564 = vpack.c.b16 %v7180, %v7172
    %v8565 = vpack.c.b16 %v7181, %v7173
    %v8566 = vpack.c.b16 %v7182, %v7174
    %v8567 = vpack.c.b16 %v7183, %v7175
    %v8568 = vpack.c.b16 %v7184, %v7176
    %v8569 = vpack.c.b16 %v7193, %v7185
    %v8570 = vpack.c.b16 %v7194, %v7186
    %v8571 = vpack.c.b16 %v7195, %v7187
    %v8572 = vpack.c.b16 %v7196, %v7188
    %v8573 = vpack.c.b16 %v7197, %v7189
    %v8574 = vpack.c.b16 %v7198, %v7190
    %v8575 = vpack.c.b16 %v7199, %v7191
    %v8576 = vpack.c.b16 %v7200, %v7192
    %v8577 = vpack.c.b16 %v7209, %v7201
    %v8578 = vpack.c.b16 %v7210, %v7202
    %v8579 = vpack.c.b16 %v7211, %v7203
    %v8580 = vpack.c.b16 %v7212, %v7204
    %v8581 = vpack.c.b16 %v7213, %v7205
    %v8582 = vpack.c.b16 %v7214, %v7206
    %v8583 = vpack.c.b16 %v7215, %v7207
    %v8584 = vpack.c.b16 %v7216, %v7208
    %v8585 = vpack.c.b16 %v7225, %v7217
    %v8586 = vpack.c.b16 %v7226, %v7218
    %v8587 = vpack.c.b16 %v7227, %v7219
    %v8588 = vpack.c.b16 %v7228, %v7220
    %v8589 = vpack.c.b16 %v7229, %v7221
    %v8590 = vpack.c.b16 %v7230, %v7222
    %v8591 = vpack.c.b16 %v7231, %v7223
    %v8592 = vpack.c.b16 %v7232, %v7224
    %v8593 = vpack.c.b16 %v7241, %v7233
    %v8594 = vpack.c.b16 %v7242, %v7234
    %v8595 = vpack.c.b16 %v7243, %v7235
    %v8596 = vpack.c.b16 %v7244, %v7236
    %v8597 = vpack.c.b16 %v7245, %v7237
    %v8598 = vpack.c.b16 %v7246, %v7238
    %v8599 = vpack.c.b16 %v7247, %v7239
    %v8600 = vpack.c.b16 %v7248, %v7240
    %v8601 = vpack.c.b16 %v7257, %v7249
    %v8602 = vpack.c.b16 %v7258, %v7250
    %v8603 = vpack.c.b16 %v7259, %v7251
    %v8604 = vpack.c.b16 %v7260, %v7252
    %v8605 = vpack.c.b16 %v7261, %v7253
    %v8606 = vpack.c.b16 %v7262, %v7254
    %v8607 = vpack.c.b16 %v7263, %v7255
    %v8608 = vpack.c.b16 %v7264, %v7256
    %v8609 = vpack.c.b16 %v7273, %v7265
    %v8610 = vpack.c.b16 %v7274, %v7266
    %v8611 = vpack.c.b16 %v7275, %v7267
    %v8612 = vpack.c.b16 %v7276, %v7268
    %v8613 = vpack.c.b16 %v7277, %v7269
    %v8614 = vpack.c.b16 %v7278, %v7270
    %v8615 = vpack.c.b16 %v7279, %v7271
    %v8616 = vpack.c.b16 %v7280, %v7272
    %v8617 = vpack.c.b16 %v7289, %v7281
    %v8618 = vpack.c.b16 %v7290, %v7282
    %v8619 = vpack.c.b16 %v7291, %v7283
    %v8620 = vpack.c.b16 %v7292, %v7284
    %v8621 = vpack.c.b16 %v7293, %v7285
    %v8622 = vpack.c.b16 %v7294, %v7286
    %v8623 = vpack.c.b16 %v7295, %v7287
    %v8624 = vpack.c.b16 %v7296, %v7288
    %v8625 = vpack.c.b16 %v7305, %v7297
    %v8626 = vpack.c.b16 %v7306, %v7298
    %v8627 = vpack.c.b16 %v7307, %v7299
    %v8628 = vpack.c.b16 %v7308, %v7300
    %v8629 = vpack.c.b16 %v7309, %v7301
    %v8630 = vpack.c.b16 %v7310, %v7302
    %v8631 = vpack.c.b16 %v7311, %v7303
    %v8632 = vpack.c.b16 %v7312, %v7304
    %v8633 = vpack.c.b16 %v7321, %v7313
    %v8634 = vpack.c.b16 %v7322, %v7314
    %v8635 = vpack.c.b16 %v7323, %v7315
    %v8636 = vpack.c.b16 %v7324, %v7316
    %v8637 = vpack.c.b16 %v7325, %v7317
    %v8638 = vpack.c.b16 %v7326, %v7318
    %v8639 = vpack.c.b16 %v7327, %v7319
    %v8640 = vpack.c.b16 %v7328, %v7320
    %v8641 = vpack.c.b16 %v7337, %v7329
    %v8642 = vpack.c.b16 %v7338, %v7330
    %v8643 = vpack.c.b16 %v7339, %v7331
    %v8644 = vpack.c.b16 %v7340, %v7332
    %v8645 = vpack.c.b16 %v7341, %v7333
    %v8646 = vpack.c.b16 %v7342, %v7334
    %v8647 = vpack.c.b16 %v7343, %v7335
    %v8648 = vpack.c.b16 %v7344, %v7336
    %v8649 = vpack.c.b16 %v7353, %v7345
    %v8650 = vpack.c.b16 %v7354, %v7346
    %v8651 = vpack.c.b16 %v7355, %v7347
    %v8652 = vpack.c.b16 %v7356, %v7348
    %v8653 = vpack.c.b16 %v7357, %v7349
    %v8654 = vpack.c.b16 %v7358, %v7350
    %v8655 = vpack.c.b16 %v7359, %v7351
    %v8656 = vpack.c.b16 %v7360, %v7352
    %v8657 = vpack.c.b16 %v7369, %v7361
    %v8658 = vpack.c.b16 %v7370, %v7362
    %v8659 = vpack.c.b16 %v7371, %v7363
    %v8660 = vpack.c.b16 %v7372, %v7364
    %v8661 = vpack.c.b16 %v7373, %v7365
    %v8662 = vpack.c.b16 %v7374, %v7366
    %v8663 = vpack.c.b16 %v7375, %v7367
    %v8664 = vpack.c.b16 %v7376, %v7368
    %v8665 = vpack.c.b16 %v7385, %v7377
    %v8666 = vpack.c.b16 %v7386, %v7378
    %v8667 = vpack.c.b16 %v7387, %v7379
    %v8668 = vpack.c.b16 %v7388, %v7380
    %v8669 = vpack.c.b16 %v7389, %v7381
    %v8670 = vpack.c.b16 %v7390, %v7382
    %v8671 = vpack.c.b16 %v7391, %v7383
    %v8672 = vpack.c.b16 %v7392, %v7384
    %v8673 = vpack.c.b16 %v7401, %v7393
    %v8674 = vpack.c.b16 %v7402, %v7394
    %v8675 = vpack.c.b16 %v7403, %v7395
    %v8676 = vpack.c.b16 %v7404, %v7396
    %v8677 = vpack.c.b16 %v7405, %v7397
    %v8678 = vpack.c.b16 %v7406, %v7398
    %v8679 = vpack.c.b16 %v7407, %v7399
    %v8680 = vpack.c.b16 %v7408, %v7400
    %v8681 = vpack.c.b16 %v7417, %v7409
    %v8682 = vpack.c.b16 %v7418, %v7410
    %v8683 = vpack.c.b16 %v7419, %v7411
    %v8684 = vpack.c.b16 %v7420, %v7412
    %v8685 = vpack.c.b16 %v7421, %v7413
    %v8686 = vpack.c.b16 %v7422, %v7414
    %v8687 = vpack.c.b16 %v7423, %v7415
    %v8688 = vpack.c.b16 %v7424, %v7416
    %v8689 = vpack.c.b16 %v7433, %v7425
    %v8690 = vpack.c.b16 %v7434, %v7426
    %v8691 = vpack.c.b16 %v7435, %v7427
    %v8692 = vpack.c.b16 %v7436, %v7428
    %v8693 = vpack.c.b16 %v7437, %v7429
    %v8694 = vpack.c.b16 %v7438, %v7430
    %v8695 = vpack.c.b16 %v7439, %v7431
    %v8696 = vpack.c.b16 %v7440, %v7432
    %v8697 = vpack.c.b16 %v7449, %v7441
    %v8698 = vpack.c.b16 %v7450, %v7442
    %v8699 = vpack.c.b16 %v7451, %v7443
    %v8700 = vpack.c.b16 %v7452, %v7444
    %v8701 = vpack.c.b16 %v7453, %v7445
    %v8702 = vpack.c.b16 %v7454, %v7446
    %v8703 = vpack.c.b16 %v7455, %v7447
    %v8704 = vpack.c.b16 %v7456, %v7448
    %v8705 = vpack.c.b16 %v7465, %v7457
    %v8706 = vpack.c.b16 %v7466, %v7458
    %v8707 = vpack.c.b16 %v7467, %v7459
    %v8708 = vpack.c.b16 %v7468, %v7460
    %v8709 = vpack.c.b16 %v7469, %v7461
    %v8710 = vpack.c.b16 %v7470, %v7462
    %v8711 = vpack.c.b16 %v7471, %v7463
    %v8712 = vpack.c.b16 %v7472, %v7464
    %v8713 = vpack.c.b16 %v7481, %v7473
    %v8714 = vpack.c.b16 %v7482, %v7474
    %v8715 = vpack.c.b16 %v7483, %v7475
    %v8716 = vpack.c.b16 %v7484, %v7476
    %v8717 = vpack.c.b16 %v7485, %v7477
    %v8718 = vpack.c.b16 %v7486, %v7478
    %v8719 = vpack.c.b16 %v7487, %v7479
    %v8720 = vpack.c.b16 %v7488, %v7480
    %v8721 = vpack.c.b16 %v7497, %v7489
    %v8722 = vpack.c.b16 %v7498, %v7490
    %v8723 = vpack.c.b16 %v7499, %v7491
    %v8724 = vpack.c.b16 %v7500, %v7492
    %v8725 = vpack.c.b16 %v7501, %v7493
    %v8726 = vpack.c.b16 %v7502, %v7494
    %v8727 = vpack.c.b16 %v7503, %v7495
    %v8728 = vpack.c.b16 %v7504, %v7496
    %v8729 = vpack.c.b16 %v7513, %v7505
    %v8730 = vpack.c.b16 %v7514, %v7506
    %v8731 = vpack.c.b16 %v7515, %v7507
    %v8732 = vpack.c.b16 %v7516, %v7508
    %v8733 = vpack.c.b16 %v7517, %v7509
    %v8734 = vpack.c.b16 %v7518, %v7510
    %v8735 = vpack.c.b16 %v7519, %v7511
    %v8736 = vpack.c.b16 %v7520, %v7512
    %v8737 = vpack.c.b16 %v7529, %v7521
    %v8738 = vpack.c.b16 %v7530, %v7522
    %v8739 = vpack.c.b16 %v7531, %v7523
    %v8740 = vpack.c.b16 %v7532, %v7524
    %v8741 = vpack.c.b16 %v7533, %v7525
    %v8742 = vpack.c.b16 %v7534, %v7526
    %v8743 = vpack.c.b16 %v7535, %v7527
    %v8744 = vpack.c.b16 %v7536, %v7528
    %v8745 = vpack.c.b16 %v7545, %v7537
    %v8746 = vpack.c.b16 %v7546, %v7538
    %v8747 = vpack.c.b16 %v7547, %v7539
    %v8748 = vpack.c.b16 %v7548, %v7540
    %v8749 = vpack.c.b16 %v7549, %v7541
    %v8750 = vpack.c.b16 %v7550, %v7542
    %v8751 = vpack.c.b16 %v7551, %v7543
    %v8752 = vpack.c.b16 %v7552, %v7544
    %v8753 = vpack.c.b16 %v7561, %v7553
    %v8754 = vpack.c.b16 %v7562, %v7554
    %v8755 = vpack.c.b16 %v7563, %v7555
    %v8756 = vpack.c.b16 %v7564, %v7556
    %v8757 = vpack.c.b16 %v7565, %v7557
    %v8758 = vpack.c.b16 %v7566, %v7558
    %v8759 = vpack.c.b16 %v7567, %v7559
    %v8760 = vpack.c.b16 %v7568, %v7560
    %v8761 = vpack.c.b16 %v7577, %v7569
    %v8762 = vpack.c.b16 %v7578, %v7570
    %v8763 = vpack.c.b16 %v7579, %v7571
    %v8764 = vpack.c.b16 %v7580, %v7572
    %v8765 = vpack.c.b16 %v7581, %v7573
    %v8766 = vpack.c.b16 %v7582, %v7574
    %v8767 = vpack.c.b16 %v7583, %v7575
    %v8768 = vpack.c.b16 %v7584, %v7576
    %v8769 = vpack.c.b16 %v7593, %v7585
    %v8770 = vpack.c.b16 %v7594, %v7586
    %v8771 = vpack.c.b16 %v7595, %v7587
    %v8772 = vpack.c.b16 %v7596, %v7588
    %v8773 = vpack.c.b16 %v7597, %v7589
    %v8774 = vpack.c.b16 %v7598, %v7590
    %v8775 = vpack.c.b16 %v7599, %v7591
    %v8776 = vpack.c.b16 %v7600, %v7592
    %v8777 = vpack.c.b16 %v7609, %v7601
    %v8778 = vpack.c.b16 %v7610, %v7602
    %v8779 = vpack.c.b16 %v7611, %v7603
    %v8780 = vpack.c.b16 %v7612, %v7604
    %v8781 = vpack.c.b16 %v7613, %v7605
    %v8782 = vpack.c.b16 %v7614, %v7606
    %v8783 = vpack.c.b16 %v7615, %v7607
    %v8784 = vpack.c.b16 %v7616, %v7608
    %v8785 = vpack.c.b16 %v7625, %v7617
    %v8786 = vpack.c.b16 %v7626, %v7618
    %v8787 = vpack.c.b16 %v7627, %v7619
    %v8788 = vpack.c.b16 %v7628, %v7620
    %v8789 = vpack.c.b16 %v7629, %v7621
    %v8790 = vpack.c.b16 %v7630, %v7622
    %v8791 = vpack.c.b16 %v7631, %v7623
    %v8792 = vpack.c.b16 %v7632, %v7624
    %v8793 = vpack.c.b16 %v7641, %v7633
    %v8794 = vpack.c.b16 %v7642, %v7634
    %v8795 = vpack.c.b16 %v7643, %v7635
    %v8796 = vpack.c.b16 %v7644, %v7636
    %v8797 = vpack.c.b16 %v7645, %v7637
    %v8798 = vpack.c.b16 %v7646, %v7638
    %v8799 = vpack.c.b16 %v7647, %v7639
    %v8800 = vpack.c.b16 %v7648, %v7640
    %v8801 = vpack.c.b16 %v7657, %v7649
    %v8802 = vpack.c.b16 %v7658, %v7650
    %v8803 = vpack.c.b16 %v7659, %v7651
    %v8804 = vpack.c.b16 %v7660, %v7652
    %v8805 = vpack.c.b16 %v7661, %v7653
    %v8806 = vpack.c.b16 %v7662, %v7654
    %v8807 = vpack.c.b16 %v7663, %v7655
    %v8808 = vpack.c.b16 %v7664, %v7656
    %v8809 = vpack.c.b16 %v7673, %v7665
    %v8810 = vpack.c.b16 %v7674, %v7666
    %v8811 = vpack.c.b16 %v7675, %v7667
    %v8812 = vpack.c.b16 %v7676, %v7668
    %v8813 = vpack.c.b16 %v7677, %v7669
    %v8814 = vpack.c.b16 %v7678, %v7670
    %v8815 = vpack.c.b16 %v7679, %v7671
    %v8816 = vpack.c.b16 %v7680, %v7672
    %v8817 = vpack.c.b16 %v7689, %v7681
    %v8818 = vpack.c.b16 %v7690, %v7682
    %v8819 = vpack.c.b16 %v7691, %v7683
    %v8820 = vpack.c.b16 %v7692, %v7684
    %v8821 = vpack.c.b16 %v7693, %v7685
    %v8822 = vpack.c.b16 %v7694, %v7686
    %v8823 = vpack.c.b16 %v7695, %v7687
    %v8824 = vpack.c.b16 %v7696, %v7688
    %v8825 = vpack.c.b16 %v7705, %v7697
    %v8826 = vpack.c.b16 %v7706, %v7698
    %v8827 = vpack.c.b16 %v7707, %v7699
    %v8828 = vpack.c.b16 %v7708, %v7700
    %v8829 = vpack.c.b16 %v7709, %v7701
    %v8830 = vpack.c.b16 %v7710, %v7702
    %v8831 = vpack.c.b16 %v7711, %v7703
    %v8832 = vpack.c.b16 %v7712, %v7704
    %v8833 = vpack.c.b16 %v7721, %v7713
    %v8834 = vpack.c.b16 %v7722, %v7714
    %v8835 = vpack.c.b16 %v7723, %v7715
    %v8836 = vpack.c.b16 %v7724, %v7716
    %v8837 = vpack.c.b16 %v7725, %v7717
    %v8838 = vpack.c.b16 %v7726, %v7718
    %v8839 = vpack.c.b16 %v7727, %v7719
    %v8840 = vpack.c.b16 %v7728, %v7720
    %v8841 = vpack.c.b16 %v7737, %v7729
    %v8842 = vpack.c.b16 %v7738, %v7730
    %v8843 = vpack.c.b16 %v7739, %v7731
    %v8844 = vpack.c.b16 %v7740, %v7732
    %v8845 = vpack.c.b16 %v7741, %v7733
    %v8846 = vpack.c.b16 %v7742, %v7734
    %v8847 = vpack.c.b16 %v7743, %v7735
    %v8848 = vpack.c.b16 %v7744, %v7736
    %v8849 = vpack.c.b16 %v7753, %v7745
    %v8850 = vpack.c.b16 %v7754, %v7746
    %v8851 = vpack.c.b16 %v7755, %v7747
    %v8852 = vpack.c.b16 %v7756, %v7748
    %v8853 = vpack.c.b16 %v7757, %v7749
    %v8854 = vpack.c.b16 %v7758, %v7750
    %v8855 = vpack.c.b16 %v7759, %v7751
    %v8856 = vpack.c.b16 %v7760, %v7752
    %v8857 = vpack.c.b16 %v7769, %v7761
    %v8858 = vpack.c.b16 %v7770, %v7762
    %v8859 = vpack.c.b16 %v7771, %v7763
    %v8860 = vpack.c.b16 %v7772, %v7764
    %v8861 = vpack.c.b16 %v7773, %v7765
    %v8862 = vpack.c.b16 %v7774, %v7766
    %v8863 = vpack.c.b16 %v7775, %v7767
    %v8864 = vpack.c.b16 %v7776, %v7768
    %v8865 = vpack.c.b16 %v7785, %v7777
    %v8866 = vpack.c.b16 %v7786, %v7778
    %v8867 = vpack.c.b16 %v7787, %v7779
    %v8868 = vpack.c.b16 %v7788, %v7780
    %v8869 = vpack.c.b16 %v7789, %v7781
    %v8870 = vpack.c.b16 %v7790, %v7782
    %v8871 = vpack.c.b16 %v7791, %v7783
    %v8872 = vpack.c.b16 %v7792, %v7784
    %v8873 = vpack.c.b16 %v7801, %v7793
    %v8874 = vpack.c.b16 %v7802, %v7794
    %v8875 = vpack.c.b16 %v7803, %v7795
    %v8876 = vpack.c.b16 %v7804, %v7796
    %v8877 = vpack.c.b16 %v7805, %v7797
    %v8878 = vpack.c.b16 %v7806, %v7798
    %v8879 = vpack.c.b16 %v7807, %v7799
    %v8880 = vpack.c.b16 %v7808, %v7800
    %v8881 = vpack.c.b16 %v7817, %v7809
    %v8882 = vpack.c.b16 %v7818, %v7810
    %v8883 = vpack.c.b16 %v7819, %v7811
    %v8884 = vpack.c.b16 %v7820, %v7812
    %v8885 = vpack.c.b16 %v7821, %v7813
    %v8886 = vpack.c.b16 %v7822, %v7814
    %v8887 = vpack.c.b16 %v7823, %v7815
    %v8888 = vpack.c.b16 %v7824, %v7816
    %v8889 = vpack.c.b16 %v7833, %v7825
    %v8890 = vpack.c.b16 %v7834, %v7826
    %v8891 = vpack.c.b16 %v7835, %v7827
    %v8892 = vpack.c.b16 %v7836, %v7828
    %v8893 = vpack.c.b16 %v7837, %v7829
    %v8894 = vpack.c.b16 %v7838, %v7830
    %v8895 = vpack.c.b16 %v7839, %v7831
    %v8896 = vpack.c.b16 %v7840, %v7832
    %v8897 = vpack.c.b16 %v7849, %v7841
    %v8898 = vpack.c.b16 %v7850, %v7842
    %v8899 = vpack.c.b16 %v7851, %v7843
    %v8900 = vpack.c.b16 %v7852, %v7844
    %v8901 = vpack.c.b16 %v7853, %v7845
    %v8902 = vpack.c.b16 %v7854, %v7846
    %v8903 = vpack.c.b16 %v7855, %v7847
    %v8904 = vpack.c.b16 %v7856, %v7848
    %v8905 = vpack.c.b16 %v7865, %v7857
    %v8906 = vpack.c.b16 %v7866, %v7858
    %v8907 = vpack.c.b16 %v7867, %v7859
    %v8908 = vpack.c.b16 %v7868, %v7860
    %v8909 = vpack.c.b16 %v7869, %v7861
    %v8910 = vpack.c.b16 %v7870, %v7862
    %v8911 = vpack.c.b16 %v7871, %v7863
    %v8912 = vpack.c.b16 %v7872, %v7864
    %v8913 = vpack.c.b16 %v7881, %v7873
    %v8914 = vpack.c.b16 %v7882, %v7874
    %v8915 = vpack.c.b16 %v7883, %v7875
    %v8916 = vpack.c.b16 %v7884, %v7876
    %v8917 = vpack.c.b16 %v7885, %v7877
    %v8918 = vpack.c.b16 %v7886, %v7878
    %v8919 = vpack.c.b16 %v7887, %v7879
    %v8920 = vpack.c.b16 %v7888, %v7880
    %v8921 = vpack.c.b16 %v7897, %v7889
    %v8922 = vpack.c.b16 %v7898, %v7890
    %v8923 = vpack.c.b16 %v7899, %v7891
    %v8924 = vpack.c.b16 %v7900, %v7892
    %v8925 = vpack.c.b16 %v7901, %v7893
    %v8926 = vpack.c.b16 %v7902, %v7894
    %v8927 = vpack.c.b16 %v7903, %v7895
    %v8928 = vpack.c.b16 %v7904, %v7896
    %9953 = vmatprep.subr.bf16.mxu0 %v7906
    %9954 = vmatpush1.bf16.msra.mxu0 %v7905
    %9955 = vmatprep.subr.bf16.mxu0 %v7914
    %9956 = vmatpush1.bf16.msra.mxu0 %v7913
    %9957 = vmatprep.subr.bf16.mxu0 %v7922
    %9958 = vmatpush1.bf16.msra.mxu0 %v7921
    %9959 = vmatprep.subr.bf16.mxu0 %v7930
    %9960 = vmatpush1.bf16.msra.mxu0 %v7929
    %9961 = vmatprep.subr.bf16.mxu0 %v7938
    %9962 = vmatpush1.bf16.msra.mxu0 %v7937
    %9963 = vmatprep.subr.bf16.mxu0 %v7946
    %9964 = vmatpush1.bf16.msra.mxu0 %v7945
    %9965 = vmatprep.subr.bf16.mxu0 %v7954
    %9966 = vmatpush1.bf16.msra.mxu0 %v7953
    %9967 = vmatprep.subr.bf16.mxu0 %v7962
    %9968 = vmatpush1.bf16.msra.mxu0 %v7961
    %9969 = vmatprep.subr.bf16.mxu0 %v7970
    %9970 = vmatpush1.bf16.msra.mxu0 %v7969
    %9971 = vmatprep.subr.bf16.mxu0 %v7978
    %9972 = vmatpush1.bf16.msra.mxu0 %v7977
    %9973 = vmatprep.subr.bf16.mxu0 %v7986
    %9974 = vmatpush1.bf16.msra.mxu0 %v7985
    %9975 = vmatprep.subr.bf16.mxu0 %v7994
    %9976 = vmatpush1.bf16.msra.mxu0 %v7993
    %9977 = vmatprep.subr.bf16.mxu0 %v8002
    %9978 = vmatpush1.bf16.msra.mxu0 %v8001
    %9979 = vmatprep.subr.bf16.mxu0 %v8010
    %9980 = vmatpush1.bf16.msra.mxu0 %v8009
    %9981 = vmatprep.subr.bf16.mxu0 %v8018
    %9982 = vmatpush1.bf16.msra.mxu0 %v8017
    %9983 = vmatprep.subr.bf16.mxu0 %v8026
    %9984 = vmatpush1.bf16.msra.mxu0 %v8025
    %9985 = vmatprep.mubr.bf16.mxu0 %v3693
    %9986 = vmatmul.mubr.bf16.gmra.mrb[0].mxu0 %v3692
    %v9987 = vpop.f32.mrb[0].mxu0
    %v9988 = vadd.f32 %v4796, %v9987
    %v9989 = vpop.f32.mrb[0].mxu0
    %v9990 = vadd.f32 %v4800, %v9989
    %v9991 = vpop.f32.mrb[0].mxu0
    %v9992 = vpop.f32.mrb[0].mxu0
    %9993 = vdwg.mxu0
    %9994 = vmatprep.subr.bf16.mxu0 %v8034
    %9995 = vmatpush1.bf16.msra.mxu0 %v8033
    %9996 = vmatprep.subr.bf16.mxu0 %v8042
    %9997 = vmatpush1.bf16.msra.mxu0 %v8041
    %9998 = vmatprep.subr.bf16.mxu0 %v8050
    %9999 = vmatpush1.bf16.msra.mxu0 %v8049
    %10000 = vmatprep.subr.bf16.mxu0 %v8058
    %10001 = vmatpush1.bf16.msra.mxu0 %v8057
    %10002 = vmatprep.subr.bf16.mxu0 %v8066
    %10003 = vmatpush1.bf16.msra.mxu0 %v8065
    %10004 = vmatprep.subr.bf16.mxu0 %v8074
    %10005 = vmatpush1.bf16.msra.mxu0 %v8073
    %10006 = vmatprep.subr.bf16.mxu0 %v8082
    %10007 = vmatpush1.bf16.msra.mxu0 %v8081
    %10008 = vmatprep.subr.bf16.mxu0 %v8090
    %10009 = vmatpush1.bf16.msra.mxu0 %v8089
    %10010 = vmatprep.subr.bf16.mxu0 %v8098
    %10011 = vmatpush1.bf16.msra.mxu0 %v8097
    %10012 = vmatprep.subr.bf16.mxu0 %v8106
    %10013 = vmatpush1.bf16.msra.mxu0 %v8105
    %10014 = vmatprep.subr.bf16.mxu0 %v8114
    %10015 = vmatpush1.bf16.msra.mxu0 %v8113
    %10016 = vmatprep.subr.bf16.mxu0 %v8122
    %10017 = vmatpush1.bf16.msra.mxu0 %v8121
    %10018 = vmatprep.subr.bf16.mxu0 %v8130
    %10019 = vmatpush1.bf16.msra.mxu0 %v8129
    %10020 = vmatprep.subr.bf16.mxu0 %v8138
    %10021 = vmatpush1.bf16.msra.mxu0 %v8137
    %10022 = vmatprep.subr.bf16.mxu0 %v8146
    %10023 = vmatpush1.bf16.msra.mxu0 %v8145
    %10024 = vmatprep.subr.bf16.mxu0 %v8154
    %10025 = vmatpush1.bf16.msra.mxu0 %v8153
    %10026 = vmatprep.mubr.bf16.mxu0 %v3695
    %10027 = vmatmul.mubr.bf16.gmra.mrb[0].mxu0 %v3694
    %v10028 = vpop.f32.mrb[0].mxu0
    %v10029 = vadd.f32 %v9988, %v10028
    %v10030 = vpop.f32.mrb[0].mxu0
    %v10031 = vadd.f32 %v9990, %v10030
    %v10032 = vpop.f32.mrb[0].mxu0
    %v10033 = vpop.f32.mrb[0].mxu0
    %10034 = vdwg.mxu0
    %10035 = vmatprep.subr.bf16.mxu0 %v8162
    %10036 = vmatpush1.bf16.msra.mxu0 %v8161
    %10037 = vmatprep.subr.bf16.mxu0 %v8170
    %10038 = vmatpush1.bf16.msra.mxu0 %v8169
    %10039 = vmatprep.subr.bf16.mxu0 %v8178
    %10040 = vmatpush1.bf16.msra.mxu0 %v8177
    %10041 = vmatprep.subr.bf16.mxu0 %v8186
    %10042 = vmatpush1.bf16.msra.mxu0 %v8185
    %10043 = vmatprep.subr.bf16.mxu0 %v8194
    %10044 = vmatpush1.bf16.msra.mxu0 %v8193
    %10045 = vmatprep.subr.bf16.mxu0 %v8202
    %10046 = vmatpush1.bf16.msra.mxu0 %v8201
    %10047 = vmatprep.subr.bf16.mxu0 %v8210
    %10048 = vmatpush1.bf16.msra.mxu0 %v8209
    %10049 = vmatprep.subr.bf16.mxu0 %v8218
    %10050 = vmatpush1.bf16.msra.mxu0 %v8217
    %10051 = vmatprep.subr.bf16.mxu0 %v8226
    %10052 = vmatpush1.bf16.msra.mxu0 %v8225
    %10053 = vmatprep.subr.bf16.mxu0 %v8234
    %10054 = vmatpush1.bf16.msra.mxu0 %v8233
    %10055 = vmatprep.subr.bf16.mxu0 %v8242
    %10056 = vmatpush1.bf16.msra.mxu0 %v8241
    %10057 = vmatprep.subr.bf16.mxu0 %v8250
    %10058 = vmatpush1.bf16.msra.mxu0 %v8249
    %10059 = vmatprep.subr.bf16.mxu0 %v8258
    %10060 = vmatpush1.bf16.msra.mxu0 %v8257
    %10061 = vmatprep.subr.bf16.mxu0 %v8266
    %10062 = vmatpush1.bf16.msra.mxu0 %v8265
    %10063 = vmatprep.subr.bf16.mxu0 %v8274
    %10064 = vmatpush1.bf16.msra.mxu0 %v8273
    %10065 = vmatprep.subr.bf16.mxu0 %v8282
    %10066 = vmatpush1.bf16.msra.mxu0 %v8281
    %10067 = vmatprep.mubr.bf16.mxu0 %v3697
    %10068 = vmatmul.mubr.bf16.gmra.mrb[0].mxu0 %v3696
    %v10069 = vpop.f32.mrb[0].mxu0
    %v10070 = vadd.f32 %v10029, %v10069
    %v10071 = vpop.f32.mrb[0].mxu0
    %v10072 = vadd.f32 %v10031, %v10071
    %v10073 = vpop.f32.mrb[0].mxu0
    %v10074 = vpop.f32.mrb[0].mxu0
    %10075 = vdwg.mxu0
    %10076 = vmatprep.subr.bf16.mxu0 %v8290
    %10077 = vmatpush1.bf16.msra.mxu0 %v8289
    %10078 = vmatprep.subr.bf16.mxu0 %v8298
    %10079 = vmatpush1.bf16.msra.mxu0 %v8297
    %10080 = vmatprep.subr.bf16.mxu0 %v8306
    %10081 = vmatpush1.bf16.msra.mxu0 %v8305
    %10082 = vmatprep.subr.bf16.mxu0 %v8314
    %10083 = vmatpush1.bf16.msra.mxu0 %v8313
    %10084 = vmatprep.subr.bf16.mxu0 %v8322
    %10085 = vmatpush1.bf16.msra.mxu0 %v8321
    %10086 = vmatprep.subr.bf16.mxu0 %v8330
    %10087 = vmatpush1.bf16.msra.mxu0 %v8329
    %10088 = vmatprep.subr.bf16.mxu0 %v8338
    %10089 = vmatpush1.bf16.msra.mxu0 %v8337
    %10090 = vmatprep.subr.bf16.mxu0 %v8346
    %10091 = vmatpush1.bf16.msra.mxu0 %v8345
    %10092 = vmatprep.subr.bf16.mxu0 %v8354
    %10093 = vmatpush1.bf16.msra.mxu0 %v8353
    %10094 = vmatprep.subr.bf16.mxu0 %v8362
    %10095 = vmatpush1.bf16.msra.mxu0 %v8361
    %10096 = vmatprep.subr.bf16.mxu0 %v8370
    %10097 = vmatpush1.bf16.msra.mxu0 %v8369
    %10098 = vmatprep.subr.bf16.mxu0 %v8378
    %10099 = vmatpush1.bf16.msra.mxu0 %v8377
    %10100 = vmatprep.subr.bf16.mxu0 %v8386
    %10101 = vmatpush1.bf16.msra.mxu0 %v8385
    %10102 = vmatprep.subr.bf16.mxu0 %v8394
    %10103 = vmatpush1.bf16.msra.mxu0 %v8393
    %10104 = vmatprep.subr.bf16.mxu0 %v8402
    %10105 = vmatpush1.bf16.msra.mxu0 %v8401
    %10106 = vmatprep.subr.bf16.mxu0 %v8410
    %10107 = vmatpush1.bf16.msra.mxu0 %v8409
    %10108 = vmatprep.mubr.bf16.mxu0 %v3699
    %10109 = vmatmul.mubr.bf16.gmra.mrb[0].mxu0 %v3698
    %v10110 = vpop.f32.mrb[0].mxu0
    %v10111 = vadd.f32 %v10070, %v10110
    %v10112 = vpop.f32.mrb[0].mxu0
    %v10113 = vadd.f32 %v10072, %v10112
    %v10114 = vpop.f32.mrb[0].mxu0
    %v10115 = vpop.f32.mrb[0].mxu0
    %10116 = vdwg.mxu0
    %10117 = vmatprep.subr.bf16.mxu0 %v8418
    %10118 = vmatpush1.bf16.msra.mxu0 %v8417
    %10119 = vmatprep.subr.bf16.mxu0 %v8426
    %10120 = vmatpush1.bf16.msra.mxu0 %v8425
    %10121 = vmatprep.subr.bf16.mxu0 %v8434
    %10122 = vmatpush1.bf16.msra.mxu0 %v8433
    %10123 = vmatprep.subr.bf16.mxu0 %v8442
    %10124 = vmatpush1.bf16.msra.mxu0 %v8441
    %10125 = vmatprep.subr.bf16.mxu0 %v8450
    %10126 = vmatpush1.bf16.msra.mxu0 %v8449
    %10127 = vmatprep.subr.bf16.mxu0 %v8458
    %10128 = vmatpush1.bf16.msra.mxu0 %v8457
    %10129 = vmatprep.subr.bf16.mxu0 %v8466
    %10130 = vmatpush1.bf16.msra.mxu0 %v8465
    %10131 = vmatprep.subr.bf16.mxu0 %v8474
    %10132 = vmatpush1.bf16.msra.mxu0 %v8473
    %10133 = vmatprep.subr.bf16.mxu0 %v8482
    %10134 = vmatpush1.bf16.msra.mxu0 %v8481
    %10135 = vmatprep.subr.bf16.mxu0 %v8490
    %10136 = vmatpush1.bf16.msra.mxu0 %v8489
    %10137 = vmatprep.subr.bf16.mxu0 %v8498
    %10138 = vmatpush1.bf16.msra.mxu0 %v8497
    %10139 = vmatprep.subr.bf16.mxu0 %v8506
    %10140 = vmatpush1.bf16.msra.mxu0 %v8505
    %10141 = vmatprep.subr.bf16.mxu0 %v8514
    %10142 = vmatpush1.bf16.msra.mxu0 %v8513
    %10143 = vmatprep.subr.bf16.mxu0 %v8522
    %10144 = vmatpush1.bf16.msra.mxu0 %v8521
    %10145 = vmatprep.subr.bf16.mxu0 %v8530
    %10146 = vmatpush1.bf16.msra.mxu0 %v8529
    %10147 = vmatprep.subr.bf16.mxu0 %v8538
    %10148 = vmatpush1.bf16.msra.mxu0 %v8537
    %10149 = vmatprep.mubr.bf16.mxu0 %v3749
    %10150 = vmatmul.mubr.bf16.gmra.mrb[0].mxu0 %v3748
    %v10151 = vpop.f32.mrb[0].mxu0
    %v10152 = vadd.f32 %v10111, %v10151
    %v10153 = vpop.f32.mrb[0].mxu0
    %v10154 = vadd.f32 %v10113, %v10153
    %v10155 = vpop.f32.mrb[0].mxu0
    %v10156 = vpop.f32.mrb[0].mxu0
    %10157 = vdwg.mxu0
    %10158 = vmatprep.subr.bf16.mxu0 %v8546
    %10159 = vmatpush1.bf16.msra.mxu0 %v8545
    %10160 = vmatprep.subr.bf16.mxu0 %v8554
    %10161 = vmatpush1.bf16.msra.mxu0 %v8553
    %10162 = vmatprep.subr.bf16.mxu0 %v8562
    %10163 = vmatpush1.bf16.msra.mxu0 %v8561
    %10164 = vmatprep.subr.bf16.mxu0 %v8570
    %10165 = vmatpush1.bf16.msra.mxu0 %v8569
    %10166 = vmatprep.subr.bf16.mxu0 %v8578
    %10167 = vmatpush1.bf16.msra.mxu0 %v8577
    %10168 = vmatprep.subr.bf16.mxu0 %v8586
    %10169 = vmatpush1.bf16.msra.mxu0 %v8585
    %10170 = vmatprep.subr.bf16.mxu0 %v8594
    %10171 = vmatpush1.bf16.msra.mxu0 %v8593
    %10172 = vmatprep.subr.bf16.mxu0 %v8602
    %10173 = vmatpush1.bf16.msra.mxu0 %v8601
    %10174 = vmatprep.subr.bf16.mxu0 %v8610
    %10175 = vmatpush1.bf16.msra.mxu0 %v8609
    %10176 = vmatprep.subr.bf16.mxu0 %v8618
    %10177 = vmatpush1.bf16.msra.mxu0 %v8617
    %10178 = vmatprep.subr.bf16.mxu0 %v8626
    %10179 = vmatpush1.bf16.msra.mxu0 %v8625
    %10180 = vmatprep.subr.bf16.mxu0 %v8634
    %10181 = vmatpush1.bf16.msra.mxu0 %v8633
    %10182 = vmatprep.subr.bf16.mxu0 %v8642
    %10183 = vmatpush1.bf16.msra.mxu0 %v8641
    %10184 = vmatprep.subr.bf16.mxu0 %v8650
    %10185 = vmatpush1.bf16.msra.mxu0 %v8649
    %10186 = vmatprep.subr.bf16.mxu0 %v8658
    %10187 = vmatpush1.bf16.msra.mxu0 %v8657
    %10188 = vmatprep.subr.bf16.mxu0 %v8666
    %10189 = vmatpush1.bf16.msra.mxu0 %v8665
    %10190 = vmatprep.mubr.bf16.mxu0 %v3751
    %10191 = vmatmul.mubr.bf16.gmra.mrb[0].mxu0 %v3750
    %v10192 = vpop.f32.mrb[0].mxu0
    %v10193 = vadd.f32 %v10152, %v10192
    %v10194 = vpop.f32.mrb[0].mxu0
    %v10195 = vadd.f32 %v10154, %v10194
    %v10196 = vpop.f32.mrb[0].mxu0
    %v10197 = vpop.f32.mrb[0].mxu0
    %10198 = vdwg.mxu0
    %10199 = vmatprep.subr.bf16.mxu0 %v8674
    %10200 = vmatpush1.bf16.msra.mxu0 %v8673
    %10201 = vmatprep.subr.bf16.mxu0 %v8682
    %10202 = vmatpush1.bf16.msra.mxu0 %v8681
    %10203 = vmatprep.subr.bf16.mxu0 %v8690
    %10204 = vmatpush1.bf16.msra.mxu0 %v8689
    %10205 = vmatprep.subr.bf16.mxu0 %v8698
    %10206 = vmatpush1.bf16.msra.mxu0 %v8697
    %10207 = vmatprep.subr.bf16.mxu0 %v8706
    %10208 = vmatpush1.bf16.msra.mxu0 %v8705
    %10209 = vmatprep.subr.bf16.mxu0 %v8714
    %10210 = vmatpush1.bf16.msra.mxu0 %v8713
    %10211 = vmatprep.subr.bf16.mxu0 %v8722
    %10212 = vmatpush1.bf16.msra.mxu0 %v8721
    %10213 = vmatprep.subr.bf16.mxu0 %v8730
    %10214 = vmatpush1.bf16.msra.mxu0 %v8729
    %10215 = vmatprep.subr.bf16.mxu0 %v8738
    %10216 = vmatpush1.bf16.msra.mxu0 %v8737
    %10217 = vmatprep.subr.bf16.mxu0 %v8746
    %10218 = vmatpush1.bf16.msra.mxu0 %v8745
    %10219 = vmatprep.subr.bf16.mxu0 %v8754
    %10220 = vmatpush1.bf16.msra.mxu0 %v8753
    %10221 = vmatprep.subr.bf16.mxu0 %v8762
    %10222 = vmatpush1.bf16.msra.mxu0 %v8761
    %10223 = vmatprep.subr.bf16.mxu0 %v8770
    %10224 = vmatpush1.bf16.msra.mxu0 %v8769
    %10225 = vmatprep.subr.bf16.mxu0 %v8778
    %10226 = vmatpush1.bf16.msra.mxu0 %v8777
    %10227 = vmatprep.subr.bf16.mxu0 %v8786
    %10228 = vmatpush1.bf16.msra.mxu0 %v8785
    %10229 = vmatprep.subr.bf16.mxu0 %v8794
    %10230 = vmatpush1.bf16.msra.mxu0 %v8793
    %10231 = vmatprep.mubr.bf16.mxu0 %v3753
    %10232 = vmatmul.mubr.bf16.gmra.mrb[0].mxu0 %v3752
    %v10233 = vpop.f32.mrb[0].mxu0
    %v10234 = vadd.f32 %v10193, %v10233
    %v10235 = vpop.f32.mrb[0].mxu0
    %v10236 = vadd.f32 %v10195, %v10235
    %v10237 = vpop.f32.mrb[0].mxu0
    %v10238 = vpop.f32.mrb[0].mxu0
    %10239 = vdwg.mxu0
    %10240 = vmatprep.subr.bf16.mxu0 %v8802
    %10241 = vmatpush1.bf16.msra.mxu0 %v8801
    %10242 = vmatprep.subr.bf16.mxu0 %v8810
    %10243 = vmatpush1.bf16.msra.mxu0 %v8809
    %10244 = vmatprep.subr.bf16.mxu0 %v8818
    %10245 = vmatpush1.bf16.msra.mxu0 %v8817
    %10246 = vmatprep.subr.bf16.mxu0 %v8826
    %10247 = vmatpush1.bf16.msra.mxu0 %v8825
    %10248 = vmatprep.subr.bf16.mxu0 %v8834
    %10249 = vmatpush1.bf16.msra.mxu0 %v8833
    %10250 = vmatprep.subr.bf16.mxu0 %v8842
    %10251 = vmatpush1.bf16.msra.mxu0 %v8841
    %10252 = vmatprep.subr.bf16.mxu0 %v8850
    %10253 = vmatpush1.bf16.msra.mxu0 %v8849
    %10254 = vmatprep.subr.bf16.mxu0 %v8858
    %10255 = vmatpush1.bf16.msra.mxu0 %v8857
    %10256 = vmatprep.subr.bf16.mxu0 %v8866
    %10257 = vmatpush1.bf16.msra.mxu0 %v8865
    %10258 = vmatprep.subr.bf16.mxu0 %v8874
    %10259 = vmatpush1.bf16.msra.mxu0 %v8873
    %10260 = vmatprep.subr.bf16.mxu0 %v8882
    %10261 = vmatpush1.bf16.msra.mxu0 %v8881
    %10262 = vmatprep.subr.bf16.mxu0 %v8890
    %10263 = vmatpush1.bf16.msra.mxu0 %v8889
    %10264 = vmatprep.subr.bf16.mxu0 %v8898
    %10265 = vmatpush1.bf16.msra.mxu0 %v8897
    %10266 = vmatprep.subr.bf16.mxu0 %v8906
    %10267 = vmatpush1.bf16.msra.mxu0 %v8905
    %10268 = vmatprep.subr.bf16.mxu0 %v8914
    %10269 = vmatpush1.bf16.msra.mxu0 %v8913
    %10270 = vmatprep.subr.bf16.mxu0 %v8922
    %10271 = vmatpush1.bf16.msra.mxu0 %v8921
    %10272 = vmatprep.mubr.bf16.mxu0 %v3755
    %10273 = vmatmul.mubr.bf16.gmra.mrb[0].mxu0 %v3754
    %v10274 = vpop.f32.mrb[0].mxu0
    %v10275 = vadd.f32 %v10234, %v10274
    %v10276 = vpop.f32.mrb[0].mxu0
    %v10277 = vadd.f32 %v10236, %v10276
    %v10278 = vpop.f32.mrb[0].mxu0
    %v10279 = vpop.f32.mrb[0].mxu0
    %10280 = vdwg.mxu0
    %10281 = vmatprep.subr.bf16.mxu0 %v7908
    %10282 = vmatpush1.bf16.msra.mxu0 %v7907
    %10283 = vmatprep.subr.bf16.mxu0 %v7916
    %10284 = vmatpush1.bf16.msra.mxu0 %v7915
    %10285 = vmatprep.subr.bf16.mxu0 %v7924
    %10286 = vmatpush1.bf16.msra.mxu0 %v7923
    %10287 = vmatprep.subr.bf16.mxu0 %v7932
    %10288 = vmatpush1.bf16.msra.mxu0 %v7931
    %10289 = vmatprep.subr.bf16.mxu0 %v7940
    %10290 = vmatpush1.bf16.msra.mxu0 %v7939
    %10291 = vmatprep.subr.bf16.mxu0 %v7948
    %10292 = vmatpush1.bf16.msra.mxu0 %v7947
    %10293 = vmatprep.subr.bf16.mxu0 %v7956
    %10294 = vmatpush1.bf16.msra.mxu0 %v7955
    %10295 = vmatprep.subr.bf16.mxu0 %v7964
    %10296 = vmatpush1.bf16.msra.mxu0 %v7963
    %10297 = vmatprep.subr.bf16.mxu0 %v7972
    %10298 = vmatpush1.bf16.msra.mxu0 %v7971
    %10299 = vmatprep.subr.bf16.mxu0 %v7980
    %10300 = vmatpush1.bf16.msra.mxu0 %v7979
    %10301 = vmatprep.subr.bf16.mxu0 %v7988
    %10302 = vmatpush1.bf16.msra.mxu0 %v7987
    %10303 = vmatprep.subr.bf16.mxu0 %v7996
    %10304 = vmatpush1.bf16.msra.mxu0 %v7995
    %10305 = vmatprep.subr.bf16.mxu0 %v8004
    %10306 = vmatpush1.bf16.msra.mxu0 %v8003
    %10307 = vmatprep.subr.bf16.mxu0 %v8012
    %10308 = vmatpush1.bf16.msra.mxu0 %v8011
    %10309 = vmatprep.subr.bf16.mxu0 %v8020
    %10310 = vmatpush1.bf16.msra.mxu0 %v8019
    %10311 = vmatprep.subr.bf16.mxu0 %v8028
    %10312 = vmatpush1.bf16.msra.mxu0 %v8027
    %10313 = vmatprep.mubr.bf16.mxu0 %v3693
    %10314 = vmatmul.mubr.bf16.gmra.mrb[0].mxu0 %v3692
    %v10315 = vpop.f32.mrb[0].mxu0
    %v10316 = vadd.f32 %v4804, %v10315
    %v10317 = vpop.f32.mrb[0].mxu0
    %v10318 = vadd.f32 %v4808, %v10317
    %v10319 = vpop.f32.mrb[0].mxu0
    %v10320 = vpop.f32.mrb[0].mxu0
    %10321 = vdwg.mxu0
    %10322 = vmatprep.subr.bf16.mxu0 %v8036
    %10323 = vmatpush1.bf16.msra.mxu0 %v8035
    %10324 = vmatprep.subr.bf16.mxu0 %v8044
    %10325 = vmatpush1.bf16.msra.mxu0 %v8043
    %10326 = vmatprep.subr.bf16.mxu0 %v8052
    %10327 = vmatpush1.bf16.msra.mxu0 %v8051
    %10328 = vmatprep.subr.bf16.mxu0 %v8060
    %10329 = vmatpush1.bf16.msra.mxu0 %v8059
    %10330 = vmatprep.subr.bf16.mxu0 %v8068
    %10331 = vmatpush1.bf16.msra.mxu0 %v8067
    %10332 = vmatprep.subr.bf16.mxu0 %v8076
    %10333 = vmatpush1.bf16.msra.mxu0 %v8075
    %10334 = vmatprep.subr.bf16.mxu0 %v8084
    %10335 = vmatpush1.bf16.msra.mxu0 %v8083
    %10336 = vmatprep.subr.bf16.mxu0 %v8092
    %10337 = vmatpush1.bf16.msra.mxu0 %v8091
    %10338 = vmatprep.subr.bf16.mxu0 %v8100
    %10339 = vmatpush1.bf16.msra.mxu0 %v8099
    %10340 = vmatprep.subr.bf16.mxu0 %v8108
    %10341 = vmatpush1.bf16.msra.mxu0 %v8107
    %10342 = vmatprep.subr.bf16.mxu0 %v8116
    %10343 = vmatpush1.bf16.msra.mxu0 %v8115
    %10344 = vmatprep.subr.bf16.mxu0 %v8124
    %10345 = vmatpush1.bf16.msra.mxu0 %v8123
    %10346 = vmatprep.subr.bf16.mxu0 %v8132
    %10347 = vmatpush1.bf16.msra.mxu0 %v8131
    %10348 = vmatprep.subr.bf16.mxu0 %v8140
    %10349 = vmatpush1.bf16.msra.mxu0 %v8139
    %10350 = vmatprep.subr.bf16.mxu0 %v8148
    %10351 = vmatpush1.bf16.msra.mxu0 %v8147
    %10352 = vmatprep.subr.bf16.mxu0 %v8156
    %10353 = vmatpush1.bf16.msra.mxu0 %v8155
    %10354 = vmatprep.mubr.bf16.mxu0 %v3695
    %10355 = vmatmul.mubr.bf16.gmra.mrb[0].mxu0 %v3694
    %v10356 = vpop.f32.mrb[0].mxu0
    %v10357 = vadd.f32 %v10316, %v10356
    %v10358 = vpop.f32.mrb[0].mxu0
    %v10359 = vadd.f32 %v10318, %v10358
    %v10360 = vpop.f32.mrb[0].mxu0
    %v10361 = vpop.f32.mrb[0].mxu0
    %10362 = vdwg.mxu0
    %10363 = vmatprep.subr.bf16.mxu0 %v8164
    %10364 = vmatpush1.bf16.msra.mxu0 %v8163
    %10365 = vmatprep.subr.bf16.mxu0 %v8172
    %10366 = vmatpush1.bf16.msra.mxu0 %v8171
    %10367 = vmatprep.subr.bf16.mxu0 %v8180
    %10368 = vmatpush1.bf16.msra.mxu0 %v8179
    %10369 = vmatprep.subr.bf16.mxu0 %v8188
    %10370 = vmatpush1.bf16.msra.mxu0 %v8187
    %10371 = vmatprep.subr.bf16.mxu0 %v8196
    %10372 = vmatpush1.bf16.msra.mxu0 %v8195
    %10373 = vmatprep.subr.bf16.mxu0 %v8204
    %10374 = vmatpush1.bf16.msra.mxu0 %v8203
    %10375 = vmatprep.subr.bf16.mxu0 %v8212
    %10376 = vmatpush1.bf16.msra.mxu0 %v8211
    %10377 = vmatprep.subr.bf16.mxu0 %v8220
    %10378 = vmatpush1.bf16.msra.mxu0 %v8219
    %10379 = vmatprep.subr.bf16.mxu0 %v8228
    %10380 = vmatpush1.bf16.msra.mxu0 %v8227
    %10381 = vmatprep.subr.bf16.mxu0 %v8236
    %10382 = vmatpush1.bf16.msra.mxu0 %v8235
    %10383 = vmatprep.subr.bf16.mxu0 %v8244
    %10384 = vmatpush1.bf16.msra.mxu0 %v8243
    %10385 = vmatprep.subr.bf16.mxu0 %v8252
    %10386 = vmatpush1.bf16.msra.mxu0 %v8251
    %10387 = vmatprep.subr.bf16.mxu0 %v8260
    %10388 = vmatpush1.bf16.msra.mxu0 %v8259
    %10389 = vmatprep.subr.bf16.mxu0 %v8268
    %10390 = vmatpush1.bf16.msra.mxu0 %v8267
    %10391 = vmatprep.subr.bf16.mxu0 %v8276
    %10392 = vmatpush1.bf16.msra.mxu0 %v8275
    %10393 = vmatprep.subr.bf16.mxu0 %v8284
    %10394 = vmatpush1.bf16.msra.mxu0 %v8283
    %10395 = vmatprep.mubr.bf16.mxu0 %v3697
    %10396 = vmatmul.mubr.bf16.gmra.mrb[0].mxu0 %v3696
    %v10397 = vpop.f32.mrb[0].mxu0
    %v10398 = vadd.f32 %v10357, %v10397
    %v10399 = vpop.f32.mrb[0].mxu0
    %v10400 = vadd.f32 %v10359, %v10399
    %v10401 = vpop.f32.mrb[0].mxu0
    %v10402 = vpop.f32.mrb[0].mxu0
    %10403 = vdwg.mxu0
    %10404 = vmatprep.subr.bf16.mxu0 %v8292
    %10405 = vmatpush1.bf16.msra.mxu0 %v8291
    %10406 = vmatprep.subr.bf16.mxu0 %v8300
    %10407 = vmatpush1.bf16.msra.mxu0 %v8299
    %10408 = vmatprep.subr.bf16.mxu0 %v8308
    %10409 = vmatpush1.bf16.msra.mxu0 %v8307
    %10410 = vmatprep.subr.bf16.mxu0 %v8316
    %10411 = vmatpush1.bf16.msra.mxu0 %v8315
    %10412 = vmatprep.subr.bf16.mxu0 %v8324
    %10413 = vmatpush1.bf16.msra.mxu0 %v8323
    %10414 = vmatprep.subr.bf16.mxu0 %v8332
    %10415 = vmatpush1.bf16.msra.mxu0 %v8331
    %10416 = vmatprep.subr.bf16.mxu0 %v8340
    %10417 = vmatpush1.bf16.msra.mxu0 %v8339
    %10418 = vmatprep.subr.bf16.mxu0 %v8348
    %10419 = vmatpush1.bf16.msra.mxu0 %v8347
    %10420 = vmatprep.subr.bf16.mxu0 %v8356
    %10421 = vmatpush1.bf16.msra.mxu0 %v8355
    %10422 = vmatprep.subr.bf16.mxu0 %v8364
    %10423 = vmatpush1.bf16.msra.mxu0 %v8363
    %10424 = vmatprep.subr.bf16.mxu0 %v8372
    %10425 = vmatpush1.bf16.msra.mxu0 %v8371
    %10426 = vmatprep.subr.bf16.mxu0 %v8380
    %10427 = vmatpush1.bf16.msra.mxu0 %v8379
    %10428 = vmatprep.subr.bf16.mxu0 %v8388
    %10429 = vmatpush1.bf16.msra.mxu0 %v8387
    %10430 = vmatprep.subr.bf16.mxu0 %v8396
    %10431 = vmatpush1.bf16.msra.mxu0 %v8395
    %10432 = vmatprep.subr.bf16.mxu0 %v8404
    %10433 = vmatpush1.bf16.msra.mxu0 %v8403
    %10434 = vmatprep.subr.bf16.mxu0 %v8412
    %10435 = vmatpush1.bf16.msra.mxu0 %v8411
    %10436 = vmatprep.mubr.bf16.mxu0 %v3699
    %10437 = vmatmul.mubr.bf16.gmra.mrb[0].mxu0 %v3698
    %v10438 = vpop.f32.mrb[0].mxu0
    %v10439 = vadd.f32 %v10398, %v10438
    %v10440 = vpop.f32.mrb[0].mxu0
    %v10441 = vadd.f32 %v10400, %v10440
    %v10442 = vpop.f32.mrb[0].mxu0
    %v10443 = vpop.f32.mrb[0].mxu0
    %10444 = vdwg.mxu0
    %10445 = vmatprep.subr.bf16.mxu0 %v8420
    %10446 = vmatpush1.bf16.msra.mxu0 %v8419
    %10447 = vmatprep.subr.bf16.mxu0 %v8428
    %10448 = vmatpush1.bf16.msra.mxu0 %v8427
    %10449 = vmatprep.subr.bf16.mxu0 %v8436
    %10450 = vmatpush1.bf16.msra.mxu0 %v8435
    %10451 = vmatprep.subr.bf16.mxu0 %v8444
    %10452 = vmatpush1.bf16.msra.mxu0 %v8443
    %10453 = vmatprep.subr.bf16.mxu0 %v8452
    %10454 = vmatpush1.bf16.msra.mxu0 %v8451
    %10455 = vmatprep.subr.bf16.mxu0 %v8460
    %10456 = vmatpush1.bf16.msra.mxu0 %v8459
    %10457 = vmatprep.subr.bf16.mxu0 %v8468
    %10458 = vmatpush1.bf16.msra.mxu0 %v8467
    %10459 = vmatprep.subr.bf16.mxu0 %v8476
    %10460 = vmatpush1.bf16.msra.mxu0 %v8475
    %10461 = vmatprep.subr.bf16.mxu0 %v8484
    %10462 = vmatpush1.bf16.msra.mxu0 %v8483
    %10463 = vmatprep.subr.bf16.mxu0 %v8492
    %10464 = vmatpush1.bf16.msra.mxu0 %v8491
    %10465 = vmatprep.subr.bf16.mxu0 %v8500
    %10466 = vmatpush1.bf16.msra.mxu0 %v8499
    %10467 = vmatprep.subr.bf16.mxu0 %v8508
    %10468 = vmatpush1.bf16.msra.mxu0 %v8507
    %10469 = vmatprep.subr.bf16.mxu0 %v8516
    %10470 = vmatpush1.bf16.msra.mxu0 %v8515
    %10471 = vmatprep.subr.bf16.mxu0 %v8524
    %10472 = vmatpush1.bf16.msra.mxu0 %v8523
    %10473 = vmatprep.subr.bf16.mxu0 %v8532
    %10474 = vmatpush1.bf16.msra.mxu0 %v8531
    %10475 = vmatprep.subr.bf16.mxu0 %v8540
    %10476 = vmatpush1.bf16.msra.mxu0 %v8539
    %10477 = vmatprep.mubr.bf16.mxu0 %v3749
    %10478 = vmatmul.mubr.bf16.gmra.mrb[0].mxu0 %v3748
    %v10479 = vpop.f32.mrb[0].mxu0
    %v10480 = vadd.f32 %v10439, %v10479
    %v10481 = vpop.f32.mrb[0].mxu0
    %v10482 = vadd.f32 %v10441, %v10481
    %v10483 = vpop.f32.mrb[0].mxu0
    %v10484 = vpop.f32.mrb[0].mxu0
    %10485 = vdwg.mxu0
    %10486 = vmatprep.subr.bf16.mxu0 %v8548
    %10487 = vmatpush1.bf16.msra.mxu0 %v8547
    %10488 = vmatprep.subr.bf16.mxu0 %v8556
    %10489 = vmatpush1.bf16.msra.mxu0 %v8555
    %10490 = vmatprep.subr.bf16.mxu0 %v8564
    %10491 = vmatpush1.bf16.msra.mxu0 %v8563
    %10492 = vmatprep.subr.bf16.mxu0 %v8572
    %10493 = vmatpush1.bf16.msra.mxu0 %v8571
    %10494 = vmatprep.subr.bf16.mxu0 %v8580
    %10495 = vmatpush1.bf16.msra.mxu0 %v8579
    %10496 = vmatprep.subr.bf16.mxu0 %v8588
    %10497 = vmatpush1.bf16.msra.mxu0 %v8587
    %10498 = vmatprep.subr.bf16.mxu0 %v8596
    %10499 = vmatpush1.bf16.msra.mxu0 %v8595
    %10500 = vmatprep.subr.bf16.mxu0 %v8604
    %10501 = vmatpush1.bf16.msra.mxu0 %v8603
    %10502 = vmatprep.subr.bf16.mxu0 %v8612
    %10503 = vmatpush1.bf16.msra.mxu0 %v8611
    %10504 = vmatprep.subr.bf16.mxu0 %v8620
    %10505 = vmatpush1.bf16.msra.mxu0 %v8619
    %10506 = vmatprep.subr.bf16.mxu0 %v8628
    %10507 = vmatpush1.bf16.msra.mxu0 %v8627
    %10508 = vmatprep.subr.bf16.mxu0 %v8636
    %10509 = vmatpush1.bf16.msra.mxu0 %v8635
    %10510 = vmatprep.subr.bf16.mxu0 %v8644
    %10511 = vmatpush1.bf16.msra.mxu0 %v8643
    %10512 = vmatprep.subr.bf16.mxu0 %v8652
    %10513 = vmatpush1.bf16.msra.mxu0 %v8651
    %10514 = vmatprep.subr.bf16.mxu0 %v8660
    %10515 = vmatpush1.bf16.msra.mxu0 %v8659
    %10516 = vmatprep.subr.bf16.mxu0 %v8668
    %10517 = vmatpush1.bf16.msra.mxu0 %v8667
    %10518 = vmatprep.mubr.bf16.mxu0 %v3751
    %10519 = vmatmul.mubr.bf16.gmra.mrb[0].mxu0 %v3750
    %v10520 = vpop.f32.mrb[0].mxu0
    %v10521 = vadd.f32 %v10480, %v10520
    %v10522 = vpop.f32.mrb[0].mxu0
    %v10523 = vadd.f32 %v10482, %v10522
    %v10524 = vpop.f32.mrb[0].mxu0
    %v10525 = vpop.f32.mrb[0].mxu0
    %10526 = vdwg.mxu0
    %10527 = vmatprep.subr.bf16.mxu0 %v8676
    %10528 = vmatpush1.bf16.msra.mxu0 %v8675
    %10529 = vmatprep.subr.bf16.mxu0 %v8684
    %10530 = vmatpush1.bf16.msra.mxu0 %v8683
    %10531 = vmatprep.subr.bf16.mxu0 %v8692
    %10532 = vmatpush1.bf16.msra.mxu0 %v8691
    %10533 = vmatprep.subr.bf16.mxu0 %v8700
    %10534 = vmatpush1.bf16.msra.mxu0 %v8699
    %10535 = vmatprep.subr.bf16.mxu0 %v8708
    %10536 = vmatpush1.bf16.msra.mxu0 %v8707
    %10537 = vmatprep.subr.bf16.mxu0 %v8716
    %10538 = vmatpush1.bf16.msra.mxu0 %v8715
    %10539 = vmatprep.subr.bf16.mxu0 %v8724
    %10540 = vmatpush1.bf16.msra.mxu0 %v8723
    %10541 = vmatprep.subr.bf16.mxu0 %v8732
    %10542 = vmatpush1.bf16.msra.mxu0 %v8731
    %10543 = vmatprep.subr.bf16.mxu0 %v8740
    %10544 = vmatpush1.bf16.msra.mxu0 %v8739
    %10545 = vmatprep.subr.bf16.mxu0 %v8748
    %10546 = vmatpush1.bf16.msra.mxu0 %v8747
    %10547 = vmatprep.subr.bf16.mxu0 %v8756
    %10548 = vmatpush1.bf16.msra.mxu0 %v8755
    %10549 = vmatprep.subr.bf16.mxu0 %v8764
    %10550 = vmatpush1.bf16.msra.mxu0 %v8763
    %10551 = vmatprep.subr.bf16.mxu0 %v8772
    %10552 = vmatpush1.bf16.msra.mxu0 %v8771
    %10553 = vmatprep.subr.bf16.mxu0 %v8780
    %10554 = vmatpush1.bf16.msra.mxu0 %v8779
    %10555 = vmatprep.subr.bf16.mxu0 %v8788
    %10556 = vmatpush1.bf16.msra.mxu0 %v8787
    %10557 = vmatprep.subr.bf16.mxu0 %v8796
    %10558 = vmatpush1.bf16.msra.mxu0 %v8795
    %10559 = vmatprep.mubr.bf16.mxu0 %v3753
    %10560 = vmatmul.mubr.bf16.gmra.mrb[0].mxu0 %v3752
    %v10561 = vpop.f32.mrb[0].mxu0
    %v10562 = vadd.f32 %v10521, %v10561
    %v10563 = vpop.f32.mrb[0].mxu0
    %v10564 = vadd.f32 %v10523, %v10563
    %v10565 = vpop.f32.mrb[0].mxu0
    %v10566 = vpop.f32.mrb[0].mxu0
    %10567 = vdwg.mxu0
    %10568 = vmatprep.subr.bf16.mxu0 %v8804
    %10569 = vmatpush1.bf16.msra.mxu0 %v8803
    %10570 = vmatprep.subr.bf16.mxu0 %v8812
    %10571 = vmatpush1.bf16.msra.mxu0 %v8811
    %10572 = vmatprep.subr.bf16.mxu0 %v8820
    %10573 = vmatpush1.bf16.msra.mxu0 %v8819
    %10574 = vmatprep.subr.bf16.mxu0 %v8828
    %10575 = vmatpush1.bf16.msra.mxu0 %v8827
    %10576 = vmatprep.subr.bf16.mxu0 %v8836
    %10577 = vmatpush1.bf16.msra.mxu0 %v8835
    %10578 = vmatprep.subr.bf16.mxu0 %v8844
    %10579 = vmatpush1.bf16.msra.mxu0 %v8843
    %10580 = vmatprep.subr.bf16.mxu0 %v8852
    %10581 = vmatpush1.bf16.msra.mxu0 %v8851
    %10582 = vmatprep.subr.bf16.mxu0 %v8860
    %10583 = vmatpush1.bf16.msra.mxu0 %v8859
    %10584 = vmatprep.subr.bf16.mxu0 %v8868
    %10585 = vmatpush1.bf16.msra.mxu0 %v8867
    %10586 = vmatprep.subr.bf16.mxu0 %v8876
    %10587 = vmatpush1.bf16.msra.mxu0 %v8875
    %10588 = vmatprep.subr.bf16.mxu0 %v8884
    %10589 = vmatpush1.bf16.msra.mxu0 %v8883
    %10590 = vmatprep.subr.bf16.mxu0 %v8892
    %10591 = vmatpush1.bf16.msra.mxu0 %v8891
    %10592 = vmatprep.subr.bf16.mxu0 %v8900
    %10593 = vmatpush1.bf16.msra.mxu0 %v8899
    %10594 = vmatprep.subr.bf16.mxu0 %v8908
    %10595 = vmatpush1.bf16.msra.mxu0 %v8907
    %10596 = vmatprep.subr.bf16.mxu0 %v8916
    %10597 = vmatpush1.bf16.msra.mxu0 %v8915
    %10598 = vmatprep.subr.bf16.mxu0 %v8924
    %10599 = vmatpush1.bf16.msra.mxu0 %v8923
    %10600 = vmatprep.mubr.bf16.mxu0 %v3755
    %10601 = vmatmul.mubr.bf16.gmra.mrb[0].mxu0 %v3754
    %v10602 = vpop.f32.mrb[0].mxu0
    %v10603 = vadd.f32 %v10562, %v10602
    %v10604 = vpop.f32.mrb[0].mxu0
    %v10605 = vadd.f32 %v10564, %v10604
    %v10606 = vpop.f32.mrb[0].mxu0
    %v10607 = vpop.f32.mrb[0].mxu0
    %10608 = vdwg.mxu0
    %10609 = vmatprep.subr.bf16.mxu0 %v7910
    %10610 = vmatpush1.bf16.msra.mxu0 %v7909
    %10611 = vmatprep.subr.bf16.mxu0 %v7918
    %10612 = vmatpush1.bf16.msra.mxu0 %v7917
    %10613 = vmatprep.subr.bf16.mxu0 %v7926
    %10614 = vmatpush1.bf16.msra.mxu0 %v7925
    %10615 = vmatprep.subr.bf16.mxu0 %v7934
    %10616 = vmatpush1.bf16.msra.mxu0 %v7933
    %10617 = vmatprep.subr.bf16.mxu0 %v7942
    %10618 = vmatpush1.bf16.msra.mxu0 %v7941
    %10619 = vmatprep.subr.bf16.mxu0 %v7950
    %10620 = vmatpush1.bf16.msra.mxu0 %v7949
    %10621 = vmatprep.subr.bf16.mxu0 %v7958
    %10622 = vmatpush1.bf16.msra.mxu0 %v7957
    %10623 = vmatprep.subr.bf16.mxu0 %v7966
    %10624 = vmatpush1.bf16.msra.mxu0 %v7965
    %10625 = vmatprep.subr.bf16.mxu0 %v7974
    %10626 = vmatpush1.bf16.msra.mxu0 %v7973
    %10627 = vmatprep.subr.bf16.mxu0 %v7982
    %10628 = vmatpush1.bf16.msra.mxu0 %v7981
    %10629 = vmatprep.subr.bf16.mxu0 %v7990
    %10630 = vmatpush1.bf16.msra.mxu0 %v7989
    %10631 = vmatprep.subr.bf16.mxu0 %v7998
    %10632 = vmatpush1.bf16.msra.mxu0 %v7997
    %10633 = vmatprep.subr.bf16.mxu0 %v8006
    %10634 = vmatpush1.bf16.msra.mxu0 %v8005
    %10635 = vmatprep.subr.bf16.mxu0 %v8014
    %10636 = vmatpush1.bf16.msra.mxu0 %v8013
    %10637 = vmatprep.subr.bf16.mxu0 %v8022
    %10638 = vmatpush1.bf16.msra.mxu0 %v8021
    %10639 = vmatprep.subr.bf16.mxu0 %v8030
    %10640 = vmatpush1.bf16.msra.mxu0 %v8029
    %10641 = vmatprep.mubr.bf16.mxu0 %v3693
    %10642 = vmatmul.mubr.bf16.gmra.mrb[0].mxu0 %v3692
    %v10643 = vpop.f32.mrb[0].mxu0
    %v10644 = vadd.f32 %v4812, %v10643
    %v10645 = vpop.f32.mrb[0].mxu0
    %v10646 = vadd.f32 %v4816, %v10645
    %v10647 = vpop.f32.mrb[0].mxu0
    %v10648 = vpop.f32.mrb[0].mxu0
    %10649 = vdwg.mxu0
    %10650 = vmatprep.subr.bf16.mxu0 %v8038
    %10651 = vmatpush1.bf16.msra.mxu0 %v8037
    %10652 = vmatprep.subr.bf16.mxu0 %v8046
    %10653 = vmatpush1.bf16.msra.mxu0 %v8045
    %10654 = vmatprep.subr.bf16.mxu0 %v8054
    %10655 = vmatpush1.bf16.msra.mxu0 %v8053
    %10656 = vmatprep.subr.bf16.mxu0 %v8062
    %10657 = vmatpush1.bf16.msra.mxu0 %v8061
    %10658 = vmatprep.subr.bf16.mxu0 %v8070
    %10659 = vmatpush1.bf16.msra.mxu0 %v8069
    %10660 = vmatprep.subr.bf16.mxu0 %v8078
    %10661 = vmatpush1.bf16.msra.mxu0 %v8077
    %10662 = vmatprep.subr.bf16.mxu0 %v8086
    %10663 = vmatpush1.bf16.msra.mxu0 %v8085
    %10664 = vmatprep.subr.bf16.mxu0 %v8094
    %10665 = vmatpush1.bf16.msra.mxu0 %v8093
    %10666 = vmatprep.subr.bf16.mxu0 %v8102
    %10667 = vmatpush1.bf16.msra.mxu0 %v8101
    %10668 = vmatprep.subr.bf16.mxu0 %v8110
    %10669 = vmatpush1.bf16.msra.mxu0 %v8109
    %10670 = vmatprep.subr.bf16.mxu0 %v8118
    %10671 = vmatpush1.bf16.msra.mxu0 %v8117
    %10672 = vmatprep.subr.bf16.mxu0 %v8126
    %10673 = vmatpush1.bf16.msra.mxu0 %v8125
    %10674 = vmatprep.subr.bf16.mxu0 %v8134
    %10675 = vmatpush1.bf16.msra.mxu0 %v8133
    %10676 = vmatprep.subr.bf16.mxu0 %v8142
    %10677 = vmatpush1.bf16.msra.mxu0 %v8141
    %10678 = vmatprep.subr.bf16.mxu0 %v8150
    %10679 = vmatpush1.bf16.msra.mxu0 %v8149
    %10680 = vmatprep.subr.bf16.mxu0 %v8158
    %10681 = vmatpush1.bf16.msra.mxu0 %v8157
    %10682 = vmatprep.mubr.bf16.mxu0 %v3695
    %10683 = vmatmul.mubr.bf16.gmra.mrb[0].mxu0 %v3694
    %v10684 = vpop.f32.mrb[0].mxu0
    %v10685 = vadd.f32 %v10644, %v10684
    %v10686 = vpop.f32.mrb[0].mxu0
    %v10687 = vadd.f32 %v10646, %v10686
    %v10688 = vpop.f32.mrb[0].mxu0
    %v10689 = vpop.f32.mrb[0].mxu0
    %10690 = vdwg.mxu0
    %10691 = vmatprep.subr.bf16.mxu0 %v8166
    %10692 = vmatpush1.bf16.msra.mxu0 %v8165
    %10693 = vmatprep.subr.bf16.mxu0 %v8174
    %10694 = vmatpush1.bf16.msra.mxu0 %v8173
    %10695 = vmatprep.subr.bf16.mxu0 %v8182
    %10696 = vmatpush1.bf16.msra.mxu0 %v8181
    %10697 = vmatprep.subr.bf16.mxu0 %v8190
    %10698 = vmatpush1.bf16.msra.mxu0 %v8189
    %10699 = vmatprep.subr.bf16.mxu0 %v8198
    %10700 = vmatpush1.bf16.msra.mxu0 %v8197
    %10701 = vmatprep.subr.bf16.mxu0 %v8206
    %10702 = vmatpush1.bf16.msra.mxu0 %v8205
    %10703 = vmatprep.subr.bf16.mxu0 %v8214
    %10704 = vmatpush1.bf16.msra.mxu0 %v8213
    %10705 = vmatprep.subr.bf16.mxu0 %v8222
    %10706 = vmatpush1.bf16.msra.mxu0 %v8221
    %10707 = vmatprep.subr.bf16.mxu0 %v8230
    %10708 = vmatpush1.bf16.msra.mxu0 %v8229
    %10709 = vmatprep.subr.bf16.mxu0 %v8238
    %10710 = vmatpush1.bf16.msra.mxu0 %v8237
    %10711 = vmatprep.subr.bf16.mxu0 %v8246
    %10712 = vmatpush1.bf16.msra.mxu0 %v8245
    %10713 = vmatprep.subr.bf16.mxu0 %v8254
    %10714 = vmatpush1.bf16.msra.mxu0 %v8253
    %10715 = vmatprep.subr.bf16.mxu0 %v8262
    %10716 = vmatpush1.bf16.msra.mxu0 %v8261
    %10717 = vmatprep.subr.bf16.mxu0 %v8270
    %10718 = vmatpush1.bf16.msra.mxu0 %v8269
    %10719 = vmatprep.subr.bf16.mxu0 %v8278
    %10720 = vmatpush1.bf16.msra.mxu0 %v8277
    %10721 = vmatprep.subr.bf16.mxu0 %v8286
    %10722 = vmatpush1.bf16.msra.mxu0 %v8285
    %10723 = vmatprep.mubr.bf16.mxu0 %v3697
    %10724 = vmatmul.mubr.bf16.gmra.mrb[0].mxu0 %v3696
    %v10725 = vpop.f32.mrb[0].mxu0
    %v10726 = vadd.f32 %v10685, %v10725
    %v10727 = vpop.f32.mrb[0].mxu0
    %v10728 = vadd.f32 %v10687, %v10727
    %v10729 = vpop.f32.mrb[0].mxu0
    %v10730 = vpop.f32.mrb[0].mxu0
    %10731 = vdwg.mxu0
    %10732 = vmatprep.subr.bf16.mxu0 %v8294
    %10733 = vmatpush1.bf16.msra.mxu0 %v8293
    %10734 = vmatprep.subr.bf16.mxu0 %v8302
    %10735 = vmatpush1.bf16.msra.mxu0 %v8301
    %10736 = vmatprep.subr.bf16.mxu0 %v8310
    %10737 = vmatpush1.bf16.msra.mxu0 %v8309
    %10738 = vmatprep.subr.bf16.mxu0 %v8318
    %10739 = vmatpush1.bf16.msra.mxu0 %v8317
    %10740 = vmatprep.subr.bf16.mxu0 %v8326
    %10741 = vmatpush1.bf16.msra.mxu0 %v8325
    %10742 = vmatprep.subr.bf16.mxu0 %v8334
    %10743 = vmatpush1.bf16.msra.mxu0 %v8333
    %10744 = vmatprep.subr.bf16.mxu0 %v8342
    %10745 = vmatpush1.bf16.msra.mxu0 %v8341
    %10746 = vmatprep.subr.bf16.mxu0 %v8350
    %10747 = vmatpush1.bf16.msra.mxu0 %v8349
    %10748 = vmatprep.subr.bf16.mxu0 %v8358
    %10749 = vmatpush1.bf16.msra.mxu0 %v8357
    %10750 = vmatprep.subr.bf16.mxu0 %v8366
    %10751 = vmatpush1.bf16.msra.mxu0 %v8365
    %10752 = vmatprep.subr.bf16.mxu0 %v8374
    %10753 = vmatpush1.bf16.msra.mxu0 %v8373
    %10754 = vmatprep.subr.bf16.mxu0 %v8382
    %10755 = vmatpush1.bf16.msra.mxu0 %v8381
    %10756 = vmatprep.subr.bf16.mxu0 %v8390
    %10757 = vmatpush1.bf16.msra.mxu0 %v8389
    %10758 = vmatprep.subr.bf16.mxu0 %v8398
    %10759 = vmatpush1.bf16.msra.mxu0 %v8397
    %10760 = vmatprep.subr.bf16.mxu0 %v8406
    %10761 = vmatpush1.bf16.msra.mxu0 %v8405
    %10762 = vmatprep.subr.bf16.mxu0 %v8414
    %10763 = vmatpush1.bf16.msra.mxu0 %v8413
    %10764 = vmatprep.mubr.bf16.mxu0 %v3699
    %10765 = vmatmul.mubr.bf16.gmra.mrb[0].mxu0 %v3698
    %v10766 = vpop.f32.mrb[0].mxu0
    %v10767 = vadd.f32 %v10726, %v10766
    %v10768 = vpop.f32.mrb[0].mxu0
    %v10769 = vadd.f32 %v10728, %v10768
    %v10770 = vpop.f32.mrb[0].mxu0
    %v10771 = vpop.f32.mrb[0].mxu0
    %10772 = vdwg.mxu0
    %10773 = vmatprep.subr.bf16.mxu0 %v8422
    %10774 = vmatpush1.bf16.msra.mxu0 %v8421
    %10775 = vmatprep.subr.bf16.mxu0 %v8430
    %10776 = vmatpush1.bf16.msra.mxu0 %v8429
    %10777 = vmatprep.subr.bf16.mxu0 %v8438
    %10778 = vmatpush1.bf16.msra.mxu0 %v8437
    %10779 = vmatprep.subr.bf16.mxu0 %v8446
    %10780 = vmatpush1.bf16.msra.mxu0 %v8445
    %10781 = vmatprep.subr.bf16.mxu0 %v8454
    %10782 = vmatpush1.bf16.msra.mxu0 %v8453
    %10783 = vmatprep.subr.bf16.mxu0 %v8462
    %10784 = vmatpush1.bf16.msra.mxu0 %v8461
    %10785 = vmatprep.subr.bf16.mxu0 %v8470
    %10786 = vmatpush1.bf16.msra.mxu0 %v8469
    %10787 = vmatprep.subr.bf16.mxu0 %v8478
    %10788 = vmatpush1.bf16.msra.mxu0 %v8477
    %10789 = vmatprep.subr.bf16.mxu0 %v8486
    %10790 = vmatpush1.bf16.msra.mxu0 %v8485
    %10791 = vmatprep.subr.bf16.mxu0 %v8494
    %10792 = vmatpush1.bf16.msra.mxu0 %v8493
    %10793 = vmatprep.subr.bf16.mxu0 %v8502
    %10794 = vmatpush1.bf16.msra.mxu0 %v8501
    %10795 = vmatprep.subr.bf16.mxu0 %v8510
    %10796 = vmatpush1.bf16.msra.mxu0 %v8509
    %10797 = vmatprep.subr.bf16.mxu0 %v8518
    %10798 = vmatpush1.bf16.msra.mxu0 %v8517
    %10799 = vmatprep.subr.bf16.mxu0 %v8526
    %10800 = vmatpush1.bf16.msra.mxu0 %v8525
    %10801 = vmatprep.subr.bf16.mxu0 %v8534
    %10802 = vmatpush1.bf16.msra.mxu0 %v8533
    %10803 = vmatprep.subr.bf16.mxu0 %v8542
    %10804 = vmatpush1.bf16.msra.mxu0 %v8541
    %10805 = vmatprep.mubr.bf16.mxu0 %v3749
    %10806 = vmatmul.mubr.bf16.gmra.mrb[0].mxu0 %v3748
    %v10807 = vpop.f32.mrb[0].mxu0
    %v10808 = vadd.f32 %v10767, %v10807
    %v10809 = vpop.f32.mrb[0].mxu0
    %v10810 = vadd.f32 %v10769, %v10809
    %v10811 = vpop.f32.mrb[0].mxu0
    %v10812 = vpop.f32.mrb[0].mxu0
    %10813 = vdwg.mxu0
    %10814 = vmatprep.subr.bf16.mxu0 %v8550
    %10815 = vmatpush1.bf16.msra.mxu0 %v8549
    %10816 = vmatprep.subr.bf16.mxu0 %v8558
    %10817 = vmatpush1.bf16.msra.mxu0 %v8557
    %10818 = vmatprep.subr.bf16.mxu0 %v8566
    %10819 = vmatpush1.bf16.msra.mxu0 %v8565
    %10820 = vmatprep.subr.bf16.mxu0 %v8574
    %10821 = vmatpush1.bf16.msra.mxu0 %v8573
    %10822 = vmatprep.subr.bf16.mxu0 %v8582
    %10823 = vmatpush1.bf16.msra.mxu0 %v8581
    %10824 = vmatprep.subr.bf16.mxu0 %v8590
    %10825 = vmatpush1.bf16.msra.mxu0 %v8589
    %10826 = vmatprep.subr.bf16.mxu0 %v8598
    %10827 = vmatpush1.bf16.msra.mxu0 %v8597
    %10828 = vmatprep.subr.bf16.mxu0 %v8606
    %10829 = vmatpush1.bf16.msra.mxu0 %v8605
    %10830 = vmatprep.subr.bf16.mxu0 %v8614
    %10831 = vmatpush1.bf16.msra.mxu0 %v8613
    %10832 = vmatprep.subr.bf16.mxu0 %v8622
    %10833 = vmatpush1.bf16.msra.mxu0 %v8621
    %10834 = vmatprep.subr.bf16.mxu0 %v8630
    %10835 = vmatpush1.bf16.msra.mxu0 %v8629
    %10836 = vmatprep.subr.bf16.mxu0 %v8638
    %10837 = vmatpush1.bf16.msra.mxu0 %v8637
    %10838 = vmatprep.subr.bf16.mxu0 %v8646
    %10839 = vmatpush1.bf16.msra.mxu0 %v8645
    %10840 = vmatprep.subr.bf16.mxu0 %v8654
    %10841 = vmatpush1.bf16.msra.mxu0 %v8653
    %10842 = vmatprep.subr.bf16.mxu0 %v8662
    %10843 = vmatpush1.bf16.msra.mxu0 %v8661
    %10844 = vmatprep.subr.bf16.mxu0 %v8670
    %10845 = vmatpush1.bf16.msra.mxu0 %v8669
    %10846 = vmatprep.mubr.bf16.mxu0 %v3751
    %10847 = vmatmul.mubr.bf16.gmra.mrb[0].mxu0 %v3750
    %v10848 = vpop.f32.mrb[0].mxu0
    %v10849 = vadd.f32 %v10808, %v10848
    %v10850 = vpop.f32.mrb[0].mxu0
    %v10851 = vadd.f32 %v10810, %v10850
    %v10852 = vpop.f32.mrb[0].mxu0
    %v10853 = vpop.f32.mrb[0].mxu0
    %10854 = vdwg.mxu0
    %10855 = vmatprep.subr.bf16.mxu0 %v8678
    %10856 = vmatpush1.bf16.msra.mxu0 %v8677
    %10857 = vmatprep.subr.bf16.mxu0 %v8686
    %10858 = vmatpush1.bf16.msra.mxu0 %v8685
    %10859 = vmatprep.subr.bf16.mxu0 %v8694
    %10860 = vmatpush1.bf16.msra.mxu0 %v8693
    %10861 = vmatprep.subr.bf16.mxu0 %v8702
    %10862 = vmatpush1.bf16.msra.mxu0 %v8701
    %10863 = vmatprep.subr.bf16.mxu0 %v8710
    %10864 = vmatpush1.bf16.msra.mxu0 %v8709
    %10865 = vmatprep.subr.bf16.mxu0 %v8718
    %10866 = vmatpush1.bf16.msra.mxu0 %v8717
    %10867 = vmatprep.subr.bf16.mxu0 %v8726
    %10868 = vmatpush1.bf16.msra.mxu0 %v8725
    %10869 = vmatprep.subr.bf16.mxu0 %v8734
    %10870 = vmatpush1.bf16.msra.mxu0 %v8733
    %10871 = vmatprep.subr.bf16.mxu0 %v8742
    %10872 = vmatpush1.bf16.msra.mxu0 %v8741
    %10873 = vmatprep.subr.bf16.mxu0 %v8750
    %10874 = vmatpush1.bf16.msra.mxu0 %v8749
    %10875 = vmatprep.subr.bf16.mxu0 %v8758
    %10876 = vmatpush1.bf16.msra.mxu0 %v8757
    %10877 = vmatprep.subr.bf16.mxu0 %v8766
    %10878 = vmatpush1.bf16.msra.mxu0 %v8765
    %10879 = vmatprep.subr.bf16.mxu0 %v8774
    %10880 = vmatpush1.bf16.msra.mxu0 %v8773
    %10881 = vmatprep.subr.bf16.mxu0 %v8782
    %10882 = vmatpush1.bf16.msra.mxu0 %v8781
    %10883 = vmatprep.subr.bf16.mxu0 %v8790
    %10884 = vmatpush1.bf16.msra.mxu0 %v8789
    %10885 = vmatprep.subr.bf16.mxu0 %v8798
    %10886 = vmatpush1.bf16.msra.mxu0 %v8797
    %10887 = vmatprep.mubr.bf16.mxu0 %v3753
    %10888 = vmatmul.mubr.bf16.gmra.mrb[0].mxu0 %v3752
    %v10889 = vpop.f32.mrb[0].mxu0
    %v10890 = vadd.f32 %v10849, %v10889
    %v10891 = vpop.f32.mrb[0].mxu0
    %v10892 = vadd.f32 %v10851, %v10891
    %v10893 = vpop.f32.mrb[0].mxu0
    %v10894 = vpop.f32.mrb[0].mxu0
    %10895 = vdwg.mxu0
    %10896 = vmatprep.subr.bf16.mxu0 %v8806
    %10897 = vmatpush1.bf16.msra.mxu0 %v8805
    %10898 = vmatprep.subr.bf16.mxu0 %v8814
    %10899 = vmatpush1.bf16.msra.mxu0 %v8813
    %10900 = vmatprep.subr.bf16.mxu0 %v8822
    %10901 = vmatpush1.bf16.msra.mxu0 %v8821
    %10902 = vmatprep.subr.bf16.mxu0 %v8830
    %10903 = vmatpush1.bf16.msra.mxu0 %v8829
    %10904 = vmatprep.subr.bf16.mxu0 %v8838
    %10905 = vmatpush1.bf16.msra.mxu0 %v8837
    %10906 = vmatprep.subr.bf16.mxu0 %v8846
    %10907 = vmatpush1.bf16.msra.mxu0 %v8845
    %10908 = vmatprep.subr.bf16.mxu0 %v8854
    %10909 = vmatpush1.bf16.msra.mxu0 %v8853
    %10910 = vmatprep.subr.bf16.mxu0 %v8862
    %10911 = vmatpush1.bf16.msra.mxu0 %v8861
    %10912 = vmatprep.subr.bf16.mxu0 %v8870
    %10913 = vmatpush1.bf16.msra.mxu0 %v8869
    %10914 = vmatprep.subr.bf16.mxu0 %v8878
    %10915 = vmatpush1.bf16.msra.mxu0 %v8877
    %10916 = vmatprep.subr.bf16.mxu0 %v8886
    %10917 = vmatpush1.bf16.msra.mxu0 %v8885
    %10918 = vmatprep.subr.bf16.mxu0 %v8894
    %10919 = vmatpush1.bf16.msra.mxu0 %v8893
    %10920 = vmatprep.subr.bf16.mxu0 %v8902
    %10921 = vmatpush1.bf16.msra.mxu0 %v8901
    %10922 = vmatprep.subr.bf16.mxu0 %v8910
    %10923 = vmatpush1.bf16.msra.mxu0 %v8909
    %10924 = vmatprep.subr.bf16.mxu0 %v8918
    %10925 = vmatpush1.bf16.msra.mxu0 %v8917
    %10926 = vmatprep.subr.bf16.mxu0 %v8926
    %10927 = vmatpush1.bf16.msra.mxu0 %v8925
    %10928 = vmatprep.mubr.bf16.mxu0 %v3755
    %10929 = vmatmul.mubr.bf16.gmra.mrb[0].mxu0 %v3754
    %v10930 = vpop.f32.mrb[0].mxu0
    %v10931 = vadd.f32 %v10890, %v10930
    %v10932 = vpop.f32.mrb[0].mxu0
    %v10933 = vadd.f32 %v10892, %v10932
    %v10934 = vpop.f32.mrb[0].mxu0
    %v10935 = vpop.f32.mrb[0].mxu0
    %10936 = vdwg.mxu0
    %10937 = vmatprep.subr.bf16.mxu0 %v7912
    %10938 = vmatpush1.bf16.msra.mxu0 %v7911
    %10939 = vmatprep.subr.bf16.mxu0 %v7920
    %10940 = vmatpush1.bf16.msra.mxu0 %v7919
    %10941 = vmatprep.subr.bf16.mxu0 %v7928
    %10942 = vmatpush1.bf16.msra.mxu0 %v7927
    %10943 = vmatprep.subr.bf16.mxu0 %v7936
    %10944 = vmatpush1.bf16.msra.mxu0 %v7935
    %10945 = vmatprep.subr.bf16.mxu0 %v7944
    %10946 = vmatpush1.bf16.msra.mxu0 %v7943
    %10947 = vmatprep.subr.bf16.mxu0 %v7952
    %10948 = vmatpush1.bf16.msra.mxu0 %v7951
    %10949 = vmatprep.subr.bf16.mxu0 %v7960
    %10950 = vmatpush1.bf16.msra.mxu0 %v7959
    %10951 = vmatprep.subr.bf16.mxu0 %v7968
    %10952 = vmatpush1.bf16.msra.mxu0 %v7967
    %10953 = vmatprep.subr.bf16.mxu0 %v7976
    %10954 = vmatpush1.bf16.msra.mxu0 %v7975
    %10955 = vmatprep.subr.bf16.mxu0 %v7984
    %10956 = vmatpush1.bf16.msra.mxu0 %v7983
    %10957 = vmatprep.subr.bf16.mxu0 %v7992
    %10958 = vmatpush1.bf16.msra.mxu0 %v7991
    %10959 = vmatprep.subr.bf16.mxu0 %v8000
    %10960 = vmatpush1.bf16.msra.mxu0 %v7999
    %10961 = vmatprep.subr.bf16.mxu0 %v8008
    %10962 = vmatpush1.bf16.msra.mxu0 %v8007
    %10963 = vmatprep.subr.bf16.mxu0 %v8016
    %10964 = vmatpush1.bf16.msra.mxu0 %v8015
    %10965 = vmatprep.subr.bf16.mxu0 %v8024
    %10966 = vmatpush1.bf16.msra.mxu0 %v8023
    %10967 = vmatprep.subr.bf16.mxu0 %v8032
    %10968 = vmatpush1.bf16.msra.mxu0 %v8031
    %10969 = vmatprep.mubr.bf16.mxu0 %v3693
    %10970 = vmatmul.mubr.bf16.gmra.mrb[0].mxu0 %v3692
    %v10971 = vpop.f32.mrb[0].mxu0
    %v10972 = vadd.f32 %v4820, %v10971
    %v10973 = vpop.f32.mrb[0].mxu0
    %v10974 = vadd.f32 %v4824, %v10973
    %v10975 = vpop.f32.mrb[0].mxu0
    %v10976 = vpop.f32.mrb[0].mxu0
    %10977 = vdwg.mxu0
    %10978 = vmatprep.subr.bf16.mxu0 %v8040
    %10979 = vmatpush1.bf16.msra.mxu0 %v8039
    %10980 = vmatprep.subr.bf16.mxu0 %v8048
    %10981 = vmatpush1.bf16.msra.mxu0 %v8047
    %10982 = vmatprep.subr.bf16.mxu0 %v8056
    %10983 = vmatpush1.bf16.msra.mxu0 %v8055
    %10984 = vmatprep.subr.bf16.mxu0 %v8064
    %10985 = vmatpush1.bf16.msra.mxu0 %v8063
    %10986 = vmatprep.subr.bf16.mxu0 %v8072
    %10987 = vmatpush1.bf16.msra.mxu0 %v8071
    %10988 = vmatprep.subr.bf16.mxu0 %v8080
    %10989 = vmatpush1.bf16.msra.mxu0 %v8079
    %10990 = vmatprep.subr.bf16.mxu0 %v8088
    %10991 = vmatpush1.bf16.msra.mxu0 %v8087
    %10992 = vmatprep.subr.bf16.mxu0 %v8096
    %10993 = vmatpush1.bf16.msra.mxu0 %v8095
    %10994 = vmatprep.subr.bf16.mxu0 %v8104
    %10995 = vmatpush1.bf16.msra.mxu0 %v8103
    %10996 = vmatprep.subr.bf16.mxu0 %v8112
    %10997 = vmatpush1.bf16.msra.mxu0 %v8111
    %10998 = vmatprep.subr.bf16.mxu0 %v8120
    %10999 = vmatpush1.bf16.msra.mxu0 %v8119
    %11000 = vmatprep.subr.bf16.mxu0 %v8128
    %11001 = vmatpush1.bf16.msra.mxu0 %v8127
    %11002 = vmatprep.subr.bf16.mxu0 %v8136
    %11003 = vmatpush1.bf16.msra.mxu0 %v8135
    %11004 = vmatprep.subr.bf16.mxu0 %v8144
    %11005 = vmatpush1.bf16.msra.mxu0 %v8143
    %11006 = vmatprep.subr.bf16.mxu0 %v8152
    %11007 = vmatpush1.bf16.msra.mxu0 %v8151
    %11008 = vmatprep.subr.bf16.mxu0 %v8160
    %11009 = vmatpush1.bf16.msra.mxu0 %v8159
    %11010 = vmatprep.mubr.bf16.mxu0 %v3695
    %11011 = vmatmul.mubr.bf16.gmra.mrb[0].mxu0 %v3694
    %v11012 = vpop.f32.mrb[0].mxu0
    %v11013 = vadd.f32 %v10972, %v11012
    %v11014 = vpop.f32.mrb[0].mxu0
    %v11015 = vadd.f32 %v10974, %v11014
    %v11016 = vpop.f32.mrb[0].mxu0
    %v11017 = vpop.f32.mrb[0].mxu0
    %11018 = vdwg.mxu0
    %11019 = vmatprep.subr.bf16.mxu0 %v8168
    %11020 = vmatpush1.bf16.msra.mxu0 %v8167
    %11021 = vmatprep.subr.bf16.mxu0 %v8176
    %11022 = vmatpush1.bf16.msra.mxu0 %v8175
    %11023 = vmatprep.subr.bf16.mxu0 %v8184
    %11024 = vmatpush1.bf16.msra.mxu0 %v8183
    %11025 = vmatprep.subr.bf16.mxu0 %v8192
    %11026 = vmatpush1.bf16.msra.mxu0 %v8191
    %11027 = vmatprep.subr.bf16.mxu0 %v8200
    %11028 = vmatpush1.bf16.msra.mxu0 %v8199
    %11029 = vmatprep.subr.bf16.mxu0 %v8208
    %11030 = vmatpush1.bf16.msra.mxu0 %v8207
    %11031 = vmatprep.subr.bf16.mxu0 %v8216
    %11032 = vmatpush1.bf16.msra.mxu0 %v8215
    %11033 = vmatprep.subr.bf16.mxu0 %v8224
    %11034 = vmatpush1.bf16.msra.mxu0 %v8223
    %11035 = vmatprep.subr.bf16.mxu0 %v8232
    %11036 = vmatpush1.bf16.msra.mxu0 %v8231
    %11037 = vmatprep.subr.bf16.mxu0 %v8240
    %11038 = vmatpush1.bf16.msra.mxu0 %v8239
    %11039 = vmatprep.subr.bf16.mxu0 %v8248
    %11040 = vmatpush1.bf16.msra.mxu0 %v8247
    %11041 = vmatprep.subr.bf16.mxu0 %v8256
    %11042 = vmatpush1.bf16.msra.mxu0 %v8255
    %11043 = vmatprep.subr.bf16.mxu0 %v8264
    %11044 = vmatpush1.bf16.msra.mxu0 %v8263
    %11045 = vmatprep.subr.bf16.mxu0 %v8272
    %11046 = vmatpush1.bf16.msra.mxu0 %v8271
    %11047 = vmatprep.subr.bf16.mxu0 %v8280
    %11048 = vmatpush1.bf16.msra.mxu0 %v8279
    %11049 = vmatprep.subr.bf16.mxu0 %v8288
    %11050 = vmatpush1.bf16.msra.mxu0 %v8287
    %11051 = vmatprep.mubr.bf16.mxu0 %v3697
    %11052 = vmatmul.mubr.bf16.gmra.mrb[0].mxu0 %v3696
    %v11053 = vpop.f32.mrb[0].mxu0
    %v11054 = vadd.f32 %v11013, %v11053
    %v11055 = vpop.f32.mrb[0].mxu0
    %v11056 = vadd.f32 %v11015, %v11055
    %v11057 = vpop.f32.mrb[0].mxu0
    %v11058 = vpop.f32.mrb[0].mxu0
    %11059 = vdwg.mxu0
    %11060 = vmatprep.subr.bf16.mxu0 %v8296
    %11061 = vmatpush1.bf16.msra.mxu0 %v8295
    %11062 = vmatprep.subr.bf16.mxu0 %v8304
    %11063 = vmatpush1.bf16.msra.mxu0 %v8303
    %11064 = vmatprep.subr.bf16.mxu0 %v8312
    %11065 = vmatpush1.bf16.msra.mxu0 %v8311
    %11066 = vmatprep.subr.bf16.mxu0 %v8320
    %11067 = vmatpush1.bf16.msra.mxu0 %v8319
    %11068 = vmatprep.subr.bf16.mxu0 %v8328
    %11069 = vmatpush1.bf16.msra.mxu0 %v8327
    %11070 = vmatprep.subr.bf16.mxu0 %v8336
    %11071 = vmatpush1.bf16.msra.mxu0 %v8335
    %11072 = vmatprep.subr.bf16.mxu0 %v8344
    %11073 = vmatpush1.bf16.msra.mxu0 %v8343
    %11074 = vmatprep.subr.bf16.mxu0 %v8352
    %11075 = vmatpush1.bf16.msra.mxu0 %v8351
    %11076 = vmatprep.subr.bf16.mxu0 %v8360
    %11077 = vmatpush1.bf16.msra.mxu0 %v8359
    %11078 = vmatprep.subr.bf16.mxu0 %v8368
    %11079 = vmatpush1.bf16.msra.mxu0 %v8367
    %11080 = vmatprep.subr.bf16.mxu0 %v8376
    %11081 = vmatpush1.bf16.msra.mxu0 %v8375
    %11082 = vmatprep.subr.bf16.mxu0 %v8384
    %11083 = vmatpush1.bf16.msra.mxu0 %v8383
    %11084 = vmatprep.subr.bf16.mxu0 %v8392
    %11085 = vmatpush1.bf16.msra.mxu0 %v8391
    %11086 = vmatprep.subr.bf16.mxu0 %v8400
    %11087 = vmatpush1.bf16.msra.mxu0 %v8399
    %11088 = vmatprep.subr.bf16.mxu0 %v8408
    %11089 = vmatpush1.bf16.msra.mxu0 %v8407
    %11090 = vmatprep.subr.bf16.mxu0 %v8416
    %11091 = vmatpush1.bf16.msra.mxu0 %v8415
    %11092 = vmatprep.mubr.bf16.mxu0 %v3699
    %11093 = vmatmul.mubr.bf16.gmra.mrb[0].mxu0 %v3698
    %v11094 = vpop.f32.mrb[0].mxu0
    %v11095 = vadd.f32 %v11054, %v11094
    %v11096 = vpop.f32.mrb[0].mxu0
    %v11097 = vadd.f32 %v11056, %v11096
    %v11098 = vpop.f32.mrb[0].mxu0
    %v11099 = vpop.f32.mrb[0].mxu0
    %11100 = vdwg.mxu0
    %11101 = vmatprep.subr.bf16.mxu0 %v8424
    %11102 = vmatpush1.bf16.msra.mxu0 %v8423
    %11103 = vmatprep.subr.bf16.mxu0 %v8432
    %11104 = vmatpush1.bf16.msra.mxu0 %v8431
    %11105 = vmatprep.subr.bf16.mxu0 %v8440
    %11106 = vmatpush1.bf16.msra.mxu0 %v8439
    %11107 = vmatprep.subr.bf16.mxu0 %v8448
    %11108 = vmatpush1.bf16.msra.mxu0 %v8447
    %11109 = vmatprep.subr.bf16.mxu0 %v8456
    %11110 = vmatpush1.bf16.msra.mxu0 %v8455
    %11111 = vmatprep.subr.bf16.mxu0 %v8464
    %11112 = vmatpush1.bf16.msra.mxu0 %v8463
    %11113 = vmatprep.subr.bf16.mxu0 %v8472
    %11114 = vmatpush1.bf16.msra.mxu0 %v8471
    %11115 = vmatprep.subr.bf16.mxu0 %v8480
    %11116 = vmatpush1.bf16.msra.mxu0 %v8479
    %11117 = vmatprep.subr.bf16.mxu0 %v8488
    %11118 = vmatpush1.bf16.msra.mxu0 %v8487
    %11119 = vmatprep.subr.bf16.mxu0 %v8496
    %11120 = vmatpush1.bf16.msra.mxu0 %v8495
    %11121 = vmatprep.subr.bf16.mxu0 %v8504
    %11122 = vmatpush1.bf16.msra.mxu0 %v8503
    %11123 = vmatprep.subr.bf16.mxu0 %v8512
    %11124 = vmatpush1.bf16.msra.mxu0 %v8511
    %11125 = vmatprep.subr.bf16.mxu0 %v8520
    %11126 = vmatpush1.bf16.msra.mxu0 %v8519
    %11127 = vmatprep.subr.bf16.mxu0 %v8528
    %11128 = vmatpush1.bf16.msra.mxu0 %v8527
    %11129 = vmatprep.subr.bf16.mxu0 %v8536
    %11130 = vmatpush1.bf16.msra.mxu0 %v8535
    %11131 = vmatprep.subr.bf16.mxu0 %v8544
    %11132 = vmatpush1.bf16.msra.mxu0 %v8543
    %11133 = vmatprep.mubr.bf16.mxu0 %v3749
    %11134 = vmatmul.mubr.bf16.gmra.mrb[0].mxu0 %v3748
    %v11135 = vpop.f32.mrb[0].mxu0
    %v11136 = vadd.f32 %v11095, %v11135
    %v11137 = vpop.f32.mrb[0].mxu0
    %v11138 = vadd.f32 %v11097, %v11137
    %v11139 = vpop.f32.mrb[0].mxu0
    %v11140 = vpop.f32.mrb[0].mxu0
    %11141 = vdwg.mxu0
    %11142 = vmatprep.subr.bf16.mxu0 %v8552
    %11143 = vmatpush1.bf16.msra.mxu0 %v8551
    %11144 = vmatprep.subr.bf16.mxu0 %v8560
    %11145 = vmatpush1.bf16.msra.mxu0 %v8559
    %11146 = vmatprep.subr.bf16.mxu0 %v8568
    %11147 = vmatpush1.bf16.msra.mxu0 %v8567
    %11148 = vmatprep.subr.bf16.mxu0 %v8576
    %11149 = vmatpush1.bf16.msra.mxu0 %v8575
    %11150 = vmatprep.subr.bf16.mxu0 %v8584
    %11151 = vmatpush1.bf16.msra.mxu0 %v8583
    %11152 = vmatprep.subr.bf16.mxu0 %v8592
    %11153 = vmatpush1.bf16.msra.mxu0 %v8591
    %11154 = vmatprep.subr.bf16.mxu0 %v8600
    %11155 = vmatpush1.bf16.msra.mxu0 %v8599
    %11156 = vmatprep.subr.bf16.mxu0 %v8608
    %11157 = vmatpush1.bf16.msra.mxu0 %v8607
    %11158 = vmatprep.subr.bf16.mxu0 %v8616
    %11159 = vmatpush1.bf16.msra.mxu0 %v8615
    %11160 = vmatprep.subr.bf16.mxu0 %v8624
    %11161 = vmatpush1.bf16.msra.mxu0 %v8623
    %11162 = vmatprep.subr.bf16.mxu0 %v8632
    %11163 = vmatpush1.bf16.msra.mxu0 %v8631
    %11164 = vmatprep.subr.bf16.mxu0 %v8640
    %11165 = vmatpush1.bf16.msra.mxu0 %v8639
    %11166 = vmatprep.subr.bf16.mxu0 %v8648
    %11167 = vmatpush1.bf16.msra.mxu0 %v8647
    %11168 = vmatprep.subr.bf16.mxu0 %v8656
    %11169 = vmatpush1.bf16.msra.mxu0 %v8655
    %11170 = vmatprep.subr.bf16.mxu0 %v8664
    %11171 = vmatpush1.bf16.msra.mxu0 %v8663
    %11172 = vmatprep.subr.bf16.mxu0 %v8672
    %11173 = vmatpush1.bf16.msra.mxu0 %v8671
    %11174 = vmatprep.mubr.bf16.mxu0 %v3751
    %11175 = vmatmul.mubr.bf16.gmra.mrb[0].mxu0 %v3750
    %v11176 = vpop.f32.mrb[0].mxu0
    %v11177 = vadd.f32 %v11136, %v11176
    %v11178 = vpop.f32.mrb[0].mxu0
    %v11179 = vadd.f32 %v11138, %v11178
    %v11180 = vpop.f32.mrb[0].mxu0
    %v11181 = vpop.f32.mrb[0].mxu0
    %11182 = vdwg.mxu0
    %11183 = vmatprep.subr.bf16.mxu0 %v8680
    %11184 = vmatpush1.bf16.msra.mxu0 %v8679
    %11185 = vmatprep.subr.bf16.mxu0 %v8688
    %11186 = vmatpush1.bf16.msra.mxu0 %v8687
    %11187 = vmatprep.subr.bf16.mxu0 %v8696
    %11188 = vmatpush1.bf16.msra.mxu0 %v8695
    %11189 = vmatprep.subr.bf16.mxu0 %v8704
    %11190 = vmatpush1.bf16.msra.mxu0 %v8703
    %11191 = vmatprep.subr.bf16.mxu0 %v8712
    %11192 = vmatpush1.bf16.msra.mxu0 %v8711
    %11193 = vmatprep.subr.bf16.mxu0 %v8720
    %11194 = vmatpush1.bf16.msra.mxu0 %v8719
    %11195 = vmatprep.subr.bf16.mxu0 %v8728
    %11196 = vmatpush1.bf16.msra.mxu0 %v8727
    %11197 = vmatprep.subr.bf16.mxu0 %v8736
    %11198 = vmatpush1.bf16.msra.mxu0 %v8735
    %11199 = vmatprep.subr.bf16.mxu0 %v8744
    %11200 = vmatpush1.bf16.msra.mxu0 %v8743
    %11201 = vmatprep.subr.bf16.mxu0 %v8752
    %11202 = vmatpush1.bf16.msra.mxu0 %v8751
    %11203 = vmatprep.subr.bf16.mxu0 %v8760
    %11204 = vmatpush1.bf16.msra.mxu0 %v8759
    %11205 = vmatprep.subr.bf16.mxu0 %v8768
    %11206 = vmatpush1.bf16.msra.mxu0 %v8767
    %11207 = vmatprep.subr.bf16.mxu0 %v8776
    %11208 = vmatpush1.bf16.msra.mxu0 %v8775
    %11209 = vmatprep.subr.bf16.mxu0 %v8784
    %11210 = vmatpush1.bf16.msra.mxu0 %v8783
    %11211 = vmatprep.subr.bf16.mxu0 %v8792
    %11212 = vmatpush1.bf16.msra.mxu0 %v8791
    %11213 = vmatprep.subr.bf16.mxu0 %v8800
    %11214 = vmatpush1.bf16.msra.mxu0 %v8799
    %11215 = vmatprep.mubr.bf16.mxu0 %v3753
    %11216 = vmatmul.mubr.bf16.gmra.mrb[0].mxu0 %v3752
    %v11217 = vpop.f32.mrb[0].mxu0
    %v11218 = vadd.f32 %v11177, %v11217
    %v11219 = vpop.f32.mrb[0].mxu0
    %v11220 = vadd.f32 %v11179, %v11219
    %v11221 = vpop.f32.mrb[0].mxu0
    %v11222 = vpop.f32.mrb[0].mxu0
    %11223 = vdwg.mxu0
    %11224 = vmatprep.subr.bf16.mxu0 %v8808
    %11225 = vmatpush1.bf16.msra.mxu0 %v8807
    %11226 = vmatprep.subr.bf16.mxu0 %v8816
    %11227 = vmatpush1.bf16.msra.mxu0 %v8815
    %11228 = vmatprep.subr.bf16.mxu0 %v8824
    %11229 = vmatpush1.bf16.msra.mxu0 %v8823
    %11230 = vmatprep.subr.bf16.mxu0 %v8832
    %11231 = vmatpush1.bf16.msra.mxu0 %v8831
    %11232 = vmatprep.subr.bf16.mxu0 %v8840
    %11233 = vmatpush1.bf16.msra.mxu0 %v8839
    %11234 = vmatprep.subr.bf16.mxu0 %v8848
    %11235 = vmatpush1.bf16.msra.mxu0 %v8847
    %11236 = vmatprep.subr.bf16.mxu0 %v8856
    %11237 = vmatpush1.bf16.msra.mxu0 %v8855
    %11238 = vmatprep.subr.bf16.mxu0 %v8864
    %11239 = vmatpush1.bf16.msra.mxu0 %v8863
    %11240 = vmatprep.subr.bf16.mxu0 %v8872
    %11241 = vmatpush1.bf16.msra.mxu0 %v8871
    %11242 = vmatprep.subr.bf16.mxu0 %v8880
    %11243 = vmatpush1.bf16.msra.mxu0 %v8879
    %11244 = vmatprep.subr.bf16.mxu0 %v8888
    %11245 = vmatpush1.bf16.msra.mxu0 %v8887
    %11246 = vmatprep.subr.bf16.mxu0 %v8896
    %11247 = vmatpush1.bf16.msra.mxu0 %v8895
    %11248 = vmatprep.subr.bf16.mxu0 %v8904
    %11249 = vmatpush1.bf16.msra.mxu0 %v8903
    %11250 = vmatprep.subr.bf16.mxu0 %v8912
    %11251 = vmatpush1.bf16.msra.mxu0 %v8911
    %11252 = vmatprep.subr.bf16.mxu0 %v8920
    %11253 = vmatpush1.bf16.msra.mxu0 %v8919
    %11254 = vmatprep.subr.bf16.mxu0 %v8928
    %11255 = vmatpush1.bf16.msra.mxu0 %v8927
    %11256 = vmatprep.mubr.bf16.mxu0 %v3755
    %11257 = vmatmul.mubr.bf16.gmra.mrb[0].mxu0 %v3754
    %v11258 = vpop.f32.mrb[0].mxu0
    %v11259 = vadd.f32 %v11218, %v11258
    %v11260 = vpop.f32.mrb[0].mxu0
    %v11261 = vadd.f32 %v11220, %v11260
    %v11262 = vpop.f32.mrb[0].mxu0
    %v11263 = vpop.f32.mrb[0].mxu0
    %11264 = vdwg.mxu0
    %vm11265 = vcmp.ge.f32.partialorder %v10275, 0.0
    %vm11266 = vcmp.ge.f32.partialorder %v10277, 0.0
    %vm11267 = vcmp.ge.f32.partialorder %v10603, 0.0
    %vm11268 = vcmp.ge.f32.partialorder %v10605, 0.0
    %vm11269 = vcmp.ge.f32.partialorder %v10931, 0.0
    %vm11270 = vcmp.ge.f32.partialorder %v10933, 0.0
    %vm11271 = vcmp.ge.f32.partialorder %v11259, 0.0
    %vm11272 = vcmp.ge.f32.partialorder %v11261, 0.0
    %v11273 = vmul.f32 %v10275, 0.01
    %v11274 = vmul.f32 %v10277, 0.01
    %v11275 = vmul.f32 %v10603, 0.01
    %v11276 = vmul.f32 %v10605, 0.01
    %v11277 = vmul.f32 %v10931, 0.01
    %v11278 = vmul.f32 %v10933, 0.01
    %v11279 = vmul.f32 %v11259, 0.01
    %v11280 = vmul.f32 %v11261, 0.01
    %v11281 = vsel %vm11265, %v10275, %v11273
    %v11282 = vsel %vm11266, %v10277, %v11274
    %v11283 = vsel %vm11267, %v10603, %v11275
    %v11284 = vsel %vm11268, %v10605, %v11276
    %v11285 = vsel %vm11269, %v10931, %v11277
    %v11286 = vsel %vm11270, %v10933, %v11278
    %v11287 = vsel %vm11271, %v11259, %v11279
    %v11288 = vsel %vm11272, %v11261, %v11280
    %v11289 = vpack.c.bf16 %v11281, %v11281
    %v11290 = vpack.c.bf16 %v11282, %v11282
    %v11291 = vpack.c.bf16 %v11283, %v11283
    %v11292 = vpack.c.bf16 %v11284, %v11284
    %v11293 = vpack.c.bf16 %v11285, %v11285
    %v11294 = vpack.c.bf16 %v11286, %v11286
    %v11295 = vpack.c.bf16 %v11287, %v11287
    %v11296 = vpack.c.bf16 %v11288, %v11288
    %v11297 = vld [vmem:[#allocation11] sm:$0xff]
    %v11298 = vld [vmem:[#allocation11 + $0x8] sm:$0xff]
    %v11299 = vld [vmem:[#allocation11 + $0x10] sm:$0xff]
    %v11300 = vld [vmem:[#allocation11 + $0x18] sm:$0xff]
    %v11301 = vld [vmem:[#allocation11 + $0x20] sm:$0xff]
    %v11302 = vld [vmem:[#allocation11 + $0x28] sm:$0xff]
    %v11303 = vld [vmem:[#allocation11 + $0x30] sm:$0xff]
    %v11304 = vld [vmem:[#allocation11 + $0x38] sm:$0xff]
    %v11305 = vld [vmem:[#allocation11 + $0x40] sm:$0xff]
    %v11306 = vld [vmem:[#allocation11 + $0x48] sm:$0xff]
    %v11307 = vld [vmem:[#allocation11 + $0x50] sm:$0xff]
    %v11308 = vld [vmem:[#allocation11 + $0x58] sm:$0xff]
    %v11309 = vld [vmem:[#allocation11 + $0x60] sm:$0xff]
    %v11310 = vld [vmem:[#allocation11 + $0x68] sm:$0xff]
    %v11311 = vld [vmem:[#allocation11 + $0x70] sm:$0xff]
    %v11312 = vld [vmem:[#allocation11 + $0x78] sm:$0xff]
    %v11313 = vld [vmem:[#allocation11 + $0x80] sm:$0xff]
    %v11314 = vld [vmem:[#allocation11 + $0x88] sm:$0xff]
    %v11315 = vld [vmem:[#allocation11 + $0x90] sm:$0xff]
    %v11316 = vld [vmem:[#allocation11 + $0x98] sm:$0xff]
    %v11317 = vld [vmem:[#allocation11 + $0xa0] sm:$0xff]
    %v11318 = vld [vmem:[#allocation11 + $0xa8] sm:$0xff]
    %v11319 = vld [vmem:[#allocation11 + $0xb0] sm:$0xff]
    %v11320 = vld [vmem:[#allocation11 + $0xb8] sm:$0xff]
    %v11321 = vld [vmem:[#allocation11 + $0xc0] sm:$0xff]
    %v11322 = vld [vmem:[#allocation11 + $0xc8] sm:$0xff]
    %v11323 = vld [vmem:[#allocation11 + $0xd0] sm:$0xff]
    %v11324 = vld [vmem:[#allocation11 + $0xd8] sm:$0xff]
    %v11325 = vld [vmem:[#allocation11 + $0xe0] sm:$0xff]
    %v11326 = vld [vmem:[#allocation11 + $0xe8] sm:$0xff]
    %v11327 = vld [vmem:[#allocation11 + $0xf0] sm:$0xff]
    %v11328 = vld [vmem:[#allocation11 + $0xf8] sm:$0xff]
    %v11329 = vld [vmem:[#allocation11 + $0x100] sm:$0xff]
    %v11330 = vld [vmem:[#allocation11 + $0x108] sm:$0xff]
    %v11331 = vld [vmem:[#allocation11 + $0x110] sm:$0xff]
    %v11332 = vld [vmem:[#allocation11 + $0x118] sm:$0xff]
    %v11333 = vld [vmem:[#allocation11 + $0x120] sm:$0xff]
    %v11334 = vld [vmem:[#allocation11 + $0x128] sm:$0xff]
    %v11335 = vld [vmem:[#allocation11 + $0x130] sm:$0xff]
    %v11336 = vld [vmem:[#allocation11 + $0x138] sm:$0xff]
    %v11337 = vld [vmem:[#allocation11 + $0x140] sm:$0xff]
    %v11338 = vld [vmem:[#allocation11 + $0x148] sm:$0xff]
    %v11339 = vld [vmem:[#allocation11 + $0x150] sm:$0xff]
    %v11340 = vld [vmem:[#allocation11 + $0x158] sm:$0xff]
    %v11341 = vld [vmem:[#allocation11 + $0x160] sm:$0xff]
    %v11342 = vld [vmem:[#allocation11 + $0x168] sm:$0xff]
    %v11343 = vld [vmem:[#allocation11 + $0x170] sm:$0xff]
    %v11344 = vld [vmem:[#allocation11 + $0x178] sm:$0xff]
    %v11345 = vld [vmem:[#allocation11 + $0x180] sm:$0xff]
    %v11346 = vld [vmem:[#allocation11 + $0x188] sm:$0xff]
    %v11347 = vld [vmem:[#allocation11 + $0x190] sm:$0xff]
    %v11348 = vld [vmem:[#allocation11 + $0x198] sm:$0xff]
    %v11349 = vld [vmem:[#allocation11 + $0x1a0] sm:$0xff]
    %v11350 = vld [vmem:[#allocation11 + $0x1a8] sm:$0xff]
    %v11351 = vld [vmem:[#allocation11 + $0x1b0] sm:$0xff]
    %v11352 = vld [vmem:[#allocation11 + $0x1b8] sm:$0xff]
    %v11353 = vld [vmem:[#allocation11 + $0x1c0] sm:$0xff]
    %v11354 = vld [vmem:[#allocation11 + $0x1c8] sm:$0xff]
    %v11355 = vld [vmem:[#allocation11 + $0x1d0] sm:$0xff]
    %v11356 = vld [vmem:[#allocation11 + $0x1d8] sm:$0xff]
    %v11357 = vld [vmem:[#allocation11 + $0x1e0] sm:$0xff]
    %v11358 = vld [vmem:[#allocation11 + $0x1e8] sm:$0xff]
    %v11359 = vld [vmem:[#allocation11 + $0x1f0] sm:$0xff]
    %v11360 = vld [vmem:[#allocation11 + $0x1f8] sm:$0xff]
    %v11361 = vld [vmem:[#allocation11 + $0x200] sm:$0xff]
    %v11362 = vld [vmem:[#allocation11 + $0x208] sm:$0xff]
    %v11363 = vld [vmem:[#allocation11 + $0x210] sm:$0xff]
    %v11364 = vld [vmem:[#allocation11 + $0x218] sm:$0xff]
    %v11365 = vld [vmem:[#allocation11 + $0x220] sm:$0xff]
    %v11366 = vld [vmem:[#allocation11 + $0x228] sm:$0xff]
    %v11367 = vld [vmem:[#allocation11 + $0x230] sm:$0xff]
    %v11368 = vld [vmem:[#allocation11 + $0x238] sm:$0xff]
    %v11369 = vld [vmem:[#allocation11 + $0x240] sm:$0xff]
    %v11370 = vld [vmem:[#allocation11 + $0x248] sm:$0xff]
    %v11371 = vld [vmem:[#allocation11 + $0x250] sm:$0xff]
    %v11372 = vld [vmem:[#allocation11 + $0x258] sm:$0xff]
    %v11373 = vld [vmem:[#allocation11 + $0x260] sm:$0xff]
    %v11374 = vld [vmem:[#allocation11 + $0x268] sm:$0xff]
    %v11375 = vld [vmem:[#allocation11 + $0x270] sm:$0xff]
    %v11376 = vld [vmem:[#allocation11 + $0x278] sm:$0xff]
    %v11377 = vld [vmem:[#allocation11 + $0x280] sm:$0xff]
    %v11378 = vld [vmem:[#allocation11 + $0x288] sm:$0xff]
    %v11379 = vld [vmem:[#allocation11 + $0x290] sm:$0xff]
    %v11380 = vld [vmem:[#allocation11 + $0x298] sm:$0xff]
    %v11381 = vld [vmem:[#allocation11 + $0x2a0] sm:$0xff]
    %v11382 = vld [vmem:[#allocation11 + $0x2a8] sm:$0xff]
    %v11383 = vld [vmem:[#allocation11 + $0x2b0] sm:$0xff]
    %v11384 = vld [vmem:[#allocation11 + $0x2b8] sm:$0xff]
    %v11385 = vld [vmem:[#allocation11 + $0x2c0] sm:$0xff]
    %v11386 = vld [vmem:[#allocation11 + $0x2c8] sm:$0xff]
    %v11387 = vld [vmem:[#allocation11 + $0x2d0] sm:$0xff]
    %v11388 = vld [vmem:[#allocation11 + $0x2d8] sm:$0xff]
    %v11389 = vld [vmem:[#allocation11 + $0x2e0] sm:$0xff]
    %v11390 = vld [vmem:[#allocation11 + $0x2e8] sm:$0xff]
    %v11391 = vld [vmem:[#allocation11 + $0x2f0] sm:$0xff]
    %v11392 = vld [vmem:[#allocation11 + $0x2f8] sm:$0xff]
    %v11393 = vld [vmem:[#allocation11 + $0x300] sm:$0xff]
    %v11394 = vld [vmem:[#allocation11 + $0x308] sm:$0xff]
    %v11395 = vld [vmem:[#allocation11 + $0x310] sm:$0xff]
    %v11396 = vld [vmem:[#allocation11 + $0x318] sm:$0xff]
    %v11397 = vld [vmem:[#allocation11 + $0x320] sm:$0xff]
    %v11398 = vld [vmem:[#allocation11 + $0x328] sm:$0xff]
    %v11399 = vld [vmem:[#allocation11 + $0x330] sm:$0xff]
    %v11400 = vld [vmem:[#allocation11 + $0x338] sm:$0xff]
    %v11401 = vld [vmem:[#allocation11 + $0x340] sm:$0xff]
    %v11402 = vld [vmem:[#allocation11 + $0x348] sm:$0xff]
    %v11403 = vld [vmem:[#allocation11 + $0x350] sm:$0xff]
    %v11404 = vld [vmem:[#allocation11 + $0x358] sm:$0xff]
    %v11405 = vld [vmem:[#allocation11 + $0x360] sm:$0xff]
    %v11406 = vld [vmem:[#allocation11 + $0x368] sm:$0xff]
    %v11407 = vld [vmem:[#allocation11 + $0x370] sm:$0xff]
    %v11408 = vld [vmem:[#allocation11 + $0x378] sm:$0xff]
    %v11409 = vld [vmem:[#allocation11 + $0x380] sm:$0xff]
    %v11410 = vld [vmem:[#allocation11 + $0x388] sm:$0xff]
    %v11411 = vld [vmem:[#allocation11 + $0x390] sm:$0xff]
    %v11412 = vld [vmem:[#allocation11 + $0x398] sm:$0xff]
    %v11413 = vld [vmem:[#allocation11 + $0x3a0] sm:$0xff]
    %v11414 = vld [vmem:[#allocation11 + $0x3a8] sm:$0xff]
    %v11415 = vld [vmem:[#allocation11 + $0x3b0] sm:$0xff]
    %v11416 = vld [vmem:[#allocation11 + $0x3b8] sm:$0xff]
    %v11417 = vld [vmem:[#allocation11 + $0x3c0] sm:$0xff]
    %v11418 = vld [vmem:[#allocation11 + $0x3c8] sm:$0xff]
    %v11419 = vld [vmem:[#allocation11 + $0x3d0] sm:$0xff]
    %v11420 = vld [vmem:[#allocation11 + $0x3d8] sm:$0xff]
    %v11421 = vld [vmem:[#allocation11 + $0x3e0] sm:$0xff]
    %v11422 = vld [vmem:[#allocation11 + $0x3e8] sm:$0xff]
    %v11423 = vld [vmem:[#allocation11 + $0x3f0] sm:$0xff]
    %v11424 = vld [vmem:[#allocation11 + $0x3f8] sm:$0xff]
    %v11425 = vld [vmem:[#allocation11 + $0x400] sm:$0xff]
    %v11426 = vld [vmem:[#allocation11 + $0x408] sm:$0xff]
    %v11427 = vld [vmem:[#allocation11 + $0x410] sm:$0xff]
    %v11428 = vld [vmem:[#allocation11 + $0x418] sm:$0xff]
    %v11429 = vld [vmem:[#allocation11 + $0x420] sm:$0xff]
    %v11430 = vld [vmem:[#allocation11 + $0x428] sm:$0xff]
    %v11431 = vld [vmem:[#allocation11 + $0x430] sm:$0xff]
    %v11432 = vld [vmem:[#allocation11 + $0x438] sm:$0xff]
    %v11433 = vld [vmem:[#allocation11 + $0x440] sm:$0xff]
    %v11434 = vld [vmem:[#allocation11 + $0x448] sm:$0xff]
    %v11435 = vld [vmem:[#allocation11 + $0x450] sm:$0xff]
    %v11436 = vld [vmem:[#allocation11 + $0x458] sm:$0xff]
    %v11437 = vld [vmem:[#allocation11 + $0x460] sm:$0xff]
    %v11438 = vld [vmem:[#allocation11 + $0x468] sm:$0xff]
    %v11439 = vld [vmem:[#allocation11 + $0x470] sm:$0xff]
    %v11440 = vld [vmem:[#allocation11 + $0x478] sm:$0xff]
    %v11441 = vld [vmem:[#allocation11 + $0x480] sm:$0xff]
    %v11442 = vld [vmem:[#allocation11 + $0x488] sm:$0xff]
    %v11443 = vld [vmem:[#allocation11 + $0x490] sm:$0xff]
    %v11444 = vld [vmem:[#allocation11 + $0x498] sm:$0xff]
    %v11445 = vld [vmem:[#allocation11 + $0x4a0] sm:$0xff]
    %v11446 = vld [vmem:[#allocation11 + $0x4a8] sm:$0xff]
    %v11447 = vld [vmem:[#allocation11 + $0x4b0] sm:$0xff]
    %v11448 = vld [vmem:[#allocation11 + $0x4b8] sm:$0xff]
    %v11449 = vld [vmem:[#allocation11 + $0x4c0] sm:$0xff]
    %v11450 = vld [vmem:[#allocation11 + $0x4c8] sm:$0xff]
    %v11451 = vld [vmem:[#allocation11 + $0x4d0] sm:$0xff]
    %v11452 = vld [vmem:[#allocation11 + $0x4d8] sm:$0xff]
    %v11453 = vld [vmem:[#allocation11 + $0x4e0] sm:$0xff]
    %v11454 = vld [vmem:[#allocation11 + $0x4e8] sm:$0xff]
    %v11455 = vld [vmem:[#allocation11 + $0x4f0] sm:$0xff]
    %v11456 = vld [vmem:[#allocation11 + $0x4f8] sm:$0xff]
    %v11457 = vld [vmem:[#allocation11 + $0x500] sm:$0xff]
    %v11458 = vld [vmem:[#allocation11 + $0x508] sm:$0xff]
    %v11459 = vld [vmem:[#allocation11 + $0x510] sm:$0xff]
    %v11460 = vld [vmem:[#allocation11 + $0x518] sm:$0xff]
    %v11461 = vld [vmem:[#allocation11 + $0x520] sm:$0xff]
    %v11462 = vld [vmem:[#allocation11 + $0x528] sm:$0xff]
    %v11463 = vld [vmem:[#allocation11 + $0x530] sm:$0xff]
    %v11464 = vld [vmem:[#allocation11 + $0x538] sm:$0xff]
    %v11465 = vld [vmem:[#allocation11 + $0x540] sm:$0xff]
    %v11466 = vld [vmem:[#allocation11 + $0x548] sm:$0xff]
    %v11467 = vld [vmem:[#allocation11 + $0x550] sm:$0xff]
    %v11468 = vld [vmem:[#allocation11 + $0x558] sm:$0xff]
    %v11469 = vld [vmem:[#allocation11 + $0x560] sm:$0xff]
    %v11470 = vld [vmem:[#allocation11 + $0x568] sm:$0xff]
    %v11471 = vld [vmem:[#allocation11 + $0x570] sm:$0xff]
    %v11472 = vld [vmem:[#allocation11 + $0x578] sm:$0xff]
    %v11473 = vld [vmem:[#allocation11 + $0x580] sm:$0xff]
    %v11474 = vld [vmem:[#allocation11 + $0x588] sm:$0xff]
    %v11475 = vld [vmem:[#allocation11 + $0x590] sm:$0xff]
    %v11476 = vld [vmem:[#allocation11 + $0x598] sm:$0xff]
    %v11477 = vld [vmem:[#allocation11 + $0x5a0] sm:$0xff]
    %v11478 = vld [vmem:[#allocation11 + $0x5a8] sm:$0xff]
    %v11479 = vld [vmem:[#allocation11 + $0x5b0] sm:$0xff]
    %v11480 = vld [vmem:[#allocation11 + $0x5b8] sm:$0xff]
    %v11481 = vld [vmem:[#allocation11 + $0x5c0] sm:$0xff]
    %v11482 = vld [vmem:[#allocation11 + $0x5c8] sm:$0xff]
    %v11483 = vld [vmem:[#allocation11 + $0x5d0] sm:$0xff]
    %v11484 = vld [vmem:[#allocation11 + $0x5d8] sm:$0xff]
    %v11485 = vld [vmem:[#allocation11 + $0x5e0] sm:$0xff]
    %v11486 = vld [vmem:[#allocation11 + $0x5e8] sm:$0xff]
    %v11487 = vld [vmem:[#allocation11 + $0x5f0] sm:$0xff]
    %v11488 = vld [vmem:[#allocation11 + $0x5f8] sm:$0xff]
    %v11489 = vld [vmem:[#allocation11 + $0x600] sm:$0xff]
    %v11490 = vld [vmem:[#allocation11 + $0x608] sm:$0xff]
    %v11491 = vld [vmem:[#allocation11 + $0x610] sm:$0xff]
    %v11492 = vld [vmem:[#allocation11 + $0x618] sm:$0xff]
    %v11493 = vld [vmem:[#allocation11 + $0x620] sm:$0xff]
    %v11494 = vld [vmem:[#allocation11 + $0x628] sm:$0xff]
    %v11495 = vld [vmem:[#allocation11 + $0x630] sm:$0xff]
    %v11496 = vld [vmem:[#allocation11 + $0x638] sm:$0xff]
    %v11497 = vld [vmem:[#allocation11 + $0x640] sm:$0xff]
    %v11498 = vld [vmem:[#allocation11 + $0x648] sm:$0xff]
    %v11499 = vld [vmem:[#allocation11 + $0x650] sm:$0xff]
    %v11500 = vld [vmem:[#allocation11 + $0x658] sm:$0xff]
    %v11501 = vld [vmem:[#allocation11 + $0x660] sm:$0xff]
    %v11502 = vld [vmem:[#allocation11 + $0x668] sm:$0xff]
    %v11503 = vld [vmem:[#allocation11 + $0x670] sm:$0xff]
    %v11504 = vld [vmem:[#allocation11 + $0x678] sm:$0xff]
    %v11505 = vld [vmem:[#allocation11 + $0x680] sm:$0xff]
    %v11506 = vld [vmem:[#allocation11 + $0x688] sm:$0xff]
    %v11507 = vld [vmem:[#allocation11 + $0x690] sm:$0xff]
    %v11508 = vld [vmem:[#allocation11 + $0x698] sm:$0xff]
    %v11509 = vld [vmem:[#allocation11 + $0x6a0] sm:$0xff]
    %v11510 = vld [vmem:[#allocation11 + $0x6a8] sm:$0xff]
    %v11511 = vld [vmem:[#allocation11 + $0x6b0] sm:$0xff]
    %v11512 = vld [vmem:[#allocation11 + $0x6b8] sm:$0xff]
    %v11513 = vld [vmem:[#allocation11 + $0x6c0] sm:$0xff]
    %v11514 = vld [vmem:[#allocation11 + $0x6c8] sm:$0xff]
    %v11515 = vld [vmem:[#allocation11 + $0x6d0] sm:$0xff]
    %v11516 = vld [vmem:[#allocation11 + $0x6d8] sm:$0xff]
    %v11517 = vld [vmem:[#allocation11 + $0x6e0] sm:$0xff]
    %v11518 = vld [vmem:[#allocation11 + $0x6e8] sm:$0xff]
    %v11519 = vld [vmem:[#allocation11 + $0x6f0] sm:$0xff]
    %v11520 = vld [vmem:[#allocation11 + $0x6f8] sm:$0xff]
    %v11521 = vld [vmem:[#allocation11 + $0x700] sm:$0xff]
    %v11522 = vld [vmem:[#allocation11 + $0x708] sm:$0xff]
    %v11523 = vld [vmem:[#allocation11 + $0x710] sm:$0xff]
    %v11524 = vld [vmem:[#allocation11 + $0x718] sm:$0xff]
    %v11525 = vld [vmem:[#allocation11 + $0x720] sm:$0xff]
    %v11526 = vld [vmem:[#allocation11 + $0x728] sm:$0xff]
    %v11527 = vld [vmem:[#allocation11 + $0x730] sm:$0xff]
    %v11528 = vld [vmem:[#allocation11 + $0x738] sm:$0xff]
    %v11529 = vld [vmem:[#allocation11 + $0x740] sm:$0xff]
    %v11530 = vld [vmem:[#allocation11 + $0x748] sm:$0xff]
    %v11531 = vld [vmem:[#allocation11 + $0x750] sm:$0xff]
    %v11532 = vld [vmem:[#allocation11 + $0x758] sm:$0xff]
    %v11533 = vld [vmem:[#allocation11 + $0x760] sm:$0xff]
    %v11534 = vld [vmem:[#allocation11 + $0x768] sm:$0xff]
    %v11535 = vld [vmem:[#allocation11 + $0x770] sm:$0xff]
    %v11536 = vld [vmem:[#allocation11 + $0x778] sm:$0xff]
    %v11537 = vld [vmem:[#allocation11 + $0x780] sm:$0xff]
    %v11538 = vld [vmem:[#allocation11 + $0x788] sm:$0xff]
    %v11539 = vld [vmem:[#allocation11 + $0x790] sm:$0xff]
    %v11540 = vld [vmem:[#allocation11 + $0x798] sm:$0xff]
    %v11541 = vld [vmem:[#allocation11 + $0x7a0] sm:$0xff]
    %v11542 = vld [vmem:[#allocation11 + $0x7a8] sm:$0xff]
    %v11543 = vld [vmem:[#allocation11 + $0x7b0] sm:$0xff]
    %v11544 = vld [vmem:[#allocation11 + $0x7b8] sm:$0xff]
    %v11545 = vld [vmem:[#allocation11 + $0x7c0] sm:$0xff]
    %v11546 = vld [vmem:[#allocation11 + $0x7c8] sm:$0xff]
    %v11547 = vld [vmem:[#allocation11 + $0x7d0] sm:$0xff]
    %v11548 = vld [vmem:[#allocation11 + $0x7d8] sm:$0xff]
    %v11549 = vld [vmem:[#allocation11 + $0x7e0] sm:$0xff]
    %v11550 = vld [vmem:[#allocation11 + $0x7e8] sm:$0xff]
    %v11551 = vld [vmem:[#allocation11 + $0x7f0] sm:$0xff]
    %v11552 = vld [vmem:[#allocation11 + $0x7f8] sm:$0xff]
    %s11553 = scalar_lea.vmem [#allocation13], 5
    %v11554 = vld [vmem:[%s11553] ss:$8 sm:$0xf]
    %v11556 = vlaneseq
    %v11557 = vshrl.u32 %v11556, 7
    %v11558 = vsub.s32 0, %v11557
    %v11559 = vrot.slane %v11554, %v11558
    %v11560 = vlaneseq
    %v11561 = vshrl.u32 %v11560, 7
    %v11562 = vsub.s32 1, %v11561
    %v11563 = vrot.slane %v11554, %v11562
    %v11564 = vlaneseq
    %v11565 = vshrl.u32 %v11564, 7
    %v11566 = vsub.s32 2, %v11565
    %v11567 = vrot.slane %v11554, %v11566
    %v11568 = vlaneseq
    %v11569 = vshrl.u32 %v11568, 7
    %v11570 = vsub.s32 3, %v11569
    %v11571 = vrot.slane %v11554, %v11570
    %v11832 = vunpack.c.l.b16 %v11297
    %v11833 = vunpack.c.h.b16 %v11297
    %v11834 = vunpack.c.l.b16 %v11298
    %v11835 = vunpack.c.h.b16 %v11298
    %v11836 = vunpack.c.l.b16 %v11299
    %v11837 = vunpack.c.h.b16 %v11299
    %v11838 = vunpack.c.l.b16 %v11300
    %v11839 = vunpack.c.h.b16 %v11300
    %v11840 = vunpack.c.l.b16 %v11301
    %v11841 = vunpack.c.h.b16 %v11301
    %v11842 = vunpack.c.l.b16 %v11302
    %v11843 = vunpack.c.h.b16 %v11302
    %v11844 = vunpack.c.l.b16 %v11303
    %v11845 = vunpack.c.h.b16 %v11303
    %v11846 = vunpack.c.l.b16 %v11304
    %v11847 = vunpack.c.h.b16 %v11304
    %v11848 = vunpack.c.l.b16 %v11305
    %v11849 = vunpack.c.h.b16 %v11305
    %v11850 = vunpack.c.l.b16 %v11306
    %v11851 = vunpack.c.h.b16 %v11306
    %v11852 = vunpack.c.l.b16 %v11307
    %v11853 = vunpack.c.h.b16 %v11307
    %v11854 = vunpack.c.l.b16 %v11308
    %v11855 = vunpack.c.h.b16 %v11308
    %v11856 = vunpack.c.l.b16 %v11309
    %v11857 = vunpack.c.h.b16 %v11309
    %v11858 = vunpack.c.l.b16 %v11310
    %v11859 = vunpack.c.h.b16 %v11310
    %v11860 = vunpack.c.l.b16 %v11311
    %v11861 = vunpack.c.h.b16 %v11311
    %v11862 = vunpack.c.l.b16 %v11312
    %v11863 = vunpack.c.h.b16 %v11312
    %v11864 = vunpack.c.l.b16 %v11313
    %v11865 = vunpack.c.h.b16 %v11313
    %v11866 = vunpack.c.l.b16 %v11314
    %v11867 = vunpack.c.h.b16 %v11314
    %v11868 = vunpack.c.l.b16 %v11315
    %v11869 = vunpack.c.h.b16 %v11315
    %v11870 = vunpack.c.l.b16 %v11316
    %v11871 = vunpack.c.h.b16 %v11316
    %v11872 = vunpack.c.l.b16 %v11317
    %v11873 = vunpack.c.h.b16 %v11317
    %v11874 = vunpack.c.l.b16 %v11318
    %v11875 = vunpack.c.h.b16 %v11318
    %v11876 = vunpack.c.l.b16 %v11319
    %v11877 = vunpack.c.h.b16 %v11319
    %v11878 = vunpack.c.l.b16 %v11320
    %v11879 = vunpack.c.h.b16 %v11320
    %v11880 = vunpack.c.l.b16 %v11321
    %v11881 = vunpack.c.h.b16 %v11321
    %v11882 = vunpack.c.l.b16 %v11322
    %v11883 = vunpack.c.h.b16 %v11322
    %v11884 = vunpack.c.l.b16 %v11323
    %v11885 = vunpack.c.h.b16 %v11323
    %v11886 = vunpack.c.l.b16 %v11324
    %v11887 = vunpack.c.h.b16 %v11324
    %v11888 = vunpack.c.l.b16 %v11325
    %v11889 = vunpack.c.h.b16 %v11325
    %v11890 = vunpack.c.l.b16 %v11326
    %v11891 = vunpack.c.h.b16 %v11326
    %v11892 = vunpack.c.l.b16 %v11327
    %v11893 = vunpack.c.h.b16 %v11327
    %v11894 = vunpack.c.l.b16 %v11328
    %v11895 = vunpack.c.h.b16 %v11328
    %v11896 = vunpack.c.l.b16 %v11329
    %v11897 = vunpack.c.h.b16 %v11329
    %v11898 = vunpack.c.l.b16 %v11330
    %v11899 = vunpack.c.h.b16 %v11330
    %v11900 = vunpack.c.l.b16 %v11331
    %v11901 = vunpack.c.h.b16 %v11331
    %v11902 = vunpack.c.l.b16 %v11332
    %v11903 = vunpack.c.h.b16 %v11332
    %v11904 = vunpack.c.l.b16 %v11333
    %v11905 = vunpack.c.h.b16 %v11333
    %v11906 = vunpack.c.l.b16 %v11334
    %v11907 = vunpack.c.h.b16 %v11334
    %v11908 = vunpack.c.l.b16 %v11335
    %v11909 = vunpack.c.h.b16 %v11335
    %v11910 = vunpack.c.l.b16 %v11336
    %v11911 = vunpack.c.h.b16 %v11336
    %v11912 = vunpack.c.l.b16 %v11337
    %v11913 = vunpack.c.h.b16 %v11337
    %v11914 = vunpack.c.l.b16 %v11338
    %v11915 = vunpack.c.h.b16 %v11338
    %v11916 = vunpack.c.l.b16 %v11339
    %v11917 = vunpack.c.h.b16 %v11339
    %v11918 = vunpack.c.l.b16 %v11340
    %v11919 = vunpack.c.h.b16 %v11340
    %v11920 = vunpack.c.l.b16 %v11341
    %v11921 = vunpack.c.h.b16 %v11341
    %v11922 = vunpack.c.l.b16 %v11342
    %v11923 = vunpack.c.h.b16 %v11342
    %v11924 = vunpack.c.l.b16 %v11343
    %v11925 = vunpack.c.h.b16 %v11343
    %v11926 = vunpack.c.l.b16 %v11344
    %v11927 = vunpack.c.h.b16 %v11344
    %v11928 = vunpack.c.l.b16 %v11345
    %v11929 = vunpack.c.h.b16 %v11345
    %v11930 = vunpack.c.l.b16 %v11346
    %v11931 = vunpack.c.h.b16 %v11346
    %v11932 = vunpack.c.l.b16 %v11347
    %v11933 = vunpack.c.h.b16 %v11347
    %v11934 = vunpack.c.l.b16 %v11348
    %v11935 = vunpack.c.h.b16 %v11348
    %v11936 = vunpack.c.l.b16 %v11349
    %v11937 = vunpack.c.h.b16 %v11349
    %v11938 = vunpack.c.l.b16 %v11350
    %v11939 = vunpack.c.h.b16 %v11350
    %v11940 = vunpack.c.l.b16 %v11351
    %v11941 = vunpack.c.h.b16 %v11351
    %v11942 = vunpack.c.l.b16 %v11352
    %v11943 = vunpack.c.h.b16 %v11352
    %v11944 = vunpack.c.l.b16 %v11353
    %v11945 = vunpack.c.h.b16 %v11353
    %v11946 = vunpack.c.l.b16 %v11354
    %v11947 = vunpack.c.h.b16 %v11354
    %v11948 = vunpack.c.l.b16 %v11355
    %v11949 = vunpack.c.h.b16 %v11355
    %v11950 = vunpack.c.l.b16 %v11356
    %v11951 = vunpack.c.h.b16 %v11356
    %v11952 = vunpack.c.l.b16 %v11357
    %v11953 = vunpack.c.h.b16 %v11357
    %v11954 = vunpack.c.l.b16 %v11358
    %v11955 = vunpack.c.h.b16 %v11358
    %v11956 = vunpack.c.l.b16 %v11359
    %v11957 = vunpack.c.h.b16 %v11359
    %v11958 = vunpack.c.l.b16 %v11360
    %v11959 = vunpack.c.h.b16 %v11360
    %v11960 = vunpack.c.l.b16 %v11361
    %v11961 = vunpack.c.h.b16 %v11361
    %v11962 = vunpack.c.l.b16 %v11362
    %v11963 = vunpack.c.h.b16 %v11362
    %v11964 = vunpack.c.l.b16 %v11363
    %v11965 = vunpack.c.h.b16 %v11363
    %v11966 = vunpack.c.l.b16 %v11364
    %v11967 = vunpack.c.h.b16 %v11364
    %v11968 = vunpack.c.l.b16 %v11365
    %v11969 = vunpack.c.h.b16 %v11365
    %v11970 = vunpack.c.l.b16 %v11366
    %v11971 = vunpack.c.h.b16 %v11366
    %v11972 = vunpack.c.l.b16 %v11367
    %v11973 = vunpack.c.h.b16 %v11367
    %v11974 = vunpack.c.l.b16 %v11368
    %v11975 = vunpack.c.h.b16 %v11368
    %v11976 = vunpack.c.l.b16 %v11369
    %v11977 = vunpack.c.h.b16 %v11369
    %v11978 = vunpack.c.l.b16 %v11370
    %v11979 = vunpack.c.h.b16 %v11370
    %v11980 = vunpack.c.l.b16 %v11371
    %v11981 = vunpack.c.h.b16 %v11371
    %v11982 = vunpack.c.l.b16 %v11372
    %v11983 = vunpack.c.h.b16 %v11372
    %v11984 = vunpack.c.l.b16 %v11373
    %v11985 = vunpack.c.h.b16 %v11373
    %v11986 = vunpack.c.l.b16 %v11374
    %v11987 = vunpack.c.h.b16 %v11374
    %v11988 = vunpack.c.l.b16 %v11375
    %v11989 = vunpack.c.h.b16 %v11375
    %v11990 = vunpack.c.l.b16 %v11376
    %v11991 = vunpack.c.h.b16 %v11376
    %v11992 = vunpack.c.l.b16 %v11377
    %v11993 = vunpack.c.h.b16 %v11377
    %v11994 = vunpack.c.l.b16 %v11378
    %v11995 = vunpack.c.h.b16 %v11378
    %v11996 = vunpack.c.l.b16 %v11379
    %v11997 = vunpack.c.h.b16 %v11379
    %v11998 = vunpack.c.l.b16 %v11380
    %v11999 = vunpack.c.h.b16 %v11380
    %v12000 = vunpack.c.l.b16 %v11381
    %v12001 = vunpack.c.h.b16 %v11381
    %v12002 = vunpack.c.l.b16 %v11382
    %v12003 = vunpack.c.h.b16 %v11382
    %v12004 = vunpack.c.l.b16 %v11383
    %v12005 = vunpack.c.h.b16 %v11383
    %v12006 = vunpack.c.l.b16 %v11384
    %v12007 = vunpack.c.h.b16 %v11384
    %v12008 = vunpack.c.l.b16 %v11385
    %v12009 = vunpack.c.h.b16 %v11385
    %v12010 = vunpack.c.l.b16 %v11386
    %v12011 = vunpack.c.h.b16 %v11386
    %v12012 = vunpack.c.l.b16 %v11387
    %v12013 = vunpack.c.h.b16 %v11387
    %v12014 = vunpack.c.l.b16 %v11388
    %v12015 = vunpack.c.h.b16 %v11388
    %v12016 = vunpack.c.l.b16 %v11389
    %v12017 = vunpack.c.h.b16 %v11389
    %v12018 = vunpack.c.l.b16 %v11390
    %v12019 = vunpack.c.h.b16 %v11390
    %v12020 = vunpack.c.l.b16 %v11391
    %v12021 = vunpack.c.h.b16 %v11391
    %v12022 = vunpack.c.l.b16 %v11392
    %v12023 = vunpack.c.h.b16 %v11392
    %v12024 = vunpack.c.l.b16 %v11393
    %v12025 = vunpack.c.h.b16 %v11393
    %v12026 = vunpack.c.l.b16 %v11394
    %v12027 = vunpack.c.h.b16 %v11394
    %v12028 = vunpack.c.l.b16 %v11395
    %v12029 = vunpack.c.h.b16 %v11395
    %v12030 = vunpack.c.l.b16 %v11396
    %v12031 = vunpack.c.h.b16 %v11396
    %v12032 = vunpack.c.l.b16 %v11397
    %v12033 = vunpack.c.h.b16 %v11397
    %v12034 = vunpack.c.l.b16 %v11398
    %v12035 = vunpack.c.h.b16 %v11398
    %v12036 = vunpack.c.l.b16 %v11399
    %v12037 = vunpack.c.h.b16 %v11399
    %v12038 = vunpack.c.l.b16 %v11400
    %v12039 = vunpack.c.h.b16 %v11400
    %v12040 = vunpack.c.l.b16 %v11401
    %v12041 = vunpack.c.h.b16 %v11401
    %v12042 = vunpack.c.l.b16 %v11402
    %v12043 = vunpack.c.h.b16 %v11402
    %v12044 = vunpack.c.l.b16 %v11403
    %v12045 = vunpack.c.h.b16 %v11403
    %v12046 = vunpack.c.l.b16 %v11404
    %v12047 = vunpack.c.h.b16 %v11404
    %v12048 = vunpack.c.l.b16 %v11405
    %v12049 = vunpack.c.h.b16 %v11405
    %v12050 = vunpack.c.l.b16 %v11406
    %v12051 = vunpack.c.h.b16 %v11406
    %v12052 = vunpack.c.l.b16 %v11407
    %v12053 = vunpack.c.h.b16 %v11407
    %v12054 = vunpack.c.l.b16 %v11408
    %v12055 = vunpack.c.h.b16 %v11408
    %v12056 = vunpack.c.l.b16 %v11409
    %v12057 = vunpack.c.h.b16 %v11409
    %v12058 = vunpack.c.l.b16 %v11410
    %v12059 = vunpack.c.h.b16 %v11410
    %v12060 = vunpack.c.l.b16 %v11411
    %v12061 = vunpack.c.h.b16 %v11411
    %v12062 = vunpack.c.l.b16 %v11412
    %v12063 = vunpack.c.h.b16 %v11412
    %v12064 = vunpack.c.l.b16 %v11413
    %v12065 = vunpack.c.h.b16 %v11413
    %v12066 = vunpack.c.l.b16 %v11414
    %v12067 = vunpack.c.h.b16 %v11414
    %v12068 = vunpack.c.l.b16 %v11415
    %v12069 = vunpack.c.h.b16 %v11415
    %v12070 = vunpack.c.l.b16 %v11416
    %v12071 = vunpack.c.h.b16 %v11416
    %v12072 = vunpack.c.l.b16 %v11417
    %v12073 = vunpack.c.h.b16 %v11417
    %v12074 = vunpack.c.l.b16 %v11418
    %v12075 = vunpack.c.h.b16 %v11418
    %v12076 = vunpack.c.l.b16 %v11419
    %v12077 = vunpack.c.h.b16 %v11419
    %v12078 = vunpack.c.l.b16 %v11420
    %v12079 = vunpack.c.h.b16 %v11420
    %v12080 = vunpack.c.l.b16 %v11421
    %v12081 = vunpack.c.h.b16 %v11421
    %v12082 = vunpack.c.l.b16 %v11422
    %v12083 = vunpack.c.h.b16 %v11422
    %v12084 = vunpack.c.l.b16 %v11423
    %v12085 = vunpack.c.h.b16 %v11423
    %v12086 = vunpack.c.l.b16 %v11424
    %v12087 = vunpack.c.h.b16 %v11424
    %v12088 = vunpack.c.l.b16 %v11425
    %v12089 = vunpack.c.h.b16 %v11425
    %v12090 = vunpack.c.l.b16 %v11426
    %v12091 = vunpack.c.h.b16 %v11426
    %v12092 = vunpack.c.l.b16 %v11427
    %v12093 = vunpack.c.h.b16 %v11427
    %v12094 = vunpack.c.l.b16 %v11428
    %v12095 = vunpack.c.h.b16 %v11428
    %v12096 = vunpack.c.l.b16 %v11429
    %v12097 = vunpack.c.h.b16 %v11429
    %v12098 = vunpack.c.l.b16 %v11430
    %v12099 = vunpack.c.h.b16 %v11430
    %v12100 = vunpack.c.l.b16 %v11431
    %v12101 = vunpack.c.h.b16 %v11431
    %v12102 = vunpack.c.l.b16 %v11432
    %v12103 = vunpack.c.h.b16 %v11432
    %v12104 = vunpack.c.l.b16 %v11433
    %v12105 = vunpack.c.h.b16 %v11433
    %v12106 = vunpack.c.l.b16 %v11434
    %v12107 = vunpack.c.h.b16 %v11434
    %v12108 = vunpack.c.l.b16 %v11435
    %v12109 = vunpack.c.h.b16 %v11435
    %v12110 = vunpack.c.l.b16 %v11436
    %v12111 = vunpack.c.h.b16 %v11436
    %v12112 = vunpack.c.l.b16 %v11437
    %v12113 = vunpack.c.h.b16 %v11437
    %v12114 = vunpack.c.l.b16 %v11438
    %v12115 = vunpack.c.h.b16 %v11438
    %v12116 = vunpack.c.l.b16 %v11439
    %v12117 = vunpack.c.h.b16 %v11439
    %v12118 = vunpack.c.l.b16 %v11440
    %v12119 = vunpack.c.h.b16 %v11440
    %v12120 = vunpack.c.l.b16 %v11441
    %v12121 = vunpack.c.h.b16 %v11441
    %v12122 = vunpack.c.l.b16 %v11442
    %v12123 = vunpack.c.h.b16 %v11442
    %v12124 = vunpack.c.l.b16 %v11443
    %v12125 = vunpack.c.h.b16 %v11443
    %v12126 = vunpack.c.l.b16 %v11444
    %v12127 = vunpack.c.h.b16 %v11444
    %v12128 = vunpack.c.l.b16 %v11445
    %v12129 = vunpack.c.h.b16 %v11445
    %v12130 = vunpack.c.l.b16 %v11446
    %v12131 = vunpack.c.h.b16 %v11446
    %v12132 = vunpack.c.l.b16 %v11447
    %v12133 = vunpack.c.h.b16 %v11447
    %v12134 = vunpack.c.l.b16 %v11448
    %v12135 = vunpack.c.h.b16 %v11448
    %v12136 = vunpack.c.l.b16 %v11449
    %v12137 = vunpack.c.h.b16 %v11449
    %v12138 = vunpack.c.l.b16 %v11450
    %v12139 = vunpack.c.h.b16 %v11450
    %v12140 = vunpack.c.l.b16 %v11451
    %v12141 = vunpack.c.h.b16 %v11451
    %v12142 = vunpack.c.l.b16 %v11452
    %v12143 = vunpack.c.h.b16 %v11452
    %v12144 = vunpack.c.l.b16 %v11453
    %v12145 = vunpack.c.h.b16 %v11453
    %v12146 = vunpack.c.l.b16 %v11454
    %v12147 = vunpack.c.h.b16 %v11454
    %v12148 = vunpack.c.l.b16 %v11455
    %v12149 = vunpack.c.h.b16 %v11455
    %v12150 = vunpack.c.l.b16 %v11456
    %v12151 = vunpack.c.h.b16 %v11456
    %v12152 = vunpack.c.l.b16 %v11457
    %v12153 = vunpack.c.h.b16 %v11457
    %v12154 = vunpack.c.l.b16 %v11458
    %v12155 = vunpack.c.h.b16 %v11458
    %v12156 = vunpack.c.l.b16 %v11459
    %v12157 = vunpack.c.h.b16 %v11459
    %v12158 = vunpack.c.l.b16 %v11460
    %v12159 = vunpack.c.h.b16 %v11460
    %v12160 = vunpack.c.l.b16 %v11461
    %v12161 = vunpack.c.h.b16 %v11461
    %v12162 = vunpack.c.l.b16 %v11462
    %v12163 = vunpack.c.h.b16 %v11462
    %v12164 = vunpack.c.l.b16 %v11463
    %v12165 = vunpack.c.h.b16 %v11463
    %v12166 = vunpack.c.l.b16 %v11464
    %v12167 = vunpack.c.h.b16 %v11464
    %v12168 = vunpack.c.l.b16 %v11465
    %v12169 = vunpack.c.h.b16 %v11465
    %v12170 = vunpack.c.l.b16 %v11466
    %v12171 = vunpack.c.h.b16 %v11466
    %v12172 = vunpack.c.l.b16 %v11467
    %v12173 = vunpack.c.h.b16 %v11467
    %v12174 = vunpack.c.l.b16 %v11468
    %v12175 = vunpack.c.h.b16 %v11468
    %v12176 = vunpack.c.l.b16 %v11469
    %v12177 = vunpack.c.h.b16 %v11469
    %v12178 = vunpack.c.l.b16 %v11470
    %v12179 = vunpack.c.h.b16 %v11470
    %v12180 = vunpack.c.l.b16 %v11471
    %v12181 = vunpack.c.h.b16 %v11471
    %v12182 = vunpack.c.l.b16 %v11472
    %v12183 = vunpack.c.h.b16 %v11472
    %v12184 = vunpack.c.l.b16 %v11473
    %v12185 = vunpack.c.h.b16 %v11473
    %v12186 = vunpack.c.l.b16 %v11474
    %v12187 = vunpack.c.h.b16 %v11474
    %v12188 = vunpack.c.l.b16 %v11475
    %v12189 = vunpack.c.h.b16 %v11475
    %v12190 = vunpack.c.l.b16 %v11476
    %v12191 = vunpack.c.h.b16 %v11476
    %v12192 = vunpack.c.l.b16 %v11477
    %v12193 = vunpack.c.h.b16 %v11477
    %v12194 = vunpack.c.l.b16 %v11478
    %v12195 = vunpack.c.h.b16 %v11478
    %v12196 = vunpack.c.l.b16 %v11479
    %v12197 = vunpack.c.h.b16 %v11479
    %v12198 = vunpack.c.l.b16 %v11480
    %v12199 = vunpack.c.h.b16 %v11480
    %v12200 = vunpack.c.l.b16 %v11481
    %v12201 = vunpack.c.h.b16 %v11481
    %v12202 = vunpack.c.l.b16 %v11482
    %v12203 = vunpack.c.h.b16 %v11482
    %v12204 = vunpack.c.l.b16 %v11483
    %v12205 = vunpack.c.h.b16 %v11483
    %v12206 = vunpack.c.l.b16 %v11484
    %v12207 = vunpack.c.h.b16 %v11484
    %v12208 = vunpack.c.l.b16 %v11485
    %v12209 = vunpack.c.h.b16 %v11485
    %v12210 = vunpack.c.l.b16 %v11486
    %v12211 = vunpack.c.h.b16 %v11486
    %v12212 = vunpack.c.l.b16 %v11487
    %v12213 = vunpack.c.h.b16 %v11487
    %v12214 = vunpack.c.l.b16 %v11488
    %v12215 = vunpack.c.h.b16 %v11488
    %v12216 = vunpack.c.l.b16 %v11489
    %v12217 = vunpack.c.h.b16 %v11489
    %v12218 = vunpack.c.l.b16 %v11490
    %v12219 = vunpack.c.h.b16 %v11490
    %v12220 = vunpack.c.l.b16 %v11491
    %v12221 = vunpack.c.h.b16 %v11491
    %v12222 = vunpack.c.l.b16 %v11492
    %v12223 = vunpack.c.h.b16 %v11492
    %v12224 = vunpack.c.l.b16 %v11493
    %v12225 = vunpack.c.h.b16 %v11493
    %v12226 = vunpack.c.l.b16 %v11494
    %v12227 = vunpack.c.h.b16 %v11494
    %v12228 = vunpack.c.l.b16 %v11495
    %v12229 = vunpack.c.h.b16 %v11495
    %v12230 = vunpack.c.l.b16 %v11496
    %v12231 = vunpack.c.h.b16 %v11496
    %v12232 = vunpack.c.l.b16 %v11497
    %v12233 = vunpack.c.h.b16 %v11497
    %v12234 = vunpack.c.l.b16 %v11498
    %v12235 = vunpack.c.h.b16 %v11498
    %v12236 = vunpack.c.l.b16 %v11499
    %v12237 = vunpack.c.h.b16 %v11499
    %v12238 = vunpack.c.l.b16 %v11500
    %v12239 = vunpack.c.h.b16 %v11500
    %v12240 = vunpack.c.l.b16 %v11501
    %v12241 = vunpack.c.h.b16 %v11501
    %v12242 = vunpack.c.l.b16 %v11502
    %v12243 = vunpack.c.h.b16 %v11502
    %v12244 = vunpack.c.l.b16 %v11503
    %v12245 = vunpack.c.h.b16 %v11503
    %v12246 = vunpack.c.l.b16 %v11504
    %v12247 = vunpack.c.h.b16 %v11504
    %v12248 = vunpack.c.l.b16 %v11505
    %v12249 = vunpack.c.h.b16 %v11505
    %v12250 = vunpack.c.l.b16 %v11506
    %v12251 = vunpack.c.h.b16 %v11506
    %v12252 = vunpack.c.l.b16 %v11507
    %v12253 = vunpack.c.h.b16 %v11507
    %v12254 = vunpack.c.l.b16 %v11508
    %v12255 = vunpack.c.h.b16 %v11508
    %v12256 = vunpack.c.l.b16 %v11509
    %v12257 = vunpack.c.h.b16 %v11509
    %v12258 = vunpack.c.l.b16 %v11510
    %v12259 = vunpack.c.h.b16 %v11510
    %v12260 = vunpack.c.l.b16 %v11511
    %v12261 = vunpack.c.h.b16 %v11511
    %v12262 = vunpack.c.l.b16 %v11512
    %v12263 = vunpack.c.h.b16 %v11512
    %v12264 = vunpack.c.l.b16 %v11513
    %v12265 = vunpack.c.h.b16 %v11513
    %v12266 = vunpack.c.l.b16 %v11514
    %v12267 = vunpack.c.h.b16 %v11514
    %v12268 = vunpack.c.l.b16 %v11515
    %v12269 = vunpack.c.h.b16 %v11515
    %v12270 = vunpack.c.l.b16 %v11516
    %v12271 = vunpack.c.h.b16 %v11516
    %v12272 = vunpack.c.l.b16 %v11517
    %v12273 = vunpack.c.h.b16 %v11517
    %v12274 = vunpack.c.l.b16 %v11518
    %v12275 = vunpack.c.h.b16 %v11518
    %v12276 = vunpack.c.l.b16 %v11519
    %v12277 = vunpack.c.h.b16 %v11519
    %v12278 = vunpack.c.l.b16 %v11520
    %v12279 = vunpack.c.h.b16 %v11520
    %v12280 = vunpack.c.l.b16 %v11521
    %v12281 = vunpack.c.h.b16 %v11521
    %v12282 = vunpack.c.l.b16 %v11522
    %v12283 = vunpack.c.h.b16 %v11522
    %v12284 = vunpack.c.l.b16 %v11523
    %v12285 = vunpack.c.h.b16 %v11523
    %v12286 = vunpack.c.l.b16 %v11524
    %v12287 = vunpack.c.h.b16 %v11524
    %v12288 = vunpack.c.l.b16 %v11525
    %v12289 = vunpack.c.h.b16 %v11525
    %v12290 = vunpack.c.l.b16 %v11526
    %v12291 = vunpack.c.h.b16 %v11526
    %v12292 = vunpack.c.l.b16 %v11527
    %v12293 = vunpack.c.h.b16 %v11527
    %v12294 = vunpack.c.l.b16 %v11528
    %v12295 = vunpack.c.h.b16 %v11528
    %v12296 = vunpack.c.l.b16 %v11529
    %v12297 = vunpack.c.h.b16 %v11529
    %v12298 = vunpack.c.l.b16 %v11530
    %v12299 = vunpack.c.h.b16 %v11530
    %v12300 = vunpack.c.l.b16 %v11531
    %v12301 = vunpack.c.h.b16 %v11531
    %v12302 = vunpack.c.l.b16 %v11532
    %v12303 = vunpack.c.h.b16 %v11532
    %v12304 = vunpack.c.l.b16 %v11533
    %v12305 = vunpack.c.h.b16 %v11533
    %v12306 = vunpack.c.l.b16 %v11534
    %v12307 = vunpack.c.h.b16 %v11534
    %v12308 = vunpack.c.l.b16 %v11535
    %v12309 = vunpack.c.h.b16 %v11535
    %v12310 = vunpack.c.l.b16 %v11536
    %v12311 = vunpack.c.h.b16 %v11536
    %v12312 = vunpack.c.l.b16 %v11537
    %v12313 = vunpack.c.h.b16 %v11537
    %v12314 = vunpack.c.l.b16 %v11538
    %v12315 = vunpack.c.h.b16 %v11538
    %v12316 = vunpack.c.l.b16 %v11539
    %v12317 = vunpack.c.h.b16 %v11539
    %v12318 = vunpack.c.l.b16 %v11540
    %v12319 = vunpack.c.h.b16 %v11540
    %v12320 = vunpack.c.l.b16 %v11541
    %v12321 = vunpack.c.h.b16 %v11541
    %v12322 = vunpack.c.l.b16 %v11542
    %v12323 = vunpack.c.h.b16 %v11542
    %v12324 = vunpack.c.l.b16 %v11543
    %v12325 = vunpack.c.h.b16 %v11543
    %v12326 = vunpack.c.l.b16 %v11544
    %v12327 = vunpack.c.h.b16 %v11544
    %v12328 = vunpack.c.l.b16 %v11545
    %v12329 = vunpack.c.h.b16 %v11545
    %v12330 = vunpack.c.l.b16 %v11546
    %v12331 = vunpack.c.h.b16 %v11546
    %v12332 = vunpack.c.l.b16 %v11547
    %v12333 = vunpack.c.h.b16 %v11547
    %v12334 = vunpack.c.l.b16 %v11548
    %v12335 = vunpack.c.h.b16 %v11548
    %v12336 = vunpack.c.l.b16 %v11549
    %v12337 = vunpack.c.h.b16 %v11549
    %v12338 = vunpack.c.l.b16 %v11550
    %v12339 = vunpack.c.h.b16 %v11550
    %v12340 = vunpack.c.l.b16 %v11551
    %v12341 = vunpack.c.h.b16 %v11551
    %v12342 = vunpack.c.l.b16 %v11552
    %v12343 = vunpack.c.h.b16 %v11552
    %v12344 = vpack.c.b16 %v11836, %v11832
    %v12345 = vpack.c.b16 %v11837, %v11833
    %v12346 = vpack.c.b16 %v11838, %v11834
    %v12347 = vpack.c.b16 %v11839, %v11835
    %v12348 = vpack.c.b16 %v11844, %v11840
    %v12349 = vpack.c.b16 %v11845, %v11841
    %v12350 = vpack.c.b16 %v11846, %v11842
    %v12351 = vpack.c.b16 %v11847, %v11843
    %v12352 = vpack.c.b16 %v11852, %v11848
    %v12353 = vpack.c.b16 %v11853, %v11849
    %v12354 = vpack.c.b16 %v11854, %v11850
    %v12355 = vpack.c.b16 %v11855, %v11851
    %v12356 = vpack.c.b16 %v11860, %v11856
    %v12357 = vpack.c.b16 %v11861, %v11857
    %v12358 = vpack.c.b16 %v11862, %v11858
    %v12359 = vpack.c.b16 %v11863, %v11859
    %v12360 = vpack.c.b16 %v11868, %v11864
    %v12361 = vpack.c.b16 %v11869, %v11865
    %v12362 = vpack.c.b16 %v11870, %v11866
    %v12363 = vpack.c.b16 %v11871, %v11867
    %v12364 = vpack.c.b16 %v11876, %v11872
    %v12365 = vpack.c.b16 %v11877, %v11873
    %v12366 = vpack.c.b16 %v11878, %v11874
    %v12367 = vpack.c.b16 %v11879, %v11875
    %v12368 = vpack.c.b16 %v11884, %v11880
    %v12369 = vpack.c.b16 %v11885, %v11881
    %v12370 = vpack.c.b16 %v11886, %v11882
    %v12371 = vpack.c.b16 %v11887, %v11883
    %v12372 = vpack.c.b16 %v11892, %v11888
    %v12373 = vpack.c.b16 %v11893, %v11889
    %v12374 = vpack.c.b16 %v11894, %v11890
    %v12375 = vpack.c.b16 %v11895, %v11891
    %v12376 = vpack.c.b16 %v11900, %v11896
    %v12377 = vpack.c.b16 %v11901, %v11897
    %v12378 = vpack.c.b16 %v11902, %v11898
    %v12379 = vpack.c.b16 %v11903, %v11899
    %v12380 = vpack.c.b16 %v11908, %v11904
    %v12381 = vpack.c.b16 %v11909, %v11905
    %v12382 = vpack.c.b16 %v11910, %v11906
    %v12383 = vpack.c.b16 %v11911, %v11907
    %v12384 = vpack.c.b16 %v11916, %v11912
    %v12385 = vpack.c.b16 %v11917, %v11913
    %v12386 = vpack.c.b16 %v11918, %v11914
    %v12387 = vpack.c.b16 %v11919, %v11915
    %v12388 = vpack.c.b16 %v11924, %v11920
    %v12389 = vpack.c.b16 %v11925, %v11921
    %v12390 = vpack.c.b16 %v11926, %v11922
    %v12391 = vpack.c.b16 %v11927, %v11923
    %v12392 = vpack.c.b16 %v11932, %v11928
    %v12393 = vpack.c.b16 %v11933, %v11929
    %v12394 = vpack.c.b16 %v11934, %v11930
    %v12395 = vpack.c.b16 %v11935, %v11931
    %v12396 = vpack.c.b16 %v11940, %v11936
    %v12397 = vpack.c.b16 %v11941, %v11937
    %v12398 = vpack.c.b16 %v11942, %v11938
    %v12399 = vpack.c.b16 %v11943, %v11939
    %v12400 = vpack.c.b16 %v11948, %v11944
    %v12401 = vpack.c.b16 %v11949, %v11945
    %v12402 = vpack.c.b16 %v11950, %v11946
    %v12403 = vpack.c.b16 %v11951, %v11947
    %v12404 = vpack.c.b16 %v11956, %v11952
    %v12405 = vpack.c.b16 %v11957, %v11953
    %v12406 = vpack.c.b16 %v11958, %v11954
    %v12407 = vpack.c.b16 %v11959, %v11955
    %v12408 = vpack.c.b16 %v11964, %v11960
    %v12409 = vpack.c.b16 %v11965, %v11961
    %v12410 = vpack.c.b16 %v11966, %v11962
    %v12411 = vpack.c.b16 %v11967, %v11963
    %v12412 = vpack.c.b16 %v11972, %v11968
    %v12413 = vpack.c.b16 %v11973, %v11969
    %v12414 = vpack.c.b16 %v11974, %v11970
    %v12415 = vpack.c.b16 %v11975, %v11971
    %v12416 = vpack.c.b16 %v11980, %v11976
    %v12417 = vpack.c.b16 %v11981, %v11977
    %v12418 = vpack.c.b16 %v11982, %v11978
    %v12419 = vpack.c.b16 %v11983, %v11979
    %v12420 = vpack.c.b16 %v11988, %v11984
    %v12421 = vpack.c.b16 %v11989, %v11985
    %v12422 = vpack.c.b16 %v11990, %v11986
    %v12423 = vpack.c.b16 %v11991, %v11987
    %v12424 = vpack.c.b16 %v11996, %v11992
    %v12425 = vpack.c.b16 %v11997, %v11993
    %v12426 = vpack.c.b16 %v11998, %v11994
    %v12427 = vpack.c.b16 %v11999, %v11995
    %v12428 = vpack.c.b16 %v12004, %v12000
    %v12429 = vpack.c.b16 %v12005, %v12001
    %v12430 = vpack.c.b16 %v12006, %v12002
    %v12431 = vpack.c.b16 %v12007, %v12003
    %v12432 = vpack.c.b16 %v12012, %v12008
    %v12433 = vpack.c.b16 %v12013, %v12009
    %v12434 = vpack.c.b16 %v12014, %v12010
    %v12435 = vpack.c.b16 %v12015, %v12011
    %v12436 = vpack.c.b16 %v12020, %v12016
    %v12437 = vpack.c.b16 %v12021, %v12017
    %v12438 = vpack.c.b16 %v12022, %v12018
    %v12439 = vpack.c.b16 %v12023, %v12019
    %v12440 = vpack.c.b16 %v12028, %v12024
    %v12441 = vpack.c.b16 %v12029, %v12025
    %v12442 = vpack.c.b16 %v12030, %v12026
    %v12443 = vpack.c.b16 %v12031, %v12027
    %v12444 = vpack.c.b16 %v12036, %v12032
    %v12445 = vpack.c.b16 %v12037, %v12033
    %v12446 = vpack.c.b16 %v12038, %v12034
    %v12447 = vpack.c.b16 %v12039, %v12035
    %v12448 = vpack.c.b16 %v12044, %v12040
    %v12449 = vpack.c.b16 %v12045, %v12041
    %v12450 = vpack.c.b16 %v12046, %v12042
    %v12451 = vpack.c.b16 %v12047, %v12043
    %v12452 = vpack.c.b16 %v12052, %v12048
    %v12453 = vpack.c.b16 %v12053, %v12049
    %v12454 = vpack.c.b16 %v12054, %v12050
    %v12455 = vpack.c.b16 %v12055, %v12051
    %v12456 = vpack.c.b16 %v12060, %v12056
    %v12457 = vpack.c.b16 %v12061, %v12057
    %v12458 = vpack.c.b16 %v12062, %v12058
    %v12459 = vpack.c.b16 %v12063, %v12059
    %v12460 = vpack.c.b16 %v12068, %v12064
    %v12461 = vpack.c.b16 %v12069, %v12065
    %v12462 = vpack.c.b16 %v12070, %v12066
    %v12463 = vpack.c.b16 %v12071, %v12067
    %v12464 = vpack.c.b16 %v12076, %v12072
    %v12465 = vpack.c.b16 %v12077, %v12073
    %v12466 = vpack.c.b16 %v12078, %v12074
    %v12467 = vpack.c.b16 %v12079, %v12075
    %v12468 = vpack.c.b16 %v12084, %v12080
    %v12469 = vpack.c.b16 %v12085, %v12081
    %v12470 = vpack.c.b16 %v12086, %v12082
    %v12471 = vpack.c.b16 %v12087, %v12083
    %v12472 = vpack.c.b16 %v12092, %v12088
    %v12473 = vpack.c.b16 %v12093, %v12089
    %v12474 = vpack.c.b16 %v12094, %v12090
    %v12475 = vpack.c.b16 %v12095, %v12091
    %v12476 = vpack.c.b16 %v12100, %v12096
    %v12477 = vpack.c.b16 %v12101, %v12097
    %v12478 = vpack.c.b16 %v12102, %v12098
    %v12479 = vpack.c.b16 %v12103, %v12099
    %v12480 = vpack.c.b16 %v12108, %v12104
    %v12481 = vpack.c.b16 %v12109, %v12105
    %v12482 = vpack.c.b16 %v12110, %v12106
    %v12483 = vpack.c.b16 %v12111, %v12107
    %v12484 = vpack.c.b16 %v12116, %v12112
    %v12485 = vpack.c.b16 %v12117, %v12113
    %v12486 = vpack.c.b16 %v12118, %v12114
    %v12487 = vpack.c.b16 %v12119, %v12115
    %v12488 = vpack.c.b16 %v12124, %v12120
    %v12489 = vpack.c.b16 %v12125, %v12121
    %v12490 = vpack.c.b16 %v12126, %v12122
    %v12491 = vpack.c.b16 %v12127, %v12123
    %v12492 = vpack.c.b16 %v12132, %v12128
    %v12493 = vpack.c.b16 %v12133, %v12129
    %v12494 = vpack.c.b16 %v12134, %v12130
    %v12495 = vpack.c.b16 %v12135, %v12131
    %v12496 = vpack.c.b16 %v12140, %v12136
    %v12497 = vpack.c.b16 %v12141, %v12137
    %v12498 = vpack.c.b16 %v12142, %v12138
    %v12499 = vpack.c.b16 %v12143, %v12139
    %v12500 = vpack.c.b16 %v12148, %v12144
    %v12501 = vpack.c.b16 %v12149, %v12145
    %v12502 = vpack.c.b16 %v12150, %v12146
    %v12503 = vpack.c.b16 %v12151, %v12147
    %v12504 = vpack.c.b16 %v12156, %v12152
    %v12505 = vpack.c.b16 %v12157, %v12153
    %v12506 = vpack.c.b16 %v12158, %v12154
    %v12507 = vpack.c.b16 %v12159, %v12155
    %v12508 = vpack.c.b16 %v12164, %v12160
    %v12509 = vpack.c.b16 %v12165, %v12161
    %v12510 = vpack.c.b16 %v12166, %v12162
    %v12511 = vpack.c.b16 %v12167, %v12163
    %v12512 = vpack.c.b16 %v12172, %v12168
    %v12513 = vpack.c.b16 %v12173, %v12169
    %v12514 = vpack.c.b16 %v12174, %v12170
    %v12515 = vpack.c.b16 %v12175, %v12171
    %v12516 = vpack.c.b16 %v12180, %v12176
    %v12517 = vpack.c.b16 %v12181, %v12177
    %v12518 = vpack.c.b16 %v12182, %v12178
    %v12519 = vpack.c.b16 %v12183, %v12179
    %v12520 = vpack.c.b16 %v12188, %v12184
    %v12521 = vpack.c.b16 %v12189, %v12185
    %v12522 = vpack.c.b16 %v12190, %v12186
    %v12523 = vpack.c.b16 %v12191, %v12187
    %v12524 = vpack.c.b16 %v12196, %v12192
    %v12525 = vpack.c.b16 %v12197, %v12193
    %v12526 = vpack.c.b16 %v12198, %v12194
    %v12527 = vpack.c.b16 %v12199, %v12195
    %v12528 = vpack.c.b16 %v12204, %v12200
    %v12529 = vpack.c.b16 %v12205, %v12201
    %v12530 = vpack.c.b16 %v12206, %v12202
    %v12531 = vpack.c.b16 %v12207, %v12203
    %v12532 = vpack.c.b16 %v12212, %v12208
    %v12533 = vpack.c.b16 %v12213, %v12209
    %v12534 = vpack.c.b16 %v12214, %v12210
    %v12535 = vpack.c.b16 %v12215, %v12211
    %v12536 = vpack.c.b16 %v12220, %v12216
    %v12537 = vpack.c.b16 %v12221, %v12217
    %v12538 = vpack.c.b16 %v12222, %v12218
    %v12539 = vpack.c.b16 %v12223, %v12219
    %v12540 = vpack.c.b16 %v12228, %v12224
    %v12541 = vpack.c.b16 %v12229, %v12225
    %v12542 = vpack.c.b16 %v12230, %v12226
    %v12543 = vpack.c.b16 %v12231, %v12227
    %v12544 = vpack.c.b16 %v12236, %v12232
    %v12545 = vpack.c.b16 %v12237, %v12233
    %v12546 = vpack.c.b16 %v12238, %v12234
    %v12547 = vpack.c.b16 %v12239, %v12235
    %v12548 = vpack.c.b16 %v12244, %v12240
    %v12549 = vpack.c.b16 %v12245, %v12241
    %v12550 = vpack.c.b16 %v12246, %v12242
    %v12551 = vpack.c.b16 %v12247, %v12243
    %v12552 = vpack.c.b16 %v12252, %v12248
    %v12553 = vpack.c.b16 %v12253, %v12249
    %v12554 = vpack.c.b16 %v12254, %v12250
    %v12555 = vpack.c.b16 %v12255, %v12251
    %v12556 = vpack.c.b16 %v12260, %v12256
    %v12557 = vpack.c.b16 %v12261, %v12257
    %v12558 = vpack.c.b16 %v12262, %v12258
    %v12559 = vpack.c.b16 %v12263, %v12259
    %v12560 = vpack.c.b16 %v12268, %v12264
    %v12561 = vpack.c.b16 %v12269, %v12265
    %v12562 = vpack.c.b16 %v12270, %v12266
    %v12563 = vpack.c.b16 %v12271, %v12267
    %v12564 = vpack.c.b16 %v12276, %v12272
    %v12565 = vpack.c.b16 %v12277, %v12273
    %v12566 = vpack.c.b16 %v12278, %v12274
    %v12567 = vpack.c.b16 %v12279, %v12275
    %v12568 = vpack.c.b16 %v12284, %v12280
    %v12569 = vpack.c.b16 %v12285, %v12281
    %v12570 = vpack.c.b16 %v12286, %v12282
    %v12571 = vpack.c.b16 %v12287, %v12283
    %v12572 = vpack.c.b16 %v12292, %v12288
    %v12573 = vpack.c.b16 %v12293, %v12289
    %v12574 = vpack.c.b16 %v12294, %v12290
    %v12575 = vpack.c.b16 %v12295, %v12291
    %v12576 = vpack.c.b16 %v12300, %v12296
    %v12577 = vpack.c.b16 %v12301, %v12297
    %v12578 = vpack.c.b16 %v12302, %v12298
    %v12579 = vpack.c.b16 %v12303, %v12299
    %v12580 = vpack.c.b16 %v12308, %v12304
    %v12581 = vpack.c.b16 %v12309, %v12305
    %v12582 = vpack.c.b16 %v12310, %v12306
    %v12583 = vpack.c.b16 %v12311, %v12307
    %v12584 = vpack.c.b16 %v12316, %v12312
    %v12585 = vpack.c.b16 %v12317, %v12313
    %v12586 = vpack.c.b16 %v12318, %v12314
    %v12587 = vpack.c.b16 %v12319, %v12315
    %v12588 = vpack.c.b16 %v12324, %v12320
    %v12589 = vpack.c.b16 %v12325, %v12321
    %v12590 = vpack.c.b16 %v12326, %v12322
    %v12591 = vpack.c.b16 %v12327, %v12323
    %v12592 = vpack.c.b16 %v12332, %v12328
    %v12593 = vpack.c.b16 %v12333, %v12329
    %v12594 = vpack.c.b16 %v12334, %v12330
    %v12595 = vpack.c.b16 %v12335, %v12331
    %v12596 = vpack.c.b16 %v12340, %v12336
    %v12597 = vpack.c.b16 %v12341, %v12337
    %v12598 = vpack.c.b16 %v12342, %v12338
    %v12599 = vpack.c.b16 %v12343, %v12339
    %12856 = vmatprep.subr.bf16.mxu0 %v12345
    %12857 = vmatpush1.bf16.msra.mxu0 %v12344
    %12858 = vmatprep.subr.bf16.mxu0 %v12349
    %12859 = vmatpush1.bf16.msra.mxu0 %v12348
    %12860 = vmatprep.subr.bf16.mxu0 %v12353
    %12861 = vmatpush1.bf16.msra.mxu0 %v12352
    %12862 = vmatprep.subr.bf16.mxu0 %v12357
    %12863 = vmatpush1.bf16.msra.mxu0 %v12356
    %12864 = vmatprep.subr.bf16.mxu0 %v12361
    %12865 = vmatpush1.bf16.msra.mxu0 %v12360
    %12866 = vmatprep.subr.bf16.mxu0 %v12365
    %12867 = vmatpush1.bf16.msra.mxu0 %v12364
    %12868 = vmatprep.subr.bf16.mxu0 %v12369
    %12869 = vmatpush1.bf16.msra.mxu0 %v12368
    %12870 = vmatprep.subr.bf16.mxu0 %v12373
    %12871 = vmatpush1.bf16.msra.mxu0 %v12372
    %12872 = vmatprep.subr.bf16.mxu0 %v12377
    %12873 = vmatpush1.bf16.msra.mxu0 %v12376
    %12874 = vmatprep.subr.bf16.mxu0 %v12381
    %12875 = vmatpush1.bf16.msra.mxu0 %v12380
    %12876 = vmatprep.subr.bf16.mxu0 %v12385
    %12877 = vmatpush1.bf16.msra.mxu0 %v12384
    %12878 = vmatprep.subr.bf16.mxu0 %v12389
    %12879 = vmatpush1.bf16.msra.mxu0 %v12388
    %12880 = vmatprep.subr.bf16.mxu0 %v12393
    %12881 = vmatpush1.bf16.msra.mxu0 %v12392
    %12882 = vmatprep.subr.bf16.mxu0 %v12397
    %12883 = vmatpush1.bf16.msra.mxu0 %v12396
    %12884 = vmatprep.subr.bf16.mxu0 %v12401
    %12885 = vmatpush1.bf16.msra.mxu0 %v12400
    %12886 = vmatprep.subr.bf16.mxu0 %v12405
    %12887 = vmatpush1.bf16.msra.mxu0 %v12404
    %12888 = vmatprep.mubr.bf16.mxu0 %v11290
    %12889 = vmatmul.mubr.bf16.gmra.mrb[0].mxu0 %v11289
    %v12890 = vpop.f32.mrb[0].mxu0
    %v12891 = vadd.f32 %v11559, %v12890
    %v12892 = vpop.f32.mrb[0].mxu0
    %v12893 = vadd.f32 %v11563, %v12892
    %v12894 = vpop.f32.mrb[0].mxu0
    %v12895 = vpop.f32.mrb[0].mxu0
    %12896 = vdwg.mxu0
    %12897 = vmatprep.subr.bf16.mxu0 %v12409
    %12898 = vmatpush1.bf16.msra.mxu0 %v12408
    %12899 = vmatprep.subr.bf16.mxu0 %v12413
    %12900 = vmatpush1.bf16.msra.mxu0 %v12412
    %12901 = vmatprep.subr.bf16.mxu0 %v12417
    %12902 = vmatpush1.bf16.msra.mxu0 %v12416
    %12903 = vmatprep.subr.bf16.mxu0 %v12421
    %12904 = vmatpush1.bf16.msra.mxu0 %v12420
    %12905 = vmatprep.subr.bf16.mxu0 %v12425
    %12906 = vmatpush1.bf16.msra.mxu0 %v12424
    %12907 = vmatprep.subr.bf16.mxu0 %v12429
    %12908 = vmatpush1.bf16.msra.mxu0 %v12428
    %12909 = vmatprep.subr.bf16.mxu0 %v12433
    %12910 = vmatpush1.bf16.msra.mxu0 %v12432
    %12911 = vmatprep.subr.bf16.mxu0 %v12437
    %12912 = vmatpush1.bf16.msra.mxu0 %v12436
    %12913 = vmatprep.subr.bf16.mxu0 %v12441
    %12914 = vmatpush1.bf16.msra.mxu0 %v12440
    %12915 = vmatprep.subr.bf16.mxu0 %v12445
    %12916 = vmatpush1.bf16.msra.mxu0 %v12444
    %12917 = vmatprep.subr.bf16.mxu0 %v12449
    %12918 = vmatpush1.bf16.msra.mxu0 %v12448
    %12919 = vmatprep.subr.bf16.mxu0 %v12453
    %12920 = vmatpush1.bf16.msra.mxu0 %v12452
    %12921 = vmatprep.subr.bf16.mxu0 %v12457
    %12922 = vmatpush1.bf16.msra.mxu0 %v12456
    %12923 = vmatprep.subr.bf16.mxu0 %v12461
    %12924 = vmatpush1.bf16.msra.mxu0 %v12460
    %12925 = vmatprep.subr.bf16.mxu0 %v12465
    %12926 = vmatpush1.bf16.msra.mxu0 %v12464
    %12927 = vmatprep.subr.bf16.mxu0 %v12469
    %12928 = vmatpush1.bf16.msra.mxu0 %v12468
    %12929 = vmatprep.mubr.bf16.mxu0 %v11292
    %12930 = vmatmul.mubr.bf16.gmra.mrb[0].mxu0 %v11291
    %v12931 = vpop.f32.mrb[0].mxu0
    %v12932 = vadd.f32 %v12891, %v12931
    %v12933 = vpop.f32.mrb[0].mxu0
    %v12934 = vadd.f32 %v12893, %v12933
    %v12935 = vpop.f32.mrb[0].mxu0
    %v12936 = vpop.f32.mrb[0].mxu0
    %12937 = vdwg.mxu0
    %12938 = vmatprep.subr.bf16.mxu0 %v12473
    %12939 = vmatpush1.bf16.msra.mxu0 %v12472
    %12940 = vmatprep.subr.bf16.mxu0 %v12477
    %12941 = vmatpush1.bf16.msra.mxu0 %v12476
    %12942 = vmatprep.subr.bf16.mxu0 %v12481
    %12943 = vmatpush1.bf16.msra.mxu0 %v12480
    %12944 = vmatprep.subr.bf16.mxu0 %v12485
    %12945 = vmatpush1.bf16.msra.mxu0 %v12484
    %12946 = vmatprep.subr.bf16.mxu0 %v12489
    %12947 = vmatpush1.bf16.msra.mxu0 %v12488
    %12948 = vmatprep.subr.bf16.mxu0 %v12493
    %12949 = vmatpush1.bf16.msra.mxu0 %v12492
    %12950 = vmatprep.subr.bf16.mxu0 %v12497
    %12951 = vmatpush1.bf16.msra.mxu0 %v12496
    %12952 = vmatprep.subr.bf16.mxu0 %v12501
    %12953 = vmatpush1.bf16.msra.mxu0 %v12500
    %12954 = vmatprep.subr.bf16.mxu0 %v12505
    %12955 = vmatpush1.bf16.msra.mxu0 %v12504
    %12956 = vmatprep.subr.bf16.mxu0 %v12509
    %12957 = vmatpush1.bf16.msra.mxu0 %v12508
    %12958 = vmatprep.subr.bf16.mxu0 %v12513
    %12959 = vmatpush1.bf16.msra.mxu0 %v12512
    %12960 = vmatprep.subr.bf16.mxu0 %v12517
    %12961 = vmatpush1.bf16.msra.mxu0 %v12516
    %12962 = vmatprep.subr.bf16.mxu0 %v12521
    %12963 = vmatpush1.bf16.msra.mxu0 %v12520
    %12964 = vmatprep.subr.bf16.mxu0 %v12525
    %12965 = vmatpush1.bf16.msra.mxu0 %v12524
    %12966 = vmatprep.subr.bf16.mxu0 %v12529
    %12967 = vmatpush1.bf16.msra.mxu0 %v12528
    %12968 = vmatprep.subr.bf16.mxu0 %v12533
    %12969 = vmatpush1.bf16.msra.mxu0 %v12532
    %12970 = vmatprep.mubr.bf16.mxu0 %v11294
    %12971 = vmatmul.mubr.bf16.gmra.mrb[0].mxu0 %v11293
    %v12972 = vpop.f32.mrb[0].mxu0
    %v12973 = vadd.f32 %v12932, %v12972
    %v12974 = vpop.f32.mrb[0].mxu0
    %v12975 = vadd.f32 %v12934, %v12974
    %v12976 = vpop.f32.mrb[0].mxu0
    %v12977 = vpop.f32.mrb[0].mxu0
    %12978 = vdwg.mxu0
    %12979 = vmatprep.subr.bf16.mxu0 %v12537
    %12980 = vmatpush1.bf16.msra.mxu0 %v12536
    %12981 = vmatprep.subr.bf16.mxu0 %v12541
    %12982 = vmatpush1.bf16.msra.mxu0 %v12540
    %12983 = vmatprep.subr.bf16.mxu0 %v12545
    %12984 = vmatpush1.bf16.msra.mxu0 %v12544
    %12985 = vmatprep.subr.bf16.mxu0 %v12549
    %12986 = vmatpush1.bf16.msra.mxu0 %v12548
    %12987 = vmatprep.subr.bf16.mxu0 %v12553
    %12988 = vmatpush1.bf16.msra.mxu0 %v12552
    %12989 = vmatprep.subr.bf16.mxu0 %v12557
    %12990 = vmatpush1.bf16.msra.mxu0 %v12556
    %12991 = vmatprep.subr.bf16.mxu0 %v12561
    %12992 = vmatpush1.bf16.msra.mxu0 %v12560
    %12993 = vmatprep.subr.bf16.mxu0 %v12565
    %12994 = vmatpush1.bf16.msra.mxu0 %v12564
    %12995 = vmatprep.subr.bf16.mxu0 %v12569
    %12996 = vmatpush1.bf16.msra.mxu0 %v12568
    %12997 = vmatprep.subr.bf16.mxu0 %v12573
    %12998 = vmatpush1.bf16.msra.mxu0 %v12572
    %12999 = vmatprep.subr.bf16.mxu0 %v12577
    %13000 = vmatpush1.bf16.msra.mxu0 %v12576
    %13001 = vmatprep.subr.bf16.mxu0 %v12581
    %13002 = vmatpush1.bf16.msra.mxu0 %v12580
    %13003 = vmatprep.subr.bf16.mxu0 %v12585
    %13004 = vmatpush1.bf16.msra.mxu0 %v12584
    %13005 = vmatprep.subr.bf16.mxu0 %v12589
    %13006 = vmatpush1.bf16.msra.mxu0 %v12588
    %13007 = vmatprep.subr.bf16.mxu0 %v12593
    %13008 = vmatpush1.bf16.msra.mxu0 %v12592
    %13009 = vmatprep.subr.bf16.mxu0 %v12597
    %13010 = vmatpush1.bf16.msra.mxu0 %v12596
    %13011 = vmatprep.mubr.bf16.mxu0 %v11296
    %13012 = vmatmul.mubr.bf16.gmra.mrb[0].mxu0 %v11295
    %v13013 = vpop.f32.mrb[0].mxu0
    %v13014 = vadd.f32 %v12973, %v13013
    %v13015 = vpop.f32.mrb[0].mxu0
    %v13016 = vadd.f32 %v12975, %v13015
    %v13017 = vpop.f32.mrb[0].mxu0
    %v13018 = vpop.f32.mrb[0].mxu0
    %13019 = vdwg.mxu0
    %13020 = vmatprep.subr.bf16.mxu0 %v12347
    %13021 = vmatpush1.bf16.msra.mxu0 %v12346
    %13022 = vmatprep.subr.bf16.mxu0 %v12351
    %13023 = vmatpush1.bf16.msra.mxu0 %v12350
    %13024 = vmatprep.subr.bf16.mxu0 %v12355
    %13025 = vmatpush1.bf16.msra.mxu0 %v12354
    %13026 = vmatprep.subr.bf16.mxu0 %v12359
    %13027 = vmatpush1.bf16.msra.mxu0 %v12358
    %13028 = vmatprep.subr.bf16.mxu0 %v12363
    %13029 = vmatpush1.bf16.msra.mxu0 %v12362
    %13030 = vmatprep.subr.bf16.mxu0 %v12367
    %13031 = vmatpush1.bf16.msra.mxu0 %v12366
    %13032 = vmatprep.subr.bf16.mxu0 %v12371
    %13033 = vmatpush1.bf16.msra.mxu0 %v12370
    %13034 = vmatprep.subr.bf16.mxu0 %v12375
    %13035 = vmatpush1.bf16.msra.mxu0 %v12374
    %13036 = vmatprep.subr.bf16.mxu0 %v12379
    %13037 = vmatpush1.bf16.msra.mxu0 %v12378
    %13038 = vmatprep.subr.bf16.mxu0 %v12383
    %13039 = vmatpush1.bf16.msra.mxu0 %v12382
    %13040 = vmatprep.subr.bf16.mxu0 %v12387
    %13041 = vmatpush1.bf16.msra.mxu0 %v12386
    %13042 = vmatprep.subr.bf16.mxu0 %v12391
    %13043 = vmatpush1.bf16.msra.mxu0 %v12390
    %13044 = vmatprep.subr.bf16.mxu0 %v12395
    %13045 = vmatpush1.bf16.msra.mxu0 %v12394
    %13046 = vmatprep.subr.bf16.mxu0 %v12399
    %13047 = vmatpush1.bf16.msra.mxu0 %v12398
    %13048 = vmatprep.subr.bf16.mxu0 %v12403
    %13049 = vmatpush1.bf16.msra.mxu0 %v12402
    %13050 = vmatprep.subr.bf16.mxu0 %v12407
    %13051 = vmatpush1.bf16.msra.mxu0 %v12406
    %13052 = vmatprep.mubr.bf16.mxu0 %v11290
    %13053 = vmatmul.mubr.bf16.gmra.mrb[0].mxu0 %v11289
    %v13054 = vpop.f32.mrb[0].mxu0
    %v13055 = vadd.f32 %v11567, %v13054
    %v13056 = vpop.f32.mrb[0].mxu0
    %v13057 = vadd.f32 %v11571, %v13056
    %v13058 = vpop.f32.mrb[0].mxu0
    %v13059 = vpop.f32.mrb[0].mxu0
    %13060 = vdwg.mxu0
    %13061 = vmatprep.subr.bf16.mxu0 %v12411
    %13062 = vmatpush1.bf16.msra.mxu0 %v12410
    %13063 = vmatprep.subr.bf16.mxu0 %v12415
    %13064 = vmatpush1.bf16.msra.mxu0 %v12414
    %13065 = vmatprep.subr.bf16.mxu0 %v12419
    %13066 = vmatpush1.bf16.msra.mxu0 %v12418
    %13067 = vmatprep.subr.bf16.mxu0 %v12423
    %13068 = vmatpush1.bf16.msra.mxu0 %v12422
    %13069 = vmatprep.subr.bf16.mxu0 %v12427
    %13070 = vmatpush1.bf16.msra.mxu0 %v12426
    %13071 = vmatprep.subr.bf16.mxu0 %v12431
    %13072 = vmatpush1.bf16.msra.mxu0 %v12430
    %13073 = vmatprep.subr.bf16.mxu0 %v12435
    %13074 = vmatpush1.bf16.msra.mxu0 %v12434
    %13075 = vmatprep.subr.bf16.mxu0 %v12439
    %13076 = vmatpush1.bf16.msra.mxu0 %v12438
    %13077 = vmatprep.subr.bf16.mxu0 %v12443
    %13078 = vmatpush1.bf16.msra.mxu0 %v12442
    %13079 = vmatprep.subr.bf16.mxu0 %v12447
    %13080 = vmatpush1.bf16.msra.mxu0 %v12446
    %13081 = vmatprep.subr.bf16.mxu0 %v12451
    %13082 = vmatpush1.bf16.msra.mxu0 %v12450
    %13083 = vmatprep.subr.bf16.mxu0 %v12455
    %13084 = vmatpush1.bf16.msra.mxu0 %v12454
    %13085 = vmatprep.subr.bf16.mxu0 %v12459
    %13086 = vmatpush1.bf16.msra.mxu0 %v12458
    %13087 = vmatprep.subr.bf16.mxu0 %v12463
    %13088 = vmatpush1.bf16.msra.mxu0 %v12462
    %13089 = vmatprep.subr.bf16.mxu0 %v12467
    %13090 = vmatpush1.bf16.msra.mxu0 %v12466
    %13091 = vmatprep.subr.bf16.mxu0 %v12471
    %13092 = vmatpush1.bf16.msra.mxu0 %v12470
    %13093 = vmatprep.mubr.bf16.mxu0 %v11292
    %13094 = vmatmul.mubr.bf16.gmra.mrb[0].mxu0 %v11291
    %v13095 = vpop.f32.mrb[0].mxu0
    %v13096 = vadd.f32 %v13055, %v13095
    %v13097 = vpop.f32.mrb[0].mxu0
    %v13098 = vadd.f32 %v13057, %v13097
    %v13099 = vpop.f32.mrb[0].mxu0
    %v13100 = vpop.f32.mrb[0].mxu0
    %13101 = vdwg.mxu0
    %13102 = vmatprep.subr.bf16.mxu0 %v12475
    %13103 = vmatpush1.bf16.msra.mxu0 %v12474
    %13104 = vmatprep.subr.bf16.mxu0 %v12479
    %13105 = vmatpush1.bf16.msra.mxu0 %v12478
    %13106 = vmatprep.subr.bf16.mxu0 %v12483
    %13107 = vmatpush1.bf16.msra.mxu0 %v12482
    %13108 = vmatprep.subr.bf16.mxu0 %v12487
    %13109 = vmatpush1.bf16.msra.mxu0 %v12486
    %13110 = vmatprep.subr.bf16.mxu0 %v12491
    %13111 = vmatpush1.bf16.msra.mxu0 %v12490
    %13112 = vmatprep.subr.bf16.mxu0 %v12495
    %13113 = vmatpush1.bf16.msra.mxu0 %v12494
    %13114 = vmatprep.subr.bf16.mxu0 %v12499
    %13115 = vmatpush1.bf16.msra.mxu0 %v12498
    %13116 = vmatprep.subr.bf16.mxu0 %v12503
    %13117 = vmatpush1.bf16.msra.mxu0 %v12502
    %13118 = vmatprep.subr.bf16.mxu0 %v12507
    %13119 = vmatpush1.bf16.msra.mxu0 %v12506
    %13120 = vmatprep.subr.bf16.mxu0 %v12511
    %13121 = vmatpush1.bf16.msra.mxu0 %v12510
    %13122 = vmatprep.subr.bf16.mxu0 %v12515
    %13123 = vmatpush1.bf16.msra.mxu0 %v12514
    %13124 = vmatprep.subr.bf16.mxu0 %v12519
    %13125 = vmatpush1.bf16.msra.mxu0 %v12518
    %13126 = vmatprep.subr.bf16.mxu0 %v12523
    %13127 = vmatpush1.bf16.msra.mxu0 %v12522
    %13128 = vmatprep.subr.bf16.mxu0 %v12527
    %13129 = vmatpush1.bf16.msra.mxu0 %v12526
    %13130 = vmatprep.subr.bf16.mxu0 %v12531
    %13131 = vmatpush1.bf16.msra.mxu0 %v12530
    %13132 = vmatprep.subr.bf16.mxu0 %v12535
    %13133 = vmatpush1.bf16.msra.mxu0 %v12534
    %13134 = vmatprep.mubr.bf16.mxu0 %v11294
    %13135 = vmatmul.mubr.bf16.gmra.mrb[0].mxu0 %v11293
    %v13136 = vpop.f32.mrb[0].mxu0
    %v13137 = vadd.f32 %v13096, %v13136
    %v13138 = vpop.f32.mrb[0].mxu0
    %v13139 = vadd.f32 %v13098, %v13138
    %v13140 = vpop.f32.mrb[0].mxu0
    %v13141 = vpop.f32.mrb[0].mxu0
    %13142 = vdwg.mxu0
    %13143 = vmatprep.subr.bf16.mxu0 %v12539
    %13144 = vmatpush1.bf16.msra.mxu0 %v12538
    %13145 = vmatprep.subr.bf16.mxu0 %v12543
    %13146 = vmatpush1.bf16.msra.mxu0 %v12542
    %13147 = vmatprep.subr.bf16.mxu0 %v12547
    %13148 = vmatpush1.bf16.msra.mxu0 %v12546
    %13149 = vmatprep.subr.bf16.mxu0 %v12551
    %13150 = vmatpush1.bf16.msra.mxu0 %v12550
    %13151 = vmatprep.subr.bf16.mxu0 %v12555
    %13152 = vmatpush1.bf16.msra.mxu0 %v12554
    %13153 = vmatprep.subr.bf16.mxu0 %v12559
    %13154 = vmatpush1.bf16.msra.mxu0 %v12558
    %13155 = vmatprep.subr.bf16.mxu0 %v12563
    %13156 = vmatpush1.bf16.msra.mxu0 %v12562
    %13157 = vmatprep.subr.bf16.mxu0 %v12567
    %13158 = vmatpush1.bf16.msra.mxu0 %v12566
    %13159 = vmatprep.subr.bf16.mxu0 %v12571
    %13160 = vmatpush1.bf16.msra.mxu0 %v12570
    %13161 = vmatprep.subr.bf16.mxu0 %v12575
    %13162 = vmatpush1.bf16.msra.mxu0 %v12574
    %13163 = vmatprep.subr.bf16.mxu0 %v12579
    %13164 = vmatpush1.bf16.msra.mxu0 %v12578
    %13165 = vmatprep.subr.bf16.mxu0 %v12583
    %13166 = vmatpush1.bf16.msra.mxu0 %v12582
    %13167 = vmatprep.subr.bf16.mxu0 %v12587
    %13168 = vmatpush1.bf16.msra.mxu0 %v12586
    %13169 = vmatprep.subr.bf16.mxu0 %v12591
    %13170 = vmatpush1.bf16.msra.mxu0 %v12590
    %13171 = vmatprep.subr.bf16.mxu0 %v12595
    %13172 = vmatpush1.bf16.msra.mxu0 %v12594
    %13173 = vmatprep.subr.bf16.mxu0 %v12599
    %13174 = vmatpush1.bf16.msra.mxu0 %v12598
    %13175 = vmatprep.mubr.bf16.mxu0 %v11296
    %13176 = vmatmul.mubr.bf16.gmra.mrb[0].mxu0 %v11295
    %v13177 = vpop.f32.mrb[0].mxu0
    %v13178 = vadd.f32 %v13137, %v13177
    %v13179 = vpop.f32.mrb[0].mxu0
    %v13180 = vadd.f32 %v13139, %v13179
    %v13181 = vpop.f32.mrb[0].mxu0
    %v13182 = vpop.f32.mrb[0].mxu0
    %13183 = vdwg.mxu0
    %vm13184 = vcmp.ge.f32.partialorder %v13014, 0.0
    %vm13185 = vcmp.ge.f32.partialorder %v13016, 0.0
    %vm13186 = vcmp.ge.f32.partialorder %v13178, 0.0
    %vm13187 = vcmp.ge.f32.partialorder %v13180, 0.0
    %v13188 = vmul.f32 %v13014, 0.01
    %v13189 = vmul.f32 %v13016, 0.01
    %v13190 = vmul.f32 %v13178, 0.01
    %v13191 = vmul.f32 %v13180, 0.01
    %v13192 = vsel %vm13184, %v13014, %v13188
    %v13193 = vsel %vm13185, %v13016, %v13189
    %v13194 = vsel %vm13186, %v13178, %v13190
    %v13195 = vsel %vm13187, %v13180, %v13191
    %v13196 = vpack.c.bf16 %v13192, %v13192
    %v13197 = vpack.c.bf16 %v13193, %v13193
    %v13198 = vpack.c.bf16 %v13194, %v13194
    %v13199 = vpack.c.bf16 %v13195, %v13195
    %v13200 = vld [vmem:[%s7] sm:$0xf]
    %v13201 = vld [vmem:[%s7 + $0x4] sm:$0xf]
    %v13202 = vld [vmem:[%s7 + $0x8] sm:$0xf]
    %v13203 = vld [vmem:[%s7 + $0xc] sm:$0xf]
    %v13204 = vld [vmem:[%s7 + $0x10] sm:$0xf]
    %v13205 = vld [vmem:[%s7 + $0x14] sm:$0xf]
    %v13206 = vld [vmem:[%s7 + $0x18] sm:$0xf]
    %v13207 = vld [vmem:[%s7 + $0x1c] sm:$0xf]
    %v13208 = vld [vmem:[%s7 + $0x20] sm:$0xf]
    %v13209 = vld [vmem:[%s7 + $0x24] sm:$0xf]
    %v13210 = vld [vmem:[%s7 + $0x28] sm:$0xf]
    %v13211 = vld [vmem:[%s7 + $0x2c] sm:$0xf]
    %v13212 = vld [vmem:[%s7 + $0x30] sm:$0xf]
    %v13213 = vld [vmem:[%s7 + $0x34] sm:$0xf]
    %v13214 = vld [vmem:[%s7 + $0x38] sm:$0xf]
    %v13215 = vld [vmem:[%s7 + $0x3c] sm:$0xf]
    %v13216 = vld [vmem:[%s7 + $0x40] sm:$0xf]
    %v13217 = vld [vmem:[%s7 + $0x44] sm:$0xf]
    %v13218 = vld [vmem:[%s7 + $0x48] sm:$0xf]
    %v13219 = vld [vmem:[%s7 + $0x4c] sm:$0xf]
    %v13220 = vld [vmem:[%s7 + $0x50] sm:$0xf]
    %v13221 = vld [vmem:[%s7 + $0x54] sm:$0xf]
    %v13222 = vld [vmem:[%s7 + $0x58] sm:$0xf]
    %v13223 = vld [vmem:[%s7 + $0x5c] sm:$0xf]
    %v13224 = vld [vmem:[%s7 + $0x60] sm:$0xf]
    %v13225 = vld [vmem:[%s7 + $0x64] sm:$0xf]
    %v13226 = vld [vmem:[%s7 + $0x68] sm:$0xf]
    %v13227 = vld [vmem:[%s7 + $0x6c] sm:$0xf]
    %v13228 = vld [vmem:[%s7 + $0x70] sm:$0xf]
    %v13229 = vld [vmem:[%s7 + $0x74] sm:$0xf]
    %v13230 = vld [vmem:[%s7 + $0x78] sm:$0xf]
    %v13231 = vld [vmem:[%s7 + $0x7c] sm:$0xf]
    %v13232 = vld [vmem:[%s7 + $0x80] sm:$0xf]
    %v13233 = vld [vmem:[%s7 + $0x84] sm:$0xf]
    %v13234 = vld [vmem:[%s7 + $0x88] sm:$0xf]
    %v13235 = vld [vmem:[%s7 + $0x8c] sm:$0xf]
    %v13236 = vld [vmem:[%s7 + $0x90] sm:$0xf]
    %v13237 = vld [vmem:[%s7 + $0x94] sm:$0xf]
    %v13238 = vld [vmem:[%s7 + $0x98] sm:$0xf]
    %v13239 = vld [vmem:[%s7 + $0x9c] sm:$0xf]
    %v13240 = vld [vmem:[%s7 + $0xa0] sm:$0xf]
    %v13241 = vld [vmem:[%s7 + $0xa4] sm:$0xf]
    %v13242 = vld [vmem:[%s7 + $0xa8] sm:$0xf]
    %v13243 = vld [vmem:[%s7 + $0xac] sm:$0xf]
    %v13244 = vld [vmem:[%s7 + $0xb0] sm:$0xf]
    %v13245 = vld [vmem:[%s7 + $0xb4] sm:$0xf]
    %v13246 = vld [vmem:[%s7 + $0xb8] sm:$0xf]
    %v13247 = vld [vmem:[%s7 + $0xbc] sm:$0xf]
    %v13248 = vld [vmem:[%s7 + $0xc0] sm:$0xf]
    %v13249 = vld [vmem:[%s7 + $0xc4] sm:$0xf]
    %v13250 = vld [vmem:[%s7 + $0xc8] sm:$0xf]
    %v13251 = vld [vmem:[%s7 + $0xcc] sm:$0xf]
    %v13252 = vld [vmem:[%s7 + $0xd0] sm:$0xf]
    %v13253 = vld [vmem:[%s7 + $0xd4] sm:$0xf]
    %v13254 = vld [vmem:[%s7 + $0xd8] sm:$0xf]
    %v13255 = vld [vmem:[%s7 + $0xdc] sm:$0xf]
    %v13256 = vld [vmem:[%s7 + $0xe0] sm:$0xf]
    %v13257 = vld [vmem:[%s7 + $0xe4] sm:$0xf]
    %v13258 = vld [vmem:[%s7 + $0xe8] sm:$0xf]
    %v13259 = vld [vmem:[%s7 + $0xec] sm:$0xf]
    %v13260 = vld [vmem:[%s7 + $0xf0] sm:$0xf]
    %v13261 = vld [vmem:[%s7 + $0xf4] sm:$0xf]
    %v13262 = vld [vmem:[%s7 + $0xf8] sm:$0xf]
    %v13263 = vld [vmem:[%s7 + $0xfc] sm:$0xf]
    %v13264 = vld [vmem:[#allocation13 + $0x6] ss:$0 sm:$0xff]
    %v13329 = vunpack.c.l.b16 %v13200
    %v13330 = vunpack.c.l.b16 %v13201
    %v13331 = vunpack.c.l.b16 %v13202
    %v13332 = vunpack.c.l.b16 %v13203
    %v13333 = vunpack.c.l.b16 %v13204
    %v13334 = vunpack.c.l.b16 %v13205
    %v13335 = vunpack.c.l.b16 %v13206
    %v13336 = vunpack.c.l.b16 %v13207
    %v13337 = vunpack.c.l.b16 %v13208
    %v13338 = vunpack.c.l.b16 %v13209
    %v13339 = vunpack.c.l.b16 %v13210
    %v13340 = vunpack.c.l.b16 %v13211
    %v13341 = vunpack.c.l.b16 %v13212
    %v13342 = vunpack.c.l.b16 %v13213
    %v13343 = vunpack.c.l.b16 %v13214
    %v13344 = vunpack.c.l.b16 %v13215
    %v13345 = vunpack.c.l.b16 %v13216
    %v13346 = vunpack.c.l.b16 %v13217
    %v13347 = vunpack.c.l.b16 %v13218
    %v13348 = vunpack.c.l.b16 %v13219
    %v13349 = vunpack.c.l.b16 %v13220
    %v13350 = vunpack.c.l.b16 %v13221
    %v13351 = vunpack.c.l.b16 %v13222
    %v13352 = vunpack.c.l.b16 %v13223
    %v13353 = vunpack.c.l.b16 %v13224
    %v13354 = vunpack.c.l.b16 %v13225
    %v13355 = vunpack.c.l.b16 %v13226
    %v13356 = vunpack.c.l.b16 %v13227
    %v13357 = vunpack.c.l.b16 %v13228
    %v13358 = vunpack.c.l.b16 %v13229
    %v13359 = vunpack.c.l.b16 %v13230
    %v13360 = vunpack.c.l.b16 %v13231
    %v13361 = vunpack.c.l.b16 %v13232
    %v13362 = vunpack.c.l.b16 %v13233
    %v13363 = vunpack.c.l.b16 %v13234
    %v13364 = vunpack.c.l.b16 %v13235
    %v13365 = vunpack.c.l.b16 %v13236
    %v13366 = vunpack.c.l.b16 %v13237
    %v13367 = vunpack.c.l.b16 %v13238
    %v13368 = vunpack.c.l.b16 %v13239
    %v13369 = vunpack.c.l.b16 %v13240
    %v13370 = vunpack.c.l.b16 %v13241
    %v13371 = vunpack.c.l.b16 %v13242
    %v13372 = vunpack.c.l.b16 %v13243
    %v13373 = vunpack.c.l.b16 %v13244
    %v13374 = vunpack.c.l.b16 %v13245
    %v13375 = vunpack.c.l.b16 %v13246
    %v13376 = vunpack.c.l.b16 %v13247
    %v13377 = vunpack.c.l.b16 %v13248
    %v13378 = vunpack.c.l.b16 %v13249
    %v13379 = vunpack.c.l.b16 %v13250
    %v13380 = vunpack.c.l.b16 %v13251
    %v13381 = vunpack.c.l.b16 %v13252
    %v13382 = vunpack.c.l.b16 %v13253
    %v13383 = vunpack.c.l.b16 %v13254
    %v13384 = vunpack.c.l.b16 %v13255
    %v13385 = vunpack.c.l.b16 %v13256
    %v13386 = vunpack.c.l.b16 %v13257
    %v13387 = vunpack.c.l.b16 %v13258
    %v13388 = vunpack.c.l.b16 %v13259
    %v13389 = vunpack.c.l.b16 %v13260
    %v13390 = vunpack.c.l.b16 %v13261
    %v13391 = vunpack.c.l.b16 %v13262
    %v13392 = vunpack.c.l.b16 %v13263
    %v13393 = vpack.c.b16 %v13330, %v13329
    %v13394 = vpack.c.b16 %v13332, %v13331
    %v13395 = vpack.c.b16 %v13334, %v13333
    %v13396 = vpack.c.b16 %v13336, %v13335
    %v13397 = vpack.c.b16 %v13338, %v13337
    %v13398 = vpack.c.b16 %v13340, %v13339
    %v13399 = vpack.c.b16 %v13342, %v13341
    %v13400 = vpack.c.b16 %v13344, %v13343
    %v13401 = vpack.c.b16 %v13346, %v13345
    %v13402 = vpack.c.b16 %v13348, %v13347
    %v13403 = vpack.c.b16 %v13350, %v13349
    %v13404 = vpack.c.b16 %v13352, %v13351
    %v13405 = vpack.c.b16 %v13354, %v13353
    %v13406 = vpack.c.b16 %v13356, %v13355
    %v13407 = vpack.c.b16 %v13358, %v13357
    %v13408 = vpack.c.b16 %v13360, %v13359
    %v13409 = vpack.c.b16 %v13362, %v13361
    %v13410 = vpack.c.b16 %v13364, %v13363
    %v13411 = vpack.c.b16 %v13366, %v13365
    %v13412 = vpack.c.b16 %v13368, %v13367
    %v13413 = vpack.c.b16 %v13370, %v13369
    %v13414 = vpack.c.b16 %v13372, %v13371
    %v13415 = vpack.c.b16 %v13374, %v13373
    %v13416 = vpack.c.b16 %v13376, %v13375
    %v13417 = vpack.c.b16 %v13378, %v13377
    %v13418 = vpack.c.b16 %v13380, %v13379
    %v13419 = vpack.c.b16 %v13382, %v13381
    %v13420 = vpack.c.b16 %v13384, %v13383
    %v13421 = vpack.c.b16 %v13386, %v13385
    %v13422 = vpack.c.b16 %v13388, %v13387
    %v13423 = vpack.c.b16 %v13390, %v13389
    %v13424 = vpack.c.b16 %v13392, %v13391
    %13457 = vmatprep.subr.bf16.mxu0 0
    %13458 = vmatpush1.bf16.msra.mxu0 %v13393
    %13459 = vmatprep.subr.bf16.mxu0 0
    %13460 = vmatpush1.bf16.msra.mxu0 %v13394
    %13461 = vmatprep.subr.bf16.mxu0 0
    %13462 = vmatpush1.bf16.msra.mxu0 %v13395
    %13463 = vmatprep.subr.bf16.mxu0 0
    %13464 = vmatpush1.bf16.msra.mxu0 %v13396
    %13465 = vmatprep.subr.bf16.mxu0 0
    %13466 = vmatpush1.bf16.msra.mxu0 %v13397
    %13467 = vmatprep.subr.bf16.mxu0 0
    %13468 = vmatpush1.bf16.msra.mxu0 %v13398
    %13469 = vmatprep.subr.bf16.mxu0 0
    %13470 = vmatpush1.bf16.msra.mxu0 %v13399
    %13471 = vmatprep.subr.bf16.mxu0 0
    %13472 = vmatpush1.bf16.msra.mxu0 %v13400
    %13473 = vmatprep.subr.bf16.mxu0 0
    %13474 = vmatpush1.bf16.msra.mxu0 %v13401
    %13475 = vmatprep.subr.bf16.mxu0 0
    %13476 = vmatpush1.bf16.msra.mxu0 %v13402
    %13477 = vmatprep.subr.bf16.mxu0 0
    %13478 = vmatpush1.bf16.msra.mxu0 %v13403
    %13479 = vmatprep.subr.bf16.mxu0 0
    %13480 = vmatpush1.bf16.msra.mxu0 %v13404
    %13481 = vmatprep.subr.bf16.mxu0 0
    %13482 = vmatpush1.bf16.msra.mxu0 %v13405
    %13483 = vmatprep.subr.bf16.mxu0 0
    %13484 = vmatpush1.bf16.msra.mxu0 %v13406
    %13485 = vmatprep.subr.bf16.mxu0 0
    %13486 = vmatpush1.bf16.msra.mxu0 %v13407
    %13487 = vmatprep.subr.bf16.mxu0 0
    %13488 = vmatpush1.bf16.msra.mxu0 %v13408
    %13489 = vmatprep.mubr.bf16.mxu0 %v13197
    %13490 = vmatmul.mubr.bf16.gmra.mrb[0].mxu0 %v13196
    %v13491 = vpop.f32.mrb[0].mxu0
    %v13492 = vadd.f32 %v13264, %v13491
    %v13493 = vpop.f32.mrb[0].mxu0
    %v13494 = vpop.f32.mrb[0].mxu0
    %v13495 = vpop.f32.mrb[0].mxu0
    %13496 = vdwg.mxu0
    %13497 = vmatprep.subr.bf16.mxu0 0
    %13498 = vmatpush1.bf16.msra.mxu0 %v13409
    %13499 = vmatprep.subr.bf16.mxu0 0
    %13500 = vmatpush1.bf16.msra.mxu0 %v13410
    %13501 = vmatprep.subr.bf16.mxu0 0
    %13502 = vmatpush1.bf16.msra.mxu0 %v13411
    %13503 = vmatprep.subr.bf16.mxu0 0
    %13504 = vmatpush1.bf16.msra.mxu0 %v13412
    %13505 = vmatprep.subr.bf16.mxu0 0
    %13506 = vmatpush1.bf16.msra.mxu0 %v13413
    %13507 = vmatprep.subr.bf16.mxu0 0
    %13508 = vmatpush1.bf16.msra.mxu0 %v13414
    %13509 = vmatprep.subr.bf16.mxu0 0
    %13510 = vmatpush1.bf16.msra.mxu0 %v13415
    %13511 = vmatprep.subr.bf16.mxu0 0
    %13512 = vmatpush1.bf16.msra.mxu0 %v13416
    %13513 = vmatprep.subr.bf16.mxu0 0
    %13514 = vmatpush1.bf16.msra.mxu0 %v13417
    %13515 = vmatprep.subr.bf16.mxu0 0
    %13516 = vmatpush1.bf16.msra.mxu0 %v13418
    %13517 = vmatprep.subr.bf16.mxu0 0
    %13518 = vmatpush1.bf16.msra.mxu0 %v13419
    %13519 = vmatprep.subr.bf16.mxu0 0
    %13520 = vmatpush1.bf16.msra.mxu0 %v13420
    %13521 = vmatprep.subr.bf16.mxu0 0
    %13522 = vmatpush1.bf16.msra.mxu0 %v13421
    %13523 = vmatprep.subr.bf16.mxu0 0
    %13524 = vmatpush1.bf16.msra.mxu0 %v13422
    %13525 = vmatprep.subr.bf16.mxu0 0
    %13526 = vmatpush1.bf16.msra.mxu0 %v13423
    %13527 = vmatprep.subr.bf16.mxu0 0
    %13528 = vmatpush1.bf16.msra.mxu0 %v13424
    %13529 = vmatprep.mubr.bf16.mxu0 %v13199
    %13530 = vmatmul.mubr.bf16.gmra.mrb[0].mxu0 %v13198
    %v13531 = vpop.f32.mrb[0].mxu0
    %v13532 = vadd.f32 %v13492, %v13531
    %v13533 = vpop.f32.mrb[0].mxu0
    %v13534 = vpop.f32.mrb[0].mxu0
    %v13535 = vpop.f32.mrb[0].mxu0
    %13536 = vdwg.mxu0
    %vm13537 = vcmp.ge.f32.partialorder %v13532, 0.0
    %v13538 = vmul.f32 %v13532, 0.01
    %v13539 = vsel %vm13537, %v13532, %v13538
    %v13540 = vpack.c.bf16 %v13539, %v13539
    %v13541 = vld [vmem:[%s8] sm:$0xf]
    %v13542 = vld [vmem:[%s8 + $0x4] sm:$0xf]
    %v13543 = vld [vmem:[%s8 + $0x8] sm:$0xf]
    %v13544 = vld [vmem:[%s8 + $0xc] sm:$0xf]
    %v13545 = vld [vmem:[%s8 + $0x10] sm:$0xf]
    %v13546 = vld [vmem:[%s8 + $0x14] sm:$0xf]
    %v13547 = vld [vmem:[%s8 + $0x18] sm:$0xf]
    %v13548 = vld [vmem:[%s8 + $0x1c] sm:$0xf]
    %v13549 = vld [vmem:[#allocation13 + $0x7] ss:$0 sm:$0xff]
    %v13558 = vunpack.c.l.b16 %v13541
    %v13559 = vunpack.c.l.b16 %v13542
    %v13560 = vunpack.c.l.b16 %v13543
    %v13561 = vunpack.c.l.b16 %v13544
    %v13562 = vunpack.c.l.b16 %v13545
    %v13563 = vunpack.c.l.b16 %v13546
    %v13564 = vunpack.c.l.b16 %v13547
    %v13565 = vunpack.c.l.b16 %v13548
    %v13566 = vpack.c.b16 %v13559, %v13558
    %v13567 = vpack.c.b16 %v13561, %v13560
    %v13568 = vpack.c.b16 %v13563, %v13562
    %v13569 = vpack.c.b16 %v13565, %v13564
    %v13575 = vsel %vm363, %v13540, 0
    %13577 = vmatprep.subr.bf16.mxu0 0
    %13578 = vmatpush1.bf16.msra.mxu0 %v13566
    %13579 = vmatprep.subr.bf16.mxu0 0
    %13580 = vmatpush1.bf16.msra.mxu0 %v13567
    %13581 = vmatprep.subr.bf16.mxu0 0
    %13582 = vmatpush1.bf16.msra.mxu0 %v13568
    %13583 = vmatprep.subr.bf16.mxu0 0
    %13584 = vmatpush1.bf16.msra.mxu0 %v13569
    %13585 = vmatprep.subr.bf16.mxu0 0
    %13586 = vmatpush1.bf16.msra.mxu0 0
    %13587 = vmatprep.subr.bf16.mxu0 0
    %13588 = vmatpush1.bf16.msra.mxu0 0
    %13589 = vmatprep.subr.bf16.mxu0 0
    %13590 = vmatpush1.bf16.msra.mxu0 0
    %13591 = vmatprep.subr.bf16.mxu0 0
    %13592 = vmatpush1.bf16.msra.mxu0 0
    %13593 = vmatprep.subr.bf16.mxu0 0
    %13594 = vmatpush1.bf16.msra.mxu0 0
    %13595 = vmatprep.subr.bf16.mxu0 0
    %13596 = vmatpush1.bf16.msra.mxu0 0
    %13597 = vmatprep.subr.bf16.mxu0 0
    %13598 = vmatpush1.bf16.msra.mxu0 0
    %13599 = vmatprep.subr.bf16.mxu0 0
    %13600 = vmatpush1.bf16.msra.mxu0 0
    %13601 = vmatprep.subr.bf16.mxu0 0
    %13602 = vmatpush1.bf16.msra.mxu0 0
    %13603 = vmatprep.subr.bf16.mxu0 0
    %13604 = vmatpush1.bf16.msra.mxu0 0
    %13605 = vmatprep.subr.bf16.mxu0 0
    %13606 = vmatpush1.bf16.msra.mxu0 0
    %13607 = vmatprep.subr.bf16.mxu0 0
    %13608 = vmatpush1.bf16.msra.mxu0 0
    %13609 = vmatprep.mubr.bf16.mxu0 0
    %13610 = vmatmul.mubr.bf16.gmra.mrb[0].mxu0 %v13575
    %v13611 = vpop.f32.mrb[0].mxu0
    %v13612 = vadd.f32 %v13549, %v13611
    %v13613 = vpop.f32.mrb[0].mxu0
    %v13614 = vpop.f32.mrb[0].mxu0
    %v13615 = vpop.f32.mrb[0].mxu0
    %13616 = vdwg.mxu0
    %vm13617 = vcmask 33792
    %13618 = vst.msk [vmem:[#allocation14] sm:$0x3] %vm13617, %v13612
    // Predicated region
    $region70: #{tpu_custom_call.1} parent=1 // pred_check
      _
    $region71: #{tpu_custom_call.1} parent=1 // pred_check_branch
      %13620 = sbr.rel (0) target = $region73
    $region72: #{tpu_custom_call.1} parent=1 // pred_region
      %s13622 = ssub.s32 32, 32
      %13623 = vsyncadd [#allocation4], %s13622
      %s13625 = sshll.u32 [#allocation14], 4
      %s13626 = int_to_ptr.vmem [resolvable:$true] %s13625
      %13628 = dma.vmem_to_hbm [thread:$0]  %s13626, 32, %s10, [#allocation4]
    $region73: #{tpu_custom_call.1} parent=1 // pred_fallthru
      _
    // Predicated region
    $region74: #{tpu_custom_call.1} parent=1 // pred_check
      _
    $region75: #{tpu_custom_call.1} parent=1 // pred_check_branch
      %13630 = sbr.rel (0) target = $region77
    $region76: #{tpu_custom_call.1} parent=1 // pred_region
      %13631 = dma.done [#allocation4], 32
    $region77: #{tpu_custom_call.1} parent=1 // pred_fallthru
      _
    %13632 = vsyncpa [#allocation3], 1
    %13633 = vsyncpa [#allocation6], 1
    %13634 = vsyncpa [#allocation9], 1
    %13635 = vsyncpa [#allocation12], 1
    %13636 = vsyncpa [#allocation4], 1

</llo_original>
